<compile_context>
chip_gen: v7x
topology: tpu7x:2x2x1
jax: 0.10.0
libtpu: 0.0.40
codegen_flags: <defaults>
</compile_context>

<pallas_src>
import jax
import jax.numpy as jnp
from jax.experimental import pallas as pl
from jax.experimental.pallas import tpu as pltpu

LEAKY_SLOPE = 0.01
BN_EPS = 1e-5
NUM_CLASSES = 2

# conv params shared by all three layers (from the PyTorch module)
KH, KW = 5, 3
SH, SW = 3, 1          # stride
DH, DW = 2, 1          # dilation
PH, PW = 12, 1         # padding

C1, C2, C3 = 64, 128, 256


def _conv_out_h(h):
    return (h + 2 * PH - DH * (KH - 1) - 1) // SH + 1


def _block_out_hw(h, w):
    # conv keeps W (pad 1, kernel 3, dil 1, stride 1); MaxPool (2,1) floors H.
    return _conv_out_h(h) // 2, w


# ---------------------------------------------------------------- fused kernel

def _make_net2_kernel(H, W):
    Ho1 = _conv_out_h(H);   Hp1 = Ho1 // 2
    Ho2 = _conv_out_h(Hp1); Hp2 = Ho2 // 2
    Ho3 = _conv_out_h(Hp2); Hp3 = Ho3 // 2
    Wp = W + 2 * PW

    def leaky(y):
        return jnp.where(y >= 0, y, LEAKY_SLOPE * y)

    def full_sum(x):  # (a, b) f32 -> (1, 1) f32, explicit lane then sublane reduce
        return jnp.sum(jnp.sum(x, axis=1, keepdims=True), axis=0, keepdims=True)

    def conv_lhs(tap, src_ref, ho):
        """Build the (ho*W, KW*Cin) bf16 LHS for KH-tap `tap` (KW folded into K).

        Each padded row is loaded once from VMEM scratch and value-sliced for the
        three W shifts (no repeated overlapping loads)."""
        pieces = []
        for h in range(ho):
            row = src_ref[tap * DH + h * SH]                       # (Wp, Cin) f32
            win = jnp.concatenate([row[j:j + W] for j in range(KW)], axis=-1)
            pieces.append(win.astype(jnp.bfloat16))                # (W, KW*Cin)
        return jnp.concatenate(pieces, axis=0)                     # (ho*W, KW*Cin)

    def kernel(p1_ref, w1_ref, s1_ref, t1_ref,
               w2_ref, s2_ref, t2_ref,
               w3_ref, s3_ref, t3_ref,
               wfc_ref, bfc_ref,
               o_ref,
               a1p_ref, a2p_ref, acc2_ref, acc3_ref):
        # Zero padded-activation scratches every step (pad region must stay 0; we
        # cannot key off program_id because megacore may shard the batch axis).
        a1p_ref[...] = jnp.zeros(a1p_ref.shape, jnp.float32)
        a2p_ref[...] = jnp.zeros(a2p_ref.shape, jnp.float32)

        # ---- layer 1: conv as one (Ho1*W, 15) @ (15, 64) matmul + BN + LeakyReLU
        y1 = jnp.dot(p1_ref[0], w1_ref[...], preferred_element_type=jnp.float32)
        y1 = leaky(y1 * s1_ref[...] + t1_ref[...])                 # (Ho1*W, 64) f32
        for p in range(Hp1):                                       # MaxPool2d((2,1))
            r0 = y1[(2 * p) * W:(2 * p) * W + W, :]
            r1 = y1[(2 * p + 1) * W:(2 * p + 1) * W + W, :]
            a1p_ref[PH + p, pl.ds(PW, W), :] = jnp.maximum(r0, r1)

        # ---- layer 2: 5 matmuls (Ho2*W, KW*C1) @ (KW*C1, C2), accumulate over KH
        acc2_ref[...] = jnp.zeros(acc2_ref.shape, jnp.float32)
        for i in range(KH):
            acc2_ref[...] += jnp.dot(conv_lhs(i, a1p_ref, Ho2), w2_ref[i],
                                     preferred_element_type=jnp.float32)
        y2 = leaky(acc2_ref[...] * s2_ref[...] + t2_ref[...])      # (Ho2*W, 128)
        for p in range(Hp2):
            r0 = y2[(2 * p) * W:(2 * p) * W + W, :]
            r1 = y2[(2 * p + 1) * W:(2 * p + 1) * W + W, :]
            a2p_ref[PH + p, pl.ds(PW, W), :] = jnp.maximum(r0, r1)

        # ---- layer 3: 5 matmuls (Ho3*W, KW*C2) @ (KW*C2, C3)
        acc3_ref[...] = jnp.zeros(acc3_ref.shape, jnp.float32)
        for i in range(KH):
            acc3_ref[...] += jnp.dot(conv_lhs(i, a2p_ref, Ho3), w3_ref[i],
                                     preferred_element_type=jnp.float32)
        y3 = leaky(acc3_ref[...] * s3_ref[...] + t3_ref[...])      # (Ho3*W, 256)

        # ---- MaxPool + flatten + fc1 (Dropout(p=0.5) = identity in eval mode)
        logit0 = jnp.zeros((1, 1), jnp.float32)
        logit1 = jnp.zeros((1, 1), jnp.float32)
        for p in range(Hp3):
            r0 = y3[(2 * p) * W:(2 * p) * W + W, :]
            r1 = y3[(2 * p + 1) * W:(2 * p + 1) * W + W, :]
            pooled = jnp.maximum(r0, r1)                           # (W, 256) f32
            logit0 += full_sum(pooled * wfc_ref[0, pl.ds(p * W, W), :])
            logit1 += full_sum(pooled * wfc_ref[1, pl.ds(p * W, W), :])

        lane = jax.lax.broadcasted_iota(jnp.int32, (1, 128), 1)
        logits = jnp.where(lane == 0, logit0, jnp.where(lane == 1, logit1, 0.0))
        o_ref[0] = logits + bfc_ref[...]

    return kernel


# ---------------------------------------------------------------- wrapper / glue

def net2_forward(x_nchw, params):
    N, _, H, W = x_nchw.shape
    x = x_nchw.astype(jnp.float32).reshape(N, H, W)                # Cin == 1

    Ho1 = _conv_out_h(H);   Hp1 = Ho1 // 2
    Ho2 = _conv_out_h(Hp1); Hp2 = Ho2 // 2
    Ho3 = _conv_out_h(Hp2); Hp3 = Ho3 // 2
    Wp = W + 2 * PW

    # layer-1 im2col patches (layout plumbing only; ~N*Ho1*W*15*2 bytes)
    xp = jnp.pad(x, ((0, 0), (PH, PH), (PW, PW)))
    taps = [xp[:, i * DH:i * DH + (Ho1 - 1) * SH + 1:SH, j:j + W]
            for i in range(KH) for j in range(KW)]                 # each (N, Ho1, W)
    p1 = jnp.stack(taps, axis=-1).reshape(N, Ho1 * W, KH * KW).astype(jnp.bfloat16)

    w1, s1, t1 = params["layer1"]
    w2, s2, t2 = params["layer2"]
    w3, s3, t3 = params["layer3"]
    wfc, bfc = params["fc1"]

    kernel = _make_net2_kernel(H, W)
    const2 = lambda b: (0, 0)
    const3 = lambda b: (0, 0, 0)

    out = pl.pallas_call(
        kernel,
        out_shape=jax.ShapeDtypeStruct((N, 1, 128), jnp.float32),
        grid=(N,),
        in_specs=[
            pl.BlockSpec((1, Ho1 * W, KH * KW), lambda b: (b, 0, 0)),   # p1 patches
            pl.BlockSpec((KH * KW, C1), const2),                        # w1
            pl.BlockSpec((1, C1), const2),                              # scale1
            pl.BlockSpec((1, C1), const2),                              # shift1
            pl.BlockSpec((KH, KW * C1, C2), const3),                    # w2
            pl.BlockSpec((1, C2), const2),
            pl.BlockSpec((1, C2), const2),
            pl.BlockSpec((KH, KW * C2, C3), const3),                    # w3
            pl.BlockSpec((1, C3), const2),
            pl.BlockSpec((1, C3), const2),
            pl.BlockSpec((NUM_CLASSES, Hp3 * W, C3), const3),           # fc weights
            pl.BlockSpec((1, 128), const2),                             # fc bias
        ],
        out_specs=pl.BlockSpec((1, 1, 128), lambda b: (b, 0, 0)),
        scratch_shapes=[
            pltpu.VMEM((Hp1 + 2 * PH, Wp, C1), jnp.float32),            # padded act 1
            pltpu.VMEM((Hp2 + 2 * PH, Wp, C2), jnp.float32),            # padded act 2
            pltpu.VMEM((Ho2 * W, C2), jnp.float32),                     # layer-2 acc
            pltpu.VMEM((Ho3 * W, C3), jnp.float32),                     # layer-3 acc
        ],
        compiler_params=pltpu.CompilerParams(dimension_semantics=("parallel",)),
    )(p1, w1, s1, t1, w2, s2, t2, w3, s3, t3, wfc, bfc)
    return out[:, 0, :NUM_CLASSES]


# ---------------------------------------------------------------- params

def init_params(key, height, width):
    """Raw parameters in PyTorch layouts (conv OIHW, fc (out, in) over NCHW flatten)."""
    def conv_layer(k, cin, cout):
        k1, k2, k3, k4, k5, k6 = jax.random.split(k, 6)
        fan_in = cin * KH * KW
        w = jax.random.normal(k1, (cout, cin, KH, KW), jnp.float32) / jnp.sqrt(fan_in)
        b = 0.01 * jax.random.normal(k2, (cout,), jnp.float32)
        gamma = 1.0 + 0.1 * jax.random.normal(k3, (cout,), jnp.float32)
        beta = 0.1 * jax.random.normal(k4, (cout,), jnp.float32)
        mean = 0.1 * jax.random.normal(k5, (cout,), jnp.float32)
        var = 0.5 + jax.random.uniform(k6, (cout,), jnp.float32)
        return (w, b, gamma, beta, mean, var)

    k1, k2, k3, k4 = jax.random.split(key, 4)
    h, w_ = height, width
    for _ in range(3):
        h, w_ = _block_out_hw(h, w_)
    flattened = C3 * h * w_
    kf1, kf2 = jax.random.split(k4)
    fc_w = jax.random.normal(kf1, (NUM_CLASSES, flattened), jnp.float32) / jnp.sqrt(flattened)
    fc_b = 0.01 * jax.random.normal(kf2, (NUM_CLASSES,), jnp.float32)
    return {
        "layer1": conv_layer(k1, 1, C1),
        "layer2": conv_layer(k2, C1, C2),
        "layer3": conv_layer(k3, C2, C3),
        "fc1": (fc_w, fc_b),
    }


def prepare_params(raw, height, width):
    """One-time offline prep: KW-folded bf16 conv weights, folded BN scale/shift
    (conv bias included), fc weights permuted NCHW-flatten -> NHWC-flatten order."""
    def prep_conv(layer):
        w, b, gamma, beta, mean, var = layer                 # w: (Cout, Cin, KH, KW)
        cout, cin = w.shape[0], w.shape[1]
        w_hwio = jnp.transpose(w, (2, 3, 1, 0))              # (KH, KW, Cin, Cout)
        if cin == 1:
            w_k = w_hwio.reshape(KH * KW, cout)              # layer 1: single matmul
        else:
            w_k = w_hwio.reshape(KH, KW * cin, cout)         # KW folded into K
        scale = gamma / jnp.sqrt(var + BN_EPS)
        shift = (b - mean) * scale + beta
        return (w_k.astype(jnp.bfloat16),
                scale.reshape(1, cout).astype(jnp.float32),
                shift.reshape(1, cout).astype(jnp.float32))

    h, w_ = height, width
    for _ in range(3):
        h, w_ = _block_out_hw(h, w_)
    fc_w, fc_b = raw["fc1"]                                  # (2, F), (2,)
    wfc = fc_w.reshape(NUM_CLASSES, C3, h, w_)               # rows are NCHW-flattened
    wfc = jnp.transpose(wfc, (0, 2, 3, 1)).reshape(NUM_CLASSES, h * w_, C3)
    bfc = jnp.zeros((1, 128), jnp.float32).at[0, :NUM_CLASSES].set(fc_b)
    return {
        "layer1": prep_conv(raw["layer1"]),
        "layer2": prep_conv(raw["layer2"]),
        "layer3": prep_conv(raw["layer3"]),
        "fc1": (wfc.astype(jnp.float32), bfc),
    }


if __name__ == "__main__":
    batch, height, width = 2, 16, 16
    root = jax.random.PRNGKey(0)
    k_params, k_x = jax.random.split(root)
    raw_params = init_params(k_params, height, width)
    params = prepare_params(raw_params, height, width)
    x = jax.random.normal(k_x, (batch, 1, height, width), dtype=jnp.float32)

    out = jax.jit(net2_forward)(x, params)
    out = jax.block_until_ready(out)
    assert out.shape == (batch, NUM_CLASSES), out.shape
    print("KERNEL_OK")
</pallas_src>

<mosaic_0001>
module attributes {stable_mosaic.version = 11 : i64} {
  func.func @kernel(%arg0: i32, %arg1: memref<1x176x15xbf16, #tpu.memory_space<vmem>>, %arg2: memref<15x64xbf16, #tpu.memory_space<vmem>>, %arg3: memref<1x64xf32, #tpu.memory_space<vmem>>, %arg4: memref<1x64xf32, #tpu.memory_space<vmem>>, %arg5: memref<5x192x128xbf16, #tpu.memory_space<vmem>>, %arg6: memref<1x128xf32, #tpu.memory_space<vmem>>, %arg7: memref<1x128xf32, #tpu.memory_space<vmem>>, %arg8: memref<5x384x256xbf16, #tpu.memory_space<vmem>>, %arg9: memref<1x256xf32, #tpu.memory_space<vmem>>, %arg10: memref<1x256xf32, #tpu.memory_space<vmem>>, %arg11: memref<2x48x256xf32, #tpu.memory_space<vmem>>, %arg12: memref<1x128xf32, #tpu.memory_space<vmem>>, %arg13: memref<1x1x128xf32, #tpu.memory_space<vmem>>, %arg14: memref<29x18x64xf32, #tpu.memory_space<vmem>>, %arg15: memref<27x18x128xf32, #tpu.memory_space<vmem>>, %arg16: memref<112x128xf32, #tpu.memory_space<vmem>>, %arg17: memref<112x256xf32, #tpu.memory_space<vmem>>) attributes {dimension_semantics = [#tpu.dimension_semantics<parallel>], iteration_bounds = array<i64: 2>, scalar_prefetch = 0 : i64, scratch_operands = 4 : i64, tpu.core_type = #tpu.core_type<tc>, window_params = [{transform_indices = @transform_0, window_bounds = array<i64: 1, 176, 15>}, {pipeline_mode = #tpu.pipeline_mode<synchronous>, transform_indices = @transform_1, window_bounds = array<i64: 15, 64>}, {pipeline_mode = #tpu.pipeline_mode<synchronous>, transform_indices = @transform_2, window_bounds = array<i64: 1, 64>}, {pipeline_mode = #tpu.pipeline_mode<synchronous>, transform_indices = @transform_3, window_bounds = array<i64: 1, 64>}, {pipeline_mode = #tpu.pipeline_mode<synchronous>, transform_indices = @transform_4, window_bounds = array<i64: 5, 192, 128>}, {pipeline_mode = #tpu.pipeline_mode<synchronous>, transform_indices = @transform_5, window_bounds = array<i64: 1, 128>}, {pipeline_mode = #tpu.pipeline_mode<synchronous>, transform_indices = @transform_6, window_bounds = array<i64: 1, 128>}, {pipeline_mode = #tpu.pipeline_mode<synchronous>, transform_indices = @transform_7, window_bounds = array<i64: 5, 384, 256>}, {pipeline_mode = #tpu.pipeline_mode<synchronous>, transform_indices = @transform_8, window_bounds = array<i64: 1, 256>}, {pipeline_mode = #tpu.pipeline_mode<synchronous>, transform_indices = @transform_9, window_bounds = array<i64: 1, 256>}, {pipeline_mode = #tpu.pipeline_mode<synchronous>, transform_indices = @transform_10, window_bounds = array<i64: 2, 48, 256>}, {pipeline_mode = #tpu.pipeline_mode<synchronous>, transform_indices = @transform_11, window_bounds = array<i64: 1, 128>}, {transform_indices = @transform_12, window_bounds = array<i64: 1, 1, 128>}]} {
    %cst = arith.constant 0.000000e+00 : f32
    %0 = vector.broadcast %cst : f32 to vector<29x18x64xf32>
    %c0 = arith.constant 0 : index
    %c0_0 = arith.constant 0 : index
    %c0_1 = arith.constant 0 : index
    %1 = vector.load %arg14[%c0, %c0_0, %c0_1] : memref<29x18x64xf32, #tpu.memory_space<vmem>>, vector<29x18x64xf32>
    tpu.vector_store %arg14[%c0, %c0_0, %c0_1], %0 {strides = array<i32>} : memref<29x18x64xf32, #tpu.memory_space<vmem>>, vector<29x18x64xf32>,
    %cst_2 = arith.constant 0.000000e+00 : f32
    %2 = vector.broadcast %cst_2 : f32 to vector<27x18x128xf32>
    %c0_3 = arith.constant 0 : index
    %c0_4 = arith.constant 0 : index
    %c0_5 = arith.constant 0 : index
    %3 = vector.load %arg15[%c0_3, %c0_4, %c0_5] : memref<27x18x128xf32, #tpu.memory_space<vmem>>, vector<27x18x128xf32>
    tpu.vector_store %arg15[%c0_3, %c0_4, %c0_5], %2 {strides = array<i32>} : memref<27x18x128xf32, #tpu.memory_space<vmem>>, vector<27x18x128xf32>,
    %c0_6 = arith.constant 0 : index
    %c0_7 = arith.constant 0 : index
    %c0_8 = arith.constant 0 : index
    %4 = vector.load %arg1[%c0_6, %c0_7, %c0_8] : memref<1x176x15xbf16, #tpu.memory_space<vmem>>, vector<1x176x15xbf16>
    %5 = vector.shape_cast %4 : vector<1x176x15xbf16> to vector<176x15xbf16>
    %c0_9 = arith.constant 0 : index
    %c0_10 = arith.constant 0 : index
    %6 = vector.load %arg2[%c0_9, %c0_10] : memref<15x64xbf16, #tpu.memory_space<vmem>>, vector<15x64xbf16>
    %cst_11 = arith.constant dense<0.000000e+00> : vector<176x64xf32>
    %7 = tpu.matmul %5, %6, %cst_11 {dimension_numbers = #tpu.dot_dimension_numbers<[1], [0], [0], [1], [0, 0, 1, 1], [], []>} : vector<176x15xbf16>, vector<15x64xbf16>, vector<176x64xf32> -> vector<176x64xf32>
    %c0_12 = arith.constant 0 : index
    %c0_13 = arith.constant 0 : index
    %8 = vector.load %arg3[%c0_12, %c0_13] : memref<1x64xf32, #tpu.memory_space<vmem>>, vector<1x64xf32>
    %9 = vector.broadcast %8 : vector<1x64xf32> to vector<176x64xf32>
    %10 = arith.mulf %7, %9 : vector<176x64xf32>
    %c0_14 = arith.constant 0 : index
    %c0_15 = arith.constant 0 : index
    %11 = vector.load %arg4[%c0_14, %c0_15] : memref<1x64xf32, #tpu.memory_space<vmem>>, vector<1x64xf32>
    %12 = vector.broadcast %11 : vector<1x64xf32> to vector<176x64xf32>
    %13 = arith.addf %10, %12 : vector<176x64xf32>
    %cst_16 = arith.constant 0.000000e+00 : f32
    %14 = vector.broadcast %cst_16 : f32 to vector<176x64xf32>
    %15 = arith.cmpf oge, %13, %14 : vector<176x64xf32>
    %cst_17 = arith.constant 0.00999999977 : f32
    %16 = vector.broadcast %cst_17 : f32 to vector<176x64xf32>
    %17 = arith.mulf %16, %13 : vector<176x64xf32>
    %18 = arith.select %15, %13, %17 : vector<176x64xi1>, vector<176x64xf32>
    %19 = vector.extract_strided_slice %18 {offsets = [0, 0], sizes = [16, 64], strides = [1, 1]} : vector<176x64xf32> to vector<16x64xf32>
    %20 = vector.extract_strided_slice %18 {offsets = [16, 0], sizes = [16, 64], strides = [1, 1]} : vector<176x64xf32> to vector<16x64xf32>
    %21 = arith.maximumf %19, %20 : vector<16x64xf32>
    %c12 = arith.constant 12 : index
    %c1 = arith.constant 1 : index
    %c0_18 = arith.constant 0 : index
    %22 = vector.load %arg14[%c12, %c1, %c0_18] : memref<29x18x64xf32, #tpu.memory_space<vmem>>, vector<1x16x64xf32>
    %23 = vector.shape_cast %22 : vector<1x16x64xf32> to vector<16x64xf32>
    %24 = vector.shape_cast %21 : vector<16x64xf32> to vector<1x16x64xf32>
    tpu.vector_store %arg14[%c12, %c1, %c0_18], %24 {strides = array<i32>} : memref<29x18x64xf32, #tpu.memory_space<vmem>>, vector<1x16x64xf32>,
    %25 = vector.extract_strided_slice %18 {offsets = [32, 0], sizes = [16, 64], strides = [1, 1]} : vector<176x64xf32> to vector<16x64xf32>
    %26 = vector.extract_strided_slice %18 {offsets = [48, 0], sizes = [16, 64], strides = [1, 1]} : vector<176x64xf32> to vector<16x64xf32>
    %27 = arith.maximumf %25, %26 : vector<16x64xf32>
    %c13 = arith.constant 13 : index
    %c1_19 = arith.constant 1 : index
    %c0_20 = arith.constant 0 : index
    %28 = vector.load %arg14[%c13, %c1_19, %c0_20] : memref<29x18x64xf32, #tpu.memory_space<vmem>>, vector<1x16x64xf32>
    %29 = vector.shape_cast %28 : vector<1x16x64xf32> to vector<16x64xf32>
    %30 = vector.shape_cast %27 : vector<16x64xf32> to vector<1x16x64xf32>
    tpu.vector_store %arg14[%c13, %c1_19, %c0_20], %30 {strides = array<i32>} : memref<29x18x64xf32, #tpu.memory_space<vmem>>, vector<1x16x64xf32>,
    %31 = vector.extract_strided_slice %18 {offsets = [64, 0], sizes = [16, 64], strides = [1, 1]} : vector<176x64xf32> to vector<16x64xf32>
    %32 = vector.extract_strided_slice %18 {offsets = [80, 0], sizes = [16, 64], strides = [1, 1]} : vector<176x64xf32> to vector<16x64xf32>
    %33 = arith.maximumf %31, %32 : vector<16x64xf32>
    %c14 = arith.constant 14 : index
    %c1_21 = arith.constant 1 : index
    %c0_22 = arith.constant 0 : index
    %34 = vector.load %arg14[%c14, %c1_21, %c0_22] : memref<29x18x64xf32, #tpu.memory_space<vmem>>, vector<1x16x64xf32>
    %35 = vector.shape_cast %34 : vector<1x16x64xf32> to vector<16x64xf32>
    %36 = vector.shape_cast %33 : vector<16x64xf32> to vector<1x16x64xf32>
    tpu.vector_store %arg14[%c14, %c1_21, %c0_22], %36 {strides = array<i32>} : memref<29x18x64xf32, #tpu.memory_space<vmem>>, vector<1x16x64xf32>,
    %37 = vector.extract_strided_slice %18 {offsets = [96, 0], sizes = [16, 64], strides = [1, 1]} : vector<176x64xf32> to vector<16x64xf32>
    %38 = vector.extract_strided_slice %18 {offsets = [112, 0], sizes = [16, 64], strides = [1, 1]} : vector<176x64xf32> to vector<16x64xf32>
    %39 = arith.maximumf %37, %38 : vector<16x64xf32>
    %c15 = arith.constant 15 : index
    %c1_23 = arith.constant 1 : index
    %c0_24 = arith.constant 0 : index
    %40 = vector.load %arg14[%c15, %c1_23, %c0_24] : memref<29x18x64xf32, #tpu.memory_space<vmem>>, vector<1x16x64xf32>
    %41 = vector.shape_cast %40 : vector<1x16x64xf32> to vector<16x64xf32>
    %42 = vector.shape_cast %39 : vector<16x64xf32> to vector<1x16x64xf32>
    tpu.vector_store %arg14[%c15, %c1_23, %c0_24], %42 {strides = array<i32>} : memref<29x18x64xf32, #tpu.memory_space<vmem>>, vector<1x16x64xf32>,
    %43 = vector.extract_strided_slice %18 {offsets = [128, 0], sizes = [16, 64], strides = [1, 1]} : vector<176x64xf32> to vector<16x64xf32>
    %44 = vector.extract_strided_slice %18 {offsets = [144, 0], sizes = [16, 64], strides = [1, 1]} : vector<176x64xf32> to vector<16x64xf32>
    %45 = arith.maximumf %43, %44 : vector<16x64xf32>
    %c16 = arith.constant 16 : index
    %c1_25 = arith.constant 1 : index
    %c0_26 = arith.constant 0 : index
    %46 = vector.load %arg14[%c16, %c1_25, %c0_26] : memref<29x18x64xf32, #tpu.memory_space<vmem>>, vector<1x16x64xf32>
    %47 = vector.shape_cast %46 : vector<1x16x64xf32> to vector<16x64xf32>
    %48 = vector.shape_cast %45 : vector<16x64xf32> to vector<1x16x64xf32>
    tpu.vector_store %arg14[%c16, %c1_25, %c0_26], %48 {strides = array<i32>} : memref<29x18x64xf32, #tpu.memory_space<vmem>>, vector<1x16x64xf32>,
    %cst_27 = arith.constant 0.000000e+00 : f32
    %49 = vector.broadcast %cst_27 : f32 to vector<112x128xf32>
    %c0_28 = arith.constant 0 : index
    %c0_29 = arith.constant 0 : index
    %50 = vector.load %arg16[%c0_28, %c0_29] : memref<112x128xf32, #tpu.memory_space<vmem>>, vector<112x128xf32>
    tpu.vector_store %arg16[%c0_28, %c0_29], %49 {strides = array<i32>} : memref<112x128xf32, #tpu.memory_space<vmem>>, vector<112x128xf32>,
    %c0_30 = arith.constant 0 : index
    %c0_31 = arith.constant 0 : index
    %51 = vector.load %arg16[%c0_30, %c0_31] : memref<112x128xf32, #tpu.memory_space<vmem>>, vector<112x128xf32>
    %c0_32 = arith.constant 0 : index
    %c0_33 = arith.constant 0 : index
    %c0_34 = arith.constant 0 : index
    %52 = vector.load %arg14[%c0_32, %c0_33, %c0_34] : memref<29x18x64xf32, #tpu.memory_space<vmem>>, vector<1x18x64xf32>
    %53 = vector.shape_cast %52 : vector<1x18x64xf32> to vector<18x64xf32>
    %54 = vector.extract_strided_slice %53 {offsets = [0, 0], sizes = [16, 64], strides = [1, 1]} : vector<18x64xf32> to vector<16x64xf32>
    %55 = vector.extract_strided_slice %53 {offsets = [1, 0], sizes = [16, 64], strides = [1, 1]} : vector<18x64xf32> to vector<16x64xf32>
    %56 = vector.extract_strided_slice %53 {offsets = [2, 0], sizes = [16, 64], strides = [1, 1]} : vector<18x64xf32> to vector<16x64xf32>
    %57 = tpu.concatenate %54, %55, %56 in 1 : vector<16x64xf32>, vector<16x64xf32>, vector<16x64xf32> -> vector<16x192xf32>
    %58 = arith.truncf %57 : vector<16x192xf32> to vector<16x192xbf16>
    %c3 = arith.constant 3 : index
    %c0_35 = arith.constant 0 : index
    %c0_36 = arith.constant 0 : index
    %59 = vector.load %arg14[%c3, %c0_35, %c0_36] : memref<29x18x64xf32, #tpu.memory_space<vmem>>, vector<1x18x64xf32>
    %60 = vector.shape_cast %59 : vector<1x18x64xf32> to vector<18x64xf32>
    %61 = vector.extract_strided_slice %60 {offsets = [0, 0], sizes = [16, 64], strides = [1, 1]} : vector<18x64xf32> to vector<16x64xf32>
    %62 = vector.extract_strided_slice %60 {offsets = [1, 0], sizes = [16, 64], strides = [1, 1]} : vector<18x64xf32> to vector<16x64xf32>
    %63 = vector.extract_strided_slice %60 {offsets = [2, 0], sizes = [16, 64], strides = [1, 1]} : vector<18x64xf32> to vector<16x64xf32>
    %64 = tpu.concatenate %61, %62, %63 in 1 : vector<16x64xf32>, vector<16x64xf32>, vector<16x64xf32> -> vector<16x192xf32>
    %65 = arith.truncf %64 : vector<16x192xf32> to vector<16x192xbf16>
    %c6 = arith.constant 6 : index
    %c0_37 = arith.constant 0 : index
    %c0_38 = arith.constant 0 : index
    %66 = vector.load %arg14[%c6, %c0_37, %c0_38] : memref<29x18x64xf32, #tpu.memory_space<vmem>>, vector<1x18x64xf32>
    %67 = vector.shape_cast %66 : vector<1x18x64xf32> to vector<18x64xf32>
    %68 = vector.extract_strided_slice %67 {offsets = [0, 0], sizes = [16, 64], strides = [1, 1]} : vector<18x64xf32> to vector<16x64xf32>
    %69 = vector.extract_strided_slice %67 {offsets = [1, 0], sizes = [16, 64], strides = [1, 1]} : vector<18x64xf32> to vector<16x64xf32>
    %70 = vector.extract_strided_slice %67 {offsets = [2, 0], sizes = [16, 64], strides = [1, 1]} : vector<18x64xf32> to vector<16x64xf32>
    %71 = tpu.concatenate %68, %69, %70 in 1 : vector<16x64xf32>, vector<16x64xf32>, vector<16x64xf32> -> vector<16x192xf32>
    %72 = arith.truncf %71 : vector<16x192xf32> to vector<16x192xbf16>
    %c9 = arith.constant 9 : index
    %c0_39 = arith.constant 0 : index
    %c0_40 = arith.constant 0 : index
    %73 = vector.load %arg14[%c9, %c0_39, %c0_40] : memref<29x18x64xf32, #tpu.memory_space<vmem>>, vector<1x18x64xf32>
    %74 = vector.shape_cast %73 : vector<1x18x64xf32> to vector<18x64xf32>
    %75 = vector.extract_strided_slice %74 {offsets = [0, 0], sizes = [16, 64], strides = [1, 1]} : vector<18x64xf32> to vector<16x64xf32>
    %76 = vector.extract_strided_slice %74 {offsets = [1, 0], sizes = [16, 64], strides = [1, 1]} : vector<18x64xf32> to vector<16x64xf32>
    %77 = vector.extract_strided_slice %74 {offsets = [2, 0], sizes = [16, 64], strides = [1, 1]} : vector<18x64xf32> to vector<16x64xf32>
    %78 = tpu.concatenate %75, %76, %77 in 1 : vector<16x64xf32>, vector<16x64xf32>, vector<16x64xf32> -> vector<16x192xf32>
    %79 = arith.truncf %78 : vector<16x192xf32> to vector<16x192xbf16>
    %c12_41 = arith.constant 12 : index
    %c0_42 = arith.constant 0 : index
    %c0_43 = arith.constant 0 : index
    %80 = vector.load %arg14[%c12_41, %c0_42, %c0_43] : memref<29x18x64xf32, #tpu.memory_space<vmem>>, vector<1x18x64xf32>
    %81 = vector.shape_cast %80 : vector<1x18x64xf32> to vector<18x64xf32>
    %82 = vector.extract_strided_slice %81 {offsets = [0, 0], sizes = [16, 64], strides = [1, 1]} : vector<18x64xf32> to vector<16x64xf32>
    %83 = vector.extract_strided_slice %81 {offsets = [1, 0], sizes = [16, 64], strides = [1, 1]} : vector<18x64xf32> to vector<16x64xf32>
    %84 = vector.extract_strided_slice %81 {offsets = [2, 0], sizes = [16, 64], strides = [1, 1]} : vector<18x64xf32> to vector<16x64xf32>
    %85 = tpu.concatenate %82, %83, %84 in 1 : vector<16x64xf32>, vector<16x64xf32>, vector<16x64xf32> -> vector<16x192xf32>
    %86 = arith.truncf %85 : vector<16x192xf32> to vector<16x192xbf16>
    %c15_44 = arith.constant 15 : index
    %c0_45 = arith.constant 0 : index
    %c0_46 = arith.constant 0 : index
    %87 = vector.load %arg14[%c15_44, %c0_45, %c0_46] : memref<29x18x64xf32, #tpu.memory_space<vmem>>, vector<1x18x64xf32>
    %88 = vector.shape_cast %87 : vector<1x18x64xf32> to vector<18x64xf32>
    %89 = vector.extract_strided_slice %88 {offsets = [0, 0], sizes = [16, 64], strides = [1, 1]} : vector<18x64xf32> to vector<16x64xf32>
    %90 = vector.extract_strided_slice %88 {offsets = [1, 0], sizes = [16, 64], strides = [1, 1]} : vector<18x64xf32> to vector<16x64xf32>
    %91 = vector.extract_strided_slice %88 {offsets = [2, 0], sizes = [16, 64], strides = [1, 1]} : vector<18x64xf32> to vector<16x64xf32>
    %92 = tpu.concatenate %89, %90, %91 in 1 : vector<16x64xf32>, vector<16x64xf32>, vector<16x64xf32> -> vector<16x192xf32>
    %93 = arith.truncf %92 : vector<16x192xf32> to vector<16x192xbf16>
    %c18 = arith.constant 18 : index
    %c0_47 = arith.constant 0 : index
    %c0_48 = arith.constant 0 : index
    %94 = vector.load %arg14[%c18, %c0_47, %c0_48] : memref<29x18x64xf32, #tpu.memory_space<vmem>>, vector<1x18x64xf32>
    %95 = vector.shape_cast %94 : vector<1x18x64xf32> to vector<18x64xf32>
    %96 = vector.extract_strided_slice %95 {offsets = [0, 0], sizes = [16, 64], strides = [1, 1]} : vector<18x64xf32> to vector<16x64xf32>
    %97 = vector.extract_strided_slice %95 {offsets = [1, 0], sizes = [16, 64], strides = [1, 1]} : vector<18x64xf32> to vector<16x64xf32>
    %98 = vector.extract_strided_slice %95 {offsets = [2, 0], sizes = [16, 64], strides = [1, 1]} : vector<18x64xf32> to vector<16x64xf32>
    %99 = tpu.concatenate %96, %97, %98 in 1 : vector<16x64xf32>, vector<16x64xf32>, vector<16x64xf32> -> vector<16x192xf32>
    %100 = arith.truncf %99 : vector<16x192xf32> to vector<16x192xbf16>
    %101 = tpu.concatenate %58, %65, %72, %79, %86, %93, %100 in 0 : vector<16x192xbf16>, vector<16x192xbf16>, vector<16x192xbf16>, vector<16x192xbf16>, vector<16x192xbf16>, vector<16x192xbf16>, vector<16x192xbf16> -> vector<112x192xbf16>
    %c0_49 = arith.constant 0 : index
    %c0_50 = arith.constant 0 : index
    %c0_51 = arith.constant 0 : index
    %102 = vector.load %arg5[%c0_49, %c0_50, %c0_51] : memref<5x192x128xbf16, #tpu.memory_space<vmem>>, vector<1x192x128xbf16>
    %103 = vector.shape_cast %102 : vector<1x192x128xbf16> to vector<192x128xbf16>
    %cst_52 = arith.constant dense<0.000000e+00> : vector<112x128xf32>
    %104 = tpu.matmul %101, %103, %cst_52 {dimension_numbers = #tpu.dot_dimension_numbers<[1], [0], [0], [1], [0, 0, 1, 1], [], []>} : vector<112x192xbf16>, vector<192x128xbf16>, vector<112x128xf32> -> vector<112x128xf32>
    %105 = arith.addf %51, %104 : vector<112x128xf32>
    %c0_53 = arith.constant 0 : index
    %c0_54 = arith.constant 0 : index
    %106 = vector.load %arg16[%c0_53, %c0_54] : memref<112x128xf32, #tpu.memory_space<vmem>>, vector<112x128xf32>
    tpu.vector_store %arg16[%c0_53, %c0_54], %105 {strides = array<i32>} : memref<112x128xf32, #tpu.memory_space<vmem>>, vector<112x128xf32>,
    %c0_55 = arith.constant 0 : index
    %c0_56 = arith.constant 0 : index
    %107 = vector.load %arg16[%c0_55, %c0_56] : memref<112x128xf32, #tpu.memory_space<vmem>>, vector<112x128xf32>
    %c2 = arith.constant 2 : index
    %c0_57 = arith.constant 0 : index
    %c0_58 = arith.constant 0 : index
    %108 = vector.load %arg14[%c2, %c0_57, %c0_58] : memref<29x18x64xf32, #tpu.memory_space<vmem>>, vector<1x18x64xf32>
    %109 = vector.shape_cast %108 : vector<1x18x64xf32> to vector<18x64xf32>
    %110 = vector.extract_strided_slice %109 {offsets = [0, 0], sizes = [16, 64], strides = [1, 1]} : vector<18x64xf32> to vector<16x64xf32>
    %111 = vector.extract_strided_slice %109 {offsets = [1, 0], sizes = [16, 64], strides = [1, 1]} : vector<18x64xf32> to vector<16x64xf32>
    %112 = vector.extract_strided_slice %109 {offsets = [2, 0], sizes = [16, 64], strides = [1, 1]} : vector<18x64xf32> to vector<16x64xf32>
    %113 = tpu.concatenate %110, %111, %112 in 1 : vector<16x64xf32>, vector<16x64xf32>, vector<16x64xf32> -> vector<16x192xf32>
    %114 = arith.truncf %113 : vector<16x192xf32> to vector<16x192xbf16>
    %c5 = arith.constant 5 : index
    %c0_59 = arith.constant 0 : index
    %c0_60 = arith.constant 0 : index
    %115 = vector.load %arg14[%c5, %c0_59, %c0_60] : memref<29x18x64xf32, #tpu.memory_space<vmem>>, vector<1x18x64xf32>
    %116 = vector.shape_cast %115 : vector<1x18x64xf32> to vector<18x64xf32>
    %117 = vector.extract_strided_slice %116 {offsets = [0, 0], sizes = [16, 64], strides = [1, 1]} : vector<18x64xf32> to vector<16x64xf32>
    %118 = vector.extract_strided_slice %116 {offsets = [1, 0], sizes = [16, 64], strides = [1, 1]} : vector<18x64xf32> to vector<16x64xf32>
    %119 = vector.extract_strided_slice %116 {offsets = [2, 0], sizes = [16, 64], strides = [1, 1]} : vector<18x64xf32> to vector<16x64xf32>
    %120 = tpu.concatenate %117, %118, %119 in 1 : vector<16x64xf32>, vector<16x64xf32>, vector<16x64xf32> -> vector<16x192xf32>
    %121 = arith.truncf %120 : vector<16x192xf32> to vector<16x192xbf16>
    %c8 = arith.constant 8 : index
    %c0_61 = arith.constant 0 : index
    %c0_62 = arith.constant 0 : index
    %122 = vector.load %arg14[%c8, %c0_61, %c0_62] : memref<29x18x64xf32, #tpu.memory_space<vmem>>, vector<1x18x64xf32>
    %123 = vector.shape_cast %122 : vector<1x18x64xf32> to vector<18x64xf32>
    %124 = vector.extract_strided_slice %123 {offsets = [0, 0], sizes = [16, 64], strides = [1, 1]} : vector<18x64xf32> to vector<16x64xf32>
    %125 = vector.extract_strided_slice %123 {offsets = [1, 0], sizes = [16, 64], strides = [1, 1]} : vector<18x64xf32> to vector<16x64xf32>
    %126 = vector.extract_strided_slice %123 {offsets = [2, 0], sizes = [16, 64], strides = [1, 1]} : vector<18x64xf32> to vector<16x64xf32>
    %127 = tpu.concatenate %124, %125, %126 in 1 : vector<16x64xf32>, vector<16x64xf32>, vector<16x64xf32> -> vector<16x192xf32>
    %128 = arith.truncf %127 : vector<16x192xf32> to vector<16x192xbf16>
    %c11 = arith.constant 11 : index
    %c0_63 = arith.constant 0 : index
    %c0_64 = arith.constant 0 : index
    %129 = vector.load %arg14[%c11, %c0_63, %c0_64] : memref<29x18x64xf32, #tpu.memory_space<vmem>>, vector<1x18x64xf32>
    %130 = vector.shape_cast %129 : vector<1x18x64xf32> to vector<18x64xf32>
    %131 = vector.extract_strided_slice %130 {offsets = [0, 0], sizes = [16, 64], strides = [1, 1]} : vector<18x64xf32> to vector<16x64xf32>
    %132 = vector.extract_strided_slice %130 {offsets = [1, 0], sizes = [16, 64], strides = [1, 1]} : vector<18x64xf32> to vector<16x64xf32>
    %133 = vector.extract_strided_slice %130 {offsets = [2, 0], sizes = [16, 64], strides = [1, 1]} : vector<18x64xf32> to vector<16x64xf32>
    %134 = tpu.concatenate %131, %132, %133 in 1 : vector<16x64xf32>, vector<16x64xf32>, vector<16x64xf32> -> vector<16x192xf32>
    %135 = arith.truncf %134 : vector<16x192xf32> to vector<16x192xbf16>
    %c14_65 = arith.constant 14 : index
    %c0_66 = arith.constant 0 : index
    %c0_67 = arith.constant 0 : index
    %136 = vector.load %arg14[%c14_65, %c0_66, %c0_67] : memref<29x18x64xf32, #tpu.memory_space<vmem>>, vector<1x18x64xf32>
    %137 = vector.shape_cast %136 : vector<1x18x64xf32> to vector<18x64xf32>
    %138 = vector.extract_strided_slice %137 {offsets = [0, 0], sizes = [16, 64], strides = [1, 1]} : vector<18x64xf32> to vector<16x64xf32>
    %139 = vector.extract_strided_slice %137 {offsets = [1, 0], sizes = [16, 64], strides = [1, 1]} : vector<18x64xf32> to vector<16x64xf32>
    %140 = vector.extract_strided_slice %137 {offsets = [2, 0], sizes = [16, 64], strides = [1, 1]} : vector<18x64xf32> to vector<16x64xf32>
    %141 = tpu.concatenate %138, %139, %140 in 1 : vector<16x64xf32>, vector<16x64xf32>, vector<16x64xf32> -> vector<16x192xf32>
    %142 = arith.truncf %141 : vector<16x192xf32> to vector<16x192xbf16>
    %c17 = arith.constant 17 : index
    %c0_68 = arith.constant 0 : index
    %c0_69 = arith.constant 0 : index
    %143 = vector.load %arg14[%c17, %c0_68, %c0_69] : memref<29x18x64xf32, #tpu.memory_space<vmem>>, vector<1x18x64xf32>
    %144 = vector.shape_cast %143 : vector<1x18x64xf32> to vector<18x64xf32>
    %145 = vector.extract_strided_slice %144 {offsets = [0, 0], sizes = [16, 64], strides = [1, 1]} : vector<18x64xf32> to vector<16x64xf32>
    %146 = vector.extract_strided_slice %144 {offsets = [1, 0], sizes = [16, 64], strides = [1, 1]} : vector<18x64xf32> to vector<16x64xf32>
    %147 = vector.extract_strided_slice %144 {offsets = [2, 0], sizes = [16, 64], strides = [1, 1]} : vector<18x64xf32> to vector<16x64xf32>
    %148 = tpu.concatenate %145, %146, %147 in 1 : vector<16x64xf32>, vector<16x64xf32>, vector<16x64xf32> -> vector<16x192xf32>
    %149 = arith.truncf %148 : vector<16x192xf32> to vector<16x192xbf16>
    %c20 = arith.constant 20 : index
    %c0_70 = arith.constant 0 : index
    %c0_71 = arith.constant 0 : index
    %150 = vector.load %arg14[%c20, %c0_70, %c0_71] : memref<29x18x64xf32, #tpu.memory_space<vmem>>, vector<1x18x64xf32>
    %151 = vector.shape_cast %150 : vector<1x18x64xf32> to vector<18x64xf32>
    %152 = vector.extract_strided_slice %151 {offsets = [0, 0], sizes = [16, 64], strides = [1, 1]} : vector<18x64xf32> to vector<16x64xf32>
    %153 = vector.extract_strided_slice %151 {offsets = [1, 0], sizes = [16, 64], strides = [1, 1]} : vector<18x64xf32> to vector<16x64xf32>
    %154 = vector.extract_strided_slice %151 {offsets = [2, 0], sizes = [16, 64], strides = [1, 1]} : vector<18x64xf32> to vector<16x64xf32>
    %155 = tpu.concatenate %152, %153, %154 in 1 : vector<16x64xf32>, vector<16x64xf32>, vector<16x64xf32> -> vector<16x192xf32>
    %156 = arith.truncf %155 : vector<16x192xf32> to vector<16x192xbf16>
    %157 = tpu.concatenate %114, %121, %128, %135, %142, %149, %156 in 0 : vector<16x192xbf16>, vector<16x192xbf16>, vector<16x192xbf16>, vector<16x192xbf16>, vector<16x192xbf16>, vector<16x192xbf16>, vector<16x192xbf16> -> vector<112x192xbf16>
    %c1_72 = arith.constant 1 : index
    %c0_73 = arith.constant 0 : index
    %c0_74 = arith.constant 0 : index
    %158 = vector.load %arg5[%c1_72, %c0_73, %c0_74] : memref<5x192x128xbf16, #tpu.memory_space<vmem>>, vector<1x192x128xbf16>
    %159 = vector.shape_cast %158 : vector<1x192x128xbf16> to vector<192x128xbf16>
    %cst_75 = arith.constant dense<0.000000e+00> : vector<112x128xf32>
    %160 = tpu.matmul %157, %159, %cst_75 {dimension_numbers = #tpu.dot_dimension_numbers<[1], [0], [0], [1], [0, 0, 1, 1], [], []>} : vector<112x192xbf16>, vector<192x128xbf16>, vector<112x128xf32> -> vector<112x128xf32>
    %161 = arith.addf %107, %160 : vector<112x128xf32>
    %c0_76 = arith.constant 0 : index
    %c0_77 = arith.constant 0 : index
    %162 = vector.load %arg16[%c0_76, %c0_77] : memref<112x128xf32, #tpu.memory_space<vmem>>, vector<112x128xf32>
    tpu.vector_store %arg16[%c0_76, %c0_77], %161 {strides = array<i32>} : memref<112x128xf32, #tpu.memory_space<vmem>>, vector<112x128xf32>,
    %c0_78 = arith.constant 0 : index
    %c0_79 = arith.constant 0 : index
    %163 = vector.load %arg16[%c0_78, %c0_79] : memref<112x128xf32, #tpu.memory_space<vmem>>, vector<112x128xf32>
    %c4 = arith.constant 4 : index
    %c0_80 = arith.constant 0 : index
    %c0_81 = arith.constant 0 : index
    %164 = vector.load %arg14[%c4, %c0_80, %c0_81] : memref<29x18x64xf32, #tpu.memory_space<vmem>>, vector<1x18x64xf32>
    %165 = vector.shape_cast %164 : vector<1x18x64xf32> to vector<18x64xf32>
    %166 = vector.extract_strided_slice %165 {offsets = [0, 0], sizes = [16, 64], strides = [1, 1]} : vector<18x64xf32> to vector<16x64xf32>
    %167 = vector.extract_strided_slice %165 {offsets = [1, 0], sizes = [16, 64], strides = [1, 1]} : vector<18x64xf32> to vector<16x64xf32>
    %168 = vector.extract_strided_slice %165 {offsets = [2, 0], sizes = [16, 64], strides = [1, 1]} : vector<18x64xf32> to vector<16x64xf32>
    %169 = tpu.concatenate %166, %167, %168 in 1 : vector<16x64xf32>, vector<16x64xf32>, vector<16x64xf32> -> vector<16x192xf32>
    %170 = arith.truncf %169 : vector<16x192xf32> to vector<16x192xbf16>
    %c7 = arith.constant 7 : index
    %c0_82 = arith.constant 0 : index
    %c0_83 = arith.constant 0 : index
    %171 = vector.load %arg14[%c7, %c0_82, %c0_83] : memref<29x18x64xf32, #tpu.memory_space<vmem>>, vector<1x18x64xf32>
    %172 = vector.shape_cast %171 : vector<1x18x64xf32> to vector<18x64xf32>
    %173 = vector.extract_strided_slice %172 {offsets = [0, 0], sizes = [16, 64], strides = [1, 1]} : vector<18x64xf32> to vector<16x64xf32>
    %174 = vector.extract_strided_slice %172 {offsets = [1, 0], sizes = [16, 64], strides = [1, 1]} : vector<18x64xf32> to vector<16x64xf32>
    %175 = vector.extract_strided_slice %172 {offsets = [2, 0], sizes = [16, 64], strides = [1, 1]} : vector<18x64xf32> to vector<16x64xf32>
    %176 = tpu.concatenate %173, %174, %175 in 1 : vector<16x64xf32>, vector<16x64xf32>, vector<16x64xf32> -> vector<16x192xf32>
    %177 = arith.truncf %176 : vector<16x192xf32> to vector<16x192xbf16>
    %c10 = arith.constant 10 : index
    %c0_84 = arith.constant 0 : index
    %c0_85 = arith.constant 0 : index
    %178 = vector.load %arg14[%c10, %c0_84, %c0_85] : memref<29x18x64xf32, #tpu.memory_space<vmem>>, vector<1x18x64xf32>
    %179 = vector.shape_cast %178 : vector<1x18x64xf32> to vector<18x64xf32>
    %180 = vector.extract_strided_slice %179 {offsets = [0, 0], sizes = [16, 64], strides = [1, 1]} : vector<18x64xf32> to vector<16x64xf32>
    %181 = vector.extract_strided_slice %179 {offsets = [1, 0], sizes = [16, 64], strides = [1, 1]} : vector<18x64xf32> to vector<16x64xf32>
    %182 = vector.extract_strided_slice %179 {offsets = [2, 0], sizes = [16, 64], strides = [1, 1]} : vector<18x64xf32> to vector<16x64xf32>
    %183 = tpu.concatenate %180, %181, %182 in 1 : vector<16x64xf32>, vector<16x64xf32>, vector<16x64xf32> -> vector<16x192xf32>
    %184 = arith.truncf %183 : vector<16x192xf32> to vector<16x192xbf16>
    %c13_86 = arith.constant 13 : index
    %c0_87 = arith.constant 0 : index
    %c0_88 = arith.constant 0 : index
    %185 = vector.load %arg14[%c13_86, %c0_87, %c0_88] : memref<29x18x64xf32, #tpu.memory_space<vmem>>, vector<1x18x64xf32>
    %186 = vector.shape_cast %185 : vector<1x18x64xf32> to vector<18x64xf32>
    %187 = vector.extract_strided_slice %186 {offsets = [0, 0], sizes = [16, 64], strides = [1, 1]} : vector<18x64xf32> to vector<16x64xf32>
    %188 = vector.extract_strided_slice %186 {offsets = [1, 0], sizes = [16, 64], strides = [1, 1]} : vector<18x64xf32> to vector<16x64xf32>
    %189 = vector.extract_strided_slice %186 {offsets = [2, 0], sizes = [16, 64], strides = [1, 1]} : vector<18x64xf32> to vector<16x64xf32>
    %190 = tpu.concatenate %187, %188, %189 in 1 : vector<16x64xf32>, vector<16x64xf32>, vector<16x64xf32> -> vector<16x192xf32>
    %191 = arith.truncf %190 : vector<16x192xf32> to vector<16x192xbf16>
    %c16_89 = arith.constant 16 : index
    %c0_90 = arith.constant 0 : index
    %c0_91 = arith.constant 0 : index
    %192 = vector.load %arg14[%c16_89, %c0_90, %c0_91] : memref<29x18x64xf32, #tpu.memory_space<vmem>>, vector<1x18x64xf32>
    %193 = vector.shape_cast %192 : vector<1x18x64xf32> to vector<18x64xf32>
    %194 = vector.extract_strided_slice %193 {offsets = [0, 0], sizes = [16, 64], strides = [1, 1]} : vector<18x64xf32> to vector<16x64xf32>
    %195 = vector.extract_strided_slice %193 {offsets = [1, 0], sizes = [16, 64], strides = [1, 1]} : vector<18x64xf32> to vector<16x64xf32>
    %196 = vector.extract_strided_slice %193 {offsets = [2, 0], sizes = [16, 64], strides = [1, 1]} : vector<18x64xf32> to vector<16x64xf32>
    %197 = tpu.concatenate %194, %195, %196 in 1 : vector<16x64xf32>, vector<16x64xf32>, vector<16x64xf32> -> vector<16x192xf32>
    %198 = arith.truncf %197 : vector<16x192xf32> to vector<16x192xbf16>
    %c19 = arith.constant 19 : index
    %c0_92 = arith.constant 0 : index
    %c0_93 = arith.constant 0 : index
    %199 = vector.load %arg14[%c19, %c0_92, %c0_93] : memref<29x18x64xf32, #tpu.memory_space<vmem>>, vector<1x18x64xf32>
    %200 = vector.shape_cast %199 : vector<1x18x64xf32> to vector<18x64xf32>
    %201 = vector.extract_strided_slice %200 {offsets = [0, 0], sizes = [16, 64], strides = [1, 1]} : vector<18x64xf32> to vector<16x64xf32>
    %202 = vector.extract_strided_slice %200 {offsets = [1, 0], sizes = [16, 64], strides = [1, 1]} : vector<18x64xf32> to vector<16x64xf32>
    %203 = vector.extract_strided_slice %200 {offsets = [2, 0], sizes = [16, 64], strides = [1, 1]} : vector<18x64xf32> to vector<16x64xf32>
    %204 = tpu.concatenate %201, %202, %203 in 1 : vector<16x64xf32>, vector<16x64xf32>, vector<16x64xf32> -> vector<16x192xf32>
    %205 = arith.truncf %204 : vector<16x192xf32> to vector<16x192xbf16>
    %c22 = arith.constant 22 : index
    %c0_94 = arith.constant 0 : index
    %c0_95 = arith.constant 0 : index
    %206 = vector.load %arg14[%c22, %c0_94, %c0_95] : memref<29x18x64xf32, #tpu.memory_space<vmem>>, vector<1x18x64xf32>
    %207 = vector.shape_cast %206 : vector<1x18x64xf32> to vector<18x64xf32>
    %208 = vector.extract_strided_slice %207 {offsets = [0, 0], sizes = [16, 64], strides = [1, 1]} : vector<18x64xf32> to vector<16x64xf32>
    %209 = vector.extract_strided_slice %207 {offsets = [1, 0], sizes = [16, 64], strides = [1, 1]} : vector<18x64xf32> to vector<16x64xf32>
    %210 = vector.extract_strided_slice %207 {offsets = [2, 0], sizes = [16, 64], strides = [1, 1]} : vector<18x64xf32> to vector<16x64xf32>
    %211 = tpu.concatenate %208, %209, %210 in 1 : vector<16x64xf32>, vector<16x64xf32>, vector<16x64xf32> -> vector<16x192xf32>
    %212 = arith.truncf %211 : vector<16x192xf32> to vector<16x192xbf16>
    %213 = tpu.concatenate %170, %177, %184, %191, %198, %205, %212 in 0 : vector<16x192xbf16>, vector<16x192xbf16>, vector<16x192xbf16>, vector<16x192xbf16>, vector<16x192xbf16>, vector<16x192xbf16>, vector<16x192xbf16> -> vector<112x192xbf16>
    %c2_96 = arith.constant 2 : index
    %c0_97 = arith.constant 0 : index
    %c0_98 = arith.constant 0 : index
    %214 = vector.load %arg5[%c2_96, %c0_97, %c0_98] : memref<5x192x128xbf16, #tpu.memory_space<vmem>>, vector<1x192x128xbf16>
    %215 = vector.shape_cast %214 : vector<1x192x128xbf16> to vector<192x128xbf16>
    %cst_99 = arith.constant dense<0.000000e+00> : vector<112x128xf32>
    %216 = tpu.matmul %213, %215, %cst_99 {dimension_numbers = #tpu.dot_dimension_numbers<[1], [0], [0], [1], [0, 0, 1, 1], [], []>} : vector<112x192xbf16>, vector<192x128xbf16>, vector<112x128xf32> -> vector<112x128xf32>
    %217 = arith.addf %163, %216 : vector<112x128xf32>
    %c0_100 = arith.constant 0 : index
    %c0_101 = arith.constant 0 : index
    %218 = vector.load %arg16[%c0_100, %c0_101] : memref<112x128xf32, #tpu.memory_space<vmem>>, vector<112x128xf32>
    tpu.vector_store %arg16[%c0_100, %c0_101], %217 {strides = array<i32>} : memref<112x128xf32, #tpu.memory_space<vmem>>, vector<112x128xf32>,
    %c0_102 = arith.constant 0 : index
    %c0_103 = arith.constant 0 : index
    %219 = vector.load %arg16[%c0_102, %c0_103] : memref<112x128xf32, #tpu.memory_space<vmem>>, vector<112x128xf32>
    %c6_104 = arith.constant 6 : index
    %c0_105 = arith.constant 0 : index
    %c0_106 = arith.constant 0 : index
    %220 = vector.load %arg14[%c6_104, %c0_105, %c0_106] : memref<29x18x64xf32, #tpu.memory_space<vmem>>, vector<1x18x64xf32>
    %221 = vector.shape_cast %220 : vector<1x18x64xf32> to vector<18x64xf32>
    %222 = vector.extract_strided_slice %221 {offsets = [0, 0], sizes = [16, 64], strides = [1, 1]} : vector<18x64xf32> to vector<16x64xf32>
    %223 = vector.extract_strided_slice %221 {offsets = [1, 0], sizes = [16, 64], strides = [1, 1]} : vector<18x64xf32> to vector<16x64xf32>
    %224 = vector.extract_strided_slice %221 {offsets = [2, 0], sizes = [16, 64], strides = [1, 1]} : vector<18x64xf32> to vector<16x64xf32>
    %225 = tpu.concatenate %222, %223, %224 in 1 : vector<16x64xf32>, vector<16x64xf32>, vector<16x64xf32> -> vector<16x192xf32>
    %226 = arith.truncf %225 : vector<16x192xf32> to vector<16x192xbf16>
    %c9_107 = arith.constant 9 : index
    %c0_108 = arith.constant 0 : index
    %c0_109 = arith.constant 0 : index
    %227 = vector.load %arg14[%c9_107, %c0_108, %c0_109] : memref<29x18x64xf32, #tpu.memory_space<vmem>>, vector<1x18x64xf32>
    %228 = vector.shape_cast %227 : vector<1x18x64xf32> to vector<18x64xf32>
    %229 = vector.extract_strided_slice %228 {offsets = [0, 0], sizes = [16, 64], strides = [1, 1]} : vector<18x64xf32> to vector<16x64xf32>
    %230 = vector.extract_strided_slice %228 {offsets = [1, 0], sizes = [16, 64], strides = [1, 1]} : vector<18x64xf32> to vector<16x64xf32>
    %231 = vector.extract_strided_slice %228 {offsets = [2, 0], sizes = [16, 64], strides = [1, 1]} : vector<18x64xf32> to vector<16x64xf32>
    %232 = tpu.concatenate %229, %230, %231 in 1 : vector<16x64xf32>, vector<16x64xf32>, vector<16x64xf32> -> vector<16x192xf32>
    %233 = arith.truncf %232 : vector<16x192xf32> to vector<16x192xbf16>
    %c12_110 = arith.constant 12 : index
    %c0_111 = arith.constant 0 : index
    %c0_112 = arith.constant 0 : index
    %234 = vector.load %arg14[%c12_110, %c0_111, %c0_112] : memref<29x18x64xf32, #tpu.memory_space<vmem>>, vector<1x18x64xf32>
    %235 = vector.shape_cast %234 : vector<1x18x64xf32> to vector<18x64xf32>
    %236 = vector.extract_strided_slice %235 {offsets = [0, 0], sizes = [16, 64], strides = [1, 1]} : vector<18x64xf32> to vector<16x64xf32>
    %237 = vector.extract_strided_slice %235 {offsets = [1, 0], sizes = [16, 64], strides = [1, 1]} : vector<18x64xf32> to vector<16x64xf32>
    %238 = vector.extract_strided_slice %235 {offsets = [2, 0], sizes = [16, 64], strides = [1, 1]} : vector<18x64xf32> to vector<16x64xf32>
    %239 = tpu.concatenate %236, %237, %238 in 1 : vector<16x64xf32>, vector<16x64xf32>, vector<16x64xf32> -> vector<16x192xf32>
    %240 = arith.truncf %239 : vector<16x192xf32> to vector<16x192xbf16>
    %c15_113 = arith.constant 15 : index
    %c0_114 = arith.constant 0 : index
    %c0_115 = arith.constant 0 : index
    %241 = vector.load %arg14[%c15_113, %c0_114, %c0_115] : memref<29x18x64xf32, #tpu.memory_space<vmem>>, vector<1x18x64xf32>
    %242 = vector.shape_cast %241 : vector<1x18x64xf32> to vector<18x64xf32>
    %243 = vector.extract_strided_slice %242 {offsets = [0, 0], sizes = [16, 64], strides = [1, 1]} : vector<18x64xf32> to vector<16x64xf32>
    %244 = vector.extract_strided_slice %242 {offsets = [1, 0], sizes = [16, 64], strides = [1, 1]} : vector<18x64xf32> to vector<16x64xf32>
    %245 = vector.extract_strided_slice %242 {offsets = [2, 0], sizes = [16, 64], strides = [1, 1]} : vector<18x64xf32> to vector<16x64xf32>
    %246 = tpu.concatenate %243, %244, %245 in 1 : vector<16x64xf32>, vector<16x64xf32>, vector<16x64xf32> -> vector<16x192xf32>
    %247 = arith.truncf %246 : vector<16x192xf32> to vector<16x192xbf16>
    %c18_116 = arith.constant 18 : index
    %c0_117 = arith.constant 0 : index
    %c0_118 = arith.constant 0 : index
    %248 = vector.load %arg14[%c18_116, %c0_117, %c0_118] : memref<29x18x64xf32, #tpu.memory_space<vmem>>, vector<1x18x64xf32>
    %249 = vector.shape_cast %248 : vector<1x18x64xf32> to vector<18x64xf32>
    %250 = vector.extract_strided_slice %249 {offsets = [0, 0], sizes = [16, 64], strides = [1, 1]} : vector<18x64xf32> to vector<16x64xf32>
    %251 = vector.extract_strided_slice %249 {offsets = [1, 0], sizes = [16, 64], strides = [1, 1]} : vector<18x64xf32> to vector<16x64xf32>
    %252 = vector.extract_strided_slice %249 {offsets = [2, 0], sizes = [16, 64], strides = [1, 1]} : vector<18x64xf32> to vector<16x64xf32>
    %253 = tpu.concatenate %250, %251, %252 in 1 : vector<16x64xf32>, vector<16x64xf32>, vector<16x64xf32> -> vector<16x192xf32>
    %254 = arith.truncf %253 : vector<16x192xf32> to vector<16x192xbf16>
    %c21 = arith.constant 21 : index
    %c0_119 = arith.constant 0 : index
    %c0_120 = arith.constant 0 : index
    %255 = vector.load %arg14[%c21, %c0_119, %c0_120] : memref<29x18x64xf32, #tpu.memory_space<vmem>>, vector<1x18x64xf32>
    %256 = vector.shape_cast %255 : vector<1x18x64xf32> to vector<18x64xf32>
    %257 = vector.extract_strided_slice %256 {offsets = [0, 0], sizes = [16, 64], strides = [1, 1]} : vector<18x64xf32> to vector<16x64xf32>
    %258 = vector.extract_strided_slice %256 {offsets = [1, 0], sizes = [16, 64], strides = [1, 1]} : vector<18x64xf32> to vector<16x64xf32>
    %259 = vector.extract_strided_slice %256 {offsets = [2, 0], sizes = [16, 64], strides = [1, 1]} : vector<18x64xf32> to vector<16x64xf32>
    %260 = tpu.concatenate %257, %258, %259 in 1 : vector<16x64xf32>, vector<16x64xf32>, vector<16x64xf32> -> vector<16x192xf32>
    %261 = arith.truncf %260 : vector<16x192xf32> to vector<16x192xbf16>
    %c24 = arith.constant 24 : index
    %c0_121 = arith.constant 0 : index
    %c0_122 = arith.constant 0 : index
    %262 = vector.load %arg14[%c24, %c0_121, %c0_122] : memref<29x18x64xf32, #tpu.memory_space<vmem>>, vector<1x18x64xf32>
    %263 = vector.shape_cast %262 : vector<1x18x64xf32> to vector<18x64xf32>
    %264 = vector.extract_strided_slice %263 {offsets = [0, 0], sizes = [16, 64], strides = [1, 1]} : vector<18x64xf32> to vector<16x64xf32>
    %265 = vector.extract_strided_slice %263 {offsets = [1, 0], sizes = [16, 64], strides = [1, 1]} : vector<18x64xf32> to vector<16x64xf32>
    %266 = vector.extract_strided_slice %263 {offsets = [2, 0], sizes = [16, 64], strides = [1, 1]} : vector<18x64xf32> to vector<16x64xf32>
    %267 = tpu.concatenate %264, %265, %266 in 1 : vector<16x64xf32>, vector<16x64xf32>, vector<16x64xf32> -> vector<16x192xf32>
    %268 = arith.truncf %267 : vector<16x192xf32> to vector<16x192xbf16>
    %269 = tpu.concatenate %226, %233, %240, %247, %254, %261, %268 in 0 : vector<16x192xbf16>, vector<16x192xbf16>, vector<16x192xbf16>, vector<16x192xbf16>, vector<16x192xbf16>, vector<16x192xbf16>, vector<16x192xbf16> -> vector<112x192xbf16>
    %c3_123 = arith.constant 3 : index
    %c0_124 = arith.constant 0 : index
    %c0_125 = arith.constant 0 : index
    %270 = vector.load %arg5[%c3_123, %c0_124, %c0_125] : memref<5x192x128xbf16, #tpu.memory_space<vmem>>, vector<1x192x128xbf16>
    %271 = vector.shape_cast %270 : vector<1x192x128xbf16> to vector<192x128xbf16>
    %cst_126 = arith.constant dense<0.000000e+00> : vector<112x128xf32>
    %272 = tpu.matmul %269, %271, %cst_126 {dimension_numbers = #tpu.dot_dimension_numbers<[1], [0], [0], [1], [0, 0, 1, 1], [], []>} : vector<112x192xbf16>, vector<192x128xbf16>, vector<112x128xf32> -> vector<112x128xf32>
    %273 = arith.addf %219, %272 : vector<112x128xf32>
    %c0_127 = arith.constant 0 : index
    %c0_128 = arith.constant 0 : index
    %274 = vector.load %arg16[%c0_127, %c0_128] : memref<112x128xf32, #tpu.memory_space<vmem>>, vector<112x128xf32>
    tpu.vector_store %arg16[%c0_127, %c0_128], %273 {strides = array<i32>} : memref<112x128xf32, #tpu.memory_space<vmem>>, vector<112x128xf32>,
    %c0_129 = arith.constant 0 : index
    %c0_130 = arith.constant 0 : index
    %275 = vector.load %arg16[%c0_129, %c0_130] : memref<112x128xf32, #tpu.memory_space<vmem>>, vector<112x128xf32>
    %c8_131 = arith.constant 8 : index
    %c0_132 = arith.constant 0 : index
    %c0_133 = arith.constant 0 : index
    %276 = vector.load %arg14[%c8_131, %c0_132, %c0_133] : memref<29x18x64xf32, #tpu.memory_space<vmem>>, vector<1x18x64xf32>
    %277 = vector.shape_cast %276 : vector<1x18x64xf32> to vector<18x64xf32>
    %278 = vector.extract_strided_slice %277 {offsets = [0, 0], sizes = [16, 64], strides = [1, 1]} : vector<18x64xf32> to vector<16x64xf32>
    %279 = vector.extract_strided_slice %277 {offsets = [1, 0], sizes = [16, 64], strides = [1, 1]} : vector<18x64xf32> to vector<16x64xf32>
    %280 = vector.extract_strided_slice %277 {offsets = [2, 0], sizes = [16, 64], strides = [1, 1]} : vector<18x64xf32> to vector<16x64xf32>
    %281 = tpu.concatenate %278, %279, %280 in 1 : vector<16x64xf32>, vector<16x64xf32>, vector<16x64xf32> -> vector<16x192xf32>
    %282 = arith.truncf %281 : vector<16x192xf32> to vector<16x192xbf16>
    %c11_134 = arith.constant 11 : index
    %c0_135 = arith.constant 0 : index
    %c0_136 = arith.constant 0 : index
    %283 = vector.load %arg14[%c11_134, %c0_135, %c0_136] : memref<29x18x64xf32, #tpu.memory_space<vmem>>, vector<1x18x64xf32>
    %284 = vector.shape_cast %283 : vector<1x18x64xf32> to vector<18x64xf32>
    %285 = vector.extract_strided_slice %284 {offsets = [0, 0], sizes = [16, 64], strides = [1, 1]} : vector<18x64xf32> to vector<16x64xf32>
    %286 = vector.extract_strided_slice %284 {offsets = [1, 0], sizes = [16, 64], strides = [1, 1]} : vector<18x64xf32> to vector<16x64xf32>
    %287 = vector.extract_strided_slice %284 {offsets = [2, 0], sizes = [16, 64], strides = [1, 1]} : vector<18x64xf32> to vector<16x64xf32>
    %288 = tpu.concatenate %285, %286, %287 in 1 : vector<16x64xf32>, vector<16x64xf32>, vector<16x64xf32> -> vector<16x192xf32>
    %289 = arith.truncf %288 : vector<16x192xf32> to vector<16x192xbf16>
    %c14_137 = arith.constant 14 : index
    %c0_138 = arith.constant 0 : index
    %c0_139 = arith.constant 0 : index
    %290 = vector.load %arg14[%c14_137, %c0_138, %c0_139] : memref<29x18x64xf32, #tpu.memory_space<vmem>>, vector<1x18x64xf32>
    %291 = vector.shape_cast %290 : vector<1x18x64xf32> to vector<18x64xf32>
    %292 = vector.extract_strided_slice %291 {offsets = [0, 0], sizes = [16, 64], strides = [1, 1]} : vector<18x64xf32> to vector<16x64xf32>
    %293 = vector.extract_strided_slice %291 {offsets = [1, 0], sizes = [16, 64], strides = [1, 1]} : vector<18x64xf32> to vector<16x64xf32>
    %294 = vector.extract_strided_slice %291 {offsets = [2, 0], sizes = [16, 64], strides = [1, 1]} : vector<18x64xf32> to vector<16x64xf32>
    %295 = tpu.concatenate %292, %293, %294 in 1 : vector<16x64xf32>, vector<16x64xf32>, vector<16x64xf32> -> vector<16x192xf32>
    %296 = arith.truncf %295 : vector<16x192xf32> to vector<16x192xbf16>
    %c17_140 = arith.constant 17 : index
    %c0_141 = arith.constant 0 : index
    %c0_142 = arith.constant 0 : index
    %297 = vector.load %arg14[%c17_140, %c0_141, %c0_142] : memref<29x18x64xf32, #tpu.memory_space<vmem>>, vector<1x18x64xf32>
    %298 = vector.shape_cast %297 : vector<1x18x64xf32> to vector<18x64xf32>
    %299 = vector.extract_strided_slice %298 {offsets = [0, 0], sizes = [16, 64], strides = [1, 1]} : vector<18x64xf32> to vector<16x64xf32>
    %300 = vector.extract_strided_slice %298 {offsets = [1, 0], sizes = [16, 64], strides = [1, 1]} : vector<18x64xf32> to vector<16x64xf32>
    %301 = vector.extract_strided_slice %298 {offsets = [2, 0], sizes = [16, 64], strides = [1, 1]} : vector<18x64xf32> to vector<16x64xf32>
    %302 = tpu.concatenate %299, %300, %301 in 1 : vector<16x64xf32>, vector<16x64xf32>, vector<16x64xf32> -> vector<16x192xf32>
    %303 = arith.truncf %302 : vector<16x192xf32> to vector<16x192xbf16>
    %c20_143 = arith.constant 20 : index
    %c0_144 = arith.constant 0 : index
    %c0_145 = arith.constant 0 : index
    %304 = vector.load %arg14[%c20_143, %c0_144, %c0_145] : memref<29x18x64xf32, #tpu.memory_space<vmem>>, vector<1x18x64xf32>
    %305 = vector.shape_cast %304 : vector<1x18x64xf32> to vector<18x64xf32>
    %306 = vector.extract_strided_slice %305 {offsets = [0, 0], sizes = [16, 64], strides = [1, 1]} : vector<18x64xf32> to vector<16x64xf32>
    %307 = vector.extract_strided_slice %305 {offsets = [1, 0], sizes = [16, 64], strides = [1, 1]} : vector<18x64xf32> to vector<16x64xf32>
    %308 = vector.extract_strided_slice %305 {offsets = [2, 0], sizes = [16, 64], strides = [1, 1]} : vector<18x64xf32> to vector<16x64xf32>
    %309 = tpu.concatenate %306, %307, %308 in 1 : vector<16x64xf32>, vector<16x64xf32>, vector<16x64xf32> -> vector<16x192xf32>
    %310 = arith.truncf %309 : vector<16x192xf32> to vector<16x192xbf16>
    %c23 = arith.constant 23 : index
    %c0_146 = arith.constant 0 : index
    %c0_147 = arith.constant 0 : index
    %311 = vector.load %arg14[%c23, %c0_146, %c0_147] : memref<29x18x64xf32, #tpu.memory_space<vmem>>, vector<1x18x64xf32>
    %312 = vector.shape_cast %311 : vector<1x18x64xf32> to vector<18x64xf32>
    %313 = vector.extract_strided_slice %312 {offsets = [0, 0], sizes = [16, 64], strides = [1, 1]} : vector<18x64xf32> to vector<16x64xf32>
    %314 = vector.extract_strided_slice %312 {offsets = [1, 0], sizes = [16, 64], strides = [1, 1]} : vector<18x64xf32> to vector<16x64xf32>
    %315 = vector.extract_strided_slice %312 {offsets = [2, 0], sizes = [16, 64], strides = [1, 1]} : vector<18x64xf32> to vector<16x64xf32>
    %316 = tpu.concatenate %313, %314, %315 in 1 : vector<16x64xf32>, vector<16x64xf32>, vector<16x64xf32> -> vector<16x192xf32>
    %317 = arith.truncf %316 : vector<16x192xf32> to vector<16x192xbf16>
    %c26 = arith.constant 26 : index
    %c0_148 = arith.constant 0 : index
    %c0_149 = arith.constant 0 : index
    %318 = vector.load %arg14[%c26, %c0_148, %c0_149] : memref<29x18x64xf32, #tpu.memory_space<vmem>>, vector<1x18x64xf32>
    %319 = vector.shape_cast %318 : vector<1x18x64xf32> to vector<18x64xf32>
    %320 = vector.extract_strided_slice %319 {offsets = [0, 0], sizes = [16, 64], strides = [1, 1]} : vector<18x64xf32> to vector<16x64xf32>
    %321 = vector.extract_strided_slice %319 {offsets = [1, 0], sizes = [16, 64], strides = [1, 1]} : vector<18x64xf32> to vector<16x64xf32>
    %322 = vector.extract_strided_slice %319 {offsets = [2, 0], sizes = [16, 64], strides = [1, 1]} : vector<18x64xf32> to vector<16x64xf32>
    %323 = tpu.concatenate %320, %321, %322 in 1 : vector<16x64xf32>, vector<16x64xf32>, vector<16x64xf32> -> vector<16x192xf32>
    %324 = arith.truncf %323 : vector<16x192xf32> to vector<16x192xbf16>
    %325 = tpu.concatenate %282, %289, %296, %303, %310, %317, %324 in 0 : vector<16x192xbf16>, vector<16x192xbf16>, vector<16x192xbf16>, vector<16x192xbf16>, vector<16x192xbf16>, vector<16x192xbf16>, vector<16x192xbf16> -> vector<112x192xbf16>
    %c4_150 = arith.constant 4 : index
    %c0_151 = arith.constant 0 : index
    %c0_152 = arith.constant 0 : index
    %326 = vector.load %arg5[%c4_150, %c0_151, %c0_152] : memref<5x192x128xbf16, #tpu.memory_space<vmem>>, vector<1x192x128xbf16>
    %327 = vector.shape_cast %326 : vector<1x192x128xbf16> to vector<192x128xbf16>
    %cst_153 = arith.constant dense<0.000000e+00> : vector<112x128xf32>
    %328 = tpu.matmul %325, %327, %cst_153 {dimension_numbers = #tpu.dot_dimension_numbers<[1], [0], [0], [1], [0, 0, 1, 1], [], []>} : vector<112x192xbf16>, vector<192x128xbf16>, vector<112x128xf32> -> vector<112x128xf32>
    %329 = arith.addf %275, %328 : vector<112x128xf32>
    %c0_154 = arith.constant 0 : index
    %c0_155 = arith.constant 0 : index
    %330 = vector.load %arg16[%c0_154, %c0_155] : memref<112x128xf32, #tpu.memory_space<vmem>>, vector<112x128xf32>
    tpu.vector_store %arg16[%c0_154, %c0_155], %329 {strides = array<i32>} : memref<112x128xf32, #tpu.memory_space<vmem>>, vector<112x128xf32>,
    %c0_156 = arith.constant 0 : index
    %c0_157 = arith.constant 0 : index
    %331 = vector.load %arg16[%c0_156, %c0_157] : memref<112x128xf32, #tpu.memory_space<vmem>>, vector<112x128xf32>
    %c0_158 = arith.constant 0 : index
    %c0_159 = arith.constant 0 : index
    %332 = vector.load %arg6[%c0_158, %c0_159] : memref<1x128xf32, #tpu.memory_space<vmem>>, vector<1x128xf32>
    %333 = vector.broadcast %332 : vector<1x128xf32> to vector<112x128xf32>
    %334 = arith.mulf %331, %333 : vector<112x128xf32>
    %c0_160 = arith.constant 0 : index
    %c0_161 = arith.constant 0 : index
    %335 = vector.load %arg7[%c0_160, %c0_161] : memref<1x128xf32, #tpu.memory_space<vmem>>, vector<1x128xf32>
    %336 = vector.broadcast %335 : vector<1x128xf32> to vector<112x128xf32>
    %337 = arith.addf %334, %336 : vector<112x128xf32>
    %cst_162 = arith.constant 0.000000e+00 : f32
    %338 = vector.broadcast %cst_162 : f32 to vector<112x128xf32>
    %339 = arith.cmpf oge, %337, %338 : vector<112x128xf32>
    %cst_163 = arith.constant 0.00999999977 : f32
    %340 = vector.broadcast %cst_163 : f32 to vector<112x128xf32>
    %341 = arith.mulf %340, %337 : vector<112x128xf32>
    %342 = arith.select %339, %337, %341 : vector<112x128xi1>, vector<112x128xf32>
    %343 = vector.extract_strided_slice %342 {offsets = [0, 0], sizes = [16, 128], strides = [1, 1]} : vector<112x128xf32> to vector<16x128xf32>
    %344 = vector.extract_strided_slice %342 {offsets = [16, 0], sizes = [16, 128], strides = [1, 1]} : vector<112x128xf32> to vector<16x128xf32>
    %345 = arith.maximumf %343, %344 : vector<16x128xf32>
    %c12_164 = arith.constant 12 : index
    %c1_165 = arith.constant 1 : index
    %c0_166 = arith.constant 0 : index
    %346 = vector.load %arg15[%c12_164, %c1_165, %c0_166] : memref<27x18x128xf32, #tpu.memory_space<vmem>>, vector<1x16x128xf32>
    %347 = vector.shape_cast %346 : vector<1x16x128xf32> to vector<16x128xf32>
    %348 = vector.shape_cast %345 : vector<16x128xf32> to vector<1x16x128xf32>
    tpu.vector_store %arg15[%c12_164, %c1_165, %c0_166], %348 {strides = array<i32>} : memref<27x18x128xf32, #tpu.memory_space<vmem>>, vector<1x16x128xf32>,
    %349 = vector.extract_strided_slice %342 {offsets = [32, 0], sizes = [16, 128], strides = [1, 1]} : vector<112x128xf32> to vector<16x128xf32>
    %350 = vector.extract_strided_slice %342 {offsets = [48, 0], sizes = [16, 128], strides = [1, 1]} : vector<112x128xf32> to vector<16x128xf32>
    %351 = arith.maximumf %349, %350 : vector<16x128xf32>
    %c13_167 = arith.constant 13 : index
    %c1_168 = arith.constant 1 : index
    %c0_169 = arith.constant 0 : index
    %352 = vector.load %arg15[%c13_167, %c1_168, %c0_169] : memref<27x18x128xf32, #tpu.memory_space<vmem>>, vector<1x16x128xf32>
    %353 = vector.shape_cast %352 : vector<1x16x128xf32> to vector<16x128xf32>
    %354 = vector.shape_cast %351 : vector<16x128xf32> to vector<1x16x128xf32>
    tpu.vector_store %arg15[%c13_167, %c1_168, %c0_169], %354 {strides = array<i32>} : memref<27x18x128xf32, #tpu.memory_space<vmem>>, vector<1x16x128xf32>,
    %355 = vector.extract_strided_slice %342 {offsets = [64, 0], sizes = [16, 128], strides = [1, 1]} : vector<112x128xf32> to vector<16x128xf32>
    %356 = vector.extract_strided_slice %342 {offsets = [80, 0], sizes = [16, 128], strides = [1, 1]} : vector<112x128xf32> to vector<16x128xf32>
    %357 = arith.maximumf %355, %356 : vector<16x128xf32>
    %c14_170 = arith.constant 14 : index
    %c1_171 = arith.constant 1 : index
    %c0_172 = arith.constant 0 : index
    %358 = vector.load %arg15[%c14_170, %c1_171, %c0_172] : memref<27x18x128xf32, #tpu.memory_space<vmem>>, vector<1x16x128xf32>
    %359 = vector.shape_cast %358 : vector<1x16x128xf32> to vector<16x128xf32>
    %360 = vector.shape_cast %357 : vector<16x128xf32> to vector<1x16x128xf32>
    tpu.vector_store %arg15[%c14_170, %c1_171, %c0_172], %360 {strides = array<i32>} : memref<27x18x128xf32, #tpu.memory_space<vmem>>, vector<1x16x128xf32>,
    %cst_173 = arith.constant 0.000000e+00 : f32
    %361 = vector.broadcast %cst_173 : f32 to vector<112x256xf32>
    %c0_174 = arith.constant 0 : index
    %c0_175 = arith.constant 0 : index
    %362 = vector.load %arg17[%c0_174, %c0_175] : memref<112x256xf32, #tpu.memory_space<vmem>>, vector<112x256xf32>
    tpu.vector_store %arg17[%c0_174, %c0_175], %361 {strides = array<i32>} : memref<112x256xf32, #tpu.memory_space<vmem>>, vector<112x256xf32>,
    %c0_176 = arith.constant 0 : index
    %c0_177 = arith.constant 0 : index
    %363 = vector.load %arg17[%c0_176, %c0_177] : memref<112x256xf32, #tpu.memory_space<vmem>>, vector<112x256xf32>
    %c0_178 = arith.constant 0 : index
    %c0_179 = arith.constant 0 : index
    %c0_180 = arith.constant 0 : index
    %364 = vector.load %arg15[%c0_178, %c0_179, %c0_180] : memref<27x18x128xf32, #tpu.memory_space<vmem>>, vector<1x18x128xf32>
    %365 = vector.shape_cast %364 : vector<1x18x128xf32> to vector<18x128xf32>
    %366 = vector.extract_strided_slice %365 {offsets = [0, 0], sizes = [16, 128], strides = [1, 1]} : vector<18x128xf32> to vector<16x128xf32>
    %367 = vector.extract_strided_slice %365 {offsets = [1, 0], sizes = [16, 128], strides = [1, 1]} : vector<18x128xf32> to vector<16x128xf32>
    %368 = vector.extract_strided_slice %365 {offsets = [2, 0], sizes = [16, 128], strides = [1, 1]} : vector<18x128xf32> to vector<16x128xf32>
    %369 = tpu.concatenate %366, %367, %368 in 1 : vector<16x128xf32>, vector<16x128xf32>, vector<16x128xf32> -> vector<16x384xf32>
    %370 = arith.truncf %369 : vector<16x384xf32> to vector<16x384xbf16>
    %c3_181 = arith.constant 3 : index
    %c0_182 = arith.constant 0 : index
    %c0_183 = arith.constant 0 : index
    %371 = vector.load %arg15[%c3_181, %c0_182, %c0_183] : memref<27x18x128xf32, #tpu.memory_space<vmem>>, vector<1x18x128xf32>
    %372 = vector.shape_cast %371 : vector<1x18x128xf32> to vector<18x128xf32>
    %373 = vector.extract_strided_slice %372 {offsets = [0, 0], sizes = [16, 128], strides = [1, 1]} : vector<18x128xf32> to vector<16x128xf32>
    %374 = vector.extract_strided_slice %372 {offsets = [1, 0], sizes = [16, 128], strides = [1, 1]} : vector<18x128xf32> to vector<16x128xf32>
    %375 = vector.extract_strided_slice %372 {offsets = [2, 0], sizes = [16, 128], strides = [1, 1]} : vector<18x128xf32> to vector<16x128xf32>
    %376 = tpu.concatenate %373, %374, %375 in 1 : vector<16x128xf32>, vector<16x128xf32>, vector<16x128xf32> -> vector<16x384xf32>
    %377 = arith.truncf %376 : vector<16x384xf32> to vector<16x384xbf16>
    %c6_184 = arith.constant 6 : index
    %c0_185 = arith.constant 0 : index
    %c0_186 = arith.constant 0 : index
    %378 = vector.load %arg15[%c6_184, %c0_185, %c0_186] : memref<27x18x128xf32, #tpu.memory_space<vmem>>, vector<1x18x128xf32>
    %379 = vector.shape_cast %378 : vector<1x18x128xf32> to vector<18x128xf32>
    %380 = vector.extract_strided_slice %379 {offsets = [0, 0], sizes = [16, 128], strides = [1, 1]} : vector<18x128xf32> to vector<16x128xf32>
    %381 = vector.extract_strided_slice %379 {offsets = [1, 0], sizes = [16, 128], strides = [1, 1]} : vector<18x128xf32> to vector<16x128xf32>
    %382 = vector.extract_strided_slice %379 {offsets = [2, 0], sizes = [16, 128], strides = [1, 1]} : vector<18x128xf32> to vector<16x128xf32>
    %383 = tpu.concatenate %380, %381, %382 in 1 : vector<16x128xf32>, vector<16x128xf32>, vector<16x128xf32> -> vector<16x384xf32>
    %384 = arith.truncf %383 : vector<16x384xf32> to vector<16x384xbf16>
    %c9_187 = arith.constant 9 : index
    %c0_188 = arith.constant 0 : index
    %c0_189 = arith.constant 0 : index
    %385 = vector.load %arg15[%c9_187, %c0_188, %c0_189] : memref<27x18x128xf32, #tpu.memory_space<vmem>>, vector<1x18x128xf32>
    %386 = vector.shape_cast %385 : vector<1x18x128xf32> to vector<18x128xf32>
    %387 = vector.extract_strided_slice %386 {offsets = [0, 0], sizes = [16, 128], strides = [1, 1]} : vector<18x128xf32> to vector<16x128xf32>
    %388 = vector.extract_strided_slice %386 {offsets = [1, 0], sizes = [16, 128], strides = [1, 1]} : vector<18x128xf32> to vector<16x128xf32>
    %389 = vector.extract_strided_slice %386 {offsets = [2, 0], sizes = [16, 128], strides = [1, 1]} : vector<18x128xf32> to vector<16x128xf32>
    %390 = tpu.concatenate %387, %388, %389 in 1 : vector<16x128xf32>, vector<16x128xf32>, vector<16x128xf32> -> vector<16x384xf32>
    %391 = arith.truncf %390 : vector<16x384xf32> to vector<16x384xbf16>
    %c12_190 = arith.constant 12 : index
    %c0_191 = arith.constant 0 : index
    %c0_192 = arith.constant 0 : index
    %392 = vector.load %arg15[%c12_190, %c0_191, %c0_192] : memref<27x18x128xf32, #tpu.memory_space<vmem>>, vector<1x18x128xf32>
    %393 = vector.shape_cast %392 : vector<1x18x128xf32> to vector<18x128xf32>
    %394 = vector.extract_strided_slice %393 {offsets = [0, 0], sizes = [16, 128], strides = [1, 1]} : vector<18x128xf32> to vector<16x128xf32>
    %395 = vector.extract_strided_slice %393 {offsets = [1, 0], sizes = [16, 128], strides = [1, 1]} : vector<18x128xf32> to vector<16x128xf32>
    %396 = vector.extract_strided_slice %393 {offsets = [2, 0], sizes = [16, 128], strides = [1, 1]} : vector<18x128xf32> to vector<16x128xf32>
    %397 = tpu.concatenate %394, %395, %396 in 1 : vector<16x128xf32>, vector<16x128xf32>, vector<16x128xf32> -> vector<16x384xf32>
    %398 = arith.truncf %397 : vector<16x384xf32> to vector<16x384xbf16>
    %c15_193 = arith.constant 15 : index
    %c0_194 = arith.constant 0 : index
    %c0_195 = arith.constant 0 : index
    %399 = vector.load %arg15[%c15_193, %c0_194, %c0_195] : memref<27x18x128xf32, #tpu.memory_space<vmem>>, vector<1x18x128xf32>
    %400 = vector.shape_cast %399 : vector<1x18x128xf32> to vector<18x128xf32>
    %401 = vector.extract_strided_slice %400 {offsets = [0, 0], sizes = [16, 128], strides = [1, 1]} : vector<18x128xf32> to vector<16x128xf32>
    %402 = vector.extract_strided_slice %400 {offsets = [1, 0], sizes = [16, 128], strides = [1, 1]} : vector<18x128xf32> to vector<16x128xf32>
    %403 = vector.extract_strided_slice %400 {offsets = [2, 0], sizes = [16, 128], strides = [1, 1]} : vector<18x128xf32> to vector<16x128xf32>
    %404 = tpu.concatenate %401, %402, %403 in 1 : vector<16x128xf32>, vector<16x128xf32>, vector<16x128xf32> -> vector<16x384xf32>
    %405 = arith.truncf %404 : vector<16x384xf32> to vector<16x384xbf16>
    %c18_196 = arith.constant 18 : index
    %c0_197 = arith.constant 0 : index
    %c0_198 = arith.constant 0 : index
    %406 = vector.load %arg15[%c18_196, %c0_197, %c0_198] : memref<27x18x128xf32, #tpu.memory_space<vmem>>, vector<1x18x128xf32>
    %407 = vector.shape_cast %406 : vector<1x18x128xf32> to vector<18x128xf32>
    %408 = vector.extract_strided_slice %407 {offsets = [0, 0], sizes = [16, 128], strides = [1, 1]} : vector<18x128xf32> to vector<16x128xf32>
    %409 = vector.extract_strided_slice %407 {offsets = [1, 0], sizes = [16, 128], strides = [1, 1]} : vector<18x128xf32> to vector<16x128xf32>
    %410 = vector.extract_strided_slice %407 {offsets = [2, 0], sizes = [16, 128], strides = [1, 1]} : vector<18x128xf32> to vector<16x128xf32>
    %411 = tpu.concatenate %408, %409, %410 in 1 : vector<16x128xf32>, vector<16x128xf32>, vector<16x128xf32> -> vector<16x384xf32>
    %412 = arith.truncf %411 : vector<16x384xf32> to vector<16x384xbf16>
    %413 = tpu.concatenate %370, %377, %384, %391, %398, %405, %412 in 0 : vector<16x384xbf16>, vector<16x384xbf16>, vector<16x384xbf16>, vector<16x384xbf16>, vector<16x384xbf16>, vector<16x384xbf16>, vector<16x384xbf16> -> vector<112x384xbf16>
    %c0_199 = arith.constant 0 : index
    %c0_200 = arith.constant 0 : index
    %c0_201 = arith.constant 0 : index
    %414 = vector.load %arg8[%c0_199, %c0_200, %c0_201] : memref<5x384x256xbf16, #tpu.memory_space<vmem>>, vector<1x384x256xbf16>
    %415 = vector.shape_cast %414 : vector<1x384x256xbf16> to vector<384x256xbf16>
    %cst_202 = arith.constant dense<0.000000e+00> : vector<112x256xf32>
    %416 = tpu.matmul %413, %415, %cst_202 {dimension_numbers = #tpu.dot_dimension_numbers<[1], [0], [0], [1], [0, 0, 1, 1], [], []>} : vector<112x384xbf16>, vector<384x256xbf16>, vector<112x256xf32> -> vector<112x256xf32>
    %417 = arith.addf %363, %416 : vector<112x256xf32>
    %c0_203 = arith.constant 0 : index
    %c0_204 = arith.constant 0 : index
    %418 = vector.load %arg17[%c0_203, %c0_204] : memref<112x256xf32, #tpu.memory_space<vmem>>, vector<112x256xf32>
    tpu.vector_store %arg17[%c0_203, %c0_204], %417 {strides = array<i32>} : memref<112x256xf32, #tpu.memory_space<vmem>>, vector<112x256xf32>,
    %c0_205 = arith.constant 0 : index
    %c0_206 = arith.constant 0 : index
    %419 = vector.load %arg17[%c0_205, %c0_206] : memref<112x256xf32, #tpu.memory_space<vmem>>, vector<112x256xf32>
    %c2_207 = arith.constant 2 : index
    %c0_208 = arith.constant 0 : index
    %c0_209 = arith.constant 0 : index
    %420 = vector.load %arg15[%c2_207, %c0_208, %c0_209] : memref<27x18x128xf32, #tpu.memory_space<vmem>>, vector<1x18x128xf32>
    %421 = vector.shape_cast %420 : vector<1x18x128xf32> to vector<18x128xf32>
    %422 = vector.extract_strided_slice %421 {offsets = [0, 0], sizes = [16, 128], strides = [1, 1]} : vector<18x128xf32> to vector<16x128xf32>
    %423 = vector.extract_strided_slice %421 {offsets = [1, 0], sizes = [16, 128], strides = [1, 1]} : vector<18x128xf32> to vector<16x128xf32>
    %424 = vector.extract_strided_slice %421 {offsets = [2, 0], sizes = [16, 128], strides = [1, 1]} : vector<18x128xf32> to vector<16x128xf32>
    %425 = tpu.concatenate %422, %423, %424 in 1 : vector<16x128xf32>, vector<16x128xf32>, vector<16x128xf32> -> vector<16x384xf32>
    %426 = arith.truncf %425 : vector<16x384xf32> to vector<16x384xbf16>
    %c5_210 = arith.constant 5 : index
    %c0_211 = arith.constant 0 : index
    %c0_212 = arith.constant 0 : index
    %427 = vector.load %arg15[%c5_210, %c0_211, %c0_212] : memref<27x18x128xf32, #tpu.memory_space<vmem>>, vector<1x18x128xf32>
    %428 = vector.shape_cast %427 : vector<1x18x128xf32> to vector<18x128xf32>
    %429 = vector.extract_strided_slice %428 {offsets = [0, 0], sizes = [16, 128], strides = [1, 1]} : vector<18x128xf32> to vector<16x128xf32>
    %430 = vector.extract_strided_slice %428 {offsets = [1, 0], sizes = [16, 128], strides = [1, 1]} : vector<18x128xf32> to vector<16x128xf32>
    %431 = vector.extract_strided_slice %428 {offsets = [2, 0], sizes = [16, 128], strides = [1, 1]} : vector<18x128xf32> to vector<16x128xf32>
    %432 = tpu.concatenate %429, %430, %431 in 1 : vector<16x128xf32>, vector<16x128xf32>, vector<16x128xf32> -> vector<16x384xf32>
    %433 = arith.truncf %432 : vector<16x384xf32> to vector<16x384xbf16>
    %c8_213 = arith.constant 8 : index
    %c0_214 = arith.constant 0 : index
    %c0_215 = arith.constant 0 : index
    %434 = vector.load %arg15[%c8_213, %c0_214, %c0_215] : memref<27x18x128xf32, #tpu.memory_space<vmem>>, vector<1x18x128xf32>
    %435 = vector.shape_cast %434 : vector<1x18x128xf32> to vector<18x128xf32>
    %436 = vector.extract_strided_slice %435 {offsets = [0, 0], sizes = [16, 128], strides = [1, 1]} : vector<18x128xf32> to vector<16x128xf32>
    %437 = vector.extract_strided_slice %435 {offsets = [1, 0], sizes = [16, 128], strides = [1, 1]} : vector<18x128xf32> to vector<16x128xf32>
    %438 = vector.extract_strided_slice %435 {offsets = [2, 0], sizes = [16, 128], strides = [1, 1]} : vector<18x128xf32> to vector<16x128xf32>
    %439 = tpu.concatenate %436, %437, %438 in 1 : vector<16x128xf32>, vector<16x128xf32>, vector<16x128xf32> -> vector<16x384xf32>
    %440 = arith.truncf %439 : vector<16x384xf32> to vector<16x384xbf16>
    %c11_216 = arith.constant 11 : index
    %c0_217 = arith.constant 0 : index
    %c0_218 = arith.constant 0 : index
    %441 = vector.load %arg15[%c11_216, %c0_217, %c0_218] : memref<27x18x128xf32, #tpu.memory_space<vmem>>, vector<1x18x128xf32>
    %442 = vector.shape_cast %441 : vector<1x18x128xf32> to vector<18x128xf32>
    %443 = vector.extract_strided_slice %442 {offsets = [0, 0], sizes = [16, 128], strides = [1, 1]} : vector<18x128xf32> to vector<16x128xf32>
    %444 = vector.extract_strided_slice %442 {offsets = [1, 0], sizes = [16, 128], strides = [1, 1]} : vector<18x128xf32> to vector<16x128xf32>
    %445 = vector.extract_strided_slice %442 {offsets = [2, 0], sizes = [16, 128], strides = [1, 1]} : vector<18x128xf32> to vector<16x128xf32>
    %446 = tpu.concatenate %443, %444, %445 in 1 : vector<16x128xf32>, vector<16x128xf32>, vector<16x128xf32> -> vector<16x384xf32>
    %447 = arith.truncf %446 : vector<16x384xf32> to vector<16x384xbf16>
    %c14_219 = arith.constant 14 : index
    %c0_220 = arith.constant 0 : index
    %c0_221 = arith.constant 0 : index
    %448 = vector.load %arg15[%c14_219, %c0_220, %c0_221] : memref<27x18x128xf32, #tpu.memory_space<vmem>>, vector<1x18x128xf32>
    %449 = vector.shape_cast %448 : vector<1x18x128xf32> to vector<18x128xf32>
    %450 = vector.extract_strided_slice %449 {offsets = [0, 0], sizes = [16, 128], strides = [1, 1]} : vector<18x128xf32> to vector<16x128xf32>
    %451 = vector.extract_strided_slice %449 {offsets = [1, 0], sizes = [16, 128], strides = [1, 1]} : vector<18x128xf32> to vector<16x128xf32>
    %452 = vector.extract_strided_slice %449 {offsets = [2, 0], sizes = [16, 128], strides = [1, 1]} : vector<18x128xf32> to vector<16x128xf32>
    %453 = tpu.concatenate %450, %451, %452 in 1 : vector<16x128xf32>, vector<16x128xf32>, vector<16x128xf32> -> vector<16x384xf32>
    %454 = arith.truncf %453 : vector<16x384xf32> to vector<16x384xbf16>
    %c17_222 = arith.constant 17 : index
    %c0_223 = arith.constant 0 : index
    %c0_224 = arith.constant 0 : index
    %455 = vector.load %arg15[%c17_222, %c0_223, %c0_224] : memref<27x18x128xf32, #tpu.memory_space<vmem>>, vector<1x18x128xf32>
    %456 = vector.shape_cast %455 : vector<1x18x128xf32> to vector<18x128xf32>
    %457 = vector.extract_strided_slice %456 {offsets = [0, 0], sizes = [16, 128], strides = [1, 1]} : vector<18x128xf32> to vector<16x128xf32>
    %458 = vector.extract_strided_slice %456 {offsets = [1, 0], sizes = [16, 128], strides = [1, 1]} : vector<18x128xf32> to vector<16x128xf32>
    %459 = vector.extract_strided_slice %456 {offsets = [2, 0], sizes = [16, 128], strides = [1, 1]} : vector<18x128xf32> to vector<16x128xf32>
    %460 = tpu.concatenate %457, %458, %459 in 1 : vector<16x128xf32>, vector<16x128xf32>, vector<16x128xf32> -> vector<16x384xf32>
    %461 = arith.truncf %460 : vector<16x384xf32> to vector<16x384xbf16>
    %c20_225 = arith.constant 20 : index
    %c0_226 = arith.constant 0 : index
    %c0_227 = arith.constant 0 : index
    %462 = vector.load %arg15[%c20_225, %c0_226, %c0_227] : memref<27x18x128xf32, #tpu.memory_space<vmem>>, vector<1x18x128xf32>
    %463 = vector.shape_cast %462 : vector<1x18x128xf32> to vector<18x128xf32>
    %464 = vector.extract_strided_slice %463 {offsets = [0, 0], sizes = [16, 128], strides = [1, 1]} : vector<18x128xf32> to vector<16x128xf32>
    %465 = vector.extract_strided_slice %463 {offsets = [1, 0], sizes = [16, 128], strides = [1, 1]} : vector<18x128xf32> to vector<16x128xf32>
    %466 = vector.extract_strided_slice %463 {offsets = [2, 0], sizes = [16, 128], strides = [1, 1]} : vector<18x128xf32> to vector<16x128xf32>
    %467 = tpu.concatenate %464, %465, %466 in 1 : vector<16x128xf32>, vector<16x128xf32>, vector<16x128xf32> -> vector<16x384xf32>
    %468 = arith.truncf %467 : vector<16x384xf32> to vector<16x384xbf16>
    %469 = tpu.concatenate %426, %433, %440, %447, %454, %461, %468 in 0 : vector<16x384xbf16>, vector<16x384xbf16>, vector<16x384xbf16>, vector<16x384xbf16>, vector<16x384xbf16>, vector<16x384xbf16>, vector<16x384xbf16> -> vector<112x384xbf16>
    %c1_228 = arith.constant 1 : index
    %c0_229 = arith.constant 0 : index
    %c0_230 = arith.constant 0 : index
    %470 = vector.load %arg8[%c1_228, %c0_229, %c0_230] : memref<5x384x256xbf16, #tpu.memory_space<vmem>>, vector<1x384x256xbf16>
    %471 = vector.shape_cast %470 : vector<1x384x256xbf16> to vector<384x256xbf16>
    %cst_231 = arith.constant dense<0.000000e+00> : vector<112x256xf32>
    %472 = tpu.matmul %469, %471, %cst_231 {dimension_numbers = #tpu.dot_dimension_numbers<[1], [0], [0], [1], [0, 0, 1, 1], [], []>} : vector<112x384xbf16>, vector<384x256xbf16>, vector<112x256xf32> -> vector<112x256xf32>
    %473 = arith.addf %419, %472 : vector<112x256xf32>
    %c0_232 = arith.constant 0 : index
    %c0_233 = arith.constant 0 : index
    %474 = vector.load %arg17[%c0_232, %c0_233] : memref<112x256xf32, #tpu.memory_space<vmem>>, vector<112x256xf32>
    tpu.vector_store %arg17[%c0_232, %c0_233], %473 {strides = array<i32>} : memref<112x256xf32, #tpu.memory_space<vmem>>, vector<112x256xf32>,
    %c0_234 = arith.constant 0 : index
    %c0_235 = arith.constant 0 : index
    %475 = vector.load %arg17[%c0_234, %c0_235] : memref<112x256xf32, #tpu.memory_space<vmem>>, vector<112x256xf32>
    %c4_236 = arith.constant 4 : index
    %c0_237 = arith.constant 0 : index
    %c0_238 = arith.constant 0 : index
    %476 = vector.load %arg15[%c4_236, %c0_237, %c0_238] : memref<27x18x128xf32, #tpu.memory_space<vmem>>, vector<1x18x128xf32>
    %477 = vector.shape_cast %476 : vector<1x18x128xf32> to vector<18x128xf32>
    %478 = vector.extract_strided_slice %477 {offsets = [0, 0], sizes = [16, 128], strides = [1, 1]} : vector<18x128xf32> to vector<16x128xf32>
    %479 = vector.extract_strided_slice %477 {offsets = [1, 0], sizes = [16, 128], strides = [1, 1]} : vector<18x128xf32> to vector<16x128xf32>
    %480 = vector.extract_strided_slice %477 {offsets = [2, 0], sizes = [16, 128], strides = [1, 1]} : vector<18x128xf32> to vector<16x128xf32>
    %481 = tpu.concatenate %478, %479, %480 in 1 : vector<16x128xf32>, vector<16x128xf32>, vector<16x128xf32> -> vector<16x384xf32>
    %482 = arith.truncf %481 : vector<16x384xf32> to vector<16x384xbf16>
    %c7_239 = arith.constant 7 : index
    %c0_240 = arith.constant 0 : index
    %c0_241 = arith.constant 0 : index
    %483 = vector.load %arg15[%c7_239, %c0_240, %c0_241] : memref<27x18x128xf32, #tpu.memory_space<vmem>>, vector<1x18x128xf32>
    %484 = vector.shape_cast %483 : vector<1x18x128xf32> to vector<18x128xf32>
    %485 = vector.extract_strided_slice %484 {offsets = [0, 0], sizes = [16, 128], strides = [1, 1]} : vector<18x128xf32> to vector<16x128xf32>
    %486 = vector.extract_strided_slice %484 {offsets = [1, 0], sizes = [16, 128], strides = [1, 1]} : vector<18x128xf32> to vector<16x128xf32>
    %487 = vector.extract_strided_slice %484 {offsets = [2, 0], sizes = [16, 128], strides = [1, 1]} : vector<18x128xf32> to vector<16x128xf32>
    %488 = tpu.concatenate %485, %486, %487 in 1 : vector<16x128xf32>, vector<16x128xf32>, vector<16x128xf32> -> vector<16x384xf32>
    %489 = arith.truncf %488 : vector<16x384xf32> to vector<16x384xbf16>
    %c10_242 = arith.constant 10 : index
    %c0_243 = arith.constant 0 : index
    %c0_244 = arith.constant 0 : index
    %490 = vector.load %arg15[%c10_242, %c0_243, %c0_244] : memref<27x18x128xf32, #tpu.memory_space<vmem>>, vector<1x18x128xf32>
    %491 = vector.shape_cast %490 : vector<1x18x128xf32> to vector<18x128xf32>
    %492 = vector.extract_strided_slice %491 {offsets = [0, 0], sizes = [16, 128], strides = [1, 1]} : vector<18x128xf32> to vector<16x128xf32>
    %493 = vector.extract_strided_slice %491 {offsets = [1, 0], sizes = [16, 128], strides = [1, 1]} : vector<18x128xf32> to vector<16x128xf32>
    %494 = vector.extract_strided_slice %491 {offsets = [2, 0], sizes = [16, 128], strides = [1, 1]} : vector<18x128xf32> to vector<16x128xf32>
    %495 = tpu.concatenate %492, %493, %494 in 1 : vector<16x128xf32>, vector<16x128xf32>, vector<16x128xf32> -> vector<16x384xf32>
    %496 = arith.truncf %495 : vector<16x384xf32> to vector<16x384xbf16>
    %c13_245 = arith.constant 13 : index
    %c0_246 = arith.constant 0 : index
    %c0_247 = arith.constant 0 : index
    %497 = vector.load %arg15[%c13_245, %c0_246, %c0_247] : memref<27x18x128xf32, #tpu.memory_space<vmem>>, vector<1x18x128xf32>
    %498 = vector.shape_cast %497 : vector<1x18x128xf32> to vector<18x128xf32>
    %499 = vector.extract_strided_slice %498 {offsets = [0, 0], sizes = [16, 128], strides = [1, 1]} : vector<18x128xf32> to vector<16x128xf32>
    %500 = vector.extract_strided_slice %498 {offsets = [1, 0], sizes = [16, 128], strides = [1, 1]} : vector<18x128xf32> to vector<16x128xf32>
    %501 = vector.extract_strided_slice %498 {offsets = [2, 0], sizes = [16, 128], strides = [1, 1]} : vector<18x128xf32> to vector<16x128xf32>
    %502 = tpu.concatenate %499, %500, %501 in 1 : vector<16x128xf32>, vector<16x128xf32>, vector<16x128xf32> -> vector<16x384xf32>
    %503 = arith.truncf %502 : vector<16x384xf32> to vector<16x384xbf16>
    %c16_248 = arith.constant 16 : index
    %c0_249 = arith.constant 0 : index
    %c0_250 = arith.constant 0 : index
    %504 = vector.load %arg15[%c16_248, %c0_249, %c0_250] : memref<27x18x128xf32, #tpu.memory_space<vmem>>, vector<1x18x128xf32>
    %505 = vector.shape_cast %504 : vector<1x18x128xf32> to vector<18x128xf32>
    %506 = vector.extract_strided_slice %505 {offsets = [0, 0], sizes = [16, 128], strides = [1, 1]} : vector<18x128xf32> to vector<16x128xf32>
    %507 = vector.extract_strided_slice %505 {offsets = [1, 0], sizes = [16, 128], strides = [1, 1]} : vector<18x128xf32> to vector<16x128xf32>
    %508 = vector.extract_strided_slice %505 {offsets = [2, 0], sizes = [16, 128], strides = [1, 1]} : vector<18x128xf32> to vector<16x128xf32>
    %509 = tpu.concatenate %506, %507, %508 in 1 : vector<16x128xf32>, vector<16x128xf32>, vector<16x128xf32> -> vector<16x384xf32>
    %510 = arith.truncf %509 : vector<16x384xf32> to vector<16x384xbf16>
    %c19_251 = arith.constant 19 : index
    %c0_252 = arith.constant 0 : index
    %c0_253 = arith.constant 0 : index
    %511 = vector.load %arg15[%c19_251, %c0_252, %c0_253] : memref<27x18x128xf32, #tpu.memory_space<vmem>>, vector<1x18x128xf32>
    %512 = vector.shape_cast %511 : vector<1x18x128xf32> to vector<18x128xf32>
    %513 = vector.extract_strided_slice %512 {offsets = [0, 0], sizes = [16, 128], strides = [1, 1]} : vector<18x128xf32> to vector<16x128xf32>
    %514 = vector.extract_strided_slice %512 {offsets = [1, 0], sizes = [16, 128], strides = [1, 1]} : vector<18x128xf32> to vector<16x128xf32>
    %515 = vector.extract_strided_slice %512 {offsets = [2, 0], sizes = [16, 128], strides = [1, 1]} : vector<18x128xf32> to vector<16x128xf32>
    %516 = tpu.concatenate %513, %514, %515 in 1 : vector<16x128xf32>, vector<16x128xf32>, vector<16x128xf32> -> vector<16x384xf32>
    %517 = arith.truncf %516 : vector<16x384xf32> to vector<16x384xbf16>
    %c22_254 = arith.constant 22 : index
    %c0_255 = arith.constant 0 : index
    %c0_256 = arith.constant 0 : index
    %518 = vector.load %arg15[%c22_254, %c0_255, %c0_256] : memref<27x18x128xf32, #tpu.memory_space<vmem>>, vector<1x18x128xf32>
    %519 = vector.shape_cast %518 : vector<1x18x128xf32> to vector<18x128xf32>
    %520 = vector.extract_strided_slice %519 {offsets = [0, 0], sizes = [16, 128], strides = [1, 1]} : vector<18x128xf32> to vector<16x128xf32>
    %521 = vector.extract_strided_slice %519 {offsets = [1, 0], sizes = [16, 128], strides = [1, 1]} : vector<18x128xf32> to vector<16x128xf32>
    %522 = vector.extract_strided_slice %519 {offsets = [2, 0], sizes = [16, 128], strides = [1, 1]} : vector<18x128xf32> to vector<16x128xf32>
    %523 = tpu.concatenate %520, %521, %522 in 1 : vector<16x128xf32>, vector<16x128xf32>, vector<16x128xf32> -> vector<16x384xf32>
    %524 = arith.truncf %523 : vector<16x384xf32> to vector<16x384xbf16>
    %525 = tpu.concatenate %482, %489, %496, %503, %510, %517, %524 in 0 : vector<16x384xbf16>, vector<16x384xbf16>, vector<16x384xbf16>, vector<16x384xbf16>, vector<16x384xbf16>, vector<16x384xbf16>, vector<16x384xbf16> -> vector<112x384xbf16>
    %c2_257 = arith.constant 2 : index
    %c0_258 = arith.constant 0 : index
    %c0_259 = arith.constant 0 : index
    %526 = vector.load %arg8[%c2_257, %c0_258, %c0_259] : memref<5x384x256xbf16, #tpu.memory_space<vmem>>, vector<1x384x256xbf16>
    %527 = vector.shape_cast %526 : vector<1x384x256xbf16> to vector<384x256xbf16>
    %cst_260 = arith.constant dense<0.000000e+00> : vector<112x256xf32>
    %528 = tpu.matmul %525, %527, %cst_260 {dimension_numbers = #tpu.dot_dimension_numbers<[1], [0], [0], [1], [0, 0, 1, 1], [], []>} : vector<112x384xbf16>, vector<384x256xbf16>, vector<112x256xf32> -> vector<112x256xf32>
    %529 = arith.addf %475, %528 : vector<112x256xf32>
    %c0_261 = arith.constant 0 : index
    %c0_262 = arith.constant 0 : index
    %530 = vector.load %arg17[%c0_261, %c0_262] : memref<112x256xf32, #tpu.memory_space<vmem>>, vector<112x256xf32>
    tpu.vector_store %arg17[%c0_261, %c0_262], %529 {strides = array<i32>} : memref<112x256xf32, #tpu.memory_space<vmem>>, vector<112x256xf32>,
    %c0_263 = arith.constant 0 : index
    %c0_264 = arith.constant 0 : index
    %531 = vector.load %arg17[%c0_263, %c0_264] : memref<112x256xf32, #tpu.memory_space<vmem>>, vector<112x256xf32>
    %c6_265 = arith.constant 6 : index
    %c0_266 = arith.constant 0 : index
    %c0_267 = arith.constant 0 : index
    %532 = vector.load %arg15[%c6_265, %c0_266, %c0_267] : memref<27x18x128xf32, #tpu.memory_space<vmem>>, vector<1x18x128xf32>
    %533 = vector.shape_cast %532 : vector<1x18x128xf32> to vector<18x128xf32>
    %534 = vector.extract_strided_slice %533 {offsets = [0, 0], sizes = [16, 128], strides = [1, 1]} : vector<18x128xf32> to vector<16x128xf32>
    %535 = vector.extract_strided_slice %533 {offsets = [1, 0], sizes = [16, 128], strides = [1, 1]} : vector<18x128xf32> to vector<16x128xf32>
    %536 = vector.extract_strided_slice %533 {offsets = [2, 0], sizes = [16, 128], strides = [1, 1]} : vector<18x128xf32> to vector<16x128xf32>
    %537 = tpu.concatenate %534, %535, %536 in 1 : vector<16x128xf32>, vector<16x128xf32>, vector<16x128xf32> -> vector<16x384xf32>
    %538 = arith.truncf %537 : vector<16x384xf32> to vector<16x384xbf16>
    %c9_268 = arith.constant 9 : index
    %c0_269 = arith.constant 0 : index
    %c0_270 = arith.constant 0 : index
    %539 = vector.load %arg15[%c9_268, %c0_269, %c0_270] : memref<27x18x128xf32, #tpu.memory_space<vmem>>, vector<1x18x128xf32>
    %540 = vector.shape_cast %539 : vector<1x18x128xf32> to vector<18x128xf32>
    %541 = vector.extract_strided_slice %540 {offsets = [0, 0], sizes = [16, 128], strides = [1, 1]} : vector<18x128xf32> to vector<16x128xf32>
    %542 = vector.extract_strided_slice %540 {offsets = [1, 0], sizes = [16, 128], strides = [1, 1]} : vector<18x128xf32> to vector<16x128xf32>
    %543 = vector.extract_strided_slice %540 {offsets = [2, 0], sizes = [16, 128], strides = [1, 1]} : vector<18x128xf32> to vector<16x128xf32>
    %544 = tpu.concatenate %541, %542, %543 in 1 : vector<16x128xf32>, vector<16x128xf32>, vector<16x128xf32> -> vector<16x384xf32>
    %545 = arith.truncf %544 : vector<16x384xf32> to vector<16x384xbf16>
    %c12_271 = arith.constant 12 : index
    %c0_272 = arith.constant 0 : index
    %c0_273 = arith.constant 0 : index
    %546 = vector.load %arg15[%c12_271, %c0_272, %c0_273] : memref<27x18x128xf32, #tpu.memory_space<vmem>>, vector<1x18x128xf32>
    %547 = vector.shape_cast %546 : vector<1x18x128xf32> to vector<18x128xf32>
    %548 = vector.extract_strided_slice %547 {offsets = [0, 0], sizes = [16, 128], strides = [1, 1]} : vector<18x128xf32> to vector<16x128xf32>
    %549 = vector.extract_strided_slice %547 {offsets = [1, 0], sizes = [16, 128], strides = [1, 1]} : vector<18x128xf32> to vector<16x128xf32>
    %550 = vector.extract_strided_slice %547 {offsets = [2, 0], sizes = [16, 128], strides = [1, 1]} : vector<18x128xf32> to vector<16x128xf32>
    %551 = tpu.concatenate %548, %549, %550 in 1 : vector<16x128xf32>, vector<16x128xf32>, vector<16x128xf32> -> vector<16x384xf32>
    %552 = arith.truncf %551 : vector<16x384xf32> to vector<16x384xbf16>
    %c15_274 = arith.constant 15 : index
    %c0_275 = arith.constant 0 : index
    %c0_276 = arith.constant 0 : index
    %553 = vector.load %arg15[%c15_274, %c0_275, %c0_276] : memref<27x18x128xf32, #tpu.memory_space<vmem>>, vector<1x18x128xf32>
    %554 = vector.shape_cast %553 : vector<1x18x128xf32> to vector<18x128xf32>
    %555 = vector.extract_strided_slice %554 {offsets = [0, 0], sizes = [16, 128], strides = [1, 1]} : vector<18x128xf32> to vector<16x128xf32>
    %556 = vector.extract_strided_slice %554 {offsets = [1, 0], sizes = [16, 128], strides = [1, 1]} : vector<18x128xf32> to vector<16x128xf32>
    %557 = vector.extract_strided_slice %554 {offsets = [2, 0], sizes = [16, 128], strides = [1, 1]} : vector<18x128xf32> to vector<16x128xf32>
    %558 = tpu.concatenate %555, %556, %557 in 1 : vector<16x128xf32>, vector<16x128xf32>, vector<16x128xf32> -> vector<16x384xf32>
    %559 = arith.truncf %558 : vector<16x384xf32> to vector<16x384xbf16>
    %c18_277 = arith.constant 18 : index
    %c0_278 = arith.constant 0 : index
    %c0_279 = arith.constant 0 : index
    %560 = vector.load %arg15[%c18_277, %c0_278, %c0_279] : memref<27x18x128xf32, #tpu.memory_space<vmem>>, vector<1x18x128xf32>
    %561 = vector.shape_cast %560 : vector<1x18x128xf32> to vector<18x128xf32>
    %562 = vector.extract_strided_slice %561 {offsets = [0, 0], sizes = [16, 128], strides = [1, 1]} : vector<18x128xf32> to vector<16x128xf32>
    %563 = vector.extract_strided_slice %561 {offsets = [1, 0], sizes = [16, 128], strides = [1, 1]} : vector<18x128xf32> to vector<16x128xf32>
    %564 = vector.extract_strided_slice %561 {offsets = [2, 0], sizes = [16, 128], strides = [1, 1]} : vector<18x128xf32> to vector<16x128xf32>
    %565 = tpu.concatenate %562, %563, %564 in 1 : vector<16x128xf32>, vector<16x128xf32>, vector<16x128xf32> -> vector<16x384xf32>
    %566 = arith.truncf %565 : vector<16x384xf32> to vector<16x384xbf16>
    %c21_280 = arith.constant 21 : index
    %c0_281 = arith.constant 0 : index
    %c0_282 = arith.constant 0 : index
    %567 = vector.load %arg15[%c21_280, %c0_281, %c0_282] : memref<27x18x128xf32, #tpu.memory_space<vmem>>, vector<1x18x128xf32>
    %568 = vector.shape_cast %567 : vector<1x18x128xf32> to vector<18x128xf32>
    %569 = vector.extract_strided_slice %568 {offsets = [0, 0], sizes = [16, 128], strides = [1, 1]} : vector<18x128xf32> to vector<16x128xf32>
    %570 = vector.extract_strided_slice %568 {offsets = [1, 0], sizes = [16, 128], strides = [1, 1]} : vector<18x128xf32> to vector<16x128xf32>
    %571 = vector.extract_strided_slice %568 {offsets = [2, 0], sizes = [16, 128], strides = [1, 1]} : vector<18x128xf32> to vector<16x128xf32>
    %572 = tpu.concatenate %569, %570, %571 in 1 : vector<16x128xf32>, vector<16x128xf32>, vector<16x128xf32> -> vector<16x384xf32>
    %573 = arith.truncf %572 : vector<16x384xf32> to vector<16x384xbf16>
    %c24_283 = arith.constant 24 : index
    %c0_284 = arith.constant 0 : index
    %c0_285 = arith.constant 0 : index
    %574 = vector.load %arg15[%c24_283, %c0_284, %c0_285] : memref<27x18x128xf32, #tpu.memory_space<vmem>>, vector<1x18x128xf32>
    %575 = vector.shape_cast %574 : vector<1x18x128xf32> to vector<18x128xf32>
    %576 = vector.extract_strided_slice %575 {offsets = [0, 0], sizes = [16, 128], strides = [1, 1]} : vector<18x128xf32> to vector<16x128xf32>
    %577 = vector.extract_strided_slice %575 {offsets = [1, 0], sizes = [16, 128], strides = [1, 1]} : vector<18x128xf32> to vector<16x128xf32>
    %578 = vector.extract_strided_slice %575 {offsets = [2, 0], sizes = [16, 128], strides = [1, 1]} : vector<18x128xf32> to vector<16x128xf32>
    %579 = tpu.concatenate %576, %577, %578 in 1 : vector<16x128xf32>, vector<16x128xf32>, vector<16x128xf32> -> vector<16x384xf32>
    %580 = arith.truncf %579 : vector<16x384xf32> to vector<16x384xbf16>
    %581 = tpu.concatenate %538, %545, %552, %559, %566, %573, %580 in 0 : vector<16x384xbf16>, vector<16x384xbf16>, vector<16x384xbf16>, vector<16x384xbf16>, vector<16x384xbf16>, vector<16x384xbf16>, vector<16x384xbf16> -> vector<112x384xbf16>
    %c3_286 = arith.constant 3 : index
    %c0_287 = arith.constant 0 : index
    %c0_288 = arith.constant 0 : index
    %582 = vector.load %arg8[%c3_286, %c0_287, %c0_288] : memref<5x384x256xbf16, #tpu.memory_space<vmem>>, vector<1x384x256xbf16>
    %583 = vector.shape_cast %582 : vector<1x384x256xbf16> to vector<384x256xbf16>
    %cst_289 = arith.constant dense<0.000000e+00> : vector<112x256xf32>
    %584 = tpu.matmul %581, %583, %cst_289 {dimension_numbers = #tpu.dot_dimension_numbers<[1], [0], [0], [1], [0, 0, 1, 1], [], []>} : vector<112x384xbf16>, vector<384x256xbf16>, vector<112x256xf32> -> vector<112x256xf32>
    %585 = arith.addf %531, %584 : vector<112x256xf32>
    %c0_290 = arith.constant 0 : index
    %c0_291 = arith.constant 0 : index
    %586 = vector.load %arg17[%c0_290, %c0_291] : memref<112x256xf32, #tpu.memory_space<vmem>>, vector<112x256xf32>
    tpu.vector_store %arg17[%c0_290, %c0_291], %585 {strides = array<i32>} : memref<112x256xf32, #tpu.memory_space<vmem>>, vector<112x256xf32>,
    %c0_292 = arith.constant 0 : index
    %c0_293 = arith.constant 0 : index
    %587 = vector.load %arg17[%c0_292, %c0_293] : memref<112x256xf32, #tpu.memory_space<vmem>>, vector<112x256xf32>
    %c8_294 = arith.constant 8 : index
    %c0_295 = arith.constant 0 : index
    %c0_296 = arith.constant 0 : index
    %588 = vector.load %arg15[%c8_294, %c0_295, %c0_296] : memref<27x18x128xf32, #tpu.memory_space<vmem>>, vector<1x18x128xf32>
    %589 = vector.shape_cast %588 : vector<1x18x128xf32> to vector<18x128xf32>
    %590 = vector.extract_strided_slice %589 {offsets = [0, 0], sizes = [16, 128], strides = [1, 1]} : vector<18x128xf32> to vector<16x128xf32>
    %591 = vector.extract_strided_slice %589 {offsets = [1, 0], sizes = [16, 128], strides = [1, 1]} : vector<18x128xf32> to vector<16x128xf32>
    %592 = vector.extract_strided_slice %589 {offsets = [2, 0], sizes = [16, 128], strides = [1, 1]} : vector<18x128xf32> to vector<16x128xf32>
    %593 = tpu.concatenate %590, %591, %592 in 1 : vector<16x128xf32>, vector<16x128xf32>, vector<16x128xf32> -> vector<16x384xf32>
    %594 = arith.truncf %593 : vector<16x384xf32> to vector<16x384xbf16>
    %c11_297 = arith.constant 11 : index
    %c0_298 = arith.constant 0 : index
    %c0_299 = arith.constant 0 : index
    %595 = vector.load %arg15[%c11_297, %c0_298, %c0_299] : memref<27x18x128xf32, #tpu.memory_space<vmem>>, vector<1x18x128xf32>
    %596 = vector.shape_cast %595 : vector<1x18x128xf32> to vector<18x128xf32>
    %597 = vector.extract_strided_slice %596 {offsets = [0, 0], sizes = [16, 128], strides = [1, 1]} : vector<18x128xf32> to vector<16x128xf32>
    %598 = vector.extract_strided_slice %596 {offsets = [1, 0], sizes = [16, 128], strides = [1, 1]} : vector<18x128xf32> to vector<16x128xf32>
    %599 = vector.extract_strided_slice %596 {offsets = [2, 0], sizes = [16, 128], strides = [1, 1]} : vector<18x128xf32> to vector<16x128xf32>
    %600 = tpu.concatenate %597, %598, %599 in 1 : vector<16x128xf32>, vector<16x128xf32>, vector<16x128xf32> -> vector<16x384xf32>
    %601 = arith.truncf %600 : vector<16x384xf32> to vector<16x384xbf16>
    %c14_300 = arith.constant 14 : index
    %c0_301 = arith.constant 0 : index
    %c0_302 = arith.constant 0 : index
    %602 = vector.load %arg15[%c14_300, %c0_301, %c0_302] : memref<27x18x128xf32, #tpu.memory_space<vmem>>, vector<1x18x128xf32>
    %603 = vector.shape_cast %602 : vector<1x18x128xf32> to vector<18x128xf32>
    %604 = vector.extract_strided_slice %603 {offsets = [0, 0], sizes = [16, 128], strides = [1, 1]} : vector<18x128xf32> to vector<16x128xf32>
    %605 = vector.extract_strided_slice %603 {offsets = [1, 0], sizes = [16, 128], strides = [1, 1]} : vector<18x128xf32> to vector<16x128xf32>
    %606 = vector.extract_strided_slice %603 {offsets = [2, 0], sizes = [16, 128], strides = [1, 1]} : vector<18x128xf32> to vector<16x128xf32>
    %607 = tpu.concatenate %604, %605, %606 in 1 : vector<16x128xf32>, vector<16x128xf32>, vector<16x128xf32> -> vector<16x384xf32>
    %608 = arith.truncf %607 : vector<16x384xf32> to vector<16x384xbf16>
    %c17_303 = arith.constant 17 : index
    %c0_304 = arith.constant 0 : index
    %c0_305 = arith.constant 0 : index
    %609 = vector.load %arg15[%c17_303, %c0_304, %c0_305] : memref<27x18x128xf32, #tpu.memory_space<vmem>>, vector<1x18x128xf32>
    %610 = vector.shape_cast %609 : vector<1x18x128xf32> to vector<18x128xf32>
    %611 = vector.extract_strided_slice %610 {offsets = [0, 0], sizes = [16, 128], strides = [1, 1]} : vector<18x128xf32> to vector<16x128xf32>
    %612 = vector.extract_strided_slice %610 {offsets = [1, 0], sizes = [16, 128], strides = [1, 1]} : vector<18x128xf32> to vector<16x128xf32>
    %613 = vector.extract_strided_slice %610 {offsets = [2, 0], sizes = [16, 128], strides = [1, 1]} : vector<18x128xf32> to vector<16x128xf32>
    %614 = tpu.concatenate %611, %612, %613 in 1 : vector<16x128xf32>, vector<16x128xf32>, vector<16x128xf32> -> vector<16x384xf32>
    %615 = arith.truncf %614 : vector<16x384xf32> to vector<16x384xbf16>
    %c20_306 = arith.constant 20 : index
    %c0_307 = arith.constant 0 : index
    %c0_308 = arith.constant 0 : index
    %616 = vector.load %arg15[%c20_306, %c0_307, %c0_308] : memref<27x18x128xf32, #tpu.memory_space<vmem>>, vector<1x18x128xf32>
    %617 = vector.shape_cast %616 : vector<1x18x128xf32> to vector<18x128xf32>
    %618 = vector.extract_strided_slice %617 {offsets = [0, 0], sizes = [16, 128], strides = [1, 1]} : vector<18x128xf32> to vector<16x128xf32>
    %619 = vector.extract_strided_slice %617 {offsets = [1, 0], sizes = [16, 128], strides = [1, 1]} : vector<18x128xf32> to vector<16x128xf32>
    %620 = vector.extract_strided_slice %617 {offsets = [2, 0], sizes = [16, 128], strides = [1, 1]} : vector<18x128xf32> to vector<16x128xf32>
    %621 = tpu.concatenate %618, %619, %620 in 1 : vector<16x128xf32>, vector<16x128xf32>, vector<16x128xf32> -> vector<16x384xf32>
    %622 = arith.truncf %621 : vector<16x384xf32> to vector<16x384xbf16>
    %c23_309 = arith.constant 23 : index
    %c0_310 = arith.constant 0 : index
    %c0_311 = arith.constant 0 : index
    %623 = vector.load %arg15[%c23_309, %c0_310, %c0_311] : memref<27x18x128xf32, #tpu.memory_space<vmem>>, vector<1x18x128xf32>
    %624 = vector.shape_cast %623 : vector<1x18x128xf32> to vector<18x128xf32>
    %625 = vector.extract_strided_slice %624 {offsets = [0, 0], sizes = [16, 128], strides = [1, 1]} : vector<18x128xf32> to vector<16x128xf32>
    %626 = vector.extract_strided_slice %624 {offsets = [1, 0], sizes = [16, 128], strides = [1, 1]} : vector<18x128xf32> to vector<16x128xf32>
    %627 = vector.extract_strided_slice %624 {offsets = [2, 0], sizes = [16, 128], strides = [1, 1]} : vector<18x128xf32> to vector<16x128xf32>
    %628 = tpu.concatenate %625, %626, %627 in 1 : vector<16x128xf32>, vector<16x128xf32>, vector<16x128xf32> -> vector<16x384xf32>
    %629 = arith.truncf %628 : vector<16x384xf32> to vector<16x384xbf16>
    %c26_312 = arith.constant 26 : index
    %c0_313 = arith.constant 0 : index
    %c0_314 = arith.constant 0 : index
    %630 = vector.load %arg15[%c26_312, %c0_313, %c0_314] : memref<27x18x128xf32, #tpu.memory_space<vmem>>, vector<1x18x128xf32>
    %631 = vector.shape_cast %630 : vector<1x18x128xf32> to vector<18x128xf32>
    %632 = vector.extract_strided_slice %631 {offsets = [0, 0], sizes = [16, 128], strides = [1, 1]} : vector<18x128xf32> to vector<16x128xf32>
    %633 = vector.extract_strided_slice %631 {offsets = [1, 0], sizes = [16, 128], strides = [1, 1]} : vector<18x128xf32> to vector<16x128xf32>
    %634 = vector.extract_strided_slice %631 {offsets = [2, 0], sizes = [16, 128], strides = [1, 1]} : vector<18x128xf32> to vector<16x128xf32>
    %635 = tpu.concatenate %632, %633, %634 in 1 : vector<16x128xf32>, vector<16x128xf32>, vector<16x128xf32> -> vector<16x384xf32>
    %636 = arith.truncf %635 : vector<16x384xf32> to vector<16x384xbf16>
    %637 = tpu.concatenate %594, %601, %608, %615, %622, %629, %636 in 0 : vector<16x384xbf16>, vector<16x384xbf16>, vector<16x384xbf16>, vector<16x384xbf16>, vector<16x384xbf16>, vector<16x384xbf16>, vector<16x384xbf16> -> vector<112x384xbf16>
    %c4_315 = arith.constant 4 : index
    %c0_316 = arith.constant 0 : index
    %c0_317 = arith.constant 0 : index
    %638 = vector.load %arg8[%c4_315, %c0_316, %c0_317] : memref<5x384x256xbf16, #tpu.memory_space<vmem>>, vector<1x384x256xbf16>
    %639 = vector.shape_cast %638 : vector<1x384x256xbf16> to vector<384x256xbf16>
    %cst_318 = arith.constant dense<0.000000e+00> : vector<112x256xf32>
    %640 = tpu.matmul %637, %639, %cst_318 {dimension_numbers = #tpu.dot_dimension_numbers<[1], [0], [0], [1], [0, 0, 1, 1], [], []>} : vector<112x384xbf16>, vector<384x256xbf16>, vector<112x256xf32> -> vector<112x256xf32>
    %641 = arith.addf %587, %640 : vector<112x256xf32>
    %c0_319 = arith.constant 0 : index
    %c0_320 = arith.constant 0 : index
    %642 = vector.load %arg17[%c0_319, %c0_320] : memref<112x256xf32, #tpu.memory_space<vmem>>, vector<112x256xf32>
    tpu.vector_store %arg17[%c0_319, %c0_320], %641 {strides = array<i32>} : memref<112x256xf32, #tpu.memory_space<vmem>>, vector<112x256xf32>,
    %c0_321 = arith.constant 0 : index
    %c0_322 = arith.constant 0 : index
    %643 = vector.load %arg17[%c0_321, %c0_322] : memref<112x256xf32, #tpu.memory_space<vmem>>, vector<112x256xf32>
    %c0_323 = arith.constant 0 : index
    %c0_324 = arith.constant 0 : index
    %644 = vector.load %arg9[%c0_323, %c0_324] : memref<1x256xf32, #tpu.memory_space<vmem>>, vector<1x256xf32>
    %645 = vector.broadcast %644 : vector<1x256xf32> to vector<112x256xf32>
    %646 = arith.mulf %643, %645 : vector<112x256xf32>
    %c0_325 = arith.constant 0 : index
    %c0_326 = arith.constant 0 : index
    %647 = vector.load %arg10[%c0_325, %c0_326] : memref<1x256xf32, #tpu.memory_space<vmem>>, vector<1x256xf32>
    %648 = vector.broadcast %647 : vector<1x256xf32> to vector<112x256xf32>
    %649 = arith.addf %646, %648 : vector<112x256xf32>
    %cst_327 = arith.constant 0.000000e+00 : f32
    %650 = vector.broadcast %cst_327 : f32 to vector<112x256xf32>
    %651 = arith.cmpf oge, %649, %650 : vector<112x256xf32>
    %cst_328 = arith.constant 0.00999999977 : f32
    %652 = vector.broadcast %cst_328 : f32 to vector<112x256xf32>
    %653 = arith.mulf %652, %649 : vector<112x256xf32>
    %654 = arith.select %651, %649, %653 : vector<112x256xi1>, vector<112x256xf32>
    %cst_329 = arith.constant 0.000000e+00 : f32
    %655 = vector.broadcast %cst_329 : f32 to vector<1x1xf32>
    %cst_330 = arith.constant 0.000000e+00 : f32
    %656 = vector.broadcast %cst_330 : f32 to vector<1x1xf32>
    %657 = vector.extract_strided_slice %654 {offsets = [0, 0], sizes = [16, 256], strides = [1, 1]} : vector<112x256xf32> to vector<16x256xf32>
    %658 = vector.extract_strided_slice %654 {offsets = [16, 0], sizes = [16, 256], strides = [1, 1]} : vector<112x256xf32> to vector<16x256xf32>
    %659 = arith.maximumf %657, %658 : vector<16x256xf32>
    %c0_331 = arith.constant 0 : index
    %c0_332 = arith.constant 0 : index
    %c0_333 = arith.constant 0 : index
    %660 = vector.load %arg11[%c0_331, %c0_332, %c0_333] : memref<2x48x256xf32, #tpu.memory_space<vmem>>, vector<1x16x256xf32>
    %661 = vector.shape_cast %660 : vector<1x16x256xf32> to vector<16x256xf32>
    %662 = arith.mulf %659, %661 : vector<16x256xf32>
    %cst_334 = arith.constant dense<0.000000e+00> : vector<16xf32>
    %663 = vector.multi_reduction <add>, %662, %cst_334 [1] : vector<16x256xf32> to vector<16xf32>
    %664 = vector.shape_cast %663 : vector<16xf32> to vector<16x1xf32>
    %cst_335 = arith.constant dense<0.000000e+00> : vector<1xf32>
    %665 = vector.multi_reduction <add>, %664, %cst_335 [0] : vector<16x1xf32> to vector<1xf32>
    %666 = vector.shape_cast %665 : vector<1xf32> to vector<1x1xf32>
    %667 = arith.addf %655, %666 : vector<1x1xf32>
    %c1_336 = arith.constant 1 : index
    %c0_337 = arith.constant 0 : index
    %c0_338 = arith.constant 0 : index
    %668 = vector.load %arg11[%c1_336, %c0_337, %c0_338] : memref<2x48x256xf32, #tpu.memory_space<vmem>>, vector<1x16x256xf32>
    %669 = vector.shape_cast %668 : vector<1x16x256xf32> to vector<16x256xf32>
    %670 = arith.mulf %659, %669 : vector<16x256xf32>
    %cst_339 = arith.constant dense<0.000000e+00> : vector<16xf32>
    %671 = vector.multi_reduction <add>, %670, %cst_339 [1] : vector<16x256xf32> to vector<16xf32>
    %672 = vector.shape_cast %671 : vector<16xf32> to vector<16x1xf32>
    %cst_340 = arith.constant dense<0.000000e+00> : vector<1xf32>
    %673 = vector.multi_reduction <add>, %672, %cst_340 [0] : vector<16x1xf32> to vector<1xf32>
    %674 = vector.shape_cast %673 : vector<1xf32> to vector<1x1xf32>
    %675 = arith.addf %656, %674 : vector<1x1xf32>
    %676 = vector.extract_strided_slice %654 {offsets = [32, 0], sizes = [16, 256], strides = [1, 1]} : vector<112x256xf32> to vector<16x256xf32>
    %677 = vector.extract_strided_slice %654 {offsets = [48, 0], sizes = [16, 256], strides = [1, 1]} : vector<112x256xf32> to vector<16x256xf32>
    %678 = arith.maximumf %676, %677 : vector<16x256xf32>
    %c0_341 = arith.constant 0 : index
    %c16_342 = arith.constant 16 : index
    %c0_343 = arith.constant 0 : index
    %679 = vector.load %arg11[%c0_341, %c16_342, %c0_343] : memref<2x48x256xf32, #tpu.memory_space<vmem>>, vector<1x16x256xf32>
    %680 = vector.shape_cast %679 : vector<1x16x256xf32> to vector<16x256xf32>
    %681 = arith.mulf %678, %680 : vector<16x256xf32>
    %cst_344 = arith.constant dense<0.000000e+00> : vector<16xf32>
    %682 = vector.multi_reduction <add>, %681, %cst_344 [1] : vector<16x256xf32> to vector<16xf32>
    %683 = vector.shape_cast %682 : vector<16xf32> to vector<16x1xf32>
    %cst_345 = arith.constant dense<0.000000e+00> : vector<1xf32>
    %684 = vector.multi_reduction <add>, %683, %cst_345 [0] : vector<16x1xf32> to vector<1xf32>
    %685 = vector.shape_cast %684 : vector<1xf32> to vector<1x1xf32>
    %686 = arith.addf %667, %685 : vector<1x1xf32>
    %c1_346 = arith.constant 1 : index
    %c16_347 = arith.constant 16 : index
    %c0_348 = arith.constant 0 : index
    %687 = vector.load %arg11[%c1_346, %c16_347, %c0_348] : memref<2x48x256xf32, #tpu.memory_space<vmem>>, vector<1x16x256xf32>
    %688 = vector.shape_cast %687 : vector<1x16x256xf32> to vector<16x256xf32>
    %689 = arith.mulf %678, %688 : vector<16x256xf32>
    %cst_349 = arith.constant dense<0.000000e+00> : vector<16xf32>
    %690 = vector.multi_reduction <add>, %689, %cst_349 [1] : vector<16x256xf32> to vector<16xf32>
    %691 = vector.shape_cast %690 : vector<16xf32> to vector<16x1xf32>
    %cst_350 = arith.constant dense<0.000000e+00> : vector<1xf32>
    %692 = vector.multi_reduction <add>, %691, %cst_350 [0] : vector<16x1xf32> to vector<1xf32>
    %693 = vector.shape_cast %692 : vector<1xf32> to vector<1x1xf32>
    %694 = arith.addf %675, %693 : vector<1x1xf32>
    %695 = vector.extract_strided_slice %654 {offsets = [64, 0], sizes = [16, 256], strides = [1, 1]} : vector<112x256xf32> to vector<16x256xf32>
    %696 = vector.extract_strided_slice %654 {offsets = [80, 0], sizes = [16, 256], strides = [1, 1]} : vector<112x256xf32> to vector<16x256xf32>
    %697 = arith.maximumf %695, %696 : vector<16x256xf32>
    %c0_351 = arith.constant 0 : index
    %c32 = arith.constant 32 : index
    %c0_352 = arith.constant 0 : index
    %698 = vector.load %arg11[%c0_351, %c32, %c0_352] : memref<2x48x256xf32, #tpu.memory_space<vmem>>, vector<1x16x256xf32>
    %699 = vector.shape_cast %698 : vector<1x16x256xf32> to vector<16x256xf32>
    %700 = arith.mulf %697, %699 : vector<16x256xf32>
    %cst_353 = arith.constant dense<0.000000e+00> : vector<16xf32>
    %701 = vector.multi_reduction <add>, %700, %cst_353 [1] : vector<16x256xf32> to vector<16xf32>
    %702 = vector.shape_cast %701 : vector<16xf32> to vector<16x1xf32>
    %cst_354 = arith.constant dense<0.000000e+00> : vector<1xf32>
    %703 = vector.multi_reduction <add>, %702, %cst_354 [0] : vector<16x1xf32> to vector<1xf32>
    %704 = vector.shape_cast %703 : vector<1xf32> to vector<1x1xf32>
    %705 = arith.addf %686, %704 : vector<1x1xf32>
    %c1_355 = arith.constant 1 : index
    %c32_356 = arith.constant 32 : index
    %c0_357 = arith.constant 0 : index
    %706 = vector.load %arg11[%c1_355, %c32_356, %c0_357] : memref<2x48x256xf32, #tpu.memory_space<vmem>>, vector<1x16x256xf32>
    %707 = vector.shape_cast %706 : vector<1x16x256xf32> to vector<16x256xf32>
    %708 = arith.mulf %697, %707 : vector<16x256xf32>
    %cst_358 = arith.constant dense<0.000000e+00> : vector<16xf32>
    %709 = vector.multi_reduction <add>, %708, %cst_358 [1] : vector<16x256xf32> to vector<16xf32>
    %710 = vector.shape_cast %709 : vector<16xf32> to vector<16x1xf32>
    %cst_359 = arith.constant dense<0.000000e+00> : vector<1xf32>
    %711 = vector.multi_reduction <add>, %710, %cst_359 [0] : vector<16x1xf32> to vector<1xf32>
    %712 = vector.shape_cast %711 : vector<1xf32> to vector<1x1xf32>
    %713 = arith.addf %694, %712 : vector<1x1xf32>
    %714 = tpu.iota {dimensions = array<i32: 1>} : vector<1x128xi32>
    %c0_i32 = arith.constant 0 : i32
    %715 = vector.broadcast %c0_i32 : i32 to vector<1x128xi32>
    %716 = arith.cmpi eq, %714, %715 : vector<1x128xi32>
    %c1_i32 = arith.constant 1 : i32
    %717 = vector.broadcast %c1_i32 : i32 to vector<1x128xi32>
    %718 = arith.cmpi eq, %714, %717 : vector<1x128xi32>
    %cst_360 = arith.constant 0.000000e+00 : f32
    %719 = vector.shape_cast %713 : vector<1x1xf32> to vector<1x1xf32>
    %720 = vector.broadcast %719 : vector<1x1xf32> to vector<1x128xf32>
    %721 = vector.broadcast %cst_360 : f32 to vector<1x128xf32>
    %722 = arith.select %718, %720, %721 : vector<1x128xi1>, vector<1x128xf32>
    %723 = vector.shape_cast %705 : vector<1x1xf32> to vector<1x1xf32>
    %724 = vector.broadcast %723 : vector<1x1xf32> to vector<1x128xf32>
    %725 = arith.select %716, %724, %722 : vector<1x128xi1>, vector<1x128xf32>
    %c0_361 = arith.constant 0 : index
    %c0_362 = arith.constant 0 : index
    %726 = vector.load %arg12[%c0_361, %c0_362] : memref<1x128xf32, #tpu.memory_space<vmem>>, vector<1x128xf32>
    %727 = arith.addf %725, %726 : vector<1x128xf32>
    %c0_363 = arith.constant 0 : index
    %c0_364 = arith.constant 0 : index
    %c0_365 = arith.constant 0 : index
    %728 = vector.load %arg13[%c0_363, %c0_364, %c0_365] : memref<1x1x128xf32, #tpu.memory_space<vmem>>, vector<1x1x128xf32>
    %729 = vector.shape_cast %728 : vector<1x1x128xf32> to vector<1x128xf32>
    %730 = vector.shape_cast %727 : vector<1x128xf32> to vector<1x1x128xf32>
    tpu.vector_store %arg13[%c0_363, %c0_364, %c0_365], %730 {strides = array<i32>} : memref<1x1x128xf32, #tpu.memory_space<vmem>>, vector<1x1x128xf32>,
    return
  }
  func.func @transform_0(%arg0: i32) -> (i32, i32, i32) {
    %c0_i32 = arith.constant 0 : i32
    %c0_i32_0 = arith.constant 0 : i32
    %c0_i32_1 = arith.constant 0 : i32
    return %arg0, %c0_i32, %c0_i32_0 : i32, i32, i32
  }
  func.func @transform_1(%arg0: i32) -> (i32, i32) {
    %c0_i32 = arith.constant 0 : i32
    %c0_i32_0 = arith.constant 0 : i32
    %c0_i32_1 = arith.constant 0 : i32
    return %c0_i32, %c0_i32_0 : i32, i32
  }
  func.func @transform_2(%arg0: i32) -> (i32, i32) {
    %c0_i32 = arith.constant 0 : i32
    %c0_i32_0 = arith.constant 0 : i32
    %c0_i32_1 = arith.constant 0 : i32
    return %c0_i32, %c0_i32_0 : i32, i32
  }
  func.func @transform_3(%arg0: i32) -> (i32, i32) {
    %c0_i32 = arith.constant 0 : i32
    %c0_i32_0 = arith.constant 0 : i32
    %c0_i32_1 = arith.constant 0 : i32
    return %c0_i32, %c0_i32_0 : i32, i32
  }
  func.func @transform_4(%arg0: i32) -> (i32, i32, i32) {
    %c0_i32 = arith.constant 0 : i32
    %c0_i32_0 = arith.constant 0 : i32
    %c0_i32_1 = arith.constant 0 : i32
    %c0_i32_2 = arith.constant 0 : i32
    return %c0_i32, %c0_i32_0, %c0_i32_1 : i32, i32, i32
  }
  func.func @transform_5(%arg0: i32) -> (i32, i32) {
    %c0_i32 = arith.constant 0 : i32
    %c0_i32_0 = arith.constant 0 : i32
    %c0_i32_1 = arith.constant 0 : i32
    return %c0_i32, %c0_i32_0 : i32, i32
  }
  func.func @transform_6(%arg0: i32) -> (i32, i32) {
    %c0_i32 = arith.constant 0 : i32
    %c0_i32_0 = arith.constant 0 : i32
    %c0_i32_1 = arith.constant 0 : i32
    return %c0_i32, %c0_i32_0 : i32, i32
  }
  func.func @transform_7(%arg0: i32) -> (i32, i32, i32) {
    %c0_i32 = arith.constant 0 : i32
    %c0_i32_0 = arith.constant 0 : i32
    %c0_i32_1 = arith.constant 0 : i32
    %c0_i32_2 = arith.constant 0 : i32
    return %c0_i32, %c0_i32_0, %c0_i32_1 : i32, i32, i32
  }
  func.func @transform_8(%arg0: i32) -> (i32, i32) {
    %c0_i32 = arith.constant 0 : i32
    %c0_i32_0 = arith.constant 0 : i32
    %c0_i32_1 = arith.constant 0 : i32
    return %c0_i32, %c0_i32_0 : i32, i32
  }
  func.func @transform_9(%arg0: i32) -> (i32, i32) {
    %c0_i32 = arith.constant 0 : i32
    %c0_i32_0 = arith.constant 0 : i32
    %c0_i32_1 = arith.constant 0 : i32
    return %c0_i32, %c0_i32_0 : i32, i32
  }
  func.func @transform_10(%arg0: i32) -> (i32, i32, i32) {
    %c0_i32 = arith.constant 0 : i32
    %c0_i32_0 = arith.constant 0 : i32
    %c0_i32_1 = arith.constant 0 : i32
    %c0_i32_2 = arith.constant 0 : i32
    return %c0_i32, %c0_i32_0, %c0_i32_1 : i32, i32, i32
  }
  func.func @transform_11(%arg0: i32) -> (i32, i32) {
    %c0_i32 = arith.constant 0 : i32
    %c0_i32_0 = arith.constant 0 : i32
    %c0_i32_1 = arith.constant 0 : i32
    return %c0_i32, %c0_i32_0 : i32, i32
  }
  func.func @transform_12(%arg0: i32) -> (i32, i32, i32) {
    %c0_i32 = arith.constant 0 : i32
    %c0_i32_0 = arith.constant 0 : i32
    %c0_i32_1 = arith.constant 0 : i32
    return %arg0, %c0_i32, %c0_i32_0 : i32, i32, i32
  }
}

</mosaic_0001>

<llo_original>
// kernel: net2_forward.1
$region0: #{net2_forward.1}
  #allocation0 [shape = 'u32[]', space=smem, size = 0x4, offset = 0x4, fixed_abs, tag = 'smem constant byte address 0x4 - core index']
  #allocation1 [shape = 'u32[144,128]{1,0:T(1,128)}', space=vmem, size = 0x12000, scoped, tag = 'internal scratch']
  #allocation2 [shape = 'f32[29,18,64]{2,1,0:T(8,128)}', space=vmem, size = 0x57000, scoped, tag = 'scratch operand']
  #allocation3 [shape = 'f32[27,18,128]{2,1,0:T(8,128)}', space=vmem, size = 0x51000, scoped, tag = 'scratch operand']
  #allocation4 [shape = 'f32[112,128]{1,0:T(8,128)}', space=vmem, size = 0xe000, scoped, tag = 'scratch operand']
  #allocation5 [shape = 'f32[112,256]{1,0:T(8,128)}', space=vmem, size = 0x1c000, scoped, tag = 'scratch operand']
  %s0 = inlined_call_operand.vmem [shape: bf16[2,176,15], index: 0, kind: input, shape index: {}]
  %s1 = inlined_call_operand.vmem [shape: bf16[15,64], index: 1, kind: input, shape index: {}]
  %s2 = inlined_call_operand.vmem [shape: f32[1,64], index: 2, kind: input, shape index: {}]
  %s3 = inlined_call_operand.vmem [shape: f32[1,64], index: 3, kind: input, shape index: {}]
  %s4 = inlined_call_operand.vmem [shape: bf16[5,192,128], index: 4, kind: input, shape index: {}]
  %s5 = inlined_call_operand.vmem [shape: f32[1,128], index: 5, kind: input, shape index: {}]
  %s6 = inlined_call_operand.vmem [shape: f32[1,128], index: 6, kind: input, shape index: {}]
  %s7 = inlined_call_operand.hbm [shape: bf16[5,384,256], index: 7, kind: input, shape index: {}]
  %s8 = inlined_call_operand.vmem [shape: f32[1,256], index: 8, kind: input, shape index: {}]
  %s9 = inlined_call_operand.vmem [shape: f32[1,256], index: 9, kind: input, shape index: {}]
  %s10 = inlined_call_operand.vmem [shape: f32[2,48,256], index: 10, kind: input, shape index: {}]
  %s11 = inlined_call_operand.vmem [shape: f32[1,128], index: 11, kind: input, shape index: {}]
  %s12 = inlined_call_operand.hbm [shape: f32[2,1,128], index: 12, kind: output, shape index: {}]
  %s13 = sld [smem:[#allocation0]]
  $region85: #{net2_forward.1} parent=0
    _
  %s15 = ssub.s32 1, %s13
  %s16 = scalar_select 0, %s15, %s13
  $region1: #{net2_forward.1} parent=0
    #allocation6 [shape = 'u8[983040]{0}', space=vmem, size = 0xf0000, scoped, tag = 'input window, operand 7, single buffered']
    #allocation7 [shape = 's32[2]{0}', space=sflag, size = 0x8, scoped, tag = 'scoped memory for net2_forward.1']
    #allocation8 [shape = 's32[2]{0}', space=sflag, size = 0x8, scoped, tag = 'scoped memory for net2_forward.1']
    #allocation9 [shape = 'u8[1024]{0}', space=vmem, size = 0x400, scoped, tag = 'output window, operand 0']
    %17 = vsyncpa [#allocation7], 0
    %18 = vsyncpa [#allocation8], 0
    %s19 = scalar_lea.sflag [#allocation8], 1
    %20 = vsyncpa %s19, 0
    loop: start=0, step=1, limit=4
    $region2: #{net2_forward.1} parent=1 // loop_pre_header
      _
    $region3: #{net2_forward.1} parent=1 // loop_header
      %s22 = sphi 0, %s26
      %p23 = scmp.ge.s32.totalorder %s22, 4
      %s32 = sphi 0, %s34
      %s35 = sphi 0, %s32
      %s36 = sphi 0, %s35
      %s52 = sphi 0, %s36
      %s56 = sphi 0, %s56
      %s58 = sphi 0, %s56
      %s59 = sphi 0, %s58
      %s73 = sphi 0, %s59
      %s77 = sphi 0, %s77
      %s79 = sphi 0, %s77
      %s80 = sphi 0, %s79
      %s94 = sphi 0, %s80
      %s98 = sphi 0, %s98
      %s100 = sphi 0, %s98
      %s101 = sphi 0, %s100
      %s115 = sphi 0, %s101
      %s119 = sphi 0, %s119
      %s121 = sphi 0, %s119
      %s122 = sphi 0, %s121
      %s136 = sphi 0, %s122
      %s140 = sphi 0, %s140
      %s142 = sphi 0, %s140
      %s143 = sphi 0, %s142
      %s157 = sphi 0, %s143
      %s161 = sphi 0, %s161
      %s163 = sphi 0, %s161
      %s164 = sphi 0, %s163
      %s178 = sphi 0, %s164
      %s182 = sphi 0, %s182
      %s184 = sphi 0, %s182
      %s185 = sphi 0, %s184
      %s199 = sphi 0, %s185
      %s203 = sphi 0, %s203
      %s205 = sphi 0, %s203
      %s206 = sphi 0, %s205
      %s220 = sphi 0, %s206
      %s224 = sphi 0, %s224
      %s226 = sphi 0, %s224
      %s227 = sphi 0, %s226
      %s241 = sphi 0, %s227
      %s245 = sphi 0, %s245
      %s247 = sphi 0, %s245
      %s248 = sphi 0, %s247
      %s262 = sphi 0, %s248
      %s266 = sphi 0, %s266
      %s268 = sphi 0, %s266
      %s269 = sphi 0, %s268
      %s283 = sphi 0, %s269
      %s289 = sphi 0, %s291
      %s292 = sphi 0, %s289
      %s293 = sphi 0, %s292
      %s309 = sphi 0, %s293
    $region4: #{net2_forward.1} parent=1 // loop_header_branch
      %25 = sbr.rel (%p23) target = $region8
    $region5: #{net2_forward.1} parent=1 // loop_body
      %s27 = ssub.s32 %s22, 1
      %s28 = ssub.s32 %s22, 2
      %s29 = sadd.s32 %s22, 1
      %s30 = ssub.s32 %s22, %s29
      %p31 = scmp.eq.s32.totalorder %s30, 0
      %s33 = sadd.s32 %s32, 1
      %s34 = scalar_select %p31, %s32, %s33
      %p37 = pneg %p31
      %p38 = scmp.eq.s32.totalorder %s22, 1
      %p39 = por %p37, %p38
      %p40 = scmp.ne.s32.totalorder %s32, %s35
      %p41 = scmp.eq.s32.totalorder %s22, 0
      %p42 = por %p40, %p41
      %p43 = scmp.ne.s32.totalorder %s32, %s35
      %p44 = scmp.eq.s32.totalorder %s27, 1
      %p45 = por %p43, %p44
      %p46 = scmp.ne.s32.totalorder %s35, %s36
      %p47 = scmp.eq.s32.totalorder %s27, 0
      %p48 = por %p46, %p47
      %p49 = scmp.ne.s32.totalorder %s35, %s36
      %p50 = scmp.eq.s32.totalorder %s28, 1
      %p51 = por %p49, %p50
      %p53 = scmp.ne.s32.totalorder %s36, %s52
      %p54 = scmp.eq.s32.totalorder %s28, 0
      %p55 = por %p53, %p54
      %s57 = sadd.s32 %s56, 1
      %p60 = scmp.eq.s32.totalorder %s22, 1
      %p61 = scmp.ne.s32.totalorder %s56, %s58
      %p62 = scmp.eq.s32.totalorder %s22, 0
      %p63 = por %p61, %p62
      %p64 = scmp.ne.s32.totalorder %s56, %s58
      %p65 = scmp.eq.s32.totalorder %s27, 1
      %p66 = por %p64, %p65
      %p67 = scmp.ne.s32.totalorder %s58, %s59
      %p68 = scmp.eq.s32.totalorder %s27, 0
      %p69 = por %p67, %p68
      %p70 = scmp.ne.s32.totalorder %s58, %s59
      %p71 = scmp.eq.s32.totalorder %s28, 1
      %p72 = por %p70, %p71
      %p74 = scmp.ne.s32.totalorder %s59, %s73
      %p75 = scmp.eq.s32.totalorder %s28, 0
      %p76 = por %p74, %p75
      %s78 = sadd.s32 %s77, 1
      %p81 = scmp.eq.s32.totalorder %s22, 1
      %p82 = scmp.ne.s32.totalorder %s77, %s79
      %p83 = scmp.eq.s32.totalorder %s22, 0
      %p84 = por %p82, %p83
      %p85 = scmp.ne.s32.totalorder %s77, %s79
      %p86 = scmp.eq.s32.totalorder %s27, 1
      %p87 = por %p85, %p86
      %p88 = scmp.ne.s32.totalorder %s79, %s80
      %p89 = scmp.eq.s32.totalorder %s27, 0
      %p90 = por %p88, %p89
      %p91 = scmp.ne.s32.totalorder %s79, %s80
      %p92 = scmp.eq.s32.totalorder %s28, 1
      %p93 = por %p91, %p92
      %p95 = scmp.ne.s32.totalorder %s80, %s94
      %p96 = scmp.eq.s32.totalorder %s28, 0
      %p97 = por %p95, %p96
      %s99 = sadd.s32 %s98, 1
      %p102 = scmp.eq.s32.totalorder %s22, 1
      %p103 = scmp.ne.s32.totalorder %s98, %s100
      %p104 = scmp.eq.s32.totalorder %s22, 0
      %p105 = por %p103, %p104
      %p106 = scmp.ne.s32.totalorder %s98, %s100
      %p107 = scmp.eq.s32.totalorder %s27, 1
      %p108 = por %p106, %p107
      %p109 = scmp.ne.s32.totalorder %s100, %s101
      %p110 = scmp.eq.s32.totalorder %s27, 0
      %p111 = por %p109, %p110
      %p112 = scmp.ne.s32.totalorder %s100, %s101
      %p113 = scmp.eq.s32.totalorder %s28, 1
      %p114 = por %p112, %p113
      %p116 = scmp.ne.s32.totalorder %s101, %s115
      %p117 = scmp.eq.s32.totalorder %s28, 0
      %p118 = por %p116, %p117
      %s120 = sadd.s32 %s119, 1
      %p123 = scmp.eq.s32.totalorder %s22, 1
      %p124 = scmp.ne.s32.totalorder %s119, %s121
      %p125 = scmp.eq.s32.totalorder %s22, 0
      %p126 = por %p124, %p125
      %p127 = scmp.ne.s32.totalorder %s119, %s121
      %p128 = scmp.eq.s32.totalorder %s27, 1
      %p129 = por %p127, %p128
      %p130 = scmp.ne.s32.totalorder %s121, %s122
      %p131 = scmp.eq.s32.totalorder %s27, 0
      %p132 = por %p130, %p131
      %p133 = scmp.ne.s32.totalorder %s121, %s122
      %p134 = scmp.eq.s32.totalorder %s28, 1
      %p135 = por %p133, %p134
      %p137 = scmp.ne.s32.totalorder %s122, %s136
      %p138 = scmp.eq.s32.totalorder %s28, 0
      %p139 = por %p137, %p138
      %s141 = sadd.s32 %s140, 1
      %p144 = scmp.eq.s32.totalorder %s22, 1
      %p145 = scmp.ne.s32.totalorder %s140, %s142
      %p146 = scmp.eq.s32.totalorder %s22, 0
      %p147 = por %p145, %p146
      %p148 = scmp.ne.s32.totalorder %s140, %s142
      %p149 = scmp.eq.s32.totalorder %s27, 1
      %p150 = por %p148, %p149
      %p151 = scmp.ne.s32.totalorder %s142, %s143
      %p152 = scmp.eq.s32.totalorder %s27, 0
      %p153 = por %p151, %p152
      %p154 = scmp.ne.s32.totalorder %s142, %s143
      %p155 = scmp.eq.s32.totalorder %s28, 1
      %p156 = por %p154, %p155
      %p158 = scmp.ne.s32.totalorder %s143, %s157
      %p159 = scmp.eq.s32.totalorder %s28, 0
      %p160 = por %p158, %p159
      %s162 = sadd.s32 %s161, 1
      %p165 = scmp.eq.s32.totalorder %s22, 1
      %p166 = scmp.ne.s32.totalorder %s161, %s163
      %p167 = scmp.eq.s32.totalorder %s22, 0
      %p168 = por %p166, %p167
      %p169 = scmp.ne.s32.totalorder %s161, %s163
      %p170 = scmp.eq.s32.totalorder %s27, 1
      %p171 = por %p169, %p170
      %p172 = scmp.ne.s32.totalorder %s163, %s164
      %p173 = scmp.eq.s32.totalorder %s27, 0
      %p174 = por %p172, %p173
      %p175 = scmp.ne.s32.totalorder %s163, %s164
      %p176 = scmp.eq.s32.totalorder %s28, 1
      %p177 = por %p175, %p176
      %p179 = scmp.ne.s32.totalorder %s164, %s178
      %p180 = scmp.eq.s32.totalorder %s28, 0
      %p181 = por %p179, %p180
      %s183 = sadd.s32 %s182, 1
      %p186 = scmp.eq.s32.totalorder %s22, 1
      %p187 = scmp.ne.s32.totalorder %s182, %s184
      %p188 = scmp.eq.s32.totalorder %s22, 0
      %p189 = por %p187, %p188
      %p190 = scmp.ne.s32.totalorder %s182, %s184
      %p191 = scmp.eq.s32.totalorder %s27, 1
      %p192 = por %p190, %p191
      %p193 = scmp.ne.s32.totalorder %s184, %s185
      %p194 = scmp.eq.s32.totalorder %s27, 0
      %p195 = por %p193, %p194
      %p196 = scmp.ne.s32.totalorder %s184, %s185
      %p197 = scmp.eq.s32.totalorder %s28, 1
      %p198 = por %p196, %p197
      %p200 = scmp.ne.s32.totalorder %s185, %s199
      %p201 = scmp.eq.s32.totalorder %s28, 0
      %p202 = por %p200, %p201
      %s204 = sadd.s32 %s203, 1
      %p207 = scmp.eq.s32.totalorder %s22, 1
      %p208 = scmp.ne.s32.totalorder %s203, %s205
      %p209 = scmp.eq.s32.totalorder %s22, 0
      %p210 = por %p208, %p209
      %p211 = scmp.ne.s32.totalorder %s203, %s205
      %p212 = scmp.eq.s32.totalorder %s27, 1
      %p213 = por %p211, %p212
      %p214 = scmp.ne.s32.totalorder %s205, %s206
      %p215 = scmp.eq.s32.totalorder %s27, 0
      %p216 = por %p214, %p215
      %p217 = scmp.ne.s32.totalorder %s205, %s206
      %p218 = scmp.eq.s32.totalorder %s28, 1
      %p219 = por %p217, %p218
      %p221 = scmp.ne.s32.totalorder %s206, %s220
      %p222 = scmp.eq.s32.totalorder %s28, 0
      %p223 = por %p221, %p222
      %s225 = sadd.s32 %s224, 1
      %p228 = scmp.eq.s32.totalorder %s22, 1
      %p229 = scmp.ne.s32.totalorder %s224, %s226
      %p230 = scmp.eq.s32.totalorder %s22, 0
      %p231 = por %p229, %p230
      %p232 = scmp.ne.s32.totalorder %s224, %s226
      %p233 = scmp.eq.s32.totalorder %s27, 1
      %p234 = por %p232, %p233
      %p235 = scmp.ne.s32.totalorder %s226, %s227
      %p236 = scmp.eq.s32.totalorder %s27, 0
      %p237 = por %p235, %p236
      %p238 = scmp.ne.s32.totalorder %s226, %s227
      %p239 = scmp.eq.s32.totalorder %s28, 1
      %p240 = por %p238, %p239
      %p242 = scmp.ne.s32.totalorder %s227, %s241
      %p243 = scmp.eq.s32.totalorder %s28, 0
      %p244 = por %p242, %p243
      %s246 = sadd.s32 %s245, 1
      %p249 = scmp.eq.s32.totalorder %s22, 1
      %p250 = scmp.ne.s32.totalorder %s245, %s247
      %p251 = scmp.eq.s32.totalorder %s22, 0
      %p252 = por %p250, %p251
      %p253 = scmp.ne.s32.totalorder %s245, %s247
      %p254 = scmp.eq.s32.totalorder %s27, 1
      %p255 = por %p253, %p254
      %p256 = scmp.ne.s32.totalorder %s247, %s248
      %p257 = scmp.eq.s32.totalorder %s27, 0
      %p258 = por %p256, %p257
      %p259 = scmp.ne.s32.totalorder %s247, %s248
      %p260 = scmp.eq.s32.totalorder %s28, 1
      %p261 = por %p259, %p260
      %p263 = scmp.ne.s32.totalorder %s248, %s262
      %p264 = scmp.eq.s32.totalorder %s28, 0
      %p265 = por %p263, %p264
      %s267 = sadd.s32 %s266, 1
      %p270 = scmp.eq.s32.totalorder %s22, 1
      %p271 = scmp.ne.s32.totalorder %s266, %s268
      %p272 = scmp.eq.s32.totalorder %s22, 0
      %p273 = por %p271, %p272
      %p274 = scmp.ne.s32.totalorder %s266, %s268
      %p275 = scmp.eq.s32.totalorder %s27, 1
      %p276 = por %p274, %p275
      %p277 = scmp.ne.s32.totalorder %s268, %s269
      %p278 = scmp.eq.s32.totalorder %s27, 0
      %p279 = por %p277, %p278
      %p280 = scmp.ne.s32.totalorder %s268, %s269
      %p281 = scmp.eq.s32.totalorder %s28, 1
      %p282 = por %p280, %p281
      %p284 = scmp.ne.s32.totalorder %s269, %s283
      %p285 = scmp.eq.s32.totalorder %s28, 0
      %p286 = por %p284, %p285
      %s287 = ssub.s32 %s22, %s29
      %p288 = scmp.eq.s32.totalorder %s287, 0
      %s290 = sadd.s32 %s289, 1
      %s291 = scalar_select %p288, %s289, %s290
      %p294 = pneg %p288
      %p295 = scmp.eq.s32.totalorder %s22, 1
      %p296 = por %p294, %p295
      %p297 = scmp.ne.s32.totalorder %s289, %s292
      %p298 = scmp.eq.s32.totalorder %s22, 0
      %p299 = por %p297, %p298
      %p300 = scmp.ne.s32.totalorder %s289, %s292
      %p301 = scmp.eq.s32.totalorder %s27, 1
      %p302 = por %p300, %p301
      %p303 = scmp.ne.s32.totalorder %s292, %s293
      %p304 = scmp.eq.s32.totalorder %s27, 0
      %p305 = por %p303, %p304
      %p306 = scmp.ne.s32.totalorder %s292, %s293
      %p307 = scmp.eq.s32.totalorder %s28, 1
      %p308 = por %p306, %p307
      %p310 = scmp.ne.s32.totalorder %s293, %s309
      %p311 = scmp.eq.s32.totalorder %s28, 0
      %p312 = por %p310, %p311
      %p313 = scmp.le.s32.totalorder 1, %s22
      %p314 = scmp.lt.s32.totalorder %s22, 3
      %p315 = pnand %p313, %p314
      %p316 = pneg %p315
      // Predicated region
      $region9: #{net2_forward.1} parent=5 // pred_check
        _
      $region10: #{net2_forward.1} parent=5 // pred_check_branch
        %318 = sbr.rel (%p315) target = $region12
      $region11: #{net2_forward.1} parent=5 // pred_region
        %s319 = ssub.s32 %s22, 1
        // Predicated region
        $region13: #{net2_forward.1} parent=11 // pred_check
          %p320 = pneg %p69
        $region14: #{net2_forward.1} parent=11 // pred_check_branch
          %322 = sbr.rel (%p320) target = $region16
        $region15: #{net2_forward.1} parent=11 // pred_region
          _
        $region16: #{net2_forward.1} parent=11 // pred_fallthru
          _
        // Predicated region
        $region17: #{net2_forward.1} parent=11 // pred_check
          %p323 = pneg %p90
        $region18: #{net2_forward.1} parent=11 // pred_check_branch
          %325 = sbr.rel (%p323) target = $region20
        $region19: #{net2_forward.1} parent=11 // pred_region
          _
        $region20: #{net2_forward.1} parent=11 // pred_fallthru
          _
        // Predicated region
        $region21: #{net2_forward.1} parent=11 // pred_check
          %p326 = pneg %p111
        $region22: #{net2_forward.1} parent=11 // pred_check_branch
          %328 = sbr.rel (%p326) target = $region24
        $region23: #{net2_forward.1} parent=11 // pred_region
          _
        $region24: #{net2_forward.1} parent=11 // pred_fallthru
          _
        // Predicated region
        $region25: #{net2_forward.1} parent=11 // pred_check
          %p329 = pneg %p132
        $region26: #{net2_forward.1} parent=11 // pred_check_branch
          %331 = sbr.rel (%p329) target = $region28
        $region27: #{net2_forward.1} parent=11 // pred_region
          _
        $region28: #{net2_forward.1} parent=11 // pred_fallthru
          _
        // Predicated region
        $region29: #{net2_forward.1} parent=11 // pred_check
          %p332 = pneg %p153
        $region30: #{net2_forward.1} parent=11 // pred_check_branch
          %334 = sbr.rel (%p332) target = $region32
        $region31: #{net2_forward.1} parent=11 // pred_region
          _
        $region32: #{net2_forward.1} parent=11 // pred_fallthru
          _
        // Predicated region
        $region33: #{net2_forward.1} parent=11 // pred_check
          %p335 = pneg %p174
        $region34: #{net2_forward.1} parent=11 // pred_check_branch
          %337 = sbr.rel (%p335) target = $region36
        $region35: #{net2_forward.1} parent=11 // pred_region
          _
        $region36: #{net2_forward.1} parent=11 // pred_fallthru
          _
        // Predicated region
        $region37: #{net2_forward.1} parent=11 // pred_check
          %p338 = pneg %p195
        $region38: #{net2_forward.1} parent=11 // pred_check_branch
          %340 = sbr.rel (%p338) target = $region40
        $region39: #{net2_forward.1} parent=11 // pred_region
          %s342 = ssub.s32 30720, 30720
          %343 = vsyncadd [#allocation7], %s342
          %s344 = sshll.u32 [#allocation6], 4
          %s345 = int_to_ptr.vmem [resolvable:$true] %s344
          %350 = dma.hbm_to_vmem [thread:$0]  %s7, 30720, %s345, [#allocation7], 128, 128, 8
        $region40: #{net2_forward.1} parent=11 // pred_fallthru
          _
        // Predicated region
        $region41: #{net2_forward.1} parent=11 // pred_check
          %p351 = pneg %p216
        $region42: #{net2_forward.1} parent=11 // pred_check_branch
          %353 = sbr.rel (%p351) target = $region44
        $region43: #{net2_forward.1} parent=11 // pred_region
          _
        $region44: #{net2_forward.1} parent=11 // pred_fallthru
          _
        // Predicated region
        $region45: #{net2_forward.1} parent=11 // pred_check
          %p354 = pneg %p237
        $region46: #{net2_forward.1} parent=11 // pred_check_branch
          %356 = sbr.rel (%p354) target = $region48
        $region47: #{net2_forward.1} parent=11 // pred_region
          _
        $region48: #{net2_forward.1} parent=11 // pred_fallthru
          _
        // Predicated region
        $region49: #{net2_forward.1} parent=11 // pred_check
          %p357 = pneg %p258
        $region50: #{net2_forward.1} parent=11 // pred_check_branch
          %359 = sbr.rel (%p357) target = $region52
        $region51: #{net2_forward.1} parent=11 // pred_region
          _
        $region52: #{net2_forward.1} parent=11 // pred_fallthru
          _
        // Predicated region
        $region53: #{net2_forward.1} parent=11 // pred_check
          %p360 = pneg %p279
        $region54: #{net2_forward.1} parent=11 // pred_check_branch
          %362 = sbr.rel (%p360) target = $region56
        $region55: #{net2_forward.1} parent=11 // pred_region
          _
        $region56: #{net2_forward.1} parent=11 // pred_fallthru
          _
      $region12: #{net2_forward.1} parent=5 // pred_fallthru
        _
      %p363 = scmp.lt.s32.totalorder %s22, 2
      // Predicated region
      $region57: #{net2_forward.1} parent=5 // pred_check
        %p364 = pneg %p363
      $region58: #{net2_forward.1} parent=5 // pred_check_branch
        %366 = sbr.rel (%p364) target = $region60
      $region59: #{net2_forward.1} parent=5 // pred_region
        // Predicated region
        $region61: #{net2_forward.1} parent=59 // pred_check
          %p367 = pneg %p42
        $region62: #{net2_forward.1} parent=59 // pred_check_branch
          %369 = sbr.rel (%p367) target = $region64
        $region63: #{net2_forward.1} parent=59 // pred_region
          %p370 = scmp.lt.s32.totalorder %s22, 1
          %s371 = scalar_select %p370, %s22, 1
          %s372 = smul.addr %s371, 22
          %s373 = smul.addr %s372, 4
          %s374 = scalar_lea.vmem %s0, %s373
        $region64: #{net2_forward.1} parent=59 // pred_fallthru
          _
      $region60: #{net2_forward.1} parent=5 // pred_fallthru
        _
      %p375 = scmp.le.s32.totalorder 1, %s22
      %p376 = scmp.lt.s32.totalorder %s22, 3
      %p377 = pnand %p375, %p376
      %p378 = pneg %p377
      // Predicated region
      $region65: #{net2_forward.1} parent=5 // pred_check
        _
      $region66: #{net2_forward.1} parent=5 // pred_check_branch
        %380 = sbr.rel (%p377) target = $region68
      $region67: #{net2_forward.1} parent=5 // pred_region
        %s381 = ssub.s32 %s22, 1
        // Predicated region
        $region69: #{net2_forward.1} parent=67 // pred_check
          %p382 = pneg %p195
        $region70: #{net2_forward.1} parent=67 // pred_check_branch
          %384 = sbr.rel (%p382) target = $region72
        $region71: #{net2_forward.1} parent=67 // pred_region
          %385 = dma.done [#allocation7], 30720
        $region72: #{net2_forward.1} parent=67 // pred_fallthru
          _
        %p386 = scmp.lt.s32.totalorder %s27, 1
        %s387 = scalar_select %p386, %s27, 1
        %s388 = smul.addr %s387, 22
        %s389 = smul.addr %s388, 4
        %s390 = scalar_lea.vmem %s0, %s389
        %p391 = pneg %p48
        %p392 = pneg %p45
        %p393 = pneg %p69
        %p394 = pneg %p66
        %p395 = pneg %p90
        %p396 = pneg %p87
        %p397 = pneg %p111
        %p398 = pneg %p108
        %p399 = pneg %p132
        %p400 = pneg %p129
        %p401 = pneg %p153
        %p402 = pneg %p150
        %p403 = pneg %p174
        %p404 = pneg %p171
        %p405 = pneg %p195
        %p406 = pneg %p192
        %p407 = pneg %p216
        %p408 = pneg %p213
        %p409 = pneg %p237
        %p410 = pneg %p234
        %p411 = pneg %p258
        %p412 = pneg %p255
        %p413 = pneg %p279
        %p414 = pneg %p276
        %p415 = pneg %p305
        %p416 = pneg %p302
        %s417 = sand.u32 %s292, 1
        %s418 = scalar_lea.sflag [#allocation8], %s417
        %s419 = sand.u32 %s292, 1
        %s420 = scalar_lea.vmem [#allocation9], %s419
        %p421 = scmp.lt.s32.totalorder %s27, 1
        %s422 = scalar_select %p421, %s27, 1
        %s423 = smul.addr %s422, 22
        %s424 = smul.addr %s423, 4
        %s425 = scalar_lea.vmem %s0, %s424
        %vm427 = vcmask 523264
        %428 = vst.msk [vmem:[#allocation2] sm:$0xff] %vm427, 0.0
        %429 = vst.msk [vmem:[#allocation2 + $0x8] sm:$0xff] %vm427, 0.0
        %vm430 = vcmask 517120
        %431 = vst.msk [vmem:[#allocation2 + $0x10] sm:$0x3] %vm430, 0.0
        %432 = vst.msk [vmem:[#allocation2 + $0x18] sm:$0xff] %vm427, 0.0
        %433 = vst.msk [vmem:[#allocation2 + $0x20] sm:$0xff] %vm427, 0.0
        %434 = vst.msk [vmem:[#allocation2 + $0x28] sm:$0x3] %vm430, 0.0
        %435 = vst.msk [vmem:[#allocation2 + $0x30] sm:$0xff] %vm427, 0.0
        %436 = vst.msk [vmem:[#allocation2 + $0x38] sm:$0xff] %vm427, 0.0
        %437 = vst.msk [vmem:[#allocation2 + $0x40] sm:$0x3] %vm430, 0.0
        %438 = vst.msk [vmem:[#allocation2 + $0x48] sm:$0xff] %vm427, 0.0
        %439 = vst.msk [vmem:[#allocation2 + $0x50] sm:$0xff] %vm427, 0.0
        %440 = vst.msk [vmem:[#allocation2 + $0x58] sm:$0x3] %vm430, 0.0
        %441 = vst.msk [vmem:[#allocation2 + $0x60] sm:$0xff] %vm427, 0.0
        %442 = vst.msk [vmem:[#allocation2 + $0x68] sm:$0xff] %vm427, 0.0
        %443 = vst.msk [vmem:[#allocation2 + $0x70] sm:$0x3] %vm430, 0.0
        %444 = vst.msk [vmem:[#allocation2 + $0x78] sm:$0xff] %vm427, 0.0
        %445 = vst.msk [vmem:[#allocation2 + $0x80] sm:$0xff] %vm427, 0.0
        %446 = vst.msk [vmem:[#allocation2 + $0x88] sm:$0x3] %vm430, 0.0
        %447 = vst.msk [vmem:[#allocation2 + $0x90] sm:$0xff] %vm427, 0.0
        %448 = vst.msk [vmem:[#allocation2 + $0x98] sm:$0xff] %vm427, 0.0
        %449 = vst.msk [vmem:[#allocation2 + $0xa0] sm:$0x3] %vm430, 0.0
        %450 = vst.msk [vmem:[#allocation2 + $0xa8] sm:$0xff] %vm427, 0.0
        %451 = vst.msk [vmem:[#allocation2 + $0xb0] sm:$0xff] %vm427, 0.0
        %452 = vst.msk [vmem:[#allocation2 + $0xb8] sm:$0x3] %vm430, 0.0
        %453 = vst.msk [vmem:[#allocation2 + $0xc0] sm:$0xff] %vm427, 0.0
        %454 = vst.msk [vmem:[#allocation2 + $0xc8] sm:$0xff] %vm427, 0.0
        %455 = vst.msk [vmem:[#allocation2 + $0xd0] sm:$0x3] %vm430, 0.0
        %456 = vst.msk [vmem:[#allocation2 + $0xd8] sm:$0xff] %vm427, 0.0
        %457 = vst.msk [vmem:[#allocation2 + $0xe0] sm:$0xff] %vm427, 0.0
        %458 = vst.msk [vmem:[#allocation2 + $0xe8] sm:$0x3] %vm430, 0.0
        %459 = vst.msk [vmem:[#allocation2 + $0xf0] sm:$0xff] %vm427, 0.0
        %460 = vst.msk [vmem:[#allocation2 + $0xf8] sm:$0xff] %vm427, 0.0
        %461 = vst.msk [vmem:[#allocation2 + $0x100] sm:$0x3] %vm430, 0.0
        %462 = vst.msk [vmem:[#allocation2 + $0x108] sm:$0xff] %vm427, 0.0
        %463 = vst.msk [vmem:[#allocation2 + $0x110] sm:$0xff] %vm427, 0.0
        %464 = vst.msk [vmem:[#allocation2 + $0x118] sm:$0x3] %vm430, 0.0
        %465 = vst.msk [vmem:[#allocation2 + $0x120] sm:$0xff] %vm427, 0.0
        %466 = vst.msk [vmem:[#allocation2 + $0x128] sm:$0xff] %vm427, 0.0
        %467 = vst.msk [vmem:[#allocation2 + $0x130] sm:$0x3] %vm430, 0.0
        %468 = vst.msk [vmem:[#allocation2 + $0x138] sm:$0xff] %vm427, 0.0
        %469 = vst.msk [vmem:[#allocation2 + $0x140] sm:$0xff] %vm427, 0.0
        %470 = vst.msk [vmem:[#allocation2 + $0x148] sm:$0x3] %vm430, 0.0
        %471 = vst.msk [vmem:[#allocation2 + $0x150] sm:$0xff] %vm427, 0.0
        %472 = vst.msk [vmem:[#allocation2 + $0x158] sm:$0xff] %vm427, 0.0
        %473 = vst.msk [vmem:[#allocation2 + $0x160] sm:$0x3] %vm430, 0.0
        %474 = vst.msk [vmem:[#allocation2 + $0x168] sm:$0xff] %vm427, 0.0
        %475 = vst.msk [vmem:[#allocation2 + $0x170] sm:$0xff] %vm427, 0.0
        %476 = vst.msk [vmem:[#allocation2 + $0x178] sm:$0x3] %vm430, 0.0
        %477 = vst.msk [vmem:[#allocation2 + $0x180] sm:$0xff] %vm427, 0.0
        %478 = vst.msk [vmem:[#allocation2 + $0x188] sm:$0xff] %vm427, 0.0
        %479 = vst.msk [vmem:[#allocation2 + $0x190] sm:$0x3] %vm430, 0.0
        %480 = vst.msk [vmem:[#allocation2 + $0x198] sm:$0xff] %vm427, 0.0
        %481 = vst.msk [vmem:[#allocation2 + $0x1a0] sm:$0xff] %vm427, 0.0
        %482 = vst.msk [vmem:[#allocation2 + $0x1a8] sm:$0x3] %vm430, 0.0
        %483 = vst.msk [vmem:[#allocation2 + $0x1b0] sm:$0xff] %vm427, 0.0
        %484 = vst.msk [vmem:[#allocation2 + $0x1b8] sm:$0xff] %vm427, 0.0
        %485 = vst.msk [vmem:[#allocation2 + $0x1c0] sm:$0x3] %vm430, 0.0
        %486 = vst.msk [vmem:[#allocation2 + $0x1c8] sm:$0xff] %vm427, 0.0
        %487 = vst.msk [vmem:[#allocation2 + $0x1d0] sm:$0xff] %vm427, 0.0
        %488 = vst.msk [vmem:[#allocation2 + $0x1d8] sm:$0x3] %vm430, 0.0
        %489 = vst.msk [vmem:[#allocation2 + $0x1e0] sm:$0xff] %vm427, 0.0
        %490 = vst.msk [vmem:[#allocation2 + $0x1e8] sm:$0xff] %vm427, 0.0
        %491 = vst.msk [vmem:[#allocation2 + $0x1f0] sm:$0x3] %vm430, 0.0
        %492 = vst.msk [vmem:[#allocation2 + $0x1f8] sm:$0xff] %vm427, 0.0
        %493 = vst.msk [vmem:[#allocation2 + $0x200] sm:$0xff] %vm427, 0.0
        %494 = vst.msk [vmem:[#allocation2 + $0x208] sm:$0x3] %vm430, 0.0
        %495 = vst.msk [vmem:[#allocation2 + $0x210] sm:$0xff] %vm427, 0.0
        %496 = vst.msk [vmem:[#allocation2 + $0x218] sm:$0xff] %vm427, 0.0
        %497 = vst.msk [vmem:[#allocation2 + $0x220] sm:$0x3] %vm430, 0.0
        %498 = vst.msk [vmem:[#allocation2 + $0x228] sm:$0xff] %vm427, 0.0
        %499 = vst.msk [vmem:[#allocation2 + $0x230] sm:$0xff] %vm427, 0.0
        %500 = vst.msk [vmem:[#allocation2 + $0x238] sm:$0x3] %vm430, 0.0
        %501 = vst.msk [vmem:[#allocation2 + $0x240] sm:$0xff] %vm427, 0.0
        %502 = vst.msk [vmem:[#allocation2 + $0x248] sm:$0xff] %vm427, 0.0
        %503 = vst.msk [vmem:[#allocation2 + $0x250] sm:$0x3] %vm430, 0.0
        %504 = vst.msk [vmem:[#allocation2 + $0x258] sm:$0xff] %vm427, 0.0
        %505 = vst.msk [vmem:[#allocation2 + $0x260] sm:$0xff] %vm427, 0.0
        %506 = vst.msk [vmem:[#allocation2 + $0x268] sm:$0x3] %vm430, 0.0
        %507 = vst.msk [vmem:[#allocation2 + $0x270] sm:$0xff] %vm427, 0.0
        %508 = vst.msk [vmem:[#allocation2 + $0x278] sm:$0xff] %vm427, 0.0
        %509 = vst.msk [vmem:[#allocation2 + $0x280] sm:$0x3] %vm430, 0.0
        %510 = vst.msk [vmem:[#allocation2 + $0x288] sm:$0xff] %vm427, 0.0
        %511 = vst.msk [vmem:[#allocation2 + $0x290] sm:$0xff] %vm427, 0.0
        %512 = vst.msk [vmem:[#allocation2 + $0x298] sm:$0x3] %vm430, 0.0
        %513 = vst.msk [vmem:[#allocation2 + $0x2a0] sm:$0xff] %vm427, 0.0
        %514 = vst.msk [vmem:[#allocation2 + $0x2a8] sm:$0xff] %vm427, 0.0
        %515 = vst.msk [vmem:[#allocation2 + $0x2b0] sm:$0x3] %vm430, 0.0
        %516 = vst [vmem:[#allocation3] sm:$0xff] 0.0
        %517 = vst [vmem:[#allocation3 + $0x8] sm:$0xff] 0.0
        %518 = vst [vmem:[#allocation3 + $0x10] sm:$0x3] 0.0
        %519 = vst [vmem:[#allocation3 + $0x18] sm:$0xff] 0.0
        %520 = vst [vmem:[#allocation3 + $0x20] sm:$0xff] 0.0
        %521 = vst [vmem:[#allocation3 + $0x28] sm:$0x3] 0.0
        %522 = vst [vmem:[#allocation3 + $0x30] sm:$0xff] 0.0
        %523 = vst [vmem:[#allocation3 + $0x38] sm:$0xff] 0.0
        %524 = vst [vmem:[#allocation3 + $0x40] sm:$0x3] 0.0
        %525 = vst [vmem:[#allocation3 + $0x48] sm:$0xff] 0.0
        %526 = vst [vmem:[#allocation3 + $0x50] sm:$0xff] 0.0
        %527 = vst [vmem:[#allocation3 + $0x58] sm:$0x3] 0.0
        %528 = vst [vmem:[#allocation3 + $0x60] sm:$0xff] 0.0
        %529 = vst [vmem:[#allocation3 + $0x68] sm:$0xff] 0.0
        %530 = vst [vmem:[#allocation3 + $0x70] sm:$0x3] 0.0
        %531 = vst [vmem:[#allocation3 + $0x78] sm:$0xff] 0.0
        %532 = vst [vmem:[#allocation3 + $0x80] sm:$0xff] 0.0
        %533 = vst [vmem:[#allocation3 + $0x88] sm:$0x3] 0.0
        %534 = vst [vmem:[#allocation3 + $0x90] sm:$0xff] 0.0
        %535 = vst [vmem:[#allocation3 + $0x98] sm:$0xff] 0.0
        %536 = vst [vmem:[#allocation3 + $0xa0] sm:$0x3] 0.0
        %537 = vst [vmem:[#allocation3 + $0xa8] sm:$0xff] 0.0
        %538 = vst [vmem:[#allocation3 + $0xb0] sm:$0xff] 0.0
        %539 = vst [vmem:[#allocation3 + $0xb8] sm:$0x3] 0.0
        %540 = vst [vmem:[#allocation3 + $0xc0] sm:$0xff] 0.0
        %541 = vst [vmem:[#allocation3 + $0xc8] sm:$0xff] 0.0
        %542 = vst [vmem:[#allocation3 + $0xd0] sm:$0x3] 0.0
        %543 = vst [vmem:[#allocation3 + $0xd8] sm:$0xff] 0.0
        %544 = vst [vmem:[#allocation3 + $0xe0] sm:$0xff] 0.0
        %545 = vst [vmem:[#allocation3 + $0xe8] sm:$0x3] 0.0
        %546 = vst [vmem:[#allocation3 + $0xf0] sm:$0xff] 0.0
        %547 = vst [vmem:[#allocation3 + $0xf8] sm:$0xff] 0.0
        %548 = vst [vmem:[#allocation3 + $0x100] sm:$0x3] 0.0
        %549 = vst [vmem:[#allocation3 + $0x108] sm:$0xff] 0.0
        %550 = vst [vmem:[#allocation3 + $0x110] sm:$0xff] 0.0
        %551 = vst [vmem:[#allocation3 + $0x118] sm:$0x3] 0.0
        %552 = vst [vmem:[#allocation3 + $0x120] sm:$0xff] 0.0
        %553 = vst [vmem:[#allocation3 + $0x128] sm:$0xff] 0.0
        %554 = vst [vmem:[#allocation3 + $0x130] sm:$0x3] 0.0
        %555 = vst [vmem:[#allocation3 + $0x138] sm:$0xff] 0.0
        %556 = vst [vmem:[#allocation3 + $0x140] sm:$0xff] 0.0
        %557 = vst [vmem:[#allocation3 + $0x148] sm:$0x3] 0.0
        %558 = vst [vmem:[#allocation3 + $0x150] sm:$0xff] 0.0
        %559 = vst [vmem:[#allocation3 + $0x158] sm:$0xff] 0.0
        %560 = vst [vmem:[#allocation3 + $0x160] sm:$0x3] 0.0
        %561 = vst [vmem:[#allocation3 + $0x168] sm:$0xff] 0.0
        %562 = vst [vmem:[#allocation3 + $0x170] sm:$0xff] 0.0
        %563 = vst [vmem:[#allocation3 + $0x178] sm:$0x3] 0.0
        %564 = vst [vmem:[#allocation3 + $0x180] sm:$0xff] 0.0
        %565 = vst [vmem:[#allocation3 + $0x188] sm:$0xff] 0.0
        %566 = vst [vmem:[#allocation3 + $0x190] sm:$0x3] 0.0
        %567 = vst [vmem:[#allocation3 + $0x198] sm:$0xff] 0.0
        %568 = vst [vmem:[#allocation3 + $0x1a0] sm:$0xff] 0.0
        %569 = vst [vmem:[#allocation3 + $0x1a8] sm:$0x3] 0.0
        %570 = vst [vmem:[#allocation3 + $0x1b0] sm:$0xff] 0.0
        %571 = vst [vmem:[#allocation3 + $0x1b8] sm:$0xff] 0.0
        %572 = vst [vmem:[#allocation3 + $0x1c0] sm:$0x3] 0.0
        %573 = vst [vmem:[#allocation3 + $0x1c8] sm:$0xff] 0.0
        %574 = vst [vmem:[#allocation3 + $0x1d0] sm:$0xff] 0.0
        %575 = vst [vmem:[#allocation3 + $0x1d8] sm:$0x3] 0.0
        %576 = vst [vmem:[#allocation3 + $0x1e0] sm:$0xff] 0.0
        %577 = vst [vmem:[#allocation3 + $0x1e8] sm:$0xff] 0.0
        %578 = vst [vmem:[#allocation3 + $0x1f0] sm:$0x3] 0.0
        %579 = vst [vmem:[#allocation3 + $0x1f8] sm:$0xff] 0.0
        %580 = vst [vmem:[#allocation3 + $0x200] sm:$0xff] 0.0
        %581 = vst [vmem:[#allocation3 + $0x208] sm:$0x3] 0.0
        %582 = vst [vmem:[#allocation3 + $0x210] sm:$0xff] 0.0
        %583 = vst [vmem:[#allocation3 + $0x218] sm:$0xff] 0.0
        %584 = vst [vmem:[#allocation3 + $0x220] sm:$0x3] 0.0
        %585 = vst [vmem:[#allocation3 + $0x228] sm:$0xff] 0.0
        %586 = vst [vmem:[#allocation3 + $0x230] sm:$0xff] 0.0
        %587 = vst [vmem:[#allocation3 + $0x238] sm:$0x3] 0.0
        %588 = vst [vmem:[#allocation3 + $0x240] sm:$0xff] 0.0
        %589 = vst [vmem:[#allocation3 + $0x248] sm:$0xff] 0.0
        %590 = vst [vmem:[#allocation3 + $0x250] sm:$0x3] 0.0
        %591 = vst [vmem:[#allocation3 + $0x258] sm:$0xff] 0.0
        %592 = vst [vmem:[#allocation3 + $0x260] sm:$0xff] 0.0
        %593 = vst [vmem:[#allocation3 + $0x268] sm:$0x3] 0.0
        %594 = vst [vmem:[#allocation3 + $0x270] sm:$0xff] 0.0
        %595 = vst [vmem:[#allocation3 + $0x278] sm:$0xff] 0.0
        %596 = vst [vmem:[#allocation3 + $0x280] sm:$0x3] 0.0
        %v597 = vld [vmem:[%s425] sm:$0xf]
        %v598 = vld [vmem:[%s425 + $0x4] sm:$0xf]
        %v599 = vld [vmem:[%s425 + $0x8] sm:$0xf]
        %v600 = vld [vmem:[%s425 + $0xc] sm:$0xf]
        %v601 = vld [vmem:[%s425 + $0x10] sm:$0xf]
        %v602 = vld [vmem:[%s425 + $0x14] sm:$0xf]
        %v603 = vld [vmem:[%s425 + $0x18] sm:$0xf]
        %v604 = vld [vmem:[%s425 + $0x1c] sm:$0xf]
        %v605 = vld [vmem:[%s425 + $0x20] sm:$0xf]
        %v606 = vld [vmem:[%s425 + $0x24] sm:$0xf]
        %v607 = vld [vmem:[%s425 + $0x28] sm:$0xf]
        %v608 = vld [vmem:[%s425 + $0x2c] sm:$0xf]
        %v609 = vld [vmem:[%s425 + $0x30] sm:$0xf]
        %v610 = vld [vmem:[%s425 + $0x34] sm:$0xf]
        %v611 = vld [vmem:[%s425 + $0x38] sm:$0xf]
        %v612 = vld [vmem:[%s425 + $0x3c] sm:$0xf]
        %v613 = vld [vmem:[%s425 + $0x40] sm:$0xf]
        %v614 = vld [vmem:[%s425 + $0x44] sm:$0xf]
        %v615 = vld [vmem:[%s425 + $0x48] sm:$0xf]
        %v616 = vld [vmem:[%s425 + $0x4c] sm:$0xf]
        %v617 = vld [vmem:[%s425 + $0x50] sm:$0xf]
        %v618 = vld [vmem:[%s425 + $0x54] sm:$0xf]
        %v619 = vld [vmem:[%s1] sm:$0xf]
        %v620 = vld [vmem:[%s1 + $0x4] sm:$0xf]
        %v643 = vunpack.c.l.b16 %v597
        %v644 = vunpack.c.l.b16 %v598
        %v645 = vunpack.c.l.b16 %v599
        %v646 = vunpack.c.l.b16 %v600
        %v647 = vunpack.c.l.b16 %v601
        %v648 = vunpack.c.l.b16 %v602
        %v649 = vunpack.c.l.b16 %v603
        %v650 = vunpack.c.l.b16 %v604
        %v651 = vunpack.c.l.b16 %v605
        %v652 = vunpack.c.l.b16 %v606
        %v653 = vunpack.c.l.b16 %v607
        %v654 = vunpack.c.l.b16 %v608
        %v655 = vunpack.c.l.b16 %v609
        %v656 = vunpack.c.l.b16 %v610
        %v657 = vunpack.c.l.b16 %v611
        %v658 = vunpack.c.l.b16 %v612
        %v659 = vunpack.c.l.b16 %v613
        %v660 = vunpack.c.l.b16 %v614
        %v661 = vunpack.c.l.b16 %v615
        %v662 = vunpack.c.l.b16 %v616
        %v663 = vunpack.c.l.b16 %v617
        %v664 = vunpack.c.l.b16 %v618
        %v665 = vpack.c.b16 %v644, %v643
        %v666 = vpack.c.b16 %v646, %v645
        %v667 = vpack.c.b16 %v648, %v647
        %v668 = vpack.c.b16 %v650, %v649
        %v669 = vpack.c.b16 %v652, %v651
        %v670 = vpack.c.b16 %v654, %v653
        %v671 = vpack.c.b16 %v656, %v655
        %v672 = vpack.c.b16 %v658, %v657
        %v673 = vpack.c.b16 %v660, %v659
        %v674 = vpack.c.b16 %v662, %v661
        %v675 = vpack.c.b16 %v664, %v663
        %v678 = vunpack.c.l.b16 %v619
        %v679 = vunpack.c.l.b16 %v620
        %v680 = vpack.c.b16 %v679, %v678
        %vm681 = vcmask 121856
        %v683 = vsel %vm681, %v665, 0
        %v686 = vsel %vm681, %v666, 0
        %v689 = vsel %vm681, %v667, 0
        %v692 = vsel %vm681, %v668, 0
        %v695 = vsel %vm681, %v669, 0
        %v698 = vsel %vm681, %v670, 0
        %v701 = vsel %vm681, %v671, 0
        %v704 = vsel %vm681, %v672, 0
        %v707 = vsel %vm681, %v673, 0
        %v710 = vsel %vm681, %v674, 0
        %v713 = vsel %vm681, %v675, 0
        %vm715 = vcmask 1046528
        %vm716 = vcmask 1047552
        %v717 = vsel %vm715, 4294967295, 65535
        %v718 = vsel %vm716, %v717, 0
        %v720 = vand.u32 %v680, %v718
        %722 = vmatprep.subr.bf16.mxu0 0
        %723 = vmatpush1.bf16.msra.mxu0 %v720
        %724 = vmatprep.subr.bf16.mxu0 0
        %725 = vmatpush1.bf16.msra.mxu0 0
        %726 = vmatprep.subr.bf16.mxu0 0
        %727 = vmatpush1.bf16.msra.mxu0 0
        %728 = vmatprep.subr.bf16.mxu0 0
        %729 = vmatpush1.bf16.msra.mxu0 0
        %730 = vmatprep.subr.bf16.mxu0 0
        %731 = vmatpush1.bf16.msra.mxu0 0
        %732 = vmatprep.subr.bf16.mxu0 0
        %733 = vmatpush1.bf16.msra.mxu0 0
        %734 = vmatprep.subr.bf16.mxu0 0
        %735 = vmatpush1.bf16.msra.mxu0 0
        %736 = vmatprep.subr.bf16.mxu0 0
        %737 = vmatpush1.bf16.msra.mxu0 0
        %738 = vmatprep.subr.bf16.mxu0 0
        %739 = vmatpush1.bf16.msra.mxu0 0
        %740 = vmatprep.subr.bf16.mxu0 0
        %741 = vmatpush1.bf16.msra.mxu0 0
        %742 = vmatprep.subr.bf16.mxu0 0
        %743 = vmatpush1.bf16.msra.mxu0 0
        %744 = vmatprep.subr.bf16.mxu0 0
        %745 = vmatpush1.bf16.msra.mxu0 0
        %746 = vmatprep.subr.bf16.mxu0 0
        %747 = vmatpush1.bf16.msra.mxu0 0
        %748 = vmatprep.subr.bf16.mxu0 0
        %749 = vmatpush1.bf16.msra.mxu0 0
        %750 = vmatprep.subr.bf16.mxu0 0
        %751 = vmatpush1.bf16.msra.mxu0 0
        %752 = vmatprep.subr.bf16.mxu0 0
        %753 = vmatpush1.bf16.msra.mxu0 0
        %754 = vmatprep.mubr.bf16.mxu0 0
        %755 = vmatmul.mubr.bf16.gmra.mrb[0].mxu0 %v683
        %v756 = vpop.f32.mrb[0].mxu0
        %v757 = vadd.f32 0.0, %v756
        %v758 = vpop.f32.mrb[0].mxu0
        %v759 = vpop.f32.mrb[0].mxu0
        %v760 = vadd.f32 0.0, %v759
        %v761 = vpop.f32.mrb[0].mxu0
        %762 = vmatprep.mubr.bf16.mxu0 0
        %763 = vmatmul.mubr.bf16.gmra.mrb[0].mxu0 %v686
        %v764 = vpop.f32.mrb[0].mxu0
        %v765 = vadd.f32 0.0, %v764
        %v766 = vpop.f32.mrb[0].mxu0
        %v767 = vpop.f32.mrb[0].mxu0
        %v768 = vadd.f32 0.0, %v767
        %v769 = vpop.f32.mrb[0].mxu0
        %770 = vmatprep.mubr.bf16.mxu0 0
        %771 = vmatmul.mubr.bf16.gmra.mrb[0].mxu0 %v689
        %v772 = vpop.f32.mrb[0].mxu0
        %v773 = vadd.f32 0.0, %v772
        %v774 = vpop.f32.mrb[0].mxu0
        %v775 = vpop.f32.mrb[0].mxu0
        %v776 = vadd.f32 0.0, %v775
        %v777 = vpop.f32.mrb[0].mxu0
        %778 = vmatprep.mubr.bf16.mxu0 0
        %779 = vmatmul.mubr.bf16.gmra.mrb[0].mxu0 %v692
        %v780 = vpop.f32.mrb[0].mxu0
        %v781 = vadd.f32 0.0, %v780
        %v782 = vpop.f32.mrb[0].mxu0
        %v783 = vpop.f32.mrb[0].mxu0
        %v784 = vadd.f32 0.0, %v783
        %v785 = vpop.f32.mrb[0].mxu0
        %786 = vmatprep.mubr.bf16.mxu0 0
        %787 = vmatmul.mubr.bf16.gmra.mrb[0].mxu0 %v695
        %v788 = vpop.f32.mrb[0].mxu0
        %v789 = vadd.f32 0.0, %v788
        %v790 = vpop.f32.mrb[0].mxu0
        %v791 = vpop.f32.mrb[0].mxu0
        %v792 = vadd.f32 0.0, %v791
        %v793 = vpop.f32.mrb[0].mxu0
        %794 = vmatprep.mubr.bf16.mxu0 0
        %795 = vmatmul.mubr.bf16.gmra.mrb[0].mxu0 %v698
        %v796 = vpop.f32.mrb[0].mxu0
        %v797 = vadd.f32 0.0, %v796
        %v798 = vpop.f32.mrb[0].mxu0
        %v799 = vpop.f32.mrb[0].mxu0
        %v800 = vadd.f32 0.0, %v799
        %v801 = vpop.f32.mrb[0].mxu0
        %802 = vmatprep.mubr.bf16.mxu0 0
        %803 = vmatmul.mubr.bf16.gmra.mrb[0].mxu0 %v701
        %v804 = vpop.f32.mrb[0].mxu0
        %v805 = vadd.f32 0.0, %v804
        %v806 = vpop.f32.mrb[0].mxu0
        %v807 = vpop.f32.mrb[0].mxu0
        %v808 = vadd.f32 0.0, %v807
        %v809 = vpop.f32.mrb[0].mxu0
        %810 = vmatprep.mubr.bf16.mxu0 0
        %811 = vmatmul.mubr.bf16.gmra.mrb[0].mxu0 %v704
        %v812 = vpop.f32.mrb[0].mxu0
        %v813 = vadd.f32 0.0, %v812
        %v814 = vpop.f32.mrb[0].mxu0
        %v815 = vpop.f32.mrb[0].mxu0
        %v816 = vadd.f32 0.0, %v815
        %v817 = vpop.f32.mrb[0].mxu0
        %818 = vmatprep.mubr.bf16.mxu0 0
        %819 = vmatmul.mubr.bf16.gmra.mrb[0].mxu0 %v707
        %v820 = vpop.f32.mrb[0].mxu0
        %v821 = vadd.f32 0.0, %v820
        %v822 = vpop.f32.mrb[0].mxu0
        %v823 = vpop.f32.mrb[0].mxu0
        %v824 = vadd.f32 0.0, %v823
        %v825 = vpop.f32.mrb[0].mxu0
        %826 = vmatprep.mubr.bf16.mxu0 0
        %827 = vmatmul.mubr.bf16.gmra.mrb[0].mxu0 %v710
        %v828 = vpop.f32.mrb[0].mxu0
        %v829 = vadd.f32 0.0, %v828
        %v830 = vpop.f32.mrb[0].mxu0
        %v831 = vpop.f32.mrb[0].mxu0
        %v832 = vadd.f32 0.0, %v831
        %v833 = vpop.f32.mrb[0].mxu0
        %834 = vmatprep.mubr.bf16.mxu0 0
        %835 = vmatmul.mubr.bf16.gmra.mrb[0].mxu0 %v713
        %v836 = vpop.f32.mrb[0].mxu0
        %v837 = vpop.f32.mrb[0].mxu0
        %v838 = vpop.f32.mrb[0].mxu0
        %v839 = vpop.f32.mrb[0].mxu0
        %840 = vdwg.mxu0
        %v841 = vld [vmem:[%s2] sm:$0x1]
        %v843 = vlaneseq
        %v844 = vshrl.u32 %v843, 7
        %v845 = vsub.s32 0, %v844
        %v846 = vrot.slane %v841, %v845
        %v848 = vmul.f32 %v757, %v846
        %v849 = vmul.f32 %v760, %v846
        %v850 = vmul.f32 %v765, %v846
        %v851 = vmul.f32 %v768, %v846
        %v852 = vmul.f32 %v773, %v846
        %v853 = vmul.f32 %v776, %v846
        %v854 = vmul.f32 %v781, %v846
        %v855 = vmul.f32 %v784, %v846
        %v856 = vmul.f32 %v789, %v846
        %v857 = vmul.f32 %v792, %v846
        %v858 = vmul.f32 %v797, %v846
        %v859 = vmul.f32 %v800, %v846
        %v860 = vmul.f32 %v805, %v846
        %v861 = vmul.f32 %v808, %v846
        %v862 = vmul.f32 %v813, %v846
        %v863 = vmul.f32 %v816, %v846
        %v864 = vmul.f32 %v821, %v846
        %v865 = vmul.f32 %v824, %v846
        %v866 = vmul.f32 %v829, %v846
        %v867 = vmul.f32 %v832, %v846
        %v868 = vld [vmem:[%s3] sm:$0x1]
        %v870 = vlaneseq
        %v871 = vshrl.u32 %v870, 7
        %v872 = vsub.s32 0, %v871
        %v873 = vrot.slane %v868, %v872
        %v875 = vadd.f32 %v848, %v873
        %v876 = vadd.f32 %v849, %v873
        %v877 = vadd.f32 %v850, %v873
        %v878 = vadd.f32 %v851, %v873
        %v879 = vadd.f32 %v852, %v873
        %v880 = vadd.f32 %v853, %v873
        %v881 = vadd.f32 %v854, %v873
        %v882 = vadd.f32 %v855, %v873
        %v883 = vadd.f32 %v856, %v873
        %v884 = vadd.f32 %v857, %v873
        %v885 = vadd.f32 %v858, %v873
        %v886 = vadd.f32 %v859, %v873
        %v887 = vadd.f32 %v860, %v873
        %v888 = vadd.f32 %v861, %v873
        %v889 = vadd.f32 %v862, %v873
        %v890 = vadd.f32 %v863, %v873
        %v891 = vadd.f32 %v864, %v873
        %v892 = vadd.f32 %v865, %v873
        %v893 = vadd.f32 %v866, %v873
        %v894 = vadd.f32 %v867, %v873
        %vm895 = vcmp.ge.f32.partialorder %v875, 0.0
        %vm896 = vcmp.ge.f32.partialorder %v876, 0.0
        %vm897 = vcmp.ge.f32.partialorder %v877, 0.0
        %vm898 = vcmp.ge.f32.partialorder %v878, 0.0
        %vm899 = vcmp.ge.f32.partialorder %v879, 0.0
        %vm900 = vcmp.ge.f32.partialorder %v880, 0.0
        %vm901 = vcmp.ge.f32.partialorder %v881, 0.0
        %vm902 = vcmp.ge.f32.partialorder %v882, 0.0
        %vm903 = vcmp.ge.f32.partialorder %v883, 0.0
        %vm904 = vcmp.ge.f32.partialorder %v884, 0.0
        %vm905 = vcmp.ge.f32.partialorder %v885, 0.0
        %vm906 = vcmp.ge.f32.partialorder %v886, 0.0
        %vm907 = vcmp.ge.f32.partialorder %v887, 0.0
        %vm908 = vcmp.ge.f32.partialorder %v888, 0.0
        %vm909 = vcmp.ge.f32.partialorder %v889, 0.0
        %vm910 = vcmp.ge.f32.partialorder %v890, 0.0
        %vm911 = vcmp.ge.f32.partialorder %v891, 0.0
        %vm912 = vcmp.ge.f32.partialorder %v892, 0.0
        %vm913 = vcmp.ge.f32.partialorder %v893, 0.0
        %vm914 = vcmp.ge.f32.partialorder %v894, 0.0
        %v915 = vmul.f32 %v875, 0.01
        %v916 = vmul.f32 %v876, 0.01
        %v917 = vmul.f32 %v877, 0.01
        %v918 = vmul.f32 %v878, 0.01
        %v919 = vmul.f32 %v879, 0.01
        %v920 = vmul.f32 %v880, 0.01
        %v921 = vmul.f32 %v881, 0.01
        %v922 = vmul.f32 %v882, 0.01
        %v923 = vmul.f32 %v883, 0.01
        %v924 = vmul.f32 %v884, 0.01
        %v925 = vmul.f32 %v885, 0.01
        %v926 = vmul.f32 %v886, 0.01
        %v927 = vmul.f32 %v887, 0.01
        %v928 = vmul.f32 %v888, 0.01
        %v929 = vmul.f32 %v889, 0.01
        %v930 = vmul.f32 %v890, 0.01
        %v931 = vmul.f32 %v891, 0.01
        %v932 = vmul.f32 %v892, 0.01
        %v933 = vmul.f32 %v893, 0.01
        %v934 = vmul.f32 %v894, 0.01
        %v935 = vsel %vm895, %v875, %v915
        %v936 = vsel %vm896, %v876, %v916
        %v937 = vsel %vm897, %v877, %v917
        %v938 = vsel %vm898, %v878, %v918
        %v939 = vsel %vm899, %v879, %v919
        %v940 = vsel %vm900, %v880, %v920
        %v941 = vsel %vm901, %v881, %v921
        %v942 = vsel %vm902, %v882, %v922
        %v943 = vsel %vm903, %v883, %v923
        %v944 = vsel %vm904, %v884, %v924
        %v945 = vsel %vm905, %v885, %v925
        %v946 = vsel %vm906, %v886, %v926
        %v947 = vsel %vm907, %v887, %v927
        %v948 = vsel %vm908, %v888, %v928
        %v949 = vsel %vm909, %v889, %v929
        %v950 = vsel %vm910, %v890, %v930
        %v951 = vsel %vm911, %v891, %v931
        %v952 = vsel %vm912, %v892, %v932
        %v953 = vsel %vm913, %v893, %v933
        %v954 = vsel %vm914, %v894, %v934
        %v955 = vmax.f32 %v935, %v937
        %v956 = vmax.f32 %v936, %v938
        %s957 = scalar_lea.vmem [#allocation2], 288
        %958 = vst.msk [vmem:[%s957 + $0x1] sm:$0xff] %vm427, %v955
        %959 = vst.msk [vmem:[%s957 + $0x9] sm:$0xff] %vm427, %v956
        %v960 = vmax.f32 %v939, %v941
        %v961 = vmax.f32 %v940, %v942
        %s962 = scalar_lea.vmem [#allocation2], 312
        %963 = vst.msk [vmem:[%s962 + $0x1] sm:$0xff] %vm427, %v960
        %964 = vst.msk [vmem:[%s962 + $0x9] sm:$0xff] %vm427, %v961
        %v965 = vmax.f32 %v943, %v945
        %v966 = vmax.f32 %v944, %v946
        %s967 = scalar_lea.vmem [#allocation2], 336
        %968 = vst.msk [vmem:[%s967 + $0x1] sm:$0xff] %vm427, %v965
        %969 = vst.msk [vmem:[%s967 + $0x9] sm:$0xff] %vm427, %v966
        %v970 = vmax.f32 %v947, %v949
        %v971 = vmax.f32 %v948, %v950
        %s972 = scalar_lea.vmem [#allocation2], 360
        %973 = vst.msk [vmem:[%s972 + $0x1] sm:$0xff] %vm427, %v970
        %974 = vst.msk [vmem:[%s972 + $0x9] sm:$0xff] %vm427, %v971
        %v975 = vmax.f32 %v951, %v953
        %v976 = vmax.f32 %v952, %v954
        %s977 = scalar_lea.vmem [#allocation2], 384
        %978 = vst.msk [vmem:[%s977 + $0x1] sm:$0xff] %vm427, %v975
        %979 = vst.msk [vmem:[%s977 + $0x9] sm:$0xff] %vm427, %v976
        %980 = vst [vmem:[#allocation4] sm:$0xff] 0.0
        %981 = vst [vmem:[#allocation4 + $0x8] sm:$0xff] 0.0
        %982 = vst [vmem:[#allocation4 + $0x10] sm:$0xff] 0.0
        %983 = vst [vmem:[#allocation4 + $0x18] sm:$0xff] 0.0
        %984 = vst [vmem:[#allocation4 + $0x20] sm:$0xff] 0.0
        %985 = vst [vmem:[#allocation4 + $0x28] sm:$0xff] 0.0
        %986 = vst [vmem:[#allocation4 + $0x30] sm:$0xff] 0.0
        %987 = vst [vmem:[#allocation4 + $0x38] sm:$0xff] 0.0
        %988 = vst [vmem:[#allocation4 + $0x40] sm:$0xff] 0.0
        %989 = vst [vmem:[#allocation4 + $0x48] sm:$0xff] 0.0
        %990 = vst [vmem:[#allocation4 + $0x50] sm:$0xff] 0.0
        %991 = vst [vmem:[#allocation4 + $0x58] sm:$0xff] 0.0
        %992 = vst [vmem:[#allocation4 + $0x60] sm:$0xff] 0.0
        %993 = vst [vmem:[#allocation4 + $0x68] sm:$0xff] 0.0
        %v994 = vld [vmem:[#allocation4] sm:$0xff]
        %v995 = vld [vmem:[#allocation4 + $0x8] sm:$0xff]
        %v996 = vld [vmem:[#allocation4 + $0x10] sm:$0xff]
        %v997 = vld [vmem:[#allocation4 + $0x18] sm:$0xff]
        %v998 = vld [vmem:[#allocation4 + $0x20] sm:$0xff]
        %v999 = vld [vmem:[#allocation4 + $0x28] sm:$0xff]
        %v1000 = vld [vmem:[#allocation4 + $0x30] sm:$0xff]
        %v1001 = vld [vmem:[#allocation4 + $0x38] sm:$0xff]
        %v1002 = vld [vmem:[#allocation4 + $0x40] sm:$0xff]
        %v1003 = vld [vmem:[#allocation4 + $0x48] sm:$0xff]
        %v1004 = vld [vmem:[#allocation4 + $0x50] sm:$0xff]
        %v1005 = vld [vmem:[#allocation4 + $0x58] sm:$0xff]
        %v1006 = vld [vmem:[#allocation4 + $0x60] sm:$0xff]
        %v1007 = vld [vmem:[#allocation4 + $0x68] sm:$0xff]
        %v1008 = vld [vmem:[#allocation2] sm:$0xff]
        %v1009 = vld [vmem:[#allocation2 + $0x8] sm:$0xff]
        %v1010 = vld [vmem:[#allocation2 + $0x10] sm:$0x3]
        %v1014 = vrot.slane %v1008, 1
        %v1015 = vrot.slane %v1009, 1
        %v1016 = vsel %vm715, %v1014, %v1015
        %v1017 = vrot.slane %v1010, 1
        %v1018 = vsel %vm715, %v1015, %v1017
        %1019 = vrot.lane.b32.xlu0 %v1016, 64
        %v1020 = vpop.permute.xlu0 %1019
        %1021 = vrot.lane.b32.xlu0 %v1018, 64
        %v1022 = vpop.permute.xlu0 %1021
        %vm1025 = vcmask 1045504
        %v1026 = vrot.slane %v1008, 2
        %v1027 = vrot.slane %v1009, 2
        %v1028 = vsel %vm1025, %v1026, %v1027
        %v1029 = vrot.slane %v1010, 2
        %v1030 = vsel %vm1025, %v1027, %v1029
        %v1033 = vsel %vm427, %v1008, %v1020
        %v1034 = vsel %vm427, %v1009, %v1022
        %v1035 = vpack.c.bf16 %v1034, %v1033
        %v1036 = vpack.c.bf16 %v1030, %v1028
        %s1037 = scalar_lea.vmem [#allocation2], 72
        %v1038 = vld [vmem:[%s1037] sm:$0xff]
        %v1039 = vld [vmem:[%s1037 + $0x8] sm:$0xff]
        %v1040 = vld [vmem:[%s1037 + $0x10] sm:$0x3]
        %v1044 = vrot.slane %v1038, 1
        %v1045 = vrot.slane %v1039, 1
        %v1046 = vsel %vm715, %v1044, %v1045
        %v1047 = vrot.slane %v1040, 1
        %v1048 = vsel %vm715, %v1045, %v1047
        %1049 = vrot.lane.b32.xlu0 %v1046, 64
        %v1050 = vpop.permute.xlu0 %1049
        %1051 = vrot.lane.b32.xlu0 %v1048, 64
        %v1052 = vpop.permute.xlu0 %1051
        %v1055 = vrot.slane %v1038, 2
        %v1056 = vrot.slane %v1039, 2
        %v1057 = vsel %vm1025, %v1055, %v1056
        %v1058 = vrot.slane %v1040, 2
        %v1059 = vsel %vm1025, %v1056, %v1058
        %v1062 = vsel %vm427, %v1038, %v1050
        %v1063 = vsel %vm427, %v1039, %v1052
        %v1064 = vpack.c.bf16 %v1063, %v1062
        %v1065 = vpack.c.bf16 %v1059, %v1057
        %s1066 = scalar_lea.vmem [#allocation2], 144
        %v1067 = vld [vmem:[%s1066] sm:$0xff]
        %v1068 = vld [vmem:[%s1066 + $0x8] sm:$0xff]
        %v1069 = vld [vmem:[%s1066 + $0x10] sm:$0x3]
        %v1073 = vrot.slane %v1067, 1
        %v1074 = vrot.slane %v1068, 1
        %v1075 = vsel %vm715, %v1073, %v1074
        %v1076 = vrot.slane %v1069, 1
        %v1077 = vsel %vm715, %v1074, %v1076
        %1078 = vrot.lane.b32.xlu0 %v1075, 64
        %v1079 = vpop.permute.xlu0 %1078
        %1080 = vrot.lane.b32.xlu0 %v1077, 64
        %v1081 = vpop.permute.xlu0 %1080
        %v1084 = vrot.slane %v1067, 2
        %v1085 = vrot.slane %v1068, 2
        %v1086 = vsel %vm1025, %v1084, %v1085
        %v1087 = vrot.slane %v1069, 2
        %v1088 = vsel %vm1025, %v1085, %v1087
        %v1091 = vsel %vm427, %v1067, %v1079
        %v1092 = vsel %vm427, %v1068, %v1081
        %v1093 = vpack.c.bf16 %v1092, %v1091
        %v1094 = vpack.c.bf16 %v1088, %v1086
        %s1095 = scalar_lea.vmem [#allocation2], 216
        %v1096 = vld [vmem:[%s1095] sm:$0xff]
        %v1097 = vld [vmem:[%s1095 + $0x8] sm:$0xff]
        %v1098 = vld [vmem:[%s1095 + $0x10] sm:$0x3]
        %v1102 = vrot.slane %v1096, 1
        %v1103 = vrot.slane %v1097, 1
        %v1104 = vsel %vm715, %v1102, %v1103
        %v1105 = vrot.slane %v1098, 1
        %v1106 = vsel %vm715, %v1103, %v1105
        %1107 = vrot.lane.b32.xlu0 %v1104, 64
        %v1108 = vpop.permute.xlu0 %1107
        %1109 = vrot.lane.b32.xlu0 %v1106, 64
        %v1110 = vpop.permute.xlu0 %1109
        %v1113 = vrot.slane %v1096, 2
        %v1114 = vrot.slane %v1097, 2
        %v1115 = vsel %vm1025, %v1113, %v1114
        %v1116 = vrot.slane %v1098, 2
        %v1117 = vsel %vm1025, %v1114, %v1116
        %v1120 = vsel %vm427, %v1096, %v1108
        %v1121 = vsel %vm427, %v1097, %v1110
        %v1122 = vpack.c.bf16 %v1121, %v1120
        %v1123 = vpack.c.bf16 %v1117, %v1115
        %v1124 = vld [vmem:[%s957] sm:$0xff]
        %v1125 = vld [vmem:[%s957 + $0x8] sm:$0xff]
        %v1126 = vld [vmem:[%s957 + $0x10] sm:$0x3]
        %v1130 = vrot.slane %v1124, 1
        %v1131 = vrot.slane %v1125, 1
        %v1132 = vsel %vm715, %v1130, %v1131
        %v1133 = vrot.slane %v1126, 1
        %v1134 = vsel %vm715, %v1131, %v1133
        %1135 = vrot.lane.b32.xlu0 %v1132, 64
        %v1136 = vpop.permute.xlu0 %1135
        %1137 = vrot.lane.b32.xlu0 %v1134, 64
        %v1138 = vpop.permute.xlu0 %1137
        %v1141 = vrot.slane %v1124, 2
        %v1142 = vrot.slane %v1125, 2
        %v1143 = vsel %vm1025, %v1141, %v1142
        %v1144 = vrot.slane %v1126, 2
        %v1145 = vsel %vm1025, %v1142, %v1144
        %v1148 = vsel %vm427, %v1124, %v1136
        %v1149 = vsel %vm427, %v1125, %v1138
        %v1150 = vpack.c.bf16 %v1149, %v1148
        %v1151 = vpack.c.bf16 %v1145, %v1143
        %v1152 = vld [vmem:[%s972] sm:$0xff]
        %v1153 = vld [vmem:[%s972 + $0x8] sm:$0xff]
        %v1154 = vld [vmem:[%s972 + $0x10] sm:$0x3]
        %v1158 = vrot.slane %v1152, 1
        %v1159 = vrot.slane %v1153, 1
        %v1160 = vsel %vm715, %v1158, %v1159
        %v1161 = vrot.slane %v1154, 1
        %v1162 = vsel %vm715, %v1159, %v1161
        %1163 = vrot.lane.b32.xlu0 %v1160, 64
        %v1164 = vpop.permute.xlu0 %1163
        %1165 = vrot.lane.b32.xlu0 %v1162, 64
        %v1166 = vpop.permute.xlu0 %1165
        %v1169 = vrot.slane %v1152, 2
        %v1170 = vrot.slane %v1153, 2
        %v1171 = vsel %vm1025, %v1169, %v1170
        %v1172 = vrot.slane %v1154, 2
        %v1173 = vsel %vm1025, %v1170, %v1172
        %v1176 = vsel %vm427, %v1152, %v1164
        %v1177 = vsel %vm427, %v1153, %v1166
        %v1178 = vpack.c.bf16 %v1177, %v1176
        %v1179 = vpack.c.bf16 %v1173, %v1171
        %s1180 = scalar_lea.vmem [#allocation2], 432
        %v1181 = vld [vmem:[%s1180] sm:$0xff]
        %v1182 = vld [vmem:[%s1180 + $0x8] sm:$0xff]
        %v1183 = vld [vmem:[%s1180 + $0x10] sm:$0x3]
        %v1187 = vrot.slane %v1181, 1
        %v1188 = vrot.slane %v1182, 1
        %v1189 = vsel %vm715, %v1187, %v1188
        %v1190 = vrot.slane %v1183, 1
        %v1191 = vsel %vm715, %v1188, %v1190
        %1192 = vrot.lane.b32.xlu0 %v1189, 64
        %v1193 = vpop.permute.xlu0 %1192
        %1194 = vrot.lane.b32.xlu0 %v1191, 64
        %v1195 = vpop.permute.xlu0 %1194
        %v1198 = vrot.slane %v1181, 2
        %v1199 = vrot.slane %v1182, 2
        %v1200 = vsel %vm1025, %v1198, %v1199
        %v1201 = vrot.slane %v1183, 2
        %v1202 = vsel %vm1025, %v1199, %v1201
        %v1205 = vsel %vm427, %v1181, %v1193
        %v1206 = vsel %vm427, %v1182, %v1195
        %v1207 = vpack.c.bf16 %v1206, %v1205
        %v1208 = vpack.c.bf16 %v1202, %v1200
        %v1209 = vld [vmem:[%s4] sm:$0xf]
        %v1210 = vld [vmem:[%s4 + $0x4] sm:$0xf]
        %v1211 = vld [vmem:[%s4 + $0x8] sm:$0xf]
        %v1212 = vld [vmem:[%s4 + $0xc] sm:$0xf]
        %v1213 = vld [vmem:[%s4 + $0x10] sm:$0xf]
        %v1214 = vld [vmem:[%s4 + $0x14] sm:$0xf]
        %v1215 = vld [vmem:[%s4 + $0x18] sm:$0xf]
        %v1216 = vld [vmem:[%s4 + $0x1c] sm:$0xf]
        %v1217 = vld [vmem:[%s4 + $0x20] sm:$0xf]
        %v1218 = vld [vmem:[%s4 + $0x24] sm:$0xf]
        %v1219 = vld [vmem:[%s4 + $0x28] sm:$0xf]
        %v1220 = vld [vmem:[%s4 + $0x2c] sm:$0xf]
        %v1221 = vld [vmem:[%s4 + $0x30] sm:$0xf]
        %v1222 = vld [vmem:[%s4 + $0x34] sm:$0xf]
        %v1223 = vld [vmem:[%s4 + $0x38] sm:$0xf]
        %v1224 = vld [vmem:[%s4 + $0x3c] sm:$0xf]
        %v1225 = vld [vmem:[%s4 + $0x40] sm:$0xf]
        %v1226 = vld [vmem:[%s4 + $0x44] sm:$0xf]
        %v1227 = vld [vmem:[%s4 + $0x48] sm:$0xf]
        %v1228 = vld [vmem:[%s4 + $0x4c] sm:$0xf]
        %v1229 = vld [vmem:[%s4 + $0x50] sm:$0xf]
        %v1230 = vld [vmem:[%s4 + $0x54] sm:$0xf]
        %v1231 = vld [vmem:[%s4 + $0x58] sm:$0xf]
        %v1232 = vld [vmem:[%s4 + $0x5c] sm:$0xf]
        %v1257 = vunpack.c.l.b16 %v1209
        %v1258 = vunpack.c.l.b16 %v1210
        %v1259 = vunpack.c.l.b16 %v1211
        %v1260 = vunpack.c.l.b16 %v1212
        %v1261 = vunpack.c.l.b16 %v1213
        %v1262 = vunpack.c.l.b16 %v1214
        %v1263 = vunpack.c.l.b16 %v1215
        %v1264 = vunpack.c.l.b16 %v1216
        %v1265 = vunpack.c.l.b16 %v1217
        %v1266 = vunpack.c.l.b16 %v1218
        %v1267 = vunpack.c.l.b16 %v1219
        %v1268 = vunpack.c.l.b16 %v1220
        %v1269 = vunpack.c.l.b16 %v1221
        %v1270 = vunpack.c.l.b16 %v1222
        %v1271 = vunpack.c.l.b16 %v1223
        %v1272 = vunpack.c.l.b16 %v1224
        %v1273 = vunpack.c.l.b16 %v1225
        %v1274 = vunpack.c.l.b16 %v1226
        %v1275 = vunpack.c.l.b16 %v1227
        %v1276 = vunpack.c.l.b16 %v1228
        %v1277 = vunpack.c.l.b16 %v1229
        %v1278 = vunpack.c.l.b16 %v1230
        %v1279 = vunpack.c.l.b16 %v1231
        %v1280 = vunpack.c.l.b16 %v1232
        %v1281 = vpack.c.b16 %v1258, %v1257
        %v1282 = vpack.c.b16 %v1260, %v1259
        %v1283 = vpack.c.b16 %v1262, %v1261
        %v1284 = vpack.c.b16 %v1264, %v1263
        %v1285 = vpack.c.b16 %v1266, %v1265
        %v1286 = vpack.c.b16 %v1268, %v1267
        %v1287 = vpack.c.b16 %v1270, %v1269
        %v1288 = vpack.c.b16 %v1272, %v1271
        %v1289 = vpack.c.b16 %v1274, %v1273
        %v1290 = vpack.c.b16 %v1276, %v1275
        %v1291 = vpack.c.b16 %v1278, %v1277
        %v1292 = vpack.c.b16 %v1280, %v1279
        %v1306 = vsel %vm427, %v1036, 0
        %v1309 = vsel %vm427, %v1065, 0
        %v1312 = vsel %vm427, %v1094, 0
        %v1315 = vsel %vm427, %v1123, 0
        %v1318 = vsel %vm427, %v1151, 0
        %v1321 = vsel %vm427, %v1179, 0
        %v1324 = vsel %vm427, %v1208, 0
        %1326 = vmatprep.subr.bf16.mxu0 0
        %1327 = vmatpush1.bf16.msra.mxu0 %v1281
        %1328 = vmatprep.subr.bf16.mxu0 0
        %1329 = vmatpush1.bf16.msra.mxu0 %v1282
        %1330 = vmatprep.subr.bf16.mxu0 0
        %1331 = vmatpush1.bf16.msra.mxu0 %v1283
        %1332 = vmatprep.subr.bf16.mxu0 0
        %1333 = vmatpush1.bf16.msra.mxu0 %v1284
        %1334 = vmatprep.subr.bf16.mxu0 0
        %1335 = vmatpush1.bf16.msra.mxu0 %v1285
        %1336 = vmatprep.subr.bf16.mxu0 0
        %1337 = vmatpush1.bf16.msra.mxu0 %v1286
        %1338 = vmatprep.subr.bf16.mxu0 0
        %1339 = vmatpush1.bf16.msra.mxu0 %v1287
        %1340 = vmatprep.subr.bf16.mxu0 0
        %1341 = vmatpush1.bf16.msra.mxu0 %v1288
        %1342 = vmatprep.subr.bf16.mxu0 0
        %1343 = vmatpush1.bf16.msra.mxu0 %v1289
        %1344 = vmatprep.subr.bf16.mxu0 0
        %1345 = vmatpush1.bf16.msra.mxu0 %v1290
        %1346 = vmatprep.subr.bf16.mxu0 0
        %1347 = vmatpush1.bf16.msra.mxu0 %v1291
        %1348 = vmatprep.subr.bf16.mxu0 0
        %1349 = vmatpush1.bf16.msra.mxu0 %v1292
        %1350 = vmatprep.subr.bf16.mxu0 0
        %1351 = vmatpush1.bf16.msra.mxu0 0
        %1352 = vmatprep.subr.bf16.mxu0 0
        %1353 = vmatpush1.bf16.msra.mxu0 0
        %1354 = vmatprep.subr.bf16.mxu0 0
        %1355 = vmatpush1.bf16.msra.mxu0 0
        %1356 = vmatprep.subr.bf16.mxu0 0
        %1357 = vmatpush1.bf16.msra.mxu0 0
        %1358 = vmatprep.mubr.bf16.mxu0 %v1306
        %1359 = vmatmul.mubr.bf16.gmra.mrb[0].mxu0 %v1035
        %v1360 = vpop.f32.mrb[0].mxu0
        %v1361 = vadd.f32 0.0, %v1360
        %v1362 = vpop.f32.mrb[0].mxu0
        %v1363 = vpop.f32.mrb[0].mxu0
        %v1364 = vadd.f32 0.0, %v1363
        %v1365 = vpop.f32.mrb[0].mxu0
        %1366 = vmatprep.mubr.bf16.mxu0 %v1309
        %1367 = vmatmul.mubr.bf16.gmra.mrb[0].mxu0 %v1064
        %v1368 = vpop.f32.mrb[0].mxu0
        %v1369 = vadd.f32 0.0, %v1368
        %v1370 = vpop.f32.mrb[0].mxu0
        %v1371 = vpop.f32.mrb[0].mxu0
        %v1372 = vadd.f32 0.0, %v1371
        %v1373 = vpop.f32.mrb[0].mxu0
        %1374 = vmatprep.mubr.bf16.mxu0 %v1312
        %1375 = vmatmul.mubr.bf16.gmra.mrb[0].mxu0 %v1093
        %v1376 = vpop.f32.mrb[0].mxu0
        %v1377 = vadd.f32 0.0, %v1376
        %v1378 = vpop.f32.mrb[0].mxu0
        %v1379 = vpop.f32.mrb[0].mxu0
        %v1380 = vadd.f32 0.0, %v1379
        %v1381 = vpop.f32.mrb[0].mxu0
        %1382 = vmatprep.mubr.bf16.mxu0 %v1315
        %1383 = vmatmul.mubr.bf16.gmra.mrb[0].mxu0 %v1122
        %v1384 = vpop.f32.mrb[0].mxu0
        %v1385 = vadd.f32 0.0, %v1384
        %v1386 = vpop.f32.mrb[0].mxu0
        %v1387 = vpop.f32.mrb[0].mxu0
        %v1388 = vadd.f32 0.0, %v1387
        %v1389 = vpop.f32.mrb[0].mxu0
        %1390 = vmatprep.mubr.bf16.mxu0 %v1318
        %1391 = vmatmul.mubr.bf16.gmra.mrb[0].mxu0 %v1150
        %v1392 = vpop.f32.mrb[0].mxu0
        %v1393 = vadd.f32 0.0, %v1392
        %v1394 = vpop.f32.mrb[0].mxu0
        %v1395 = vpop.f32.mrb[0].mxu0
        %v1396 = vadd.f32 0.0, %v1395
        %v1397 = vpop.f32.mrb[0].mxu0
        %1398 = vmatprep.mubr.bf16.mxu0 %v1321
        %1399 = vmatmul.mubr.bf16.gmra.mrb[0].mxu0 %v1178
        %v1400 = vpop.f32.mrb[0].mxu0
        %v1401 = vadd.f32 0.0, %v1400
        %v1402 = vpop.f32.mrb[0].mxu0
        %v1403 = vpop.f32.mrb[0].mxu0
        %v1404 = vadd.f32 0.0, %v1403
        %v1405 = vpop.f32.mrb[0].mxu0
        %1406 = vmatprep.mubr.bf16.mxu0 %v1324
        %1407 = vmatmul.mubr.bf16.gmra.mrb[0].mxu0 %v1207
        %v1408 = vpop.f32.mrb[0].mxu0
        %v1409 = vadd.f32 0.0, %v1408
        %v1410 = vpop.f32.mrb[0].mxu0
        %v1411 = vpop.f32.mrb[0].mxu0
        %v1412 = vadd.f32 0.0, %v1411
        %v1413 = vpop.f32.mrb[0].mxu0
        %1414 = vdwg.mxu0
        %v1415 = vadd.f32 %v994, %v1361
        %v1416 = vadd.f32 %v995, %v1364
        %v1417 = vadd.f32 %v996, %v1369
        %v1418 = vadd.f32 %v997, %v1372
        %v1419 = vadd.f32 %v998, %v1377
        %v1420 = vadd.f32 %v999, %v1380
        %v1421 = vadd.f32 %v1000, %v1385
        %v1422 = vadd.f32 %v1001, %v1388
        %v1423 = vadd.f32 %v1002, %v1393
        %v1424 = vadd.f32 %v1003, %v1396
        %v1425 = vadd.f32 %v1004, %v1401
        %v1426 = vadd.f32 %v1005, %v1404
        %v1427 = vadd.f32 %v1006, %v1409
        %v1428 = vadd.f32 %v1007, %v1412
        %1429 = vst [vmem:[#allocation4] sm:$0xff] %v1415
        %1430 = vst [vmem:[#allocation4 + $0x8] sm:$0xff] %v1416
        %1431 = vst [vmem:[#allocation4 + $0x10] sm:$0xff] %v1417
        %1432 = vst [vmem:[#allocation4 + $0x18] sm:$0xff] %v1418
        %1433 = vst [vmem:[#allocation4 + $0x20] sm:$0xff] %v1419
        %1434 = vst [vmem:[#allocation4 + $0x28] sm:$0xff] %v1420
        %1435 = vst [vmem:[#allocation4 + $0x30] sm:$0xff] %v1421
        %1436 = vst [vmem:[#allocation4 + $0x38] sm:$0xff] %v1422
        %1437 = vst [vmem:[#allocation4 + $0x40] sm:$0xff] %v1423
        %1438 = vst [vmem:[#allocation4 + $0x48] sm:$0xff] %v1424
        %1439 = vst [vmem:[#allocation4 + $0x50] sm:$0xff] %v1425
        %1440 = vst [vmem:[#allocation4 + $0x58] sm:$0xff] %v1426
        %1441 = vst [vmem:[#allocation4 + $0x60] sm:$0xff] %v1427
        %1442 = vst [vmem:[#allocation4 + $0x68] sm:$0xff] %v1428
        %v1443 = vld [vmem:[#allocation4] sm:$0xff]
        %v1444 = vld [vmem:[#allocation4 + $0x8] sm:$0xff]
        %v1445 = vld [vmem:[#allocation4 + $0x10] sm:$0xff]
        %v1446 = vld [vmem:[#allocation4 + $0x18] sm:$0xff]
        %v1447 = vld [vmem:[#allocation4 + $0x20] sm:$0xff]
        %v1448 = vld [vmem:[#allocation4 + $0x28] sm:$0xff]
        %v1449 = vld [vmem:[#allocation4 + $0x30] sm:$0xff]
        %v1450 = vld [vmem:[#allocation4 + $0x38] sm:$0xff]
        %v1451 = vld [vmem:[#allocation4 + $0x40] sm:$0xff]
        %v1452 = vld [vmem:[#allocation4 + $0x48] sm:$0xff]
        %v1453 = vld [vmem:[#allocation4 + $0x50] sm:$0xff]
        %v1454 = vld [vmem:[#allocation4 + $0x58] sm:$0xff]
        %v1455 = vld [vmem:[#allocation4 + $0x60] sm:$0xff]
        %v1456 = vld [vmem:[#allocation4 + $0x68] sm:$0xff]
        %s1457 = scalar_lea.vmem [#allocation2], 48
        %v1458 = vld [vmem:[%s1457] sm:$0xff]
        %v1459 = vld [vmem:[%s1457 + $0x8] sm:$0xff]
        %v1460 = vld [vmem:[%s1457 + $0x10] sm:$0x3]
        %v1464 = vrot.slane %v1458, 1
        %v1465 = vrot.slane %v1459, 1
        %v1466 = vsel %vm715, %v1464, %v1465
        %v1467 = vrot.slane %v1460, 1
        %v1468 = vsel %vm715, %v1465, %v1467
        %1469 = vrot.lane.b32.xlu0 %v1466, 64
        %v1470 = vpop.permute.xlu0 %1469
        %1471 = vrot.lane.b32.xlu0 %v1468, 64
        %v1472 = vpop.permute.xlu0 %1471
        %v1475 = vrot.slane %v1458, 2
        %v1476 = vrot.slane %v1459, 2
        %v1477 = vsel %vm1025, %v1475, %v1476
        %v1478 = vrot.slane %v1460, 2
        %v1479 = vsel %vm1025, %v1476, %v1478
        %v1482 = vsel %vm427, %v1458, %v1470
        %v1483 = vsel %vm427, %v1459, %v1472
        %v1484 = vpack.c.bf16 %v1483, %v1482
        %v1485 = vpack.c.bf16 %v1479, %v1477
        %s1486 = scalar_lea.vmem [#allocation2], 120
        %v1487 = vld [vmem:[%s1486] sm:$0xff]
        %v1488 = vld [vmem:[%s1486 + $0x8] sm:$0xff]
        %v1489 = vld [vmem:[%s1486 + $0x10] sm:$0x3]
        %v1493 = vrot.slane %v1487, 1
        %v1494 = vrot.slane %v1488, 1
        %v1495 = vsel %vm715, %v1493, %v1494
        %v1496 = vrot.slane %v1489, 1
        %v1497 = vsel %vm715, %v1494, %v1496
        %1498 = vrot.lane.b32.xlu0 %v1495, 64
        %v1499 = vpop.permute.xlu0 %1498
        %1500 = vrot.lane.b32.xlu0 %v1497, 64
        %v1501 = vpop.permute.xlu0 %1500
        %v1504 = vrot.slane %v1487, 2
        %v1505 = vrot.slane %v1488, 2
        %v1506 = vsel %vm1025, %v1504, %v1505
        %v1507 = vrot.slane %v1489, 2
        %v1508 = vsel %vm1025, %v1505, %v1507
        %v1511 = vsel %vm427, %v1487, %v1499
        %v1512 = vsel %vm427, %v1488, %v1501
        %v1513 = vpack.c.bf16 %v1512, %v1511
        %v1514 = vpack.c.bf16 %v1508, %v1506
        %s1515 = scalar_lea.vmem [#allocation2], 192
        %v1516 = vld [vmem:[%s1515] sm:$0xff]
        %v1517 = vld [vmem:[%s1515 + $0x8] sm:$0xff]
        %v1518 = vld [vmem:[%s1515 + $0x10] sm:$0x3]
        %v1522 = vrot.slane %v1516, 1
        %v1523 = vrot.slane %v1517, 1
        %v1524 = vsel %vm715, %v1522, %v1523
        %v1525 = vrot.slane %v1518, 1
        %v1526 = vsel %vm715, %v1523, %v1525
        %1527 = vrot.lane.b32.xlu0 %v1524, 64
        %v1528 = vpop.permute.xlu0 %1527
        %1529 = vrot.lane.b32.xlu0 %v1526, 64
        %v1530 = vpop.permute.xlu0 %1529
        %v1533 = vrot.slane %v1516, 2
        %v1534 = vrot.slane %v1517, 2
        %v1535 = vsel %vm1025, %v1533, %v1534
        %v1536 = vrot.slane %v1518, 2
        %v1537 = vsel %vm1025, %v1534, %v1536
        %v1540 = vsel %vm427, %v1516, %v1528
        %v1541 = vsel %vm427, %v1517, %v1530
        %v1542 = vpack.c.bf16 %v1541, %v1540
        %v1543 = vpack.c.bf16 %v1537, %v1535
        %s1544 = scalar_lea.vmem [#allocation2], 264
        %v1545 = vld [vmem:[%s1544] sm:$0xff]
        %v1546 = vld [vmem:[%s1544 + $0x8] sm:$0xff]
        %v1547 = vld [vmem:[%s1544 + $0x10] sm:$0x3]
        %v1551 = vrot.slane %v1545, 1
        %v1552 = vrot.slane %v1546, 1
        %v1553 = vsel %vm715, %v1551, %v1552
        %v1554 = vrot.slane %v1547, 1
        %v1555 = vsel %vm715, %v1552, %v1554
        %1556 = vrot.lane.b32.xlu0 %v1553, 64
        %v1557 = vpop.permute.xlu0 %1556
        %1558 = vrot.lane.b32.xlu0 %v1555, 64
        %v1559 = vpop.permute.xlu0 %1558
        %v1562 = vrot.slane %v1545, 2
        %v1563 = vrot.slane %v1546, 2
        %v1564 = vsel %vm1025, %v1562, %v1563
        %v1565 = vrot.slane %v1547, 2
        %v1566 = vsel %vm1025, %v1563, %v1565
        %v1569 = vsel %vm427, %v1545, %v1557
        %v1570 = vsel %vm427, %v1546, %v1559
        %v1571 = vpack.c.bf16 %v1570, %v1569
        %v1572 = vpack.c.bf16 %v1566, %v1564
        %v1573 = vld [vmem:[%s967] sm:$0xff]
        %v1574 = vld [vmem:[%s967 + $0x8] sm:$0xff]
        %v1575 = vld [vmem:[%s967 + $0x10] sm:$0x3]
        %v1579 = vrot.slane %v1573, 1
        %v1580 = vrot.slane %v1574, 1
        %v1581 = vsel %vm715, %v1579, %v1580
        %v1582 = vrot.slane %v1575, 1
        %v1583 = vsel %vm715, %v1580, %v1582
        %1584 = vrot.lane.b32.xlu0 %v1581, 64
        %v1585 = vpop.permute.xlu0 %1584
        %1586 = vrot.lane.b32.xlu0 %v1583, 64
        %v1587 = vpop.permute.xlu0 %1586
        %v1590 = vrot.slane %v1573, 2
        %v1591 = vrot.slane %v1574, 2
        %v1592 = vsel %vm1025, %v1590, %v1591
        %v1593 = vrot.slane %v1575, 2
        %v1594 = vsel %vm1025, %v1591, %v1593
        %v1597 = vsel %vm427, %v1573, %v1585
        %v1598 = vsel %vm427, %v1574, %v1587
        %v1599 = vpack.c.bf16 %v1598, %v1597
        %v1600 = vpack.c.bf16 %v1594, %v1592
        %s1601 = scalar_lea.vmem [#allocation2], 408
        %v1602 = vld [vmem:[%s1601] sm:$0xff]
        %v1603 = vld [vmem:[%s1601 + $0x8] sm:$0xff]
        %v1604 = vld [vmem:[%s1601 + $0x10] sm:$0x3]
        %v1608 = vrot.slane %v1602, 1
        %v1609 = vrot.slane %v1603, 1
        %v1610 = vsel %vm715, %v1608, %v1609
        %v1611 = vrot.slane %v1604, 1
        %v1612 = vsel %vm715, %v1609, %v1611
        %1613 = vrot.lane.b32.xlu0 %v1610, 64
        %v1614 = vpop.permute.xlu0 %1613
        %1615 = vrot.lane.b32.xlu0 %v1612, 64
        %v1616 = vpop.permute.xlu0 %1615
        %v1619 = vrot.slane %v1602, 2
        %v1620 = vrot.slane %v1603, 2
        %v1621 = vsel %vm1025, %v1619, %v1620
        %v1622 = vrot.slane %v1604, 2
        %v1623 = vsel %vm1025, %v1620, %v1622
        %v1626 = vsel %vm427, %v1602, %v1614
        %v1627 = vsel %vm427, %v1603, %v1616
        %v1628 = vpack.c.bf16 %v1627, %v1626
        %v1629 = vpack.c.bf16 %v1623, %v1621
        %s1630 = scalar_lea.vmem [#allocation2], 480
        %v1631 = vld [vmem:[%s1630] sm:$0xff]
        %v1632 = vld [vmem:[%s1630 + $0x8] sm:$0xff]
        %v1633 = vld [vmem:[%s1630 + $0x10] sm:$0x3]
        %v1637 = vrot.slane %v1631, 1
        %v1638 = vrot.slane %v1632, 1
        %v1639 = vsel %vm715, %v1637, %v1638
        %v1640 = vrot.slane %v1633, 1
        %v1641 = vsel %vm715, %v1638, %v1640
        %1642 = vrot.lane.b32.xlu0 %v1639, 64
        %v1643 = vpop.permute.xlu0 %1642
        %1644 = vrot.lane.b32.xlu0 %v1641, 64
        %v1645 = vpop.permute.xlu0 %1644
        %v1648 = vrot.slane %v1631, 2
        %v1649 = vrot.slane %v1632, 2
        %v1650 = vsel %vm1025, %v1648, %v1649
        %v1651 = vrot.slane %v1633, 2
        %v1652 = vsel %vm1025, %v1649, %v1651
        %v1655 = vsel %vm427, %v1631, %v1643
        %v1656 = vsel %vm427, %v1632, %v1645
        %v1657 = vpack.c.bf16 %v1656, %v1655
        %v1658 = vpack.c.bf16 %v1652, %v1650
        %s1659 = scalar_lea.vmem %s4, 96
        %v1660 = vld [vmem:[%s1659] sm:$0xf]
        %v1661 = vld [vmem:[%s1659 + $0x4] sm:$0xf]
        %v1662 = vld [vmem:[%s1659 + $0x8] sm:$0xf]
        %v1663 = vld [vmem:[%s1659 + $0xc] sm:$0xf]
        %v1664 = vld [vmem:[%s1659 + $0x10] sm:$0xf]
        %v1665 = vld [vmem:[%s1659 + $0x14] sm:$0xf]
        %v1666 = vld [vmem:[%s1659 + $0x18] sm:$0xf]
        %v1667 = vld [vmem:[%s1659 + $0x1c] sm:$0xf]
        %v1668 = vld [vmem:[%s1659 + $0x20] sm:$0xf]
        %v1669 = vld [vmem:[%s1659 + $0x24] sm:$0xf]
        %v1670 = vld [vmem:[%s1659 + $0x28] sm:$0xf]
        %v1671 = vld [vmem:[%s1659 + $0x2c] sm:$0xf]
        %v1672 = vld [vmem:[%s1659 + $0x30] sm:$0xf]
        %v1673 = vld [vmem:[%s1659 + $0x34] sm:$0xf]
        %v1674 = vld [vmem:[%s1659 + $0x38] sm:$0xf]
        %v1675 = vld [vmem:[%s1659 + $0x3c] sm:$0xf]
        %v1676 = vld [vmem:[%s1659 + $0x40] sm:$0xf]
        %v1677 = vld [vmem:[%s1659 + $0x44] sm:$0xf]
        %v1678 = vld [vmem:[%s1659 + $0x48] sm:$0xf]
        %v1679 = vld [vmem:[%s1659 + $0x4c] sm:$0xf]
        %v1680 = vld [vmem:[%s1659 + $0x50] sm:$0xf]
        %v1681 = vld [vmem:[%s1659 + $0x54] sm:$0xf]
        %v1682 = vld [vmem:[%s1659 + $0x58] sm:$0xf]
        %v1683 = vld [vmem:[%s1659 + $0x5c] sm:$0xf]
        %v1708 = vunpack.c.l.b16 %v1660
        %v1709 = vunpack.c.l.b16 %v1661
        %v1710 = vunpack.c.l.b16 %v1662
        %v1711 = vunpack.c.l.b16 %v1663
        %v1712 = vunpack.c.l.b16 %v1664
        %v1713 = vunpack.c.l.b16 %v1665
        %v1714 = vunpack.c.l.b16 %v1666
        %v1715 = vunpack.c.l.b16 %v1667
        %v1716 = vunpack.c.l.b16 %v1668
        %v1717 = vunpack.c.l.b16 %v1669
        %v1718 = vunpack.c.l.b16 %v1670
        %v1719 = vunpack.c.l.b16 %v1671
        %v1720 = vunpack.c.l.b16 %v1672
        %v1721 = vunpack.c.l.b16 %v1673
        %v1722 = vunpack.c.l.b16 %v1674
        %v1723 = vunpack.c.l.b16 %v1675
        %v1724 = vunpack.c.l.b16 %v1676
        %v1725 = vunpack.c.l.b16 %v1677
        %v1726 = vunpack.c.l.b16 %v1678
        %v1727 = vunpack.c.l.b16 %v1679
        %v1728 = vunpack.c.l.b16 %v1680
        %v1729 = vunpack.c.l.b16 %v1681
        %v1730 = vunpack.c.l.b16 %v1682
        %v1731 = vunpack.c.l.b16 %v1683
        %v1732 = vpack.c.b16 %v1709, %v1708
        %v1733 = vpack.c.b16 %v1711, %v1710
        %v1734 = vpack.c.b16 %v1713, %v1712
        %v1735 = vpack.c.b16 %v1715, %v1714
        %v1736 = vpack.c.b16 %v1717, %v1716
        %v1737 = vpack.c.b16 %v1719, %v1718
        %v1738 = vpack.c.b16 %v1721, %v1720
        %v1739 = vpack.c.b16 %v1723, %v1722
        %v1740 = vpack.c.b16 %v1725, %v1724
        %v1741 = vpack.c.b16 %v1727, %v1726
        %v1742 = vpack.c.b16 %v1729, %v1728
        %v1743 = vpack.c.b16 %v1731, %v1730
        %v1757 = vsel %vm427, %v1485, 0
        %v1760 = vsel %vm427, %v1514, 0
        %v1763 = vsel %vm427, %v1543, 0
        %v1766 = vsel %vm427, %v1572, 0
        %v1769 = vsel %vm427, %v1600, 0
        %v1772 = vsel %vm427, %v1629, 0
        %v1775 = vsel %vm427, %v1658, 0
        %1777 = vmatprep.subr.bf16.mxu0 0
        %1778 = vmatpush1.bf16.msra.mxu0 %v1732
        %1779 = vmatprep.subr.bf16.mxu0 0
        %1780 = vmatpush1.bf16.msra.mxu0 %v1733
        %1781 = vmatprep.subr.bf16.mxu0 0
        %1782 = vmatpush1.bf16.msra.mxu0 %v1734
        %1783 = vmatprep.subr.bf16.mxu0 0
        %1784 = vmatpush1.bf16.msra.mxu0 %v1735
        %1785 = vmatprep.subr.bf16.mxu0 0
        %1786 = vmatpush1.bf16.msra.mxu0 %v1736
        %1787 = vmatprep.subr.bf16.mxu0 0
        %1788 = vmatpush1.bf16.msra.mxu0 %v1737
        %1789 = vmatprep.subr.bf16.mxu0 0
        %1790 = vmatpush1.bf16.msra.mxu0 %v1738
        %1791 = vmatprep.subr.bf16.mxu0 0
        %1792 = vmatpush1.bf16.msra.mxu0 %v1739
        %1793 = vmatprep.subr.bf16.mxu0 0
        %1794 = vmatpush1.bf16.msra.mxu0 %v1740
        %1795 = vmatprep.subr.bf16.mxu0 0
        %1796 = vmatpush1.bf16.msra.mxu0 %v1741
        %1797 = vmatprep.subr.bf16.mxu0 0
        %1798 = vmatpush1.bf16.msra.mxu0 %v1742
        %1799 = vmatprep.subr.bf16.mxu0 0
        %1800 = vmatpush1.bf16.msra.mxu0 %v1743
        %1801 = vmatprep.subr.bf16.mxu0 0
        %1802 = vmatpush1.bf16.msra.mxu0 0
        %1803 = vmatprep.subr.bf16.mxu0 0
        %1804 = vmatpush1.bf16.msra.mxu0 0
        %1805 = vmatprep.subr.bf16.mxu0 0
        %1806 = vmatpush1.bf16.msra.mxu0 0
        %1807 = vmatprep.subr.bf16.mxu0 0
        %1808 = vmatpush1.bf16.msra.mxu0 0
        %1809 = vmatprep.mubr.bf16.mxu0 %v1757
        %1810 = vmatmul.mubr.bf16.gmra.mrb[0].mxu0 %v1484
        %v1811 = vpop.f32.mrb[0].mxu0
        %v1812 = vadd.f32 0.0, %v1811
        %v1813 = vpop.f32.mrb[0].mxu0
        %v1814 = vpop.f32.mrb[0].mxu0
        %v1815 = vadd.f32 0.0, %v1814
        %v1816 = vpop.f32.mrb[0].mxu0
        %1817 = vmatprep.mubr.bf16.mxu0 %v1760
        %1818 = vmatmul.mubr.bf16.gmra.mrb[0].mxu0 %v1513
        %v1819 = vpop.f32.mrb[0].mxu0
        %v1820 = vadd.f32 0.0, %v1819
        %v1821 = vpop.f32.mrb[0].mxu0
        %v1822 = vpop.f32.mrb[0].mxu0
        %v1823 = vadd.f32 0.0, %v1822
        %v1824 = vpop.f32.mrb[0].mxu0
        %1825 = vmatprep.mubr.bf16.mxu0 %v1763
        %1826 = vmatmul.mubr.bf16.gmra.mrb[0].mxu0 %v1542
        %v1827 = vpop.f32.mrb[0].mxu0
        %v1828 = vadd.f32 0.0, %v1827
        %v1829 = vpop.f32.mrb[0].mxu0
        %v1830 = vpop.f32.mrb[0].mxu0
        %v1831 = vadd.f32 0.0, %v1830
        %v1832 = vpop.f32.mrb[0].mxu0
        %1833 = vmatprep.mubr.bf16.mxu0 %v1766
        %1834 = vmatmul.mubr.bf16.gmra.mrb[0].mxu0 %v1571
        %v1835 = vpop.f32.mrb[0].mxu0
        %v1836 = vadd.f32 0.0, %v1835
        %v1837 = vpop.f32.mrb[0].mxu0
        %v1838 = vpop.f32.mrb[0].mxu0
        %v1839 = vadd.f32 0.0, %v1838
        %v1840 = vpop.f32.mrb[0].mxu0
        %1841 = vmatprep.mubr.bf16.mxu0 %v1769
        %1842 = vmatmul.mubr.bf16.gmra.mrb[0].mxu0 %v1599
        %v1843 = vpop.f32.mrb[0].mxu0
        %v1844 = vadd.f32 0.0, %v1843
        %v1845 = vpop.f32.mrb[0].mxu0
        %v1846 = vpop.f32.mrb[0].mxu0
        %v1847 = vadd.f32 0.0, %v1846
        %v1848 = vpop.f32.mrb[0].mxu0
        %1849 = vmatprep.mubr.bf16.mxu0 %v1772
        %1850 = vmatmul.mubr.bf16.gmra.mrb[0].mxu0 %v1628
        %v1851 = vpop.f32.mrb[0].mxu0
        %v1852 = vadd.f32 0.0, %v1851
        %v1853 = vpop.f32.mrb[0].mxu0
        %v1854 = vpop.f32.mrb[0].mxu0
        %v1855 = vadd.f32 0.0, %v1854
        %v1856 = vpop.f32.mrb[0].mxu0
        %1857 = vmatprep.mubr.bf16.mxu0 %v1775
        %1858 = vmatmul.mubr.bf16.gmra.mrb[0].mxu0 %v1657
        %v1859 = vpop.f32.mrb[0].mxu0
        %v1860 = vadd.f32 0.0, %v1859
        %v1861 = vpop.f32.mrb[0].mxu0
        %v1862 = vpop.f32.mrb[0].mxu0
        %v1863 = vadd.f32 0.0, %v1862
        %v1864 = vpop.f32.mrb[0].mxu0
        %1865 = vdwg.mxu0
        %v1866 = vadd.f32 %v1443, %v1812
        %v1867 = vadd.f32 %v1444, %v1815
        %v1868 = vadd.f32 %v1445, %v1820
        %v1869 = vadd.f32 %v1446, %v1823
        %v1870 = vadd.f32 %v1447, %v1828
        %v1871 = vadd.f32 %v1448, %v1831
        %v1872 = vadd.f32 %v1449, %v1836
        %v1873 = vadd.f32 %v1450, %v1839
        %v1874 = vadd.f32 %v1451, %v1844
        %v1875 = vadd.f32 %v1452, %v1847
        %v1876 = vadd.f32 %v1453, %v1852
        %v1877 = vadd.f32 %v1454, %v1855
        %v1878 = vadd.f32 %v1455, %v1860
        %v1879 = vadd.f32 %v1456, %v1863
        %1880 = vst [vmem:[#allocation4] sm:$0xff] %v1866
        %1881 = vst [vmem:[#allocation4 + $0x8] sm:$0xff] %v1867
        %1882 = vst [vmem:[#allocation4 + $0x10] sm:$0xff] %v1868
        %1883 = vst [vmem:[#allocation4 + $0x18] sm:$0xff] %v1869
        %1884 = vst [vmem:[#allocation4 + $0x20] sm:$0xff] %v1870
        %1885 = vst [vmem:[#allocation4 + $0x28] sm:$0xff] %v1871
        %1886 = vst [vmem:[#allocation4 + $0x30] sm:$0xff] %v1872
        %1887 = vst [vmem:[#allocation4 + $0x38] sm:$0xff] %v1873
        %1888 = vst [vmem:[#allocation4 + $0x40] sm:$0xff] %v1874
        %1889 = vst [vmem:[#allocation4 + $0x48] sm:$0xff] %v1875
        %1890 = vst [vmem:[#allocation4 + $0x50] sm:$0xff] %v1876
        %1891 = vst [vmem:[#allocation4 + $0x58] sm:$0xff] %v1877
        %1892 = vst [vmem:[#allocation4 + $0x60] sm:$0xff] %v1878
        %1893 = vst [vmem:[#allocation4 + $0x68] sm:$0xff] %v1879
        %v1894 = vld [vmem:[#allocation4] sm:$0xff]
        %v1895 = vld [vmem:[#allocation4 + $0x8] sm:$0xff]
        %v1896 = vld [vmem:[#allocation4 + $0x10] sm:$0xff]
        %v1897 = vld [vmem:[#allocation4 + $0x18] sm:$0xff]
        %v1898 = vld [vmem:[#allocation4 + $0x20] sm:$0xff]
        %v1899 = vld [vmem:[#allocation4 + $0x28] sm:$0xff]
        %v1900 = vld [vmem:[#allocation4 + $0x30] sm:$0xff]
        %v1901 = vld [vmem:[#allocation4 + $0x38] sm:$0xff]
        %v1902 = vld [vmem:[#allocation4 + $0x40] sm:$0xff]
        %v1903 = vld [vmem:[#allocation4 + $0x48] sm:$0xff]
        %v1904 = vld [vmem:[#allocation4 + $0x50] sm:$0xff]
        %v1905 = vld [vmem:[#allocation4 + $0x58] sm:$0xff]
        %v1906 = vld [vmem:[#allocation4 + $0x60] sm:$0xff]
        %v1907 = vld [vmem:[#allocation4 + $0x68] sm:$0xff]
        %s1908 = scalar_lea.vmem [#allocation2], 96
        %v1909 = vld [vmem:[%s1908] sm:$0xff]
        %v1910 = vld [vmem:[%s1908 + $0x8] sm:$0xff]
        %v1911 = vld [vmem:[%s1908 + $0x10] sm:$0x3]
        %v1915 = vrot.slane %v1909, 1
        %v1916 = vrot.slane %v1910, 1
        %v1917 = vsel %vm715, %v1915, %v1916
        %v1918 = vrot.slane %v1911, 1
        %v1919 = vsel %vm715, %v1916, %v1918
        %1920 = vrot.lane.b32.xlu0 %v1917, 64
        %v1921 = vpop.permute.xlu0 %1920
        %1922 = vrot.lane.b32.xlu0 %v1919, 64
        %v1923 = vpop.permute.xlu0 %1922
        %v1926 = vrot.slane %v1909, 2
        %v1927 = vrot.slane %v1910, 2
        %v1928 = vsel %vm1025, %v1926, %v1927
        %v1929 = vrot.slane %v1911, 2
        %v1930 = vsel %vm1025, %v1927, %v1929
        %v1933 = vsel %vm427, %v1909, %v1921
        %v1934 = vsel %vm427, %v1910, %v1923
        %v1935 = vpack.c.bf16 %v1934, %v1933
        %v1936 = vpack.c.bf16 %v1930, %v1928
        %s1937 = scalar_lea.vmem [#allocation2], 168
        %v1938 = vld [vmem:[%s1937] sm:$0xff]
        %v1939 = vld [vmem:[%s1937 + $0x8] sm:$0xff]
        %v1940 = vld [vmem:[%s1937 + $0x10] sm:$0x3]
        %v1944 = vrot.slane %v1938, 1
        %v1945 = vrot.slane %v1939, 1
        %v1946 = vsel %vm715, %v1944, %v1945
        %v1947 = vrot.slane %v1940, 1
        %v1948 = vsel %vm715, %v1945, %v1947
        %1949 = vrot.lane.b32.xlu0 %v1946, 64
        %v1950 = vpop.permute.xlu0 %1949
        %1951 = vrot.lane.b32.xlu0 %v1948, 64
        %v1952 = vpop.permute.xlu0 %1951
        %v1955 = vrot.slane %v1938, 2
        %v1956 = vrot.slane %v1939, 2
        %v1957 = vsel %vm1025, %v1955, %v1956
        %v1958 = vrot.slane %v1940, 2
        %v1959 = vsel %vm1025, %v1956, %v1958
        %v1962 = vsel %vm427, %v1938, %v1950
        %v1963 = vsel %vm427, %v1939, %v1952
        %v1964 = vpack.c.bf16 %v1963, %v1962
        %v1965 = vpack.c.bf16 %v1959, %v1957
        %s1966 = scalar_lea.vmem [#allocation2], 240
        %v1967 = vld [vmem:[%s1966] sm:$0xff]
        %v1968 = vld [vmem:[%s1966 + $0x8] sm:$0xff]
        %v1969 = vld [vmem:[%s1966 + $0x10] sm:$0x3]
        %v1973 = vrot.slane %v1967, 1
        %v1974 = vrot.slane %v1968, 1
        %v1975 = vsel %vm715, %v1973, %v1974
        %v1976 = vrot.slane %v1969, 1
        %v1977 = vsel %vm715, %v1974, %v1976
        %1978 = vrot.lane.b32.xlu0 %v1975, 64
        %v1979 = vpop.permute.xlu0 %1978
        %1980 = vrot.lane.b32.xlu0 %v1977, 64
        %v1981 = vpop.permute.xlu0 %1980
        %v1984 = vrot.slane %v1967, 2
        %v1985 = vrot.slane %v1968, 2
        %v1986 = vsel %vm1025, %v1984, %v1985
        %v1987 = vrot.slane %v1969, 2
        %v1988 = vsel %vm1025, %v1985, %v1987
        %v1991 = vsel %vm427, %v1967, %v1979
        %v1992 = vsel %vm427, %v1968, %v1981
        %v1993 = vpack.c.bf16 %v1992, %v1991
        %v1994 = vpack.c.bf16 %v1988, %v1986
        %v1995 = vld [vmem:[%s962] sm:$0xff]
        %v1996 = vld [vmem:[%s962 + $0x8] sm:$0xff]
        %v1997 = vld [vmem:[%s962 + $0x10] sm:$0x3]
        %v2001 = vrot.slane %v1995, 1
        %v2002 = vrot.slane %v1996, 1
        %v2003 = vsel %vm715, %v2001, %v2002
        %v2004 = vrot.slane %v1997, 1
        %v2005 = vsel %vm715, %v2002, %v2004
        %2006 = vrot.lane.b32.xlu0 %v2003, 64
        %v2007 = vpop.permute.xlu0 %2006
        %2008 = vrot.lane.b32.xlu0 %v2005, 64
        %v2009 = vpop.permute.xlu0 %2008
        %v2012 = vrot.slane %v1995, 2
        %v2013 = vrot.slane %v1996, 2
        %v2014 = vsel %vm1025, %v2012, %v2013
        %v2015 = vrot.slane %v1997, 2
        %v2016 = vsel %vm1025, %v2013, %v2015
        %v2019 = vsel %vm427, %v1995, %v2007
        %v2020 = vsel %vm427, %v1996, %v2009
        %v2021 = vpack.c.bf16 %v2020, %v2019
        %v2022 = vpack.c.bf16 %v2016, %v2014
        %v2023 = vld [vmem:[%s977] sm:$0xff]
        %v2024 = vld [vmem:[%s977 + $0x8] sm:$0xff]
        %v2025 = vld [vmem:[%s977 + $0x10] sm:$0x3]
        %v2029 = vrot.slane %v2023, 1
        %v2030 = vrot.slane %v2024, 1
        %v2031 = vsel %vm715, %v2029, %v2030
        %v2032 = vrot.slane %v2025, 1
        %v2033 = vsel %vm715, %v2030, %v2032
        %2034 = vrot.lane.b32.xlu0 %v2031, 64
        %v2035 = vpop.permute.xlu0 %2034
        %2036 = vrot.lane.b32.xlu0 %v2033, 64
        %v2037 = vpop.permute.xlu0 %2036
        %v2040 = vrot.slane %v2023, 2
        %v2041 = vrot.slane %v2024, 2
        %v2042 = vsel %vm1025, %v2040, %v2041
        %v2043 = vrot.slane %v2025, 2
        %v2044 = vsel %vm1025, %v2041, %v2043
        %v2047 = vsel %vm427, %v2023, %v2035
        %v2048 = vsel %vm427, %v2024, %v2037
        %v2049 = vpack.c.bf16 %v2048, %v2047
        %v2050 = vpack.c.bf16 %v2044, %v2042
        %s2051 = scalar_lea.vmem [#allocation2], 456
        %v2052 = vld [vmem:[%s2051] sm:$0xff]
        %v2053 = vld [vmem:[%s2051 + $0x8] sm:$0xff]
        %v2054 = vld [vmem:[%s2051 + $0x10] sm:$0x3]
        %v2058 = vrot.slane %v2052, 1
        %v2059 = vrot.slane %v2053, 1
        %v2060 = vsel %vm715, %v2058, %v2059
        %v2061 = vrot.slane %v2054, 1
        %v2062 = vsel %vm715, %v2059, %v2061
        %2063 = vrot.lane.b32.xlu0 %v2060, 64
        %v2064 = vpop.permute.xlu0 %2063
        %2065 = vrot.lane.b32.xlu0 %v2062, 64
        %v2066 = vpop.permute.xlu0 %2065
        %v2069 = vrot.slane %v2052, 2
        %v2070 = vrot.slane %v2053, 2
        %v2071 = vsel %vm1025, %v2069, %v2070
        %v2072 = vrot.slane %v2054, 2
        %v2073 = vsel %vm1025, %v2070, %v2072
        %v2076 = vsel %vm427, %v2052, %v2064
        %v2077 = vsel %vm427, %v2053, %v2066
        %v2078 = vpack.c.bf16 %v2077, %v2076
        %v2079 = vpack.c.bf16 %v2073, %v2071
        %s2080 = scalar_lea.vmem [#allocation2], 528
        %v2081 = vld [vmem:[%s2080] sm:$0xff]
        %v2082 = vld [vmem:[%s2080 + $0x8] sm:$0xff]
        %v2083 = vld [vmem:[%s2080 + $0x10] sm:$0x3]
        %v2087 = vrot.slane %v2081, 1
        %v2088 = vrot.slane %v2082, 1
        %v2089 = vsel %vm715, %v2087, %v2088
        %v2090 = vrot.slane %v2083, 1
        %v2091 = vsel %vm715, %v2088, %v2090
        %2092 = vrot.lane.b32.xlu0 %v2089, 64
        %v2093 = vpop.permute.xlu0 %2092
        %2094 = vrot.lane.b32.xlu0 %v2091, 64
        %v2095 = vpop.permute.xlu0 %2094
        %v2098 = vrot.slane %v2081, 2
        %v2099 = vrot.slane %v2082, 2
        %v2100 = vsel %vm1025, %v2098, %v2099
        %v2101 = vrot.slane %v2083, 2
        %v2102 = vsel %vm1025, %v2099, %v2101
        %v2105 = vsel %vm427, %v2081, %v2093
        %v2106 = vsel %vm427, %v2082, %v2095
        %v2107 = vpack.c.bf16 %v2106, %v2105
        %v2108 = vpack.c.bf16 %v2102, %v2100
        %s2109 = scalar_lea.vmem %s4, 192
        %v2110 = vld [vmem:[%s2109] sm:$0xf]
        %v2111 = vld [vmem:[%s2109 + $0x4] sm:$0xf]
        %v2112 = vld [vmem:[%s2109 + $0x8] sm:$0xf]
        %v2113 = vld [vmem:[%s2109 + $0xc] sm:$0xf]
        %v2114 = vld [vmem:[%s2109 + $0x10] sm:$0xf]
        %v2115 = vld [vmem:[%s2109 + $0x14] sm:$0xf]
        %v2116 = vld [vmem:[%s2109 + $0x18] sm:$0xf]
        %v2117 = vld [vmem:[%s2109 + $0x1c] sm:$0xf]
        %v2118 = vld [vmem:[%s2109 + $0x20] sm:$0xf]
        %v2119 = vld [vmem:[%s2109 + $0x24] sm:$0xf]
        %v2120 = vld [vmem:[%s2109 + $0x28] sm:$0xf]
        %v2121 = vld [vmem:[%s2109 + $0x2c] sm:$0xf]
        %v2122 = vld [vmem:[%s2109 + $0x30] sm:$0xf]
        %v2123 = vld [vmem:[%s2109 + $0x34] sm:$0xf]
        %v2124 = vld [vmem:[%s2109 + $0x38] sm:$0xf]
        %v2125 = vld [vmem:[%s2109 + $0x3c] sm:$0xf]
        %v2126 = vld [vmem:[%s2109 + $0x40] sm:$0xf]
        %v2127 = vld [vmem:[%s2109 + $0x44] sm:$0xf]
        %v2128 = vld [vmem:[%s2109 + $0x48] sm:$0xf]
        %v2129 = vld [vmem:[%s2109 + $0x4c] sm:$0xf]
        %v2130 = vld [vmem:[%s2109 + $0x50] sm:$0xf]
        %v2131 = vld [vmem:[%s2109 + $0x54] sm:$0xf]
        %v2132 = vld [vmem:[%s2109 + $0x58] sm:$0xf]
        %v2133 = vld [vmem:[%s2109 + $0x5c] sm:$0xf]
        %v2158 = vunpack.c.l.b16 %v2110
        %v2159 = vunpack.c.l.b16 %v2111
        %v2160 = vunpack.c.l.b16 %v2112
        %v2161 = vunpack.c.l.b16 %v2113
        %v2162 = vunpack.c.l.b16 %v2114
        %v2163 = vunpack.c.l.b16 %v2115
        %v2164 = vunpack.c.l.b16 %v2116
        %v2165 = vunpack.c.l.b16 %v2117
        %v2166 = vunpack.c.l.b16 %v2118
        %v2167 = vunpack.c.l.b16 %v2119
        %v2168 = vunpack.c.l.b16 %v2120
        %v2169 = vunpack.c.l.b16 %v2121
        %v2170 = vunpack.c.l.b16 %v2122
        %v2171 = vunpack.c.l.b16 %v2123
        %v2172 = vunpack.c.l.b16 %v2124
        %v2173 = vunpack.c.l.b16 %v2125
        %v2174 = vunpack.c.l.b16 %v2126
        %v2175 = vunpack.c.l.b16 %v2127
        %v2176 = vunpack.c.l.b16 %v2128
        %v2177 = vunpack.c.l.b16 %v2129
        %v2178 = vunpack.c.l.b16 %v2130
        %v2179 = vunpack.c.l.b16 %v2131
        %v2180 = vunpack.c.l.b16 %v2132
        %v2181 = vunpack.c.l.b16 %v2133
        %v2182 = vpack.c.b16 %v2159, %v2158
        %v2183 = vpack.c.b16 %v2161, %v2160
        %v2184 = vpack.c.b16 %v2163, %v2162
        %v2185 = vpack.c.b16 %v2165, %v2164
        %v2186 = vpack.c.b16 %v2167, %v2166
        %v2187 = vpack.c.b16 %v2169, %v2168
        %v2188 = vpack.c.b16 %v2171, %v2170
        %v2189 = vpack.c.b16 %v2173, %v2172
        %v2190 = vpack.c.b16 %v2175, %v2174
        %v2191 = vpack.c.b16 %v2177, %v2176
        %v2192 = vpack.c.b16 %v2179, %v2178
        %v2193 = vpack.c.b16 %v2181, %v2180
        %v2207 = vsel %vm427, %v1936, 0
        %v2210 = vsel %vm427, %v1965, 0
        %v2213 = vsel %vm427, %v1994, 0
        %v2216 = vsel %vm427, %v2022, 0
        %v2219 = vsel %vm427, %v2050, 0
        %v2222 = vsel %vm427, %v2079, 0
        %v2225 = vsel %vm427, %v2108, 0
        %2227 = vmatprep.subr.bf16.mxu0 0
        %2228 = vmatpush1.bf16.msra.mxu0 %v2182
        %2229 = vmatprep.subr.bf16.mxu0 0
        %2230 = vmatpush1.bf16.msra.mxu0 %v2183
        %2231 = vmatprep.subr.bf16.mxu0 0
        %2232 = vmatpush1.bf16.msra.mxu0 %v2184
        %2233 = vmatprep.subr.bf16.mxu0 0
        %2234 = vmatpush1.bf16.msra.mxu0 %v2185
        %2235 = vmatprep.subr.bf16.mxu0 0
        %2236 = vmatpush1.bf16.msra.mxu0 %v2186
        %2237 = vmatprep.subr.bf16.mxu0 0
        %2238 = vmatpush1.bf16.msra.mxu0 %v2187
        %2239 = vmatprep.subr.bf16.mxu0 0
        %2240 = vmatpush1.bf16.msra.mxu0 %v2188
        %2241 = vmatprep.subr.bf16.mxu0 0
        %2242 = vmatpush1.bf16.msra.mxu0 %v2189
        %2243 = vmatprep.subr.bf16.mxu0 0
        %2244 = vmatpush1.bf16.msra.mxu0 %v2190
        %2245 = vmatprep.subr.bf16.mxu0 0
        %2246 = vmatpush1.bf16.msra.mxu0 %v2191
        %2247 = vmatprep.subr.bf16.mxu0 0
        %2248 = vmatpush1.bf16.msra.mxu0 %v2192
        %2249 = vmatprep.subr.bf16.mxu0 0
        %2250 = vmatpush1.bf16.msra.mxu0 %v2193
        %2251 = vmatprep.subr.bf16.mxu0 0
        %2252 = vmatpush1.bf16.msra.mxu0 0
        %2253 = vmatprep.subr.bf16.mxu0 0
        %2254 = vmatpush1.bf16.msra.mxu0 0
        %2255 = vmatprep.subr.bf16.mxu0 0
        %2256 = vmatpush1.bf16.msra.mxu0 0
        %2257 = vmatprep.subr.bf16.mxu0 0
        %2258 = vmatpush1.bf16.msra.mxu0 0
        %2259 = vmatprep.mubr.bf16.mxu0 %v2207
        %2260 = vmatmul.mubr.bf16.gmra.mrb[0].mxu0 %v1935
        %v2261 = vpop.f32.mrb[0].mxu0
        %v2262 = vadd.f32 0.0, %v2261
        %v2263 = vpop.f32.mrb[0].mxu0
        %v2264 = vpop.f32.mrb[0].mxu0
        %v2265 = vadd.f32 0.0, %v2264
        %v2266 = vpop.f32.mrb[0].mxu0
        %2267 = vmatprep.mubr.bf16.mxu0 %v2210
        %2268 = vmatmul.mubr.bf16.gmra.mrb[0].mxu0 %v1964
        %v2269 = vpop.f32.mrb[0].mxu0
        %v2270 = vadd.f32 0.0, %v2269
        %v2271 = vpop.f32.mrb[0].mxu0
        %v2272 = vpop.f32.mrb[0].mxu0
        %v2273 = vadd.f32 0.0, %v2272
        %v2274 = vpop.f32.mrb[0].mxu0
        %2275 = vmatprep.mubr.bf16.mxu0 %v2213
        %2276 = vmatmul.mubr.bf16.gmra.mrb[0].mxu0 %v1993
        %v2277 = vpop.f32.mrb[0].mxu0
        %v2278 = vadd.f32 0.0, %v2277
        %v2279 = vpop.f32.mrb[0].mxu0
        %v2280 = vpop.f32.mrb[0].mxu0
        %v2281 = vadd.f32 0.0, %v2280
        %v2282 = vpop.f32.mrb[0].mxu0
        %2283 = vmatprep.mubr.bf16.mxu0 %v2216
        %2284 = vmatmul.mubr.bf16.gmra.mrb[0].mxu0 %v2021
        %v2285 = vpop.f32.mrb[0].mxu0
        %v2286 = vadd.f32 0.0, %v2285
        %v2287 = vpop.f32.mrb[0].mxu0
        %v2288 = vpop.f32.mrb[0].mxu0
        %v2289 = vadd.f32 0.0, %v2288
        %v2290 = vpop.f32.mrb[0].mxu0
        %2291 = vmatprep.mubr.bf16.mxu0 %v2219
        %2292 = vmatmul.mubr.bf16.gmra.mrb[0].mxu0 %v2049
        %v2293 = vpop.f32.mrb[0].mxu0
        %v2294 = vadd.f32 0.0, %v2293
        %v2295 = vpop.f32.mrb[0].mxu0
        %v2296 = vpop.f32.mrb[0].mxu0
        %v2297 = vadd.f32 0.0, %v2296
        %v2298 = vpop.f32.mrb[0].mxu0
        %2299 = vmatprep.mubr.bf16.mxu0 %v2222
        %2300 = vmatmul.mubr.bf16.gmra.mrb[0].mxu0 %v2078
        %v2301 = vpop.f32.mrb[0].mxu0
        %v2302 = vadd.f32 0.0, %v2301
        %v2303 = vpop.f32.mrb[0].mxu0
        %v2304 = vpop.f32.mrb[0].mxu0
        %v2305 = vadd.f32 0.0, %v2304
        %v2306 = vpop.f32.mrb[0].mxu0
        %2307 = vmatprep.mubr.bf16.mxu0 %v2225
        %2308 = vmatmul.mubr.bf16.gmra.mrb[0].mxu0 %v2107
        %v2309 = vpop.f32.mrb[0].mxu0
        %v2310 = vadd.f32 0.0, %v2309
        %v2311 = vpop.f32.mrb[0].mxu0
        %v2312 = vpop.f32.mrb[0].mxu0
        %v2313 = vadd.f32 0.0, %v2312
        %v2314 = vpop.f32.mrb[0].mxu0
        %2315 = vdwg.mxu0
        %v2316 = vadd.f32 %v1894, %v2262
        %v2317 = vadd.f32 %v1895, %v2265
        %v2318 = vadd.f32 %v1896, %v2270
        %v2319 = vadd.f32 %v1897, %v2273
        %v2320 = vadd.f32 %v1898, %v2278
        %v2321 = vadd.f32 %v1899, %v2281
        %v2322 = vadd.f32 %v1900, %v2286
        %v2323 = vadd.f32 %v1901, %v2289
        %v2324 = vadd.f32 %v1902, %v2294
        %v2325 = vadd.f32 %v1903, %v2297
        %v2326 = vadd.f32 %v1904, %v2302
        %v2327 = vadd.f32 %v1905, %v2305
        %v2328 = vadd.f32 %v1906, %v2310
        %v2329 = vadd.f32 %v1907, %v2313
        %2330 = vst [vmem:[#allocation4] sm:$0xff] %v2316
        %2331 = vst [vmem:[#allocation4 + $0x8] sm:$0xff] %v2317
        %2332 = vst [vmem:[#allocation4 + $0x10] sm:$0xff] %v2318
        %2333 = vst [vmem:[#allocation4 + $0x18] sm:$0xff] %v2319
        %2334 = vst [vmem:[#allocation4 + $0x20] sm:$0xff] %v2320
        %2335 = vst [vmem:[#allocation4 + $0x28] sm:$0xff] %v2321
        %2336 = vst [vmem:[#allocation4 + $0x30] sm:$0xff] %v2322
        %2337 = vst [vmem:[#allocation4 + $0x38] sm:$0xff] %v2323
        %2338 = vst [vmem:[#allocation4 + $0x40] sm:$0xff] %v2324
        %2339 = vst [vmem:[#allocation4 + $0x48] sm:$0xff] %v2325
        %2340 = vst [vmem:[#allocation4 + $0x50] sm:$0xff] %v2326
        %2341 = vst [vmem:[#allocation4 + $0x58] sm:$0xff] %v2327
        %2342 = vst [vmem:[#allocation4 + $0x60] sm:$0xff] %v2328
        %2343 = vst [vmem:[#allocation4 + $0x68] sm:$0xff] %v2329
        %v2344 = vld [vmem:[#allocation4] sm:$0xff]
        %v2345 = vld [vmem:[#allocation4 + $0x8] sm:$0xff]
        %v2346 = vld [vmem:[#allocation4 + $0x10] sm:$0xff]
        %v2347 = vld [vmem:[#allocation4 + $0x18] sm:$0xff]
        %v2348 = vld [vmem:[#allocation4 + $0x20] sm:$0xff]
        %v2349 = vld [vmem:[#allocation4 + $0x28] sm:$0xff]
        %v2350 = vld [vmem:[#allocation4 + $0x30] sm:$0xff]
        %v2351 = vld [vmem:[#allocation4 + $0x38] sm:$0xff]
        %v2352 = vld [vmem:[#allocation4 + $0x40] sm:$0xff]
        %v2353 = vld [vmem:[#allocation4 + $0x48] sm:$0xff]
        %v2354 = vld [vmem:[#allocation4 + $0x50] sm:$0xff]
        %v2355 = vld [vmem:[#allocation4 + $0x58] sm:$0xff]
        %v2356 = vld [vmem:[#allocation4 + $0x60] sm:$0xff]
        %v2357 = vld [vmem:[#allocation4 + $0x68] sm:$0xff]
        %v2358 = vld [vmem:[%s1066] sm:$0xff]
        %v2359 = vld [vmem:[%s1066 + $0x8] sm:$0xff]
        %v2360 = vld [vmem:[%s1066 + $0x10] sm:$0x3]
        %v2364 = vrot.slane %v2358, 1
        %v2365 = vrot.slane %v2359, 1
        %v2366 = vsel %vm715, %v2364, %v2365
        %v2367 = vrot.slane %v2360, 1
        %v2368 = vsel %vm715, %v2365, %v2367
        %2369 = vrot.lane.b32.xlu0 %v2366, 64
        %v2370 = vpop.permute.xlu0 %2369
        %2371 = vrot.lane.b32.xlu0 %v2368, 64
        %v2372 = vpop.permute.xlu0 %2371
        %v2375 = vrot.slane %v2358, 2
        %v2376 = vrot.slane %v2359, 2
        %v2377 = vsel %vm1025, %v2375, %v2376
        %v2378 = vrot.slane %v2360, 2
        %v2379 = vsel %vm1025, %v2376, %v2378
        %v2382 = vsel %vm427, %v2358, %v2370
        %v2383 = vsel %vm427, %v2359, %v2372
        %v2384 = vpack.c.bf16 %v2383, %v2382
        %v2385 = vpack.c.bf16 %v2379, %v2377
        %v2386 = vld [vmem:[%s1095] sm:$0xff]
        %v2387 = vld [vmem:[%s1095 + $0x8] sm:$0xff]
        %v2388 = vld [vmem:[%s1095 + $0x10] sm:$0x3]
        %v2392 = vrot.slane %v2386, 1
        %v2393 = vrot.slane %v2387, 1
        %v2394 = vsel %vm715, %v2392, %v2393
        %v2395 = vrot.slane %v2388, 1
        %v2396 = vsel %vm715, %v2393, %v2395
        %2397 = vrot.lane.b32.xlu0 %v2394, 64
        %v2398 = vpop.permute.xlu0 %2397
        %2399 = vrot.lane.b32.xlu0 %v2396, 64
        %v2400 = vpop.permute.xlu0 %2399
        %v2403 = vrot.slane %v2386, 2
        %v2404 = vrot.slane %v2387, 2
        %v2405 = vsel %vm1025, %v2403, %v2404
        %v2406 = vrot.slane %v2388, 2
        %v2407 = vsel %vm1025, %v2404, %v2406
        %v2410 = vsel %vm427, %v2386, %v2398
        %v2411 = vsel %vm427, %v2387, %v2400
        %v2412 = vpack.c.bf16 %v2411, %v2410
        %v2413 = vpack.c.bf16 %v2407, %v2405
        %v2414 = vld [vmem:[%s957] sm:$0xff]
        %v2415 = vld [vmem:[%s957 + $0x8] sm:$0xff]
        %v2416 = vld [vmem:[%s957 + $0x10] sm:$0x3]
        %v2420 = vrot.slane %v2414, 1
        %v2421 = vrot.slane %v2415, 1
        %v2422 = vsel %vm715, %v2420, %v2421
        %v2423 = vrot.slane %v2416, 1
        %v2424 = vsel %vm715, %v2421, %v2423
        %2425 = vrot.lane.b32.xlu0 %v2422, 64
        %v2426 = vpop.permute.xlu0 %2425
        %2427 = vrot.lane.b32.xlu0 %v2424, 64
        %v2428 = vpop.permute.xlu0 %2427
        %v2431 = vrot.slane %v2414, 2
        %v2432 = vrot.slane %v2415, 2
        %v2433 = vsel %vm1025, %v2431, %v2432
        %v2434 = vrot.slane %v2416, 2
        %v2435 = vsel %vm1025, %v2432, %v2434
        %v2438 = vsel %vm427, %v2414, %v2426
        %v2439 = vsel %vm427, %v2415, %v2428
        %v2440 = vpack.c.bf16 %v2439, %v2438
        %v2441 = vpack.c.bf16 %v2435, %v2433
        %v2442 = vld [vmem:[%s972] sm:$0xff]
        %v2443 = vld [vmem:[%s972 + $0x8] sm:$0xff]
        %v2444 = vld [vmem:[%s972 + $0x10] sm:$0x3]
        %v2448 = vrot.slane %v2442, 1
        %v2449 = vrot.slane %v2443, 1
        %v2450 = vsel %vm715, %v2448, %v2449
        %v2451 = vrot.slane %v2444, 1
        %v2452 = vsel %vm715, %v2449, %v2451
        %2453 = vrot.lane.b32.xlu0 %v2450, 64
        %v2454 = vpop.permute.xlu0 %2453
        %2455 = vrot.lane.b32.xlu0 %v2452, 64
        %v2456 = vpop.permute.xlu0 %2455
        %v2459 = vrot.slane %v2442, 2
        %v2460 = vrot.slane %v2443, 2
        %v2461 = vsel %vm1025, %v2459, %v2460
        %v2462 = vrot.slane %v2444, 2
        %v2463 = vsel %vm1025, %v2460, %v2462
        %v2466 = vsel %vm427, %v2442, %v2454
        %v2467 = vsel %vm427, %v2443, %v2456
        %v2468 = vpack.c.bf16 %v2467, %v2466
        %v2469 = vpack.c.bf16 %v2463, %v2461
        %v2470 = vld [vmem:[%s1180] sm:$0xff]
        %v2471 = vld [vmem:[%s1180 + $0x8] sm:$0xff]
        %v2472 = vld [vmem:[%s1180 + $0x10] sm:$0x3]
        %v2476 = vrot.slane %v2470, 1
        %v2477 = vrot.slane %v2471, 1
        %v2478 = vsel %vm715, %v2476, %v2477
        %v2479 = vrot.slane %v2472, 1
        %v2480 = vsel %vm715, %v2477, %v2479
        %2481 = vrot.lane.b32.xlu0 %v2478, 64
        %v2482 = vpop.permute.xlu0 %2481
        %2483 = vrot.lane.b32.xlu0 %v2480, 64
        %v2484 = vpop.permute.xlu0 %2483
        %v2487 = vrot.slane %v2470, 2
        %v2488 = vrot.slane %v2471, 2
        %v2489 = vsel %vm1025, %v2487, %v2488
        %v2490 = vrot.slane %v2472, 2
        %v2491 = vsel %vm1025, %v2488, %v2490
        %v2494 = vsel %vm427, %v2470, %v2482
        %v2495 = vsel %vm427, %v2471, %v2484
        %v2496 = vpack.c.bf16 %v2495, %v2494
        %v2497 = vpack.c.bf16 %v2491, %v2489
        %s2498 = scalar_lea.vmem [#allocation2], 504
        %v2499 = vld [vmem:[%s2498] sm:$0xff]
        %v2500 = vld [vmem:[%s2498 + $0x8] sm:$0xff]
        %v2501 = vld [vmem:[%s2498 + $0x10] sm:$0x3]
        %v2505 = vrot.slane %v2499, 1
        %v2506 = vrot.slane %v2500, 1
        %v2507 = vsel %vm715, %v2505, %v2506
        %v2508 = vrot.slane %v2501, 1
        %v2509 = vsel %vm715, %v2506, %v2508
        %2510 = vrot.lane.b32.xlu0 %v2507, 64
        %v2511 = vpop.permute.xlu0 %2510
        %2512 = vrot.lane.b32.xlu0 %v2509, 64
        %v2513 = vpop.permute.xlu0 %2512
        %v2516 = vrot.slane %v2499, 2
        %v2517 = vrot.slane %v2500, 2
        %v2518 = vsel %vm1025, %v2516, %v2517
        %v2519 = vrot.slane %v2501, 2
        %v2520 = vsel %vm1025, %v2517, %v2519
        %v2523 = vsel %vm427, %v2499, %v2511
        %v2524 = vsel %vm427, %v2500, %v2513
        %v2525 = vpack.c.bf16 %v2524, %v2523
        %v2526 = vpack.c.bf16 %v2520, %v2518
        %s2527 = scalar_lea.vmem [#allocation2], 576
        %v2528 = vld [vmem:[%s2527] sm:$0xff]
        %v2529 = vld [vmem:[%s2527 + $0x8] sm:$0xff]
        %v2530 = vld [vmem:[%s2527 + $0x10] sm:$0x3]
        %v2534 = vrot.slane %v2528, 1
        %v2535 = vrot.slane %v2529, 1
        %v2536 = vsel %vm715, %v2534, %v2535
        %v2537 = vrot.slane %v2530, 1
        %v2538 = vsel %vm715, %v2535, %v2537
        %2539 = vrot.lane.b32.xlu0 %v2536, 64
        %v2540 = vpop.permute.xlu0 %2539
        %2541 = vrot.lane.b32.xlu0 %v2538, 64
        %v2542 = vpop.permute.xlu0 %2541
        %v2545 = vrot.slane %v2528, 2
        %v2546 = vrot.slane %v2529, 2
        %v2547 = vsel %vm1025, %v2545, %v2546
        %v2548 = vrot.slane %v2530, 2
        %v2549 = vsel %vm1025, %v2546, %v2548
        %v2552 = vsel %vm427, %v2528, %v2540
        %v2553 = vsel %vm427, %v2529, %v2542
        %v2554 = vpack.c.bf16 %v2553, %v2552
        %v2555 = vpack.c.bf16 %v2549, %v2547
        %s2556 = scalar_lea.vmem %s4, 288
        %v2557 = vld [vmem:[%s2556] sm:$0xf]
        %v2558 = vld [vmem:[%s2556 + $0x4] sm:$0xf]
        %v2559 = vld [vmem:[%s2556 + $0x8] sm:$0xf]
        %v2560 = vld [vmem:[%s2556 + $0xc] sm:$0xf]
        %v2561 = vld [vmem:[%s2556 + $0x10] sm:$0xf]
        %v2562 = vld [vmem:[%s2556 + $0x14] sm:$0xf]
        %v2563 = vld [vmem:[%s2556 + $0x18] sm:$0xf]
        %v2564 = vld [vmem:[%s2556 + $0x1c] sm:$0xf]
        %v2565 = vld [vmem:[%s2556 + $0x20] sm:$0xf]
        %v2566 = vld [vmem:[%s2556 + $0x24] sm:$0xf]
        %v2567 = vld [vmem:[%s2556 + $0x28] sm:$0xf]
        %v2568 = vld [vmem:[%s2556 + $0x2c] sm:$0xf]
        %v2569 = vld [vmem:[%s2556 + $0x30] sm:$0xf]
        %v2570 = vld [vmem:[%s2556 + $0x34] sm:$0xf]
        %v2571 = vld [vmem:[%s2556 + $0x38] sm:$0xf]
        %v2572 = vld [vmem:[%s2556 + $0x3c] sm:$0xf]
        %v2573 = vld [vmem:[%s2556 + $0x40] sm:$0xf]
        %v2574 = vld [vmem:[%s2556 + $0x44] sm:$0xf]
        %v2575 = vld [vmem:[%s2556 + $0x48] sm:$0xf]
        %v2576 = vld [vmem:[%s2556 + $0x4c] sm:$0xf]
        %v2577 = vld [vmem:[%s2556 + $0x50] sm:$0xf]
        %v2578 = vld [vmem:[%s2556 + $0x54] sm:$0xf]
        %v2579 = vld [vmem:[%s2556 + $0x58] sm:$0xf]
        %v2580 = vld [vmem:[%s2556 + $0x5c] sm:$0xf]
        %v2605 = vunpack.c.l.b16 %v2557
        %v2606 = vunpack.c.l.b16 %v2558
        %v2607 = vunpack.c.l.b16 %v2559
        %v2608 = vunpack.c.l.b16 %v2560
        %v2609 = vunpack.c.l.b16 %v2561
        %v2610 = vunpack.c.l.b16 %v2562
        %v2611 = vunpack.c.l.b16 %v2563
        %v2612 = vunpack.c.l.b16 %v2564
        %v2613 = vunpack.c.l.b16 %v2565
        %v2614 = vunpack.c.l.b16 %v2566
        %v2615 = vunpack.c.l.b16 %v2567
        %v2616 = vunpack.c.l.b16 %v2568
        %v2617 = vunpack.c.l.b16 %v2569
        %v2618 = vunpack.c.l.b16 %v2570
        %v2619 = vunpack.c.l.b16 %v2571
        %v2620 = vunpack.c.l.b16 %v2572
        %v2621 = vunpack.c.l.b16 %v2573
        %v2622 = vunpack.c.l.b16 %v2574
        %v2623 = vunpack.c.l.b16 %v2575
        %v2624 = vunpack.c.l.b16 %v2576
        %v2625 = vunpack.c.l.b16 %v2577
        %v2626 = vunpack.c.l.b16 %v2578
        %v2627 = vunpack.c.l.b16 %v2579
        %v2628 = vunpack.c.l.b16 %v2580
        %v2629 = vpack.c.b16 %v2606, %v2605
        %v2630 = vpack.c.b16 %v2608, %v2607
        %v2631 = vpack.c.b16 %v2610, %v2609
        %v2632 = vpack.c.b16 %v2612, %v2611
        %v2633 = vpack.c.b16 %v2614, %v2613
        %v2634 = vpack.c.b16 %v2616, %v2615
        %v2635 = vpack.c.b16 %v2618, %v2617
        %v2636 = vpack.c.b16 %v2620, %v2619
        %v2637 = vpack.c.b16 %v2622, %v2621
        %v2638 = vpack.c.b16 %v2624, %v2623
        %v2639 = vpack.c.b16 %v2626, %v2625
        %v2640 = vpack.c.b16 %v2628, %v2627
        %v2654 = vsel %vm427, %v2385, 0
        %v2657 = vsel %vm427, %v2413, 0
        %v2660 = vsel %vm427, %v2441, 0
        %v2663 = vsel %vm427, %v2469, 0
        %v2666 = vsel %vm427, %v2497, 0
        %v2669 = vsel %vm427, %v2526, 0
        %v2672 = vsel %vm427, %v2555, 0
        %2674 = vmatprep.subr.bf16.mxu0 0
        %2675 = vmatpush1.bf16.msra.mxu0 %v2629
        %2676 = vmatprep.subr.bf16.mxu0 0
        %2677 = vmatpush1.bf16.msra.mxu0 %v2630
        %2678 = vmatprep.subr.bf16.mxu0 0
        %2679 = vmatpush1.bf16.msra.mxu0 %v2631
        %2680 = vmatprep.subr.bf16.mxu0 0
        %2681 = vmatpush1.bf16.msra.mxu0 %v2632
        %2682 = vmatprep.subr.bf16.mxu0 0
        %2683 = vmatpush1.bf16.msra.mxu0 %v2633
        %2684 = vmatprep.subr.bf16.mxu0 0
        %2685 = vmatpush1.bf16.msra.mxu0 %v2634
        %2686 = vmatprep.subr.bf16.mxu0 0
        %2687 = vmatpush1.bf16.msra.mxu0 %v2635
        %2688 = vmatprep.subr.bf16.mxu0 0
        %2689 = vmatpush1.bf16.msra.mxu0 %v2636
        %2690 = vmatprep.subr.bf16.mxu0 0
        %2691 = vmatpush1.bf16.msra.mxu0 %v2637
        %2692 = vmatprep.subr.bf16.mxu0 0
        %2693 = vmatpush1.bf16.msra.mxu0 %v2638
        %2694 = vmatprep.subr.bf16.mxu0 0
        %2695 = vmatpush1.bf16.msra.mxu0 %v2639
        %2696 = vmatprep.subr.bf16.mxu0 0
        %2697 = vmatpush1.bf16.msra.mxu0 %v2640
        %2698 = vmatprep.subr.bf16.mxu0 0
        %2699 = vmatpush1.bf16.msra.mxu0 0
        %2700 = vmatprep.subr.bf16.mxu0 0
        %2701 = vmatpush1.bf16.msra.mxu0 0
        %2702 = vmatprep.subr.bf16.mxu0 0
        %2703 = vmatpush1.bf16.msra.mxu0 0
        %2704 = vmatprep.subr.bf16.mxu0 0
        %2705 = vmatpush1.bf16.msra.mxu0 0
        %2706 = vmatprep.mubr.bf16.mxu0 %v2654
        %2707 = vmatmul.mubr.bf16.gmra.mrb[0].mxu0 %v2384
        %v2708 = vpop.f32.mrb[0].mxu0
        %v2709 = vadd.f32 0.0, %v2708
        %v2710 = vpop.f32.mrb[0].mxu0
        %v2711 = vpop.f32.mrb[0].mxu0
        %v2712 = vadd.f32 0.0, %v2711
        %v2713 = vpop.f32.mrb[0].mxu0
        %2714 = vmatprep.mubr.bf16.mxu0 %v2657
        %2715 = vmatmul.mubr.bf16.gmra.mrb[0].mxu0 %v2412
        %v2716 = vpop.f32.mrb[0].mxu0
        %v2717 = vadd.f32 0.0, %v2716
        %v2718 = vpop.f32.mrb[0].mxu0
        %v2719 = vpop.f32.mrb[0].mxu0
        %v2720 = vadd.f32 0.0, %v2719
        %v2721 = vpop.f32.mrb[0].mxu0
        %2722 = vmatprep.mubr.bf16.mxu0 %v2660
        %2723 = vmatmul.mubr.bf16.gmra.mrb[0].mxu0 %v2440
        %v2724 = vpop.f32.mrb[0].mxu0
        %v2725 = vadd.f32 0.0, %v2724
        %v2726 = vpop.f32.mrb[0].mxu0
        %v2727 = vpop.f32.mrb[0].mxu0
        %v2728 = vadd.f32 0.0, %v2727
        %v2729 = vpop.f32.mrb[0].mxu0
        %2730 = vmatprep.mubr.bf16.mxu0 %v2663
        %2731 = vmatmul.mubr.bf16.gmra.mrb[0].mxu0 %v2468
        %v2732 = vpop.f32.mrb[0].mxu0
        %v2733 = vadd.f32 0.0, %v2732
        %v2734 = vpop.f32.mrb[0].mxu0
        %v2735 = vpop.f32.mrb[0].mxu0
        %v2736 = vadd.f32 0.0, %v2735
        %v2737 = vpop.f32.mrb[0].mxu0
        %2738 = vmatprep.mubr.bf16.mxu0 %v2666
        %2739 = vmatmul.mubr.bf16.gmra.mrb[0].mxu0 %v2496
        %v2740 = vpop.f32.mrb[0].mxu0
        %v2741 = vadd.f32 0.0, %v2740
        %v2742 = vpop.f32.mrb[0].mxu0
        %v2743 = vpop.f32.mrb[0].mxu0
        %v2744 = vadd.f32 0.0, %v2743
        %v2745 = vpop.f32.mrb[0].mxu0
        %2746 = vmatprep.mubr.bf16.mxu0 %v2669
        %2747 = vmatmul.mubr.bf16.gmra.mrb[0].mxu0 %v2525
        %v2748 = vpop.f32.mrb[0].mxu0
        %v2749 = vadd.f32 0.0, %v2748
        %v2750 = vpop.f32.mrb[0].mxu0
        %v2751 = vpop.f32.mrb[0].mxu0
        %v2752 = vadd.f32 0.0, %v2751
        %v2753 = vpop.f32.mrb[0].mxu0
        %2754 = vmatprep.mubr.bf16.mxu0 %v2672
        %2755 = vmatmul.mubr.bf16.gmra.mrb[0].mxu0 %v2554
        %v2756 = vpop.f32.mrb[0].mxu0
        %v2757 = vadd.f32 0.0, %v2756
        %v2758 = vpop.f32.mrb[0].mxu0
        %v2759 = vpop.f32.mrb[0].mxu0
        %v2760 = vadd.f32 0.0, %v2759
        %v2761 = vpop.f32.mrb[0].mxu0
        %2762 = vdwg.mxu0
        %v2763 = vadd.f32 %v2344, %v2709
        %v2764 = vadd.f32 %v2345, %v2712
        %v2765 = vadd.f32 %v2346, %v2717
        %v2766 = vadd.f32 %v2347, %v2720
        %v2767 = vadd.f32 %v2348, %v2725
        %v2768 = vadd.f32 %v2349, %v2728
        %v2769 = vadd.f32 %v2350, %v2733
        %v2770 = vadd.f32 %v2351, %v2736
        %v2771 = vadd.f32 %v2352, %v2741
        %v2772 = vadd.f32 %v2353, %v2744
        %v2773 = vadd.f32 %v2354, %v2749
        %v2774 = vadd.f32 %v2355, %v2752
        %v2775 = vadd.f32 %v2356, %v2757
        %v2776 = vadd.f32 %v2357, %v2760
        %2777 = vst [vmem:[#allocation4] sm:$0xff] %v2763
        %2778 = vst [vmem:[#allocation4 + $0x8] sm:$0xff] %v2764
        %2779 = vst [vmem:[#allocation4 + $0x10] sm:$0xff] %v2765
        %2780 = vst [vmem:[#allocation4 + $0x18] sm:$0xff] %v2766
        %2781 = vst [vmem:[#allocation4 + $0x20] sm:$0xff] %v2767
        %2782 = vst [vmem:[#allocation4 + $0x28] sm:$0xff] %v2768
        %2783 = vst [vmem:[#allocation4 + $0x30] sm:$0xff] %v2769
        %2784 = vst [vmem:[#allocation4 + $0x38] sm:$0xff] %v2770
        %2785 = vst [vmem:[#allocation4 + $0x40] sm:$0xff] %v2771
        %2786 = vst [vmem:[#allocation4 + $0x48] sm:$0xff] %v2772
        %2787 = vst [vmem:[#allocation4 + $0x50] sm:$0xff] %v2773
        %2788 = vst [vmem:[#allocation4 + $0x58] sm:$0xff] %v2774
        %2789 = vst [vmem:[#allocation4 + $0x60] sm:$0xff] %v2775
        %2790 = vst [vmem:[#allocation4 + $0x68] sm:$0xff] %v2776
        %v2791 = vld [vmem:[#allocation4] sm:$0xff]
        %v2792 = vld [vmem:[#allocation4 + $0x8] sm:$0xff]
        %v2793 = vld [vmem:[#allocation4 + $0x10] sm:$0xff]
        %v2794 = vld [vmem:[#allocation4 + $0x18] sm:$0xff]
        %v2795 = vld [vmem:[#allocation4 + $0x20] sm:$0xff]
        %v2796 = vld [vmem:[#allocation4 + $0x28] sm:$0xff]
        %v2797 = vld [vmem:[#allocation4 + $0x30] sm:$0xff]
        %v2798 = vld [vmem:[#allocation4 + $0x38] sm:$0xff]
        %v2799 = vld [vmem:[#allocation4 + $0x40] sm:$0xff]
        %v2800 = vld [vmem:[#allocation4 + $0x48] sm:$0xff]
        %v2801 = vld [vmem:[#allocation4 + $0x50] sm:$0xff]
        %v2802 = vld [vmem:[#allocation4 + $0x58] sm:$0xff]
        %v2803 = vld [vmem:[#allocation4 + $0x60] sm:$0xff]
        %v2804 = vld [vmem:[#allocation4 + $0x68] sm:$0xff]
        %v2805 = vld [vmem:[%s1515] sm:$0xff]
        %v2806 = vld [vmem:[%s1515 + $0x8] sm:$0xff]
        %v2807 = vld [vmem:[%s1515 + $0x10] sm:$0x3]
        %v2811 = vrot.slane %v2805, 1
        %v2812 = vrot.slane %v2806, 1
        %v2813 = vsel %vm715, %v2811, %v2812
        %v2814 = vrot.slane %v2807, 1
        %v2815 = vsel %vm715, %v2812, %v2814
        %2816 = vrot.lane.b32.xlu0 %v2813, 64
        %v2817 = vpop.permute.xlu0 %2816
        %2818 = vrot.lane.b32.xlu0 %v2815, 64
        %v2819 = vpop.permute.xlu0 %2818
        %v2822 = vrot.slane %v2805, 2
        %v2823 = vrot.slane %v2806, 2
        %v2824 = vsel %vm1025, %v2822, %v2823
        %v2825 = vrot.slane %v2807, 2
        %v2826 = vsel %vm1025, %v2823, %v2825
        %v2829 = vsel %vm427, %v2805, %v2817
        %v2830 = vsel %vm427, %v2806, %v2819
        %v2831 = vpack.c.bf16 %v2830, %v2829
        %v2832 = vpack.c.bf16 %v2826, %v2824
        %v2833 = vld [vmem:[%s1544] sm:$0xff]
        %v2834 = vld [vmem:[%s1544 + $0x8] sm:$0xff]
        %v2835 = vld [vmem:[%s1544 + $0x10] sm:$0x3]
        %v2839 = vrot.slane %v2833, 1
        %v2840 = vrot.slane %v2834, 1
        %v2841 = vsel %vm715, %v2839, %v2840
        %v2842 = vrot.slane %v2835, 1
        %v2843 = vsel %vm715, %v2840, %v2842
        %2844 = vrot.lane.b32.xlu0 %v2841, 64
        %v2845 = vpop.permute.xlu0 %2844
        %2846 = vrot.lane.b32.xlu0 %v2843, 64
        %v2847 = vpop.permute.xlu0 %2846
        %v2850 = vrot.slane %v2833, 2
        %v2851 = vrot.slane %v2834, 2
        %v2852 = vsel %vm1025, %v2850, %v2851
        %v2853 = vrot.slane %v2835, 2
        %v2854 = vsel %vm1025, %v2851, %v2853
        %v2857 = vsel %vm427, %v2833, %v2845
        %v2858 = vsel %vm427, %v2834, %v2847
        %v2859 = vpack.c.bf16 %v2858, %v2857
        %v2860 = vpack.c.bf16 %v2854, %v2852
        %v2861 = vld [vmem:[%s967] sm:$0xff]
        %v2862 = vld [vmem:[%s967 + $0x8] sm:$0xff]
        %v2863 = vld [vmem:[%s967 + $0x10] sm:$0x3]
        %v2867 = vrot.slane %v2861, 1
        %v2868 = vrot.slane %v2862, 1
        %v2869 = vsel %vm715, %v2867, %v2868
        %v2870 = vrot.slane %v2863, 1
        %v2871 = vsel %vm715, %v2868, %v2870
        %2872 = vrot.lane.b32.xlu0 %v2869, 64
        %v2873 = vpop.permute.xlu0 %2872
        %2874 = vrot.lane.b32.xlu0 %v2871, 64
        %v2875 = vpop.permute.xlu0 %2874
        %v2878 = vrot.slane %v2861, 2
        %v2879 = vrot.slane %v2862, 2
        %v2880 = vsel %vm1025, %v2878, %v2879
        %v2881 = vrot.slane %v2863, 2
        %v2882 = vsel %vm1025, %v2879, %v2881
        %v2885 = vsel %vm427, %v2861, %v2873
        %v2886 = vsel %vm427, %v2862, %v2875
        %v2887 = vpack.c.bf16 %v2886, %v2885
        %v2888 = vpack.c.bf16 %v2882, %v2880
        %v2889 = vld [vmem:[%s1601] sm:$0xff]
        %v2890 = vld [vmem:[%s1601 + $0x8] sm:$0xff]
        %v2891 = vld [vmem:[%s1601 + $0x10] sm:$0x3]
        %v2895 = vrot.slane %v2889, 1
        %v2896 = vrot.slane %v2890, 1
        %v2897 = vsel %vm715, %v2895, %v2896
        %v2898 = vrot.slane %v2891, 1
        %v2899 = vsel %vm715, %v2896, %v2898
        %2900 = vrot.lane.b32.xlu0 %v2897, 64
        %v2901 = vpop.permute.xlu0 %2900
        %2902 = vrot.lane.b32.xlu0 %v2899, 64
        %v2903 = vpop.permute.xlu0 %2902
        %v2906 = vrot.slane %v2889, 2
        %v2907 = vrot.slane %v2890, 2
        %v2908 = vsel %vm1025, %v2906, %v2907
        %v2909 = vrot.slane %v2891, 2
        %v2910 = vsel %vm1025, %v2907, %v2909
        %v2913 = vsel %vm427, %v2889, %v2901
        %v2914 = vsel %vm427, %v2890, %v2903
        %v2915 = vpack.c.bf16 %v2914, %v2913
        %v2916 = vpack.c.bf16 %v2910, %v2908
        %v2917 = vld [vmem:[%s1630] sm:$0xff]
        %v2918 = vld [vmem:[%s1630 + $0x8] sm:$0xff]
        %v2919 = vld [vmem:[%s1630 + $0x10] sm:$0x3]
        %v2923 = vrot.slane %v2917, 1
        %v2924 = vrot.slane %v2918, 1
        %v2925 = vsel %vm715, %v2923, %v2924
        %v2926 = vrot.slane %v2919, 1
        %v2927 = vsel %vm715, %v2924, %v2926
        %2928 = vrot.lane.b32.xlu0 %v2925, 64
        %v2929 = vpop.permute.xlu0 %2928
        %2930 = vrot.lane.b32.xlu0 %v2927, 64
        %v2931 = vpop.permute.xlu0 %2930
        %v2934 = vrot.slane %v2917, 2
        %v2935 = vrot.slane %v2918, 2
        %v2936 = vsel %vm1025, %v2934, %v2935
        %v2937 = vrot.slane %v2919, 2
        %v2938 = vsel %vm1025, %v2935, %v2937
        %v2941 = vsel %vm427, %v2917, %v2929
        %v2942 = vsel %vm427, %v2918, %v2931
        %v2943 = vpack.c.bf16 %v2942, %v2941
        %v2944 = vpack.c.bf16 %v2938, %v2936
        %s2945 = scalar_lea.vmem [#allocation2], 552
        %v2946 = vld [vmem:[%s2945] sm:$0xff]
        %v2947 = vld [vmem:[%s2945 + $0x8] sm:$0xff]
        %v2948 = vld [vmem:[%s2945 + $0x10] sm:$0x3]
        %v2952 = vrot.slane %v2946, 1
        %v2953 = vrot.slane %v2947, 1
        %v2954 = vsel %vm715, %v2952, %v2953
        %v2955 = vrot.slane %v2948, 1
        %v2956 = vsel %vm715, %v2953, %v2955
        %2957 = vrot.lane.b32.xlu0 %v2954, 64
        %v2958 = vpop.permute.xlu0 %2957
        %2959 = vrot.lane.b32.xlu0 %v2956, 64
        %v2960 = vpop.permute.xlu0 %2959
        %v2963 = vrot.slane %v2946, 2
        %v2964 = vrot.slane %v2947, 2
        %v2965 = vsel %vm1025, %v2963, %v2964
        %v2966 = vrot.slane %v2948, 2
        %v2967 = vsel %vm1025, %v2964, %v2966
        %v2970 = vsel %vm427, %v2946, %v2958
        %v2971 = vsel %vm427, %v2947, %v2960
        %v2972 = vpack.c.bf16 %v2971, %v2970
        %v2973 = vpack.c.bf16 %v2967, %v2965
        %s2974 = scalar_lea.vmem [#allocation2], 624
        %v2975 = vld [vmem:[%s2974] sm:$0xff]
        %v2976 = vld [vmem:[%s2974 + $0x8] sm:$0xff]
        %v2977 = vld [vmem:[%s2974 + $0x10] sm:$0x3]
        %v2981 = vrot.slane %v2975, 1
        %v2982 = vrot.slane %v2976, 1
        %v2983 = vsel %vm715, %v2981, %v2982
        %v2984 = vrot.slane %v2977, 1
        %v2985 = vsel %vm715, %v2982, %v2984
        %2986 = vrot.lane.b32.xlu0 %v2983, 64
        %v2987 = vpop.permute.xlu0 %2986
        %2988 = vrot.lane.b32.xlu0 %v2985, 64
        %v2989 = vpop.permute.xlu0 %2988
        %v2992 = vrot.slane %v2975, 2
        %v2993 = vrot.slane %v2976, 2
        %v2994 = vsel %vm1025, %v2992, %v2993
        %v2995 = vrot.slane %v2977, 2
        %v2996 = vsel %vm1025, %v2993, %v2995
        %v2999 = vsel %vm427, %v2975, %v2987
        %v3000 = vsel %vm427, %v2976, %v2989
        %v3001 = vpack.c.bf16 %v3000, %v2999
        %v3002 = vpack.c.bf16 %v2996, %v2994
        %s3003 = scalar_lea.vmem %s4, 384
        %v3004 = vld [vmem:[%s3003] sm:$0xf]
        %v3005 = vld [vmem:[%s3003 + $0x4] sm:$0xf]
        %v3006 = vld [vmem:[%s3003 + $0x8] sm:$0xf]
        %v3007 = vld [vmem:[%s3003 + $0xc] sm:$0xf]
        %v3008 = vld [vmem:[%s3003 + $0x10] sm:$0xf]
        %v3009 = vld [vmem:[%s3003 + $0x14] sm:$0xf]
        %v3010 = vld [vmem:[%s3003 + $0x18] sm:$0xf]
        %v3011 = vld [vmem:[%s3003 + $0x1c] sm:$0xf]
        %v3012 = vld [vmem:[%s3003 + $0x20] sm:$0xf]
        %v3013 = vld [vmem:[%s3003 + $0x24] sm:$0xf]
        %v3014 = vld [vmem:[%s3003 + $0x28] sm:$0xf]
        %v3015 = vld [vmem:[%s3003 + $0x2c] sm:$0xf]
        %v3016 = vld [vmem:[%s3003 + $0x30] sm:$0xf]
        %v3017 = vld [vmem:[%s3003 + $0x34] sm:$0xf]
        %v3018 = vld [vmem:[%s3003 + $0x38] sm:$0xf]
        %v3019 = vld [vmem:[%s3003 + $0x3c] sm:$0xf]
        %v3020 = vld [vmem:[%s3003 + $0x40] sm:$0xf]
        %v3021 = vld [vmem:[%s3003 + $0x44] sm:$0xf]
        %v3022 = vld [vmem:[%s3003 + $0x48] sm:$0xf]
        %v3023 = vld [vmem:[%s3003 + $0x4c] sm:$0xf]
        %v3024 = vld [vmem:[%s3003 + $0x50] sm:$0xf]
        %v3025 = vld [vmem:[%s3003 + $0x54] sm:$0xf]
        %v3026 = vld [vmem:[%s3003 + $0x58] sm:$0xf]
        %v3027 = vld [vmem:[%s3003 + $0x5c] sm:$0xf]
        %v3052 = vunpack.c.l.b16 %v3004
        %v3053 = vunpack.c.l.b16 %v3005
        %v3054 = vunpack.c.l.b16 %v3006
        %v3055 = vunpack.c.l.b16 %v3007
        %v3056 = vunpack.c.l.b16 %v3008
        %v3057 = vunpack.c.l.b16 %v3009
        %v3058 = vunpack.c.l.b16 %v3010
        %v3059 = vunpack.c.l.b16 %v3011
        %v3060 = vunpack.c.l.b16 %v3012
        %v3061 = vunpack.c.l.b16 %v3013
        %v3062 = vunpack.c.l.b16 %v3014
        %v3063 = vunpack.c.l.b16 %v3015
        %v3064 = vunpack.c.l.b16 %v3016
        %v3065 = vunpack.c.l.b16 %v3017
        %v3066 = vunpack.c.l.b16 %v3018
        %v3067 = vunpack.c.l.b16 %v3019
        %v3068 = vunpack.c.l.b16 %v3020
        %v3069 = vunpack.c.l.b16 %v3021
        %v3070 = vunpack.c.l.b16 %v3022
        %v3071 = vunpack.c.l.b16 %v3023
        %v3072 = vunpack.c.l.b16 %v3024
        %v3073 = vunpack.c.l.b16 %v3025
        %v3074 = vunpack.c.l.b16 %v3026
        %v3075 = vunpack.c.l.b16 %v3027
        %v3076 = vpack.c.b16 %v3053, %v3052
        %v3077 = vpack.c.b16 %v3055, %v3054
        %v3078 = vpack.c.b16 %v3057, %v3056
        %v3079 = vpack.c.b16 %v3059, %v3058
        %v3080 = vpack.c.b16 %v3061, %v3060
        %v3081 = vpack.c.b16 %v3063, %v3062
        %v3082 = vpack.c.b16 %v3065, %v3064
        %v3083 = vpack.c.b16 %v3067, %v3066
        %v3084 = vpack.c.b16 %v3069, %v3068
        %v3085 = vpack.c.b16 %v3071, %v3070
        %v3086 = vpack.c.b16 %v3073, %v3072
        %v3087 = vpack.c.b16 %v3075, %v3074
        %v3101 = vsel %vm427, %v2832, 0
        %v3104 = vsel %vm427, %v2860, 0
        %v3107 = vsel %vm427, %v2888, 0
        %v3110 = vsel %vm427, %v2916, 0
        %v3113 = vsel %vm427, %v2944, 0
        %v3116 = vsel %vm427, %v2973, 0
        %v3119 = vsel %vm427, %v3002, 0
        %3121 = vmatprep.subr.bf16.mxu0 0
        %3122 = vmatpush1.bf16.msra.mxu0 %v3076
        %3123 = vmatprep.subr.bf16.mxu0 0
        %3124 = vmatpush1.bf16.msra.mxu0 %v3077
        %3125 = vmatprep.subr.bf16.mxu0 0
        %3126 = vmatpush1.bf16.msra.mxu0 %v3078
        %3127 = vmatprep.subr.bf16.mxu0 0
        %3128 = vmatpush1.bf16.msra.mxu0 %v3079
        %3129 = vmatprep.subr.bf16.mxu0 0
        %3130 = vmatpush1.bf16.msra.mxu0 %v3080
        %3131 = vmatprep.subr.bf16.mxu0 0
        %3132 = vmatpush1.bf16.msra.mxu0 %v3081
        %3133 = vmatprep.subr.bf16.mxu0 0
        %3134 = vmatpush1.bf16.msra.mxu0 %v3082
        %3135 = vmatprep.subr.bf16.mxu0 0
        %3136 = vmatpush1.bf16.msra.mxu0 %v3083
        %3137 = vmatprep.subr.bf16.mxu0 0
        %3138 = vmatpush1.bf16.msra.mxu0 %v3084
        %3139 = vmatprep.subr.bf16.mxu0 0
        %3140 = vmatpush1.bf16.msra.mxu0 %v3085
        %3141 = vmatprep.subr.bf16.mxu0 0
        %3142 = vmatpush1.bf16.msra.mxu0 %v3086
        %3143 = vmatprep.subr.bf16.mxu0 0
        %3144 = vmatpush1.bf16.msra.mxu0 %v3087
        %3145 = vmatprep.subr.bf16.mxu0 0
        %3146 = vmatpush1.bf16.msra.mxu0 0
        %3147 = vmatprep.subr.bf16.mxu0 0
        %3148 = vmatpush1.bf16.msra.mxu0 0
        %3149 = vmatprep.subr.bf16.mxu0 0
        %3150 = vmatpush1.bf16.msra.mxu0 0
        %3151 = vmatprep.subr.bf16.mxu0 0
        %3152 = vmatpush1.bf16.msra.mxu0 0
        %3153 = vmatprep.mubr.bf16.mxu0 %v3101
        %3154 = vmatmul.mubr.bf16.gmra.mrb[0].mxu0 %v2831
        %v3155 = vpop.f32.mrb[0].mxu0
        %v3156 = vadd.f32 0.0, %v3155
        %v3157 = vpop.f32.mrb[0].mxu0
        %v3158 = vpop.f32.mrb[0].mxu0
        %v3159 = vadd.f32 0.0, %v3158
        %v3160 = vpop.f32.mrb[0].mxu0
        %3161 = vmatprep.mubr.bf16.mxu0 %v3104
        %3162 = vmatmul.mubr.bf16.gmra.mrb[0].mxu0 %v2859
        %v3163 = vpop.f32.mrb[0].mxu0
        %v3164 = vadd.f32 0.0, %v3163
        %v3165 = vpop.f32.mrb[0].mxu0
        %v3166 = vpop.f32.mrb[0].mxu0
        %v3167 = vadd.f32 0.0, %v3166
        %v3168 = vpop.f32.mrb[0].mxu0
        %3169 = vmatprep.mubr.bf16.mxu0 %v3107
        %3170 = vmatmul.mubr.bf16.gmra.mrb[0].mxu0 %v2887
        %v3171 = vpop.f32.mrb[0].mxu0
        %v3172 = vadd.f32 0.0, %v3171
        %v3173 = vpop.f32.mrb[0].mxu0
        %v3174 = vpop.f32.mrb[0].mxu0
        %v3175 = vadd.f32 0.0, %v3174
        %v3176 = vpop.f32.mrb[0].mxu0
        %3177 = vmatprep.mubr.bf16.mxu0 %v3110
        %3178 = vmatmul.mubr.bf16.gmra.mrb[0].mxu0 %v2915
        %v3179 = vpop.f32.mrb[0].mxu0
        %v3180 = vadd.f32 0.0, %v3179
        %v3181 = vpop.f32.mrb[0].mxu0
        %v3182 = vpop.f32.mrb[0].mxu0
        %v3183 = vadd.f32 0.0, %v3182
        %v3184 = vpop.f32.mrb[0].mxu0
        %3185 = vmatprep.mubr.bf16.mxu0 %v3113
        %3186 = vmatmul.mubr.bf16.gmra.mrb[0].mxu0 %v2943
        %v3187 = vpop.f32.mrb[0].mxu0
        %v3188 = vadd.f32 0.0, %v3187
        %v3189 = vpop.f32.mrb[0].mxu0
        %v3190 = vpop.f32.mrb[0].mxu0
        %v3191 = vadd.f32 0.0, %v3190
        %v3192 = vpop.f32.mrb[0].mxu0
        %3193 = vmatprep.mubr.bf16.mxu0 %v3116
        %3194 = vmatmul.mubr.bf16.gmra.mrb[0].mxu0 %v2972
        %v3195 = vpop.f32.mrb[0].mxu0
        %v3196 = vadd.f32 0.0, %v3195
        %v3197 = vpop.f32.mrb[0].mxu0
        %v3198 = vpop.f32.mrb[0].mxu0
        %v3199 = vadd.f32 0.0, %v3198
        %v3200 = vpop.f32.mrb[0].mxu0
        %3201 = vmatprep.mubr.bf16.mxu0 %v3119
        %3202 = vmatmul.mubr.bf16.gmra.mrb[0].mxu0 %v3001
        %v3203 = vpop.f32.mrb[0].mxu0
        %v3204 = vadd.f32 0.0, %v3203
        %v3205 = vpop.f32.mrb[0].mxu0
        %v3206 = vpop.f32.mrb[0].mxu0
        %v3207 = vadd.f32 0.0, %v3206
        %v3208 = vpop.f32.mrb[0].mxu0
        %3209 = vdwg.mxu0
        %v3210 = vadd.f32 %v2791, %v3156
        %v3211 = vadd.f32 %v2792, %v3159
        %v3212 = vadd.f32 %v2793, %v3164
        %v3213 = vadd.f32 %v2794, %v3167
        %v3214 = vadd.f32 %v2795, %v3172
        %v3215 = vadd.f32 %v2796, %v3175
        %v3216 = vadd.f32 %v2797, %v3180
        %v3217 = vadd.f32 %v2798, %v3183
        %v3218 = vadd.f32 %v2799, %v3188
        %v3219 = vadd.f32 %v2800, %v3191
        %v3220 = vadd.f32 %v2801, %v3196
        %v3221 = vadd.f32 %v2802, %v3199
        %v3222 = vadd.f32 %v2803, %v3204
        %v3223 = vadd.f32 %v2804, %v3207
        %3224 = vst [vmem:[#allocation4] sm:$0xff] %v3210
        %3225 = vst [vmem:[#allocation4 + $0x8] sm:$0xff] %v3211
        %3226 = vst [vmem:[#allocation4 + $0x10] sm:$0xff] %v3212
        %3227 = vst [vmem:[#allocation4 + $0x18] sm:$0xff] %v3213
        %3228 = vst [vmem:[#allocation4 + $0x20] sm:$0xff] %v3214
        %3229 = vst [vmem:[#allocation4 + $0x28] sm:$0xff] %v3215
        %3230 = vst [vmem:[#allocation4 + $0x30] sm:$0xff] %v3216
        %3231 = vst [vmem:[#allocation4 + $0x38] sm:$0xff] %v3217
        %3232 = vst [vmem:[#allocation4 + $0x40] sm:$0xff] %v3218
        %3233 = vst [vmem:[#allocation4 + $0x48] sm:$0xff] %v3219
        %3234 = vst [vmem:[#allocation4 + $0x50] sm:$0xff] %v3220
        %3235 = vst [vmem:[#allocation4 + $0x58] sm:$0xff] %v3221
        %3236 = vst [vmem:[#allocation4 + $0x60] sm:$0xff] %v3222
        %3237 = vst [vmem:[#allocation4 + $0x68] sm:$0xff] %v3223
        %v3238 = vld [vmem:[#allocation4] sm:$0xff]
        %v3239 = vld [vmem:[#allocation4 + $0x8] sm:$0xff]
        %v3240 = vld [vmem:[#allocation4 + $0x10] sm:$0xff]
        %v3241 = vld [vmem:[#allocation4 + $0x18] sm:$0xff]
        %v3242 = vld [vmem:[#allocation4 + $0x20] sm:$0xff]
        %v3243 = vld [vmem:[#allocation4 + $0x28] sm:$0xff]
        %v3244 = vld [vmem:[#allocation4 + $0x30] sm:$0xff]
        %v3245 = vld [vmem:[#allocation4 + $0x38] sm:$0xff]
        %v3246 = vld [vmem:[#allocation4 + $0x40] sm:$0xff]
        %v3247 = vld [vmem:[#allocation4 + $0x48] sm:$0xff]
        %v3248 = vld [vmem:[#allocation4 + $0x50] sm:$0xff]
        %v3249 = vld [vmem:[#allocation4 + $0x58] sm:$0xff]
        %v3250 = vld [vmem:[%s5] sm:$0x1]
        %v3252 = vlaneseq
        %v3253 = vshrl.u32 %v3252, 7
        %v3254 = vsub.s32 0, %v3253
        %v3255 = vrot.slane %v3250, %v3254
        %v3257 = vmul.f32 %v3238, %v3255
        %v3258 = vmul.f32 %v3239, %v3255
        %v3259 = vmul.f32 %v3240, %v3255
        %v3260 = vmul.f32 %v3241, %v3255
        %v3261 = vmul.f32 %v3242, %v3255
        %v3262 = vmul.f32 %v3243, %v3255
        %v3263 = vmul.f32 %v3244, %v3255
        %v3264 = vmul.f32 %v3245, %v3255
        %v3265 = vmul.f32 %v3246, %v3255
        %v3266 = vmul.f32 %v3247, %v3255
        %v3267 = vmul.f32 %v3248, %v3255
        %v3268 = vmul.f32 %v3249, %v3255
        %v3269 = vld [vmem:[%s6] sm:$0x1]
        %v3271 = vlaneseq
        %v3272 = vshrl.u32 %v3271, 7
        %v3273 = vsub.s32 0, %v3272
        %v3274 = vrot.slane %v3269, %v3273
        %v3276 = vadd.f32 %v3257, %v3274
        %v3277 = vadd.f32 %v3258, %v3274
        %v3278 = vadd.f32 %v3259, %v3274
        %v3279 = vadd.f32 %v3260, %v3274
        %v3280 = vadd.f32 %v3261, %v3274
        %v3281 = vadd.f32 %v3262, %v3274
        %v3282 = vadd.f32 %v3263, %v3274
        %v3283 = vadd.f32 %v3264, %v3274
        %v3284 = vadd.f32 %v3265, %v3274
        %v3285 = vadd.f32 %v3266, %v3274
        %v3286 = vadd.f32 %v3267, %v3274
        %v3287 = vadd.f32 %v3268, %v3274
        %vm3288 = vcmp.ge.f32.partialorder %v3276, 0.0
        %vm3289 = vcmp.ge.f32.partialorder %v3277, 0.0
        %vm3290 = vcmp.ge.f32.partialorder %v3278, 0.0
        %vm3291 = vcmp.ge.f32.partialorder %v3279, 0.0
        %vm3292 = vcmp.ge.f32.partialorder %v3280, 0.0
        %vm3293 = vcmp.ge.f32.partialorder %v3281, 0.0
        %vm3294 = vcmp.ge.f32.partialorder %v3282, 0.0
        %vm3295 = vcmp.ge.f32.partialorder %v3283, 0.0
        %vm3296 = vcmp.ge.f32.partialorder %v3284, 0.0
        %vm3297 = vcmp.ge.f32.partialorder %v3285, 0.0
        %vm3298 = vcmp.ge.f32.partialorder %v3286, 0.0
        %vm3299 = vcmp.ge.f32.partialorder %v3287, 0.0
        %v3300 = vmul.f32 %v3276, 0.01
        %v3301 = vmul.f32 %v3277, 0.01
        %v3302 = vmul.f32 %v3278, 0.01
        %v3303 = vmul.f32 %v3279, 0.01
        %v3304 = vmul.f32 %v3280, 0.01
        %v3305 = vmul.f32 %v3281, 0.01
        %v3306 = vmul.f32 %v3282, 0.01
        %v3307 = vmul.f32 %v3283, 0.01
        %v3308 = vmul.f32 %v3284, 0.01
        %v3309 = vmul.f32 %v3285, 0.01
        %v3310 = vmul.f32 %v3286, 0.01
        %v3311 = vmul.f32 %v3287, 0.01
        %v3312 = vsel %vm3288, %v3276, %v3300
        %v3313 = vsel %vm3289, %v3277, %v3301
        %v3314 = vsel %vm3290, %v3278, %v3302
        %v3315 = vsel %vm3291, %v3279, %v3303
        %v3316 = vsel %vm3292, %v3280, %v3304
        %v3317 = vsel %vm3293, %v3281, %v3305
        %v3318 = vsel %vm3294, %v3282, %v3306
        %v3319 = vsel %vm3295, %v3283, %v3307
        %v3320 = vsel %vm3296, %v3284, %v3308
        %v3321 = vsel %vm3297, %v3285, %v3309
        %v3322 = vsel %vm3298, %v3286, %v3310
        %v3323 = vsel %vm3299, %v3287, %v3311
        %v3324 = vmax.f32 %v3312, %v3314
        %v3325 = vmax.f32 %v3313, %v3315
        %s3326 = scalar_lea.vmem [#allocation3], 288
        %3327 = vst [vmem:[%s3326 + $0x1] sm:$0xff] %v3324
        %3328 = vst [vmem:[%s3326 + $0x9] sm:$0xff] %v3325
        %v3329 = vmax.f32 %v3316, %v3318
        %v3330 = vmax.f32 %v3317, %v3319
        %s3331 = scalar_lea.vmem [#allocation3], 312
        %3332 = vst [vmem:[%s3331 + $0x1] sm:$0xff] %v3329
        %3333 = vst [vmem:[%s3331 + $0x9] sm:$0xff] %v3330
        %v3334 = vmax.f32 %v3320, %v3322
        %v3335 = vmax.f32 %v3321, %v3323
        %s3336 = scalar_lea.vmem [#allocation3], 336
        %3337 = vst [vmem:[%s3336 + $0x1] sm:$0xff] %v3334
        %3338 = vst [vmem:[%s3336 + $0x9] sm:$0xff] %v3335
        %3339 = vst [vmem:[#allocation5] sm:$0xff] 0.0
        %3340 = vst [vmem:[#allocation5 + $0x8] sm:$0xff] 0.0
        %3341 = vst [vmem:[#allocation5 + $0x10] sm:$0xff] 0.0
        %3342 = vst [vmem:[#allocation5 + $0x18] sm:$0xff] 0.0
        %3343 = vst [vmem:[#allocation5 + $0x20] sm:$0xff] 0.0
        %3344 = vst [vmem:[#allocation5 + $0x28] sm:$0xff] 0.0
        %3345 = vst [vmem:[#allocation5 + $0x30] sm:$0xff] 0.0
        %3346 = vst [vmem:[#allocation5 + $0x38] sm:$0xff] 0.0
        %3347 = vst [vmem:[#allocation5 + $0x40] sm:$0xff] 0.0
        %3348 = vst [vmem:[#allocation5 + $0x48] sm:$0xff] 0.0
        %3349 = vst [vmem:[#allocation5 + $0x50] sm:$0xff] 0.0
        %3350 = vst [vmem:[#allocation5 + $0x58] sm:$0xff] 0.0
        %3351 = vst [vmem:[#allocation5 + $0x60] sm:$0xff] 0.0
        %3352 = vst [vmem:[#allocation5 + $0x68] sm:$0xff] 0.0
        %3353 = vst [vmem:[#allocation5 + $0x70] sm:$0xff] 0.0
        %3354 = vst [vmem:[#allocation5 + $0x78] sm:$0xff] 0.0
        %3355 = vst [vmem:[#allocation5 + $0x80] sm:$0xff] 0.0
        %3356 = vst [vmem:[#allocation5 + $0x88] sm:$0xff] 0.0
        %3357 = vst [vmem:[#allocation5 + $0x90] sm:$0xff] 0.0
        %3358 = vst [vmem:[#allocation5 + $0x98] sm:$0xff] 0.0
        %3359 = vst [vmem:[#allocation5 + $0xa0] sm:$0xff] 0.0
        %3360 = vst [vmem:[#allocation5 + $0xa8] sm:$0xff] 0.0
        %3361 = vst [vmem:[#allocation5 + $0xb0] sm:$0xff] 0.0
        %3362 = vst [vmem:[#allocation5 + $0xb8] sm:$0xff] 0.0
        %3363 = vst [vmem:[#allocation5 + $0xc0] sm:$0xff] 0.0
        %3364 = vst [vmem:[#allocation5 + $0xc8] sm:$0xff] 0.0
        %3365 = vst [vmem:[#allocation5 + $0xd0] sm:$0xff] 0.0
        %3366 = vst [vmem:[#allocation5 + $0xd8] sm:$0xff] 0.0
        %v3367 = vld [vmem:[#allocation5] sm:$0xff]
        %v3368 = vld [vmem:[#allocation5 + $0x8] sm:$0xff]
        %v3369 = vld [vmem:[#allocation5 + $0x10] sm:$0xff]
        %v3370 = vld [vmem:[#allocation5 + $0x18] sm:$0xff]
        %v3371 = vld [vmem:[#allocation5 + $0x20] sm:$0xff]
        %v3372 = vld [vmem:[#allocation5 + $0x28] sm:$0xff]
        %v3373 = vld [vmem:[#allocation5 + $0x30] sm:$0xff]
        %v3374 = vld [vmem:[#allocation5 + $0x38] sm:$0xff]
        %v3375 = vld [vmem:[#allocation5 + $0x40] sm:$0xff]
        %v3376 = vld [vmem:[#allocation5 + $0x48] sm:$0xff]
        %v3377 = vld [vmem:[#allocation5 + $0x50] sm:$0xff]
        %v3378 = vld [vmem:[#allocation5 + $0x58] sm:$0xff]
        %v3379 = vld [vmem:[#allocation5 + $0x60] sm:$0xff]
        %v3380 = vld [vmem:[#allocation5 + $0x68] sm:$0xff]
        %v3381 = vld [vmem:[#allocation5 + $0x70] sm:$0xff]
        %v3382 = vld [vmem:[#allocation5 + $0x78] sm:$0xff]
        %v3383 = vld [vmem:[#allocation5 + $0x80] sm:$0xff]
        %v3384 = vld [vmem:[#allocation5 + $0x88] sm:$0xff]
        %v3385 = vld [vmem:[#allocation5 + $0x90] sm:$0xff]
        %v3386 = vld [vmem:[#allocation5 + $0x98] sm:$0xff]
        %v3387 = vld [vmem:[#allocation5 + $0xa0] sm:$0xff]
        %v3388 = vld [vmem:[#allocation5 + $0xa8] sm:$0xff]
        %v3389 = vld [vmem:[#allocation5 + $0xb0] sm:$0xff]
        %v3390 = vld [vmem:[#allocation5 + $0xb8] sm:$0xff]
        %v3391 = vld [vmem:[#allocation5 + $0xc0] sm:$0xff]
        %v3392 = vld [vmem:[#allocation5 + $0xc8] sm:$0xff]
        %v3393 = vld [vmem:[#allocation5 + $0xd0] sm:$0xff]
        %v3394 = vld [vmem:[#allocation5 + $0xd8] sm:$0xff]
        %v3395 = vld [vmem:[#allocation3] sm:$0xff]
        %v3396 = vld [vmem:[#allocation3 + $0x8] sm:$0xff]
        %v3397 = vld [vmem:[#allocation3 + $0x10] sm:$0x3]
        %v3401 = vrot.slane %v3395, 1
        %v3402 = vrot.slane %v3396, 1
        %v3403 = vsel %vm715, %v3401, %v3402
        %v3404 = vrot.slane %v3397, 1
        %v3405 = vsel %vm715, %v3402, %v3404
        %v3408 = vrot.slane %v3395, 2
        %v3409 = vrot.slane %v3396, 2
        %v3410 = vsel %vm1025, %v3408, %v3409
        %v3411 = vrot.slane %v3397, 2
        %v3412 = vsel %vm1025, %v3409, %v3411
        %v3415 = vpack.c.bf16 %v3396, %v3395
        %v3416 = vpack.c.bf16 %v3405, %v3403
        %v3417 = vpack.c.bf16 %v3412, %v3410
        %s3418 = scalar_lea.vmem [#allocation3], 72
        %v3419 = vld [vmem:[%s3418] sm:$0xff]
        %v3420 = vld [vmem:[%s3418 + $0x8] sm:$0xff]
        %v3421 = vld [vmem:[%s3418 + $0x10] sm:$0x3]
        %v3425 = vrot.slane %v3419, 1
        %v3426 = vrot.slane %v3420, 1
        %v3427 = vsel %vm715, %v3425, %v3426
        %v3428 = vrot.slane %v3421, 1
        %v3429 = vsel %vm715, %v3426, %v3428
        %v3432 = vrot.slane %v3419, 2
        %v3433 = vrot.slane %v3420, 2
        %v3434 = vsel %vm1025, %v3432, %v3433
        %v3435 = vrot.slane %v3421, 2
        %v3436 = vsel %vm1025, %v3433, %v3435
        %v3439 = vpack.c.bf16 %v3420, %v3419
        %v3440 = vpack.c.bf16 %v3429, %v3427
        %v3441 = vpack.c.bf16 %v3436, %v3434
        %s3442 = scalar_lea.vmem [#allocation3], 144
        %v3443 = vld [vmem:[%s3442] sm:$0xff]
        %v3444 = vld [vmem:[%s3442 + $0x8] sm:$0xff]
        %v3445 = vld [vmem:[%s3442 + $0x10] sm:$0x3]
        %v3449 = vrot.slane %v3443, 1
        %v3450 = vrot.slane %v3444, 1
        %v3451 = vsel %vm715, %v3449, %v3450
        %v3452 = vrot.slane %v3445, 1
        %v3453 = vsel %vm715, %v3450, %v3452
        %v3456 = vrot.slane %v3443, 2
        %v3457 = vrot.slane %v3444, 2
        %v3458 = vsel %vm1025, %v3456, %v3457
        %v3459 = vrot.slane %v3445, 2
        %v3460 = vsel %vm1025, %v3457, %v3459
        %v3463 = vpack.c.bf16 %v3444, %v3443
        %v3464 = vpack.c.bf16 %v3453, %v3451
        %v3465 = vpack.c.bf16 %v3460, %v3458
        %s3466 = scalar_lea.vmem [#allocation3], 216
        %v3467 = vld [vmem:[%s3466] sm:$0xff]
        %v3468 = vld [vmem:[%s3466 + $0x8] sm:$0xff]
        %v3469 = vld [vmem:[%s3466 + $0x10] sm:$0x3]
        %v3473 = vrot.slane %v3467, 1
        %v3474 = vrot.slane %v3468, 1
        %v3475 = vsel %vm715, %v3473, %v3474
        %v3476 = vrot.slane %v3469, 1
        %v3477 = vsel %vm715, %v3474, %v3476
        %v3480 = vrot.slane %v3467, 2
        %v3481 = vrot.slane %v3468, 2
        %v3482 = vsel %vm1025, %v3480, %v3481
        %v3483 = vrot.slane %v3469, 2
        %v3484 = vsel %vm1025, %v3481, %v3483
        %v3487 = vpack.c.bf16 %v3468, %v3467
        %v3488 = vpack.c.bf16 %v3477, %v3475
        %v3489 = vpack.c.bf16 %v3484, %v3482
        %v3490 = vld [vmem:[%s3326] sm:$0xff]
        %v3491 = vld [vmem:[%s3326 + $0x8] sm:$0xff]
        %v3492 = vld [vmem:[%s3326 + $0x10] sm:$0x3]
        %v3496 = vrot.slane %v3490, 1
        %v3497 = vrot.slane %v3491, 1
        %v3498 = vsel %vm715, %v3496, %v3497
        %v3499 = vrot.slane %v3492, 1
        %v3500 = vsel %vm715, %v3497, %v3499
        %v3503 = vrot.slane %v3490, 2
        %v3504 = vrot.slane %v3491, 2
        %v3505 = vsel %vm1025, %v3503, %v3504
        %v3506 = vrot.slane %v3492, 2
        %v3507 = vsel %vm1025, %v3504, %v3506
        %v3510 = vpack.c.bf16 %v3491, %v3490
        %v3511 = vpack.c.bf16 %v3500, %v3498
        %v3512 = vpack.c.bf16 %v3507, %v3505
        %s3513 = scalar_lea.vmem [#allocation3], 360
        %v3514 = vld [vmem:[%s3513] sm:$0xff]
        %v3515 = vld [vmem:[%s3513 + $0x8] sm:$0xff]
        %v3516 = vld [vmem:[%s3513 + $0x10] sm:$0x3]
        %v3520 = vrot.slane %v3514, 1
        %v3521 = vrot.slane %v3515, 1
        %v3522 = vsel %vm715, %v3520, %v3521
        %v3523 = vrot.slane %v3516, 1
        %v3524 = vsel %vm715, %v3521, %v3523
        %v3527 = vrot.slane %v3514, 2
        %v3528 = vrot.slane %v3515, 2
        %v3529 = vsel %vm1025, %v3527, %v3528
        %v3530 = vrot.slane %v3516, 2
        %v3531 = vsel %vm1025, %v3528, %v3530
        %v3534 = vpack.c.bf16 %v3515, %v3514
        %v3535 = vpack.c.bf16 %v3524, %v3522
        %v3536 = vpack.c.bf16 %v3531, %v3529
        %s3537 = scalar_lea.vmem [#allocation3], 432
        %v3538 = vld [vmem:[%s3537] sm:$0xff]
        %v3539 = vld [vmem:[%s3537 + $0x8] sm:$0xff]
        %v3540 = vld [vmem:[%s3537 + $0x10] sm:$0x3]
        %v3544 = vrot.slane %v3538, 1
        %v3545 = vrot.slane %v3539, 1
        %v3546 = vsel %vm715, %v3544, %v3545
        %v3547 = vrot.slane %v3540, 1
        %v3548 = vsel %vm715, %v3545, %v3547
        %v3551 = vrot.slane %v3538, 2
        %v3552 = vrot.slane %v3539, 2
        %v3553 = vsel %vm1025, %v3551, %v3552
        %v3554 = vrot.slane %v3540, 2
        %v3555 = vsel %vm1025, %v3552, %v3554
        %v3558 = vpack.c.bf16 %v3539, %v3538
        %v3559 = vpack.c.bf16 %v3548, %v3546
        %v3560 = vpack.c.bf16 %v3555, %v3553
        %v3561 = vld [vmem:[#allocation6] sm:$0xff]
        %v3562 = vld [vmem:[#allocation6 + $0x8] sm:$0xff]
        %v3563 = vld [vmem:[#allocation6 + $0x10] sm:$0xff]
        %v3564 = vld [vmem:[#allocation6 + $0x18] sm:$0xff]
        %v3565 = vld [vmem:[#allocation6 + $0x20] sm:$0xff]
        %v3566 = vld [vmem:[#allocation6 + $0x28] sm:$0xff]
        %v3567 = vld [vmem:[#allocation6 + $0x30] sm:$0xff]
        %v3568 = vld [vmem:[#allocation6 + $0x38] sm:$0xff]
        %v3569 = vld [vmem:[#allocation6 + $0x40] sm:$0xff]
        %v3570 = vld [vmem:[#allocation6 + $0x48] sm:$0xff]
        %v3571 = vld [vmem:[#allocation6 + $0x50] sm:$0xff]
        %v3572 = vld [vmem:[#allocation6 + $0x58] sm:$0xff]
        %v3573 = vld [vmem:[#allocation6 + $0x60] sm:$0xff]
        %v3574 = vld [vmem:[#allocation6 + $0x68] sm:$0xff]
        %v3575 = vld [vmem:[#allocation6 + $0x70] sm:$0xff]
        %v3576 = vld [vmem:[#allocation6 + $0x78] sm:$0xff]
        %v3577 = vld [vmem:[#allocation6 + $0x80] sm:$0xff]
        %v3578 = vld [vmem:[#allocation6 + $0x88] sm:$0xff]
        %v3579 = vld [vmem:[#allocation6 + $0x90] sm:$0xff]
        %v3580 = vld [vmem:[#allocation6 + $0x98] sm:$0xff]
        %v3581 = vld [vmem:[#allocation6 + $0xa0] sm:$0xff]
        %v3582 = vld [vmem:[#allocation6 + $0xa8] sm:$0xff]
        %v3583 = vld [vmem:[#allocation6 + $0xb0] sm:$0xff]
        %v3584 = vld [vmem:[#allocation6 + $0xb8] sm:$0xff]
        %v3585 = vld [vmem:[#allocation6 + $0xc0] sm:$0xff]
        %v3586 = vld [vmem:[#allocation6 + $0xc8] sm:$0xff]
        %v3587 = vld [vmem:[#allocation6 + $0xd0] sm:$0xff]
        %v3588 = vld [vmem:[#allocation6 + $0xd8] sm:$0xff]
        %v3589 = vld [vmem:[#allocation6 + $0xe0] sm:$0xff]
        %v3590 = vld [vmem:[#allocation6 + $0xe8] sm:$0xff]
        %v3591 = vld [vmem:[#allocation6 + $0xf0] sm:$0xff]
        %v3592 = vld [vmem:[#allocation6 + $0xf8] sm:$0xff]
        %v3593 = vld [vmem:[#allocation6 + $0x100] sm:$0xff]
        %v3594 = vld [vmem:[#allocation6 + $0x108] sm:$0xff]
        %v3595 = vld [vmem:[#allocation6 + $0x110] sm:$0xff]
        %v3596 = vld [vmem:[#allocation6 + $0x118] sm:$0xff]
        %v3597 = vld [vmem:[#allocation6 + $0x120] sm:$0xff]
        %v3598 = vld [vmem:[#allocation6 + $0x128] sm:$0xff]
        %v3599 = vld [vmem:[#allocation6 + $0x130] sm:$0xff]
        %v3600 = vld [vmem:[#allocation6 + $0x138] sm:$0xff]
        %v3601 = vld [vmem:[#allocation6 + $0x140] sm:$0xff]
        %v3602 = vld [vmem:[#allocation6 + $0x148] sm:$0xff]
        %v3603 = vld [vmem:[#allocation6 + $0x150] sm:$0xff]
        %v3604 = vld [vmem:[#allocation6 + $0x158] sm:$0xff]
        %v3605 = vld [vmem:[#allocation6 + $0x160] sm:$0xff]
        %v3606 = vld [vmem:[#allocation6 + $0x168] sm:$0xff]
        %v3607 = vld [vmem:[#allocation6 + $0x170] sm:$0xff]
        %v3608 = vld [vmem:[#allocation6 + $0x178] sm:$0xff]
        %v3657 = vunpack.c.l.b16 %v3561
        %v3658 = vunpack.c.h.b16 %v3561
        %v3659 = vunpack.c.l.b16 %v3562
        %v3660 = vunpack.c.h.b16 %v3562
        %v3661 = vunpack.c.l.b16 %v3563
        %v3662 = vunpack.c.h.b16 %v3563
        %v3663 = vunpack.c.l.b16 %v3564
        %v3664 = vunpack.c.h.b16 %v3564
        %v3665 = vunpack.c.l.b16 %v3565
        %v3666 = vunpack.c.h.b16 %v3565
        %v3667 = vunpack.c.l.b16 %v3566
        %v3668 = vunpack.c.h.b16 %v3566
        %v3669 = vunpack.c.l.b16 %v3567
        %v3670 = vunpack.c.h.b16 %v3567
        %v3671 = vunpack.c.l.b16 %v3568
        %v3672 = vunpack.c.h.b16 %v3568
        %v3673 = vunpack.c.l.b16 %v3569
        %v3674 = vunpack.c.h.b16 %v3569
        %v3675 = vunpack.c.l.b16 %v3570
        %v3676 = vunpack.c.h.b16 %v3570
        %v3677 = vunpack.c.l.b16 %v3571
        %v3678 = vunpack.c.h.b16 %v3571
        %v3679 = vunpack.c.l.b16 %v3572
        %v3680 = vunpack.c.h.b16 %v3572
        %v3681 = vunpack.c.l.b16 %v3573
        %v3682 = vunpack.c.h.b16 %v3573
        %v3683 = vunpack.c.l.b16 %v3574
        %v3684 = vunpack.c.h.b16 %v3574
        %v3685 = vunpack.c.l.b16 %v3575
        %v3686 = vunpack.c.h.b16 %v3575
        %v3687 = vunpack.c.l.b16 %v3576
        %v3688 = vunpack.c.h.b16 %v3576
        %v3689 = vunpack.c.l.b16 %v3577
        %v3690 = vunpack.c.h.b16 %v3577
        %v3691 = vunpack.c.l.b16 %v3578
        %v3692 = vunpack.c.h.b16 %v3578
        %v3693 = vunpack.c.l.b16 %v3579
        %v3694 = vunpack.c.h.b16 %v3579
        %v3695 = vunpack.c.l.b16 %v3580
        %v3696 = vunpack.c.h.b16 %v3580
        %v3697 = vunpack.c.l.b16 %v3581
        %v3698 = vunpack.c.h.b16 %v3581
        %v3699 = vunpack.c.l.b16 %v3582
        %v3700 = vunpack.c.h.b16 %v3582
        %v3701 = vunpack.c.l.b16 %v3583
        %v3702 = vunpack.c.h.b16 %v3583
        %v3703 = vunpack.c.l.b16 %v3584
        %v3704 = vunpack.c.h.b16 %v3584
        %v3705 = vunpack.c.l.b16 %v3585
        %v3706 = vunpack.c.h.b16 %v3585
        %v3707 = vunpack.c.l.b16 %v3586
        %v3708 = vunpack.c.h.b16 %v3586
        %v3709 = vunpack.c.l.b16 %v3587
        %v3710 = vunpack.c.h.b16 %v3587
        %v3711 = vunpack.c.l.b16 %v3588
        %v3712 = vunpack.c.h.b16 %v3588
        %v3713 = vunpack.c.l.b16 %v3589
        %v3714 = vunpack.c.h.b16 %v3589
        %v3715 = vunpack.c.l.b16 %v3590
        %v3716 = vunpack.c.h.b16 %v3590
        %v3717 = vunpack.c.l.b16 %v3591
        %v3718 = vunpack.c.h.b16 %v3591
        %v3719 = vunpack.c.l.b16 %v3592
        %v3720 = vunpack.c.h.b16 %v3592
        %v3721 = vunpack.c.l.b16 %v3593
        %v3722 = vunpack.c.h.b16 %v3593
        %v3723 = vunpack.c.l.b16 %v3594
        %v3724 = vunpack.c.h.b16 %v3594
        %v3725 = vunpack.c.l.b16 %v3595
        %v3726 = vunpack.c.h.b16 %v3595
        %v3727 = vunpack.c.l.b16 %v3596
        %v3728 = vunpack.c.h.b16 %v3596
        %v3729 = vunpack.c.l.b16 %v3597
        %v3730 = vunpack.c.h.b16 %v3597
        %v3731 = vunpack.c.l.b16 %v3598
        %v3732 = vunpack.c.h.b16 %v3598
        %v3733 = vunpack.c.l.b16 %v3599
        %v3734 = vunpack.c.h.b16 %v3599
        %v3735 = vunpack.c.l.b16 %v3600
        %v3736 = vunpack.c.h.b16 %v3600
        %v3737 = vunpack.c.l.b16 %v3601
        %v3738 = vunpack.c.h.b16 %v3601
        %v3739 = vunpack.c.l.b16 %v3602
        %v3740 = vunpack.c.h.b16 %v3602
        %v3741 = vunpack.c.l.b16 %v3603
        %v3742 = vunpack.c.h.b16 %v3603
        %v3743 = vunpack.c.l.b16 %v3604
        %v3744 = vunpack.c.h.b16 %v3604
        %v3745 = vunpack.c.l.b16 %v3605
        %v3746 = vunpack.c.h.b16 %v3605
        %v3747 = vunpack.c.l.b16 %v3606
        %v3748 = vunpack.c.h.b16 %v3606
        %v3749 = vunpack.c.l.b16 %v3607
        %v3750 = vunpack.c.h.b16 %v3607
        %v3751 = vunpack.c.l.b16 %v3608
        %v3752 = vunpack.c.h.b16 %v3608
        %v3753 = vpack.c.b16 %v3659, %v3657
        %v3754 = vpack.c.b16 %v3660, %v3658
        %v3755 = vpack.c.b16 %v3663, %v3661
        %v3756 = vpack.c.b16 %v3664, %v3662
        %v3757 = vpack.c.b16 %v3667, %v3665
        %v3758 = vpack.c.b16 %v3668, %v3666
        %v3759 = vpack.c.b16 %v3671, %v3669
        %v3760 = vpack.c.b16 %v3672, %v3670
        %v3761 = vpack.c.b16 %v3675, %v3673
        %v3762 = vpack.c.b16 %v3676, %v3674
        %v3763 = vpack.c.b16 %v3679, %v3677
        %v3764 = vpack.c.b16 %v3680, %v3678
        %v3765 = vpack.c.b16 %v3683, %v3681
        %v3766 = vpack.c.b16 %v3684, %v3682
        %v3767 = vpack.c.b16 %v3687, %v3685
        %v3768 = vpack.c.b16 %v3688, %v3686
        %v3769 = vpack.c.b16 %v3691, %v3689
        %v3770 = vpack.c.b16 %v3692, %v3690
        %v3771 = vpack.c.b16 %v3695, %v3693
        %v3772 = vpack.c.b16 %v3696, %v3694
        %v3773 = vpack.c.b16 %v3699, %v3697
        %v3774 = vpack.c.b16 %v3700, %v3698
        %v3775 = vpack.c.b16 %v3703, %v3701
        %v3776 = vpack.c.b16 %v3704, %v3702
        %v3777 = vpack.c.b16 %v3707, %v3705
        %v3778 = vpack.c.b16 %v3708, %v3706
        %v3779 = vpack.c.b16 %v3711, %v3709
        %v3780 = vpack.c.b16 %v3712, %v3710
        %v3781 = vpack.c.b16 %v3715, %v3713
        %v3782 = vpack.c.b16 %v3716, %v3714
        %v3783 = vpack.c.b16 %v3719, %v3717
        %v3784 = vpack.c.b16 %v3720, %v3718
        %v3785 = vpack.c.b16 %v3723, %v3721
        %v3786 = vpack.c.b16 %v3724, %v3722
        %v3787 = vpack.c.b16 %v3727, %v3725
        %v3788 = vpack.c.b16 %v3728, %v3726
        %v3789 = vpack.c.b16 %v3731, %v3729
        %v3790 = vpack.c.b16 %v3732, %v3730
        %v3791 = vpack.c.b16 %v3735, %v3733
        %v3792 = vpack.c.b16 %v3736, %v3734
        %v3793 = vpack.c.b16 %v3739, %v3737
        %v3794 = vpack.c.b16 %v3740, %v3738
        %v3795 = vpack.c.b16 %v3743, %v3741
        %v3796 = vpack.c.b16 %v3744, %v3742
        %v3797 = vpack.c.b16 %v3747, %v3745
        %v3798 = vpack.c.b16 %v3748, %v3746
        %v3799 = vpack.c.b16 %v3751, %v3749
        %v3800 = vpack.c.b16 %v3752, %v3750
        %3849 = vmatprep.subr.bf16.mxu0 %v3754
        %3850 = vmatpush1.bf16.msra.mxu0 %v3753
        %3851 = vmatprep.subr.bf16.mxu0 %v3756
        %3852 = vmatpush1.bf16.msra.mxu0 %v3755
        %3853 = vmatprep.subr.bf16.mxu0 %v3758
        %3854 = vmatpush1.bf16.msra.mxu0 %v3757
        %3855 = vmatprep.subr.bf16.mxu0 %v3760
        %3856 = vmatpush1.bf16.msra.mxu0 %v3759
        %3857 = vmatprep.subr.bf16.mxu0 %v3762
        %3858 = vmatpush1.bf16.msra.mxu0 %v3761
        %3859 = vmatprep.subr.bf16.mxu0 %v3764
        %3860 = vmatpush1.bf16.msra.mxu0 %v3763
        %3861 = vmatprep.subr.bf16.mxu0 %v3766
        %3862 = vmatpush1.bf16.msra.mxu0 %v3765
        %3863 = vmatprep.subr.bf16.mxu0 %v3768
        %3864 = vmatpush1.bf16.msra.mxu0 %v3767
        %3865 = vmatprep.subr.bf16.mxu0 %v3770
        %3866 = vmatpush1.bf16.msra.mxu0 %v3769
        %3867 = vmatprep.subr.bf16.mxu0 %v3772
        %3868 = vmatpush1.bf16.msra.mxu0 %v3771
        %3869 = vmatprep.subr.bf16.mxu0 %v3774
        %3870 = vmatpush1.bf16.msra.mxu0 %v3773
        %3871 = vmatprep.subr.bf16.mxu0 %v3776
        %3872 = vmatpush1.bf16.msra.mxu0 %v3775
        %3873 = vmatprep.subr.bf16.mxu0 %v3778
        %3874 = vmatpush1.bf16.msra.mxu0 %v3777
        %3875 = vmatprep.subr.bf16.mxu0 %v3780
        %3876 = vmatpush1.bf16.msra.mxu0 %v3779
        %3877 = vmatprep.subr.bf16.mxu0 %v3782
        %3878 = vmatpush1.bf16.msra.mxu0 %v3781
        %3879 = vmatprep.subr.bf16.mxu0 %v3784
        %3880 = vmatpush1.bf16.msra.mxu0 %v3783
        %3881 = vmatprep.mubr.bf16.mxu0 %v3416
        %3882 = vmatmul.mubr.bf16.gmra.mrb[0].mxu0 %v3415
        %v3883 = vpop.f32.mrb[0].mxu0
        %v3884 = vadd.f32 0.0, %v3883
        %v3885 = vpop.f32.mrb[0].mxu0
        %v3886 = vadd.f32 0.0, %v3885
        %v3887 = vpop.f32.mrb[0].mxu0
        %v3888 = vadd.f32 0.0, %v3887
        %v3889 = vpop.f32.mrb[0].mxu0
        %v3890 = vadd.f32 0.0, %v3889
        %3891 = vmatprep.mubr.bf16.mxu0 %v3440
        %3892 = vmatmul.mubr.bf16.gmra.mrb[0].mxu0 %v3439
        %v3893 = vpop.f32.mrb[0].mxu0
        %v3894 = vadd.f32 0.0, %v3893
        %v3895 = vpop.f32.mrb[0].mxu0
        %v3896 = vadd.f32 0.0, %v3895
        %v3897 = vpop.f32.mrb[0].mxu0
        %v3898 = vadd.f32 0.0, %v3897
        %v3899 = vpop.f32.mrb[0].mxu0
        %v3900 = vadd.f32 0.0, %v3899
        %3901 = vmatprep.mubr.bf16.mxu0 %v3464
        %3902 = vmatmul.mubr.bf16.gmra.mrb[0].mxu0 %v3463
        %v3903 = vpop.f32.mrb[0].mxu0
        %v3904 = vadd.f32 0.0, %v3903
        %v3905 = vpop.f32.mrb[0].mxu0
        %v3906 = vadd.f32 0.0, %v3905
        %v3907 = vpop.f32.mrb[0].mxu0
        %v3908 = vadd.f32 0.0, %v3907
        %v3909 = vpop.f32.mrb[0].mxu0
        %v3910 = vadd.f32 0.0, %v3909
        %3911 = vmatprep.mubr.bf16.mxu0 %v3488
        %3912 = vmatmul.mubr.bf16.gmra.mrb[0].mxu0 %v3487
        %v3913 = vpop.f32.mrb[0].mxu0
        %v3914 = vadd.f32 0.0, %v3913
        %v3915 = vpop.f32.mrb[0].mxu0
        %v3916 = vadd.f32 0.0, %v3915
        %v3917 = vpop.f32.mrb[0].mxu0
        %v3918 = vadd.f32 0.0, %v3917
        %v3919 = vpop.f32.mrb[0].mxu0
        %v3920 = vadd.f32 0.0, %v3919
        %3921 = vmatprep.mubr.bf16.mxu0 %v3511
        %3922 = vmatmul.mubr.bf16.gmra.mrb[0].mxu0 %v3510
        %v3923 = vpop.f32.mrb[0].mxu0
        %v3924 = vadd.f32 0.0, %v3923
        %v3925 = vpop.f32.mrb[0].mxu0
        %v3926 = vadd.f32 0.0, %v3925
        %v3927 = vpop.f32.mrb[0].mxu0
        %v3928 = vadd.f32 0.0, %v3927
        %v3929 = vpop.f32.mrb[0].mxu0
        %v3930 = vadd.f32 0.0, %v3929
        %3931 = vmatprep.mubr.bf16.mxu0 %v3535
        %3932 = vmatmul.mubr.bf16.gmra.mrb[0].mxu0 %v3534
        %v3933 = vpop.f32.mrb[0].mxu0
        %v3934 = vadd.f32 0.0, %v3933
        %v3935 = vpop.f32.mrb[0].mxu0
        %v3936 = vadd.f32 0.0, %v3935
        %v3937 = vpop.f32.mrb[0].mxu0
        %v3938 = vadd.f32 0.0, %v3937
        %v3939 = vpop.f32.mrb[0].mxu0
        %v3940 = vadd.f32 0.0, %v3939
        %3941 = vmatprep.mubr.bf16.mxu0 %v3559
        %3942 = vmatmul.mubr.bf16.gmra.mrb[0].mxu0 %v3558
        %v3943 = vpop.f32.mrb[0].mxu0
        %v3944 = vadd.f32 0.0, %v3943
        %v3945 = vpop.f32.mrb[0].mxu0
        %v3946 = vadd.f32 0.0, %v3945
        %v3947 = vpop.f32.mrb[0].mxu0
        %v3948 = vadd.f32 0.0, %v3947
        %v3949 = vpop.f32.mrb[0].mxu0
        %v3950 = vadd.f32 0.0, %v3949
        %3951 = vdwg.mxu0
        %3952 = vmatprep.subr.bf16.mxu0 %v3786
        %3953 = vmatpush1.bf16.msra.mxu0 %v3785
        %3954 = vmatprep.subr.bf16.mxu0 %v3788
        %3955 = vmatpush1.bf16.msra.mxu0 %v3787
        %3956 = vmatprep.subr.bf16.mxu0 %v3790
        %3957 = vmatpush1.bf16.msra.mxu0 %v3789
        %3958 = vmatprep.subr.bf16.mxu0 %v3792
        %3959 = vmatpush1.bf16.msra.mxu0 %v3791
        %3960 = vmatprep.subr.bf16.mxu0 %v3794
        %3961 = vmatpush1.bf16.msra.mxu0 %v3793
        %3962 = vmatprep.subr.bf16.mxu0 %v3796
        %3963 = vmatpush1.bf16.msra.mxu0 %v3795
        %3964 = vmatprep.subr.bf16.mxu0 %v3798
        %3965 = vmatpush1.bf16.msra.mxu0 %v3797
        %3966 = vmatprep.subr.bf16.mxu0 %v3800
        %3967 = vmatpush1.bf16.msra.mxu0 %v3799
        %3968 = vmatprep.subr.bf16.mxu0 0
        %3969 = vmatpush1.bf16.msra.mxu0 0
        %3970 = vmatprep.subr.bf16.mxu0 0
        %3971 = vmatpush1.bf16.msra.mxu0 0
        %3972 = vmatprep.subr.bf16.mxu0 0
        %3973 = vmatpush1.bf16.msra.mxu0 0
        %3974 = vmatprep.subr.bf16.mxu0 0
        %3975 = vmatpush1.bf16.msra.mxu0 0
        %3976 = vmatprep.subr.bf16.mxu0 0
        %3977 = vmatpush1.bf16.msra.mxu0 0
        %3978 = vmatprep.subr.bf16.mxu0 0
        %3979 = vmatpush1.bf16.msra.mxu0 0
        %3980 = vmatprep.subr.bf16.mxu0 0
        %3981 = vmatpush1.bf16.msra.mxu0 0
        %3982 = vmatprep.subr.bf16.mxu0 0
        %3983 = vmatpush1.bf16.msra.mxu0 0
        %3984 = vmatprep.mubr.bf16.mxu0 0
        %3985 = vmatmul.mubr.bf16.gmra.mrb[0].mxu0 %v3417
        %v3986 = vpop.f32.mrb[0].mxu0
        %v3987 = vadd.f32 %v3884, %v3986
        %v3988 = vpop.f32.mrb[0].mxu0
        %v3989 = vadd.f32 %v3886, %v3988
        %v3990 = vpop.f32.mrb[0].mxu0
        %v3991 = vadd.f32 %v3888, %v3990
        %v3992 = vpop.f32.mrb[0].mxu0
        %v3993 = vadd.f32 %v3890, %v3992
        %3994 = vmatprep.mubr.bf16.mxu0 0
        %3995 = vmatmul.mubr.bf16.gmra.mrb[0].mxu0 %v3441
        %v3996 = vpop.f32.mrb[0].mxu0
        %v3997 = vadd.f32 %v3894, %v3996
        %v3998 = vpop.f32.mrb[0].mxu0
        %v3999 = vadd.f32 %v3896, %v3998
        %v4000 = vpop.f32.mrb[0].mxu0
        %v4001 = vadd.f32 %v3898, %v4000
        %v4002 = vpop.f32.mrb[0].mxu0
        %v4003 = vadd.f32 %v3900, %v4002
        %4004 = vmatprep.mubr.bf16.mxu0 0
        %4005 = vmatmul.mubr.bf16.gmra.mrb[0].mxu0 %v3465
        %v4006 = vpop.f32.mrb[0].mxu0
        %v4007 = vadd.f32 %v3904, %v4006
        %v4008 = vpop.f32.mrb[0].mxu0
        %v4009 = vadd.f32 %v3906, %v4008
        %v4010 = vpop.f32.mrb[0].mxu0
        %v4011 = vadd.f32 %v3908, %v4010
        %v4012 = vpop.f32.mrb[0].mxu0
        %v4013 = vadd.f32 %v3910, %v4012
        %4014 = vmatprep.mubr.bf16.mxu0 0
        %4015 = vmatmul.mubr.bf16.gmra.mrb[0].mxu0 %v3489
        %v4016 = vpop.f32.mrb[0].mxu0
        %v4017 = vadd.f32 %v3914, %v4016
        %v4018 = vpop.f32.mrb[0].mxu0
        %v4019 = vadd.f32 %v3916, %v4018
        %v4020 = vpop.f32.mrb[0].mxu0
        %v4021 = vadd.f32 %v3918, %v4020
        %v4022 = vpop.f32.mrb[0].mxu0
        %v4023 = vadd.f32 %v3920, %v4022
        %4024 = vmatprep.mubr.bf16.mxu0 0
        %4025 = vmatmul.mubr.bf16.gmra.mrb[0].mxu0 %v3512
        %v4026 = vpop.f32.mrb[0].mxu0
        %v4027 = vadd.f32 %v3924, %v4026
        %v4028 = vpop.f32.mrb[0].mxu0
        %v4029 = vadd.f32 %v3926, %v4028
        %v4030 = vpop.f32.mrb[0].mxu0
        %v4031 = vadd.f32 %v3928, %v4030
        %v4032 = vpop.f32.mrb[0].mxu0
        %v4033 = vadd.f32 %v3930, %v4032
        %4034 = vmatprep.mubr.bf16.mxu0 0
        %4035 = vmatmul.mubr.bf16.gmra.mrb[0].mxu0 %v3536
        %v4036 = vpop.f32.mrb[0].mxu0
        %v4037 = vadd.f32 %v3934, %v4036
        %v4038 = vpop.f32.mrb[0].mxu0
        %v4039 = vadd.f32 %v3936, %v4038
        %v4040 = vpop.f32.mrb[0].mxu0
        %v4041 = vadd.f32 %v3938, %v4040
        %v4042 = vpop.f32.mrb[0].mxu0
        %v4043 = vadd.f32 %v3940, %v4042
        %4044 = vmatprep.mubr.bf16.mxu0 0
        %4045 = vmatmul.mubr.bf16.gmra.mrb[0].mxu0 %v3560
        %v4046 = vpop.f32.mrb[0].mxu0
        %v4047 = vadd.f32 %v3944, %v4046
        %v4048 = vpop.f32.mrb[0].mxu0
        %v4049 = vadd.f32 %v3946, %v4048
        %v4050 = vpop.f32.mrb[0].mxu0
        %v4051 = vadd.f32 %v3948, %v4050
        %v4052 = vpop.f32.mrb[0].mxu0
        %v4053 = vadd.f32 %v3950, %v4052
        %4054 = vdwg.mxu0
        %v4055 = vadd.f32 %v3367, %v3987
        %v4056 = vadd.f32 %v3368, %v3989
        %v4057 = vadd.f32 %v3369, %v3991
        %v4058 = vadd.f32 %v3370, %v3993
        %v4059 = vadd.f32 %v3371, %v3997
        %v4060 = vadd.f32 %v3372, %v3999
        %v4061 = vadd.f32 %v3373, %v4001
        %v4062 = vadd.f32 %v3374, %v4003
        %v4063 = vadd.f32 %v3375, %v4007
        %v4064 = vadd.f32 %v3376, %v4009
        %v4065 = vadd.f32 %v3377, %v4011
        %v4066 = vadd.f32 %v3378, %v4013
        %v4067 = vadd.f32 %v3379, %v4017
        %v4068 = vadd.f32 %v3380, %v4019
        %v4069 = vadd.f32 %v3381, %v4021
        %v4070 = vadd.f32 %v3382, %v4023
        %v4071 = vadd.f32 %v3383, %v4027
        %v4072 = vadd.f32 %v3384, %v4029
        %v4073 = vadd.f32 %v3385, %v4031
        %v4074 = vadd.f32 %v3386, %v4033
        %v4075 = vadd.f32 %v3387, %v4037
        %v4076 = vadd.f32 %v3388, %v4039
        %v4077 = vadd.f32 %v3389, %v4041
        %v4078 = vadd.f32 %v3390, %v4043
        %v4079 = vadd.f32 %v3391, %v4047
        %v4080 = vadd.f32 %v3392, %v4049
        %v4081 = vadd.f32 %v3393, %v4051
        %v4082 = vadd.f32 %v3394, %v4053
        %4083 = vst [vmem:[#allocation5] sm:$0xff] %v4055
        %4084 = vst [vmem:[#allocation5 + $0x8] sm:$0xff] %v4056
        %4085 = vst [vmem:[#allocation5 + $0x10] sm:$0xff] %v4057
        %4086 = vst [vmem:[#allocation5 + $0x18] sm:$0xff] %v4058
        %4087 = vst [vmem:[#allocation5 + $0x20] sm:$0xff] %v4059
        %4088 = vst [vmem:[#allocation5 + $0x28] sm:$0xff] %v4060
        %4089 = vst [vmem:[#allocation5 + $0x30] sm:$0xff] %v4061
        %4090 = vst [vmem:[#allocation5 + $0x38] sm:$0xff] %v4062
        %4091 = vst [vmem:[#allocation5 + $0x40] sm:$0xff] %v4063
        %4092 = vst [vmem:[#allocation5 + $0x48] sm:$0xff] %v4064
        %4093 = vst [vmem:[#allocation5 + $0x50] sm:$0xff] %v4065
        %4094 = vst [vmem:[#allocation5 + $0x58] sm:$0xff] %v4066
        %4095 = vst [vmem:[#allocation5 + $0x60] sm:$0xff] %v4067
        %4096 = vst [vmem:[#allocation5 + $0x68] sm:$0xff] %v4068
        %4097 = vst [vmem:[#allocation5 + $0x70] sm:$0xff] %v4069
        %4098 = vst [vmem:[#allocation5 + $0x78] sm:$0xff] %v4070
        %4099 = vst [vmem:[#allocation5 + $0x80] sm:$0xff] %v4071
        %4100 = vst [vmem:[#allocation5 + $0x88] sm:$0xff] %v4072
        %4101 = vst [vmem:[#allocation5 + $0x90] sm:$0xff] %v4073
        %4102 = vst [vmem:[#allocation5 + $0x98] sm:$0xff] %v4074
        %4103 = vst [vmem:[#allocation5 + $0xa0] sm:$0xff] %v4075
        %4104 = vst [vmem:[#allocation5 + $0xa8] sm:$0xff] %v4076
        %4105 = vst [vmem:[#allocation5 + $0xb0] sm:$0xff] %v4077
        %4106 = vst [vmem:[#allocation5 + $0xb8] sm:$0xff] %v4078
        %4107 = vst [vmem:[#allocation5 + $0xc0] sm:$0xff] %v4079
        %4108 = vst [vmem:[#allocation5 + $0xc8] sm:$0xff] %v4080
        %4109 = vst [vmem:[#allocation5 + $0xd0] sm:$0xff] %v4081
        %4110 = vst [vmem:[#allocation5 + $0xd8] sm:$0xff] %v4082
        %v4111 = vld [vmem:[#allocation5] sm:$0xff]
        %v4112 = vld [vmem:[#allocation5 + $0x8] sm:$0xff]
        %v4113 = vld [vmem:[#allocation5 + $0x10] sm:$0xff]
        %v4114 = vld [vmem:[#allocation5 + $0x18] sm:$0xff]
        %v4115 = vld [vmem:[#allocation5 + $0x20] sm:$0xff]
        %v4116 = vld [vmem:[#allocation5 + $0x28] sm:$0xff]
        %v4117 = vld [vmem:[#allocation5 + $0x30] sm:$0xff]
        %v4118 = vld [vmem:[#allocation5 + $0x38] sm:$0xff]
        %v4119 = vld [vmem:[#allocation5 + $0x40] sm:$0xff]
        %v4120 = vld [vmem:[#allocation5 + $0x48] sm:$0xff]
        %v4121 = vld [vmem:[#allocation5 + $0x50] sm:$0xff]
        %v4122 = vld [vmem:[#allocation5 + $0x58] sm:$0xff]
        %v4123 = vld [vmem:[#allocation5 + $0x60] sm:$0xff]
        %v4124 = vld [vmem:[#allocation5 + $0x68] sm:$0xff]
        %v4125 = vld [vmem:[#allocation5 + $0x70] sm:$0xff]
        %v4126 = vld [vmem:[#allocation5 + $0x78] sm:$0xff]
        %v4127 = vld [vmem:[#allocation5 + $0x80] sm:$0xff]
        %v4128 = vld [vmem:[#allocation5 + $0x88] sm:$0xff]
        %v4129 = vld [vmem:[#allocation5 + $0x90] sm:$0xff]
        %v4130 = vld [vmem:[#allocation5 + $0x98] sm:$0xff]
        %v4131 = vld [vmem:[#allocation5 + $0xa0] sm:$0xff]
        %v4132 = vld [vmem:[#allocation5 + $0xa8] sm:$0xff]
        %v4133 = vld [vmem:[#allocation5 + $0xb0] sm:$0xff]
        %v4134 = vld [vmem:[#allocation5 + $0xb8] sm:$0xff]
        %v4135 = vld [vmem:[#allocation5 + $0xc0] sm:$0xff]
        %v4136 = vld [vmem:[#allocation5 + $0xc8] sm:$0xff]
        %v4137 = vld [vmem:[#allocation5 + $0xd0] sm:$0xff]
        %v4138 = vld [vmem:[#allocation5 + $0xd8] sm:$0xff]
        %s4139 = scalar_lea.vmem [#allocation3], 48
        %v4140 = vld [vmem:[%s4139] sm:$0xff]
        %v4141 = vld [vmem:[%s4139 + $0x8] sm:$0xff]
        %v4142 = vld [vmem:[%s4139 + $0x10] sm:$0x3]
        %v4146 = vrot.slane %v4140, 1
        %v4147 = vrot.slane %v4141, 1
        %v4148 = vsel %vm715, %v4146, %v4147
        %v4149 = vrot.slane %v4142, 1
        %v4150 = vsel %vm715, %v4147, %v4149
        %v4153 = vrot.slane %v4140, 2
        %v4154 = vrot.slane %v4141, 2
        %v4155 = vsel %vm1025, %v4153, %v4154
        %v4156 = vrot.slane %v4142, 2
        %v4157 = vsel %vm1025, %v4154, %v4156
        %v4160 = vpack.c.bf16 %v4141, %v4140
        %v4161 = vpack.c.bf16 %v4150, %v4148
        %v4162 = vpack.c.bf16 %v4157, %v4155
        %s4163 = scalar_lea.vmem [#allocation3], 120
        %v4164 = vld [vmem:[%s4163] sm:$0xff]
        %v4165 = vld [vmem:[%s4163 + $0x8] sm:$0xff]
        %v4166 = vld [vmem:[%s4163 + $0x10] sm:$0x3]
        %v4170 = vrot.slane %v4164, 1
        %v4171 = vrot.slane %v4165, 1
        %v4172 = vsel %vm715, %v4170, %v4171
        %v4173 = vrot.slane %v4166, 1
        %v4174 = vsel %vm715, %v4171, %v4173
        %v4177 = vrot.slane %v4164, 2
        %v4178 = vrot.slane %v4165, 2
        %v4179 = vsel %vm1025, %v4177, %v4178
        %v4180 = vrot.slane %v4166, 2
        %v4181 = vsel %vm1025, %v4178, %v4180
        %v4184 = vpack.c.bf16 %v4165, %v4164
        %v4185 = vpack.c.bf16 %v4174, %v4172
        %v4186 = vpack.c.bf16 %v4181, %v4179
        %s4187 = scalar_lea.vmem [#allocation3], 192
        %v4188 = vld [vmem:[%s4187] sm:$0xff]
        %v4189 = vld [vmem:[%s4187 + $0x8] sm:$0xff]
        %v4190 = vld [vmem:[%s4187 + $0x10] sm:$0x3]
        %v4194 = vrot.slane %v4188, 1
        %v4195 = vrot.slane %v4189, 1
        %v4196 = vsel %vm715, %v4194, %v4195
        %v4197 = vrot.slane %v4190, 1
        %v4198 = vsel %vm715, %v4195, %v4197
        %v4201 = vrot.slane %v4188, 2
        %v4202 = vrot.slane %v4189, 2
        %v4203 = vsel %vm1025, %v4201, %v4202
        %v4204 = vrot.slane %v4190, 2
        %v4205 = vsel %vm1025, %v4202, %v4204
        %v4208 = vpack.c.bf16 %v4189, %v4188
        %v4209 = vpack.c.bf16 %v4198, %v4196
        %v4210 = vpack.c.bf16 %v4205, %v4203
        %s4211 = scalar_lea.vmem [#allocation3], 264
        %v4212 = vld [vmem:[%s4211] sm:$0xff]
        %v4213 = vld [vmem:[%s4211 + $0x8] sm:$0xff]
        %v4214 = vld [vmem:[%s4211 + $0x10] sm:$0x3]
        %v4218 = vrot.slane %v4212, 1
        %v4219 = vrot.slane %v4213, 1
        %v4220 = vsel %vm715, %v4218, %v4219
        %v4221 = vrot.slane %v4214, 1
        %v4222 = vsel %vm715, %v4219, %v4221
        %v4225 = vrot.slane %v4212, 2
        %v4226 = vrot.slane %v4213, 2
        %v4227 = vsel %vm1025, %v4225, %v4226
        %v4228 = vrot.slane %v4214, 2
        %v4229 = vsel %vm1025, %v4226, %v4228
        %v4232 = vpack.c.bf16 %v4213, %v4212
        %v4233 = vpack.c.bf16 %v4222, %v4220
        %v4234 = vpack.c.bf16 %v4229, %v4227
        %v4235 = vld [vmem:[%s3336] sm:$0xff]
        %v4236 = vld [vmem:[%s3336 + $0x8] sm:$0xff]
        %v4237 = vld [vmem:[%s3336 + $0x10] sm:$0x3]
        %v4241 = vrot.slane %v4235, 1
        %v4242 = vrot.slane %v4236, 1
        %v4243 = vsel %vm715, %v4241, %v4242
        %v4244 = vrot.slane %v4237, 1
        %v4245 = vsel %vm715, %v4242, %v4244
        %v4248 = vrot.slane %v4235, 2
        %v4249 = vrot.slane %v4236, 2
        %v4250 = vsel %vm1025, %v4248, %v4249
        %v4251 = vrot.slane %v4237, 2
        %v4252 = vsel %vm1025, %v4249, %v4251
        %v4255 = vpack.c.bf16 %v4236, %v4235
        %v4256 = vpack.c.bf16 %v4245, %v4243
        %v4257 = vpack.c.bf16 %v4252, %v4250
        %s4258 = scalar_lea.vmem [#allocation3], 408
        %v4259 = vld [vmem:[%s4258] sm:$0xff]
        %v4260 = vld [vmem:[%s4258 + $0x8] sm:$0xff]
        %v4261 = vld [vmem:[%s4258 + $0x10] sm:$0x3]
        %v4265 = vrot.slane %v4259, 1
        %v4266 = vrot.slane %v4260, 1
        %v4267 = vsel %vm715, %v4265, %v4266
        %v4268 = vrot.slane %v4261, 1
        %v4269 = vsel %vm715, %v4266, %v4268
        %v4272 = vrot.slane %v4259, 2
        %v4273 = vrot.slane %v4260, 2
        %v4274 = vsel %vm1025, %v4272, %v4273
        %v4275 = vrot.slane %v4261, 2
        %v4276 = vsel %vm1025, %v4273, %v4275
        %v4279 = vpack.c.bf16 %v4260, %v4259
        %v4280 = vpack.c.bf16 %v4269, %v4267
        %v4281 = vpack.c.bf16 %v4276, %v4274
        %s4282 = scalar_lea.vmem [#allocation3], 480
        %v4283 = vld [vmem:[%s4282] sm:$0xff]
        %v4284 = vld [vmem:[%s4282 + $0x8] sm:$0xff]
        %v4285 = vld [vmem:[%s4282 + $0x10] sm:$0x3]
        %v4289 = vrot.slane %v4283, 1
        %v4290 = vrot.slane %v4284, 1
        %v4291 = vsel %vm715, %v4289, %v4290
        %v4292 = vrot.slane %v4285, 1
        %v4293 = vsel %vm715, %v4290, %v4292
        %v4296 = vrot.slane %v4283, 2
        %v4297 = vrot.slane %v4284, 2
        %v4298 = vsel %vm1025, %v4296, %v4297
        %v4299 = vrot.slane %v4285, 2
        %v4300 = vsel %vm1025, %v4297, %v4299
        %v4303 = vpack.c.bf16 %v4284, %v4283
        %v4304 = vpack.c.bf16 %v4293, %v4291
        %v4305 = vpack.c.bf16 %v4300, %v4298
        %s4306 = scalar_lea.vmem [#allocation6], 384
        %v4307 = vld [vmem:[%s4306] sm:$0xff]
        %v4308 = vld [vmem:[%s4306 + $0x8] sm:$0xff]
        %v4309 = vld [vmem:[%s4306 + $0x10] sm:$0xff]
        %v4310 = vld [vmem:[%s4306 + $0x18] sm:$0xff]
        %v4311 = vld [vmem:[%s4306 + $0x20] sm:$0xff]
        %v4312 = vld [vmem:[%s4306 + $0x28] sm:$0xff]
        %v4313 = vld [vmem:[%s4306 + $0x30] sm:$0xff]
        %v4314 = vld [vmem:[%s4306 + $0x38] sm:$0xff]
        %v4315 = vld [vmem:[%s4306 + $0x40] sm:$0xff]
        %v4316 = vld [vmem:[%s4306 + $0x48] sm:$0xff]
        %v4317 = vld [vmem:[%s4306 + $0x50] sm:$0xff]
        %v4318 = vld [vmem:[%s4306 + $0x58] sm:$0xff]
        %v4319 = vld [vmem:[%s4306 + $0x60] sm:$0xff]
        %v4320 = vld [vmem:[%s4306 + $0x68] sm:$0xff]
        %v4321 = vld [vmem:[%s4306 + $0x70] sm:$0xff]
        %v4322 = vld [vmem:[%s4306 + $0x78] sm:$0xff]
        %v4323 = vld [vmem:[%s4306 + $0x80] sm:$0xff]
        %v4324 = vld [vmem:[%s4306 + $0x88] sm:$0xff]
        %v4325 = vld [vmem:[%s4306 + $0x90] sm:$0xff]
        %v4326 = vld [vmem:[%s4306 + $0x98] sm:$0xff]
        %v4327 = vld [vmem:[%s4306 + $0xa0] sm:$0xff]
        %v4328 = vld [vmem:[%s4306 + $0xa8] sm:$0xff]
        %v4329 = vld [vmem:[%s4306 + $0xb0] sm:$0xff]
        %v4330 = vld [vmem:[%s4306 + $0xb8] sm:$0xff]
        %v4331 = vld [vmem:[%s4306 + $0xc0] sm:$0xff]
        %v4332 = vld [vmem:[%s4306 + $0xc8] sm:$0xff]
        %v4333 = vld [vmem:[%s4306 + $0xd0] sm:$0xff]
        %v4334 = vld [vmem:[%s4306 + $0xd8] sm:$0xff]
        %v4335 = vld [vmem:[%s4306 + $0xe0] sm:$0xff]
        %v4336 = vld [vmem:[%s4306 + $0xe8] sm:$0xff]
        %v4337 = vld [vmem:[%s4306 + $0xf0] sm:$0xff]
        %v4338 = vld [vmem:[%s4306 + $0xf8] sm:$0xff]
        %v4339 = vld [vmem:[%s4306 + $0x100] sm:$0xff]
        %v4340 = vld [vmem:[%s4306 + $0x108] sm:$0xff]
        %v4341 = vld [vmem:[%s4306 + $0x110] sm:$0xff]
        %v4342 = vld [vmem:[%s4306 + $0x118] sm:$0xff]
        %v4343 = vld [vmem:[%s4306 + $0x120] sm:$0xff]
        %v4344 = vld [vmem:[%s4306 + $0x128] sm:$0xff]
        %v4345 = vld [vmem:[%s4306 + $0x130] sm:$0xff]
        %v4346 = vld [vmem:[%s4306 + $0x138] sm:$0xff]
        %v4347 = vld [vmem:[%s4306 + $0x140] sm:$0xff]
        %v4348 = vld [vmem:[%s4306 + $0x148] sm:$0xff]
        %v4349 = vld [vmem:[%s4306 + $0x150] sm:$0xff]
        %v4350 = vld [vmem:[%s4306 + $0x158] sm:$0xff]
        %v4351 = vld [vmem:[%s4306 + $0x160] sm:$0xff]
        %v4352 = vld [vmem:[%s4306 + $0x168] sm:$0xff]
        %v4353 = vld [vmem:[%s4306 + $0x170] sm:$0xff]
        %v4354 = vld [vmem:[%s4306 + $0x178] sm:$0xff]
        %v4403 = vunpack.c.l.b16 %v4307
        %v4404 = vunpack.c.h.b16 %v4307
        %v4405 = vunpack.c.l.b16 %v4308
        %v4406 = vunpack.c.h.b16 %v4308
        %v4407 = vunpack.c.l.b16 %v4309
        %v4408 = vunpack.c.h.b16 %v4309
        %v4409 = vunpack.c.l.b16 %v4310
        %v4410 = vunpack.c.h.b16 %v4310
        %v4411 = vunpack.c.l.b16 %v4311
        %v4412 = vunpack.c.h.b16 %v4311
        %v4413 = vunpack.c.l.b16 %v4312
        %v4414 = vunpack.c.h.b16 %v4312
        %v4415 = vunpack.c.l.b16 %v4313
        %v4416 = vunpack.c.h.b16 %v4313
        %v4417 = vunpack.c.l.b16 %v4314
        %v4418 = vunpack.c.h.b16 %v4314
        %v4419 = vunpack.c.l.b16 %v4315
        %v4420 = vunpack.c.h.b16 %v4315
        %v4421 = vunpack.c.l.b16 %v4316
        %v4422 = vunpack.c.h.b16 %v4316
        %v4423 = vunpack.c.l.b16 %v4317
        %v4424 = vunpack.c.h.b16 %v4317
        %v4425 = vunpack.c.l.b16 %v4318
        %v4426 = vunpack.c.h.b16 %v4318
        %v4427 = vunpack.c.l.b16 %v4319
        %v4428 = vunpack.c.h.b16 %v4319
        %v4429 = vunpack.c.l.b16 %v4320
        %v4430 = vunpack.c.h.b16 %v4320
        %v4431 = vunpack.c.l.b16 %v4321
        %v4432 = vunpack.c.h.b16 %v4321
        %v4433 = vunpack.c.l.b16 %v4322
        %v4434 = vunpack.c.h.b16 %v4322
        %v4435 = vunpack.c.l.b16 %v4323
        %v4436 = vunpack.c.h.b16 %v4323
        %v4437 = vunpack.c.l.b16 %v4324
        %v4438 = vunpack.c.h.b16 %v4324
        %v4439 = vunpack.c.l.b16 %v4325
        %v4440 = vunpack.c.h.b16 %v4325
        %v4441 = vunpack.c.l.b16 %v4326
        %v4442 = vunpack.c.h.b16 %v4326
        %v4443 = vunpack.c.l.b16 %v4327
        %v4444 = vunpack.c.h.b16 %v4327
        %v4445 = vunpack.c.l.b16 %v4328
        %v4446 = vunpack.c.h.b16 %v4328
        %v4447 = vunpack.c.l.b16 %v4329
        %v4448 = vunpack.c.h.b16 %v4329
        %v4449 = vunpack.c.l.b16 %v4330
        %v4450 = vunpack.c.h.b16 %v4330
        %v4451 = vunpack.c.l.b16 %v4331
        %v4452 = vunpack.c.h.b16 %v4331
        %v4453 = vunpack.c.l.b16 %v4332
        %v4454 = vunpack.c.h.b16 %v4332
        %v4455 = vunpack.c.l.b16 %v4333
        %v4456 = vunpack.c.h.b16 %v4333
        %v4457 = vunpack.c.l.b16 %v4334
        %v4458 = vunpack.c.h.b16 %v4334
        %v4459 = vunpack.c.l.b16 %v4335
        %v4460 = vunpack.c.h.b16 %v4335
        %v4461 = vunpack.c.l.b16 %v4336
        %v4462 = vunpack.c.h.b16 %v4336
        %v4463 = vunpack.c.l.b16 %v4337
        %v4464 = vunpack.c.h.b16 %v4337
        %v4465 = vunpack.c.l.b16 %v4338
        %v4466 = vunpack.c.h.b16 %v4338
        %v4467 = vunpack.c.l.b16 %v4339
        %v4468 = vunpack.c.h.b16 %v4339
        %v4469 = vunpack.c.l.b16 %v4340
        %v4470 = vunpack.c.h.b16 %v4340
        %v4471 = vunpack.c.l.b16 %v4341
        %v4472 = vunpack.c.h.b16 %v4341
        %v4473 = vunpack.c.l.b16 %v4342
        %v4474 = vunpack.c.h.b16 %v4342
        %v4475 = vunpack.c.l.b16 %v4343
        %v4476 = vunpack.c.h.b16 %v4343
        %v4477 = vunpack.c.l.b16 %v4344
        %v4478 = vunpack.c.h.b16 %v4344
        %v4479 = vunpack.c.l.b16 %v4345
        %v4480 = vunpack.c.h.b16 %v4345
        %v4481 = vunpack.c.l.b16 %v4346
        %v4482 = vunpack.c.h.b16 %v4346
        %v4483 = vunpack.c.l.b16 %v4347
        %v4484 = vunpack.c.h.b16 %v4347
        %v4485 = vunpack.c.l.b16 %v4348
        %v4486 = vunpack.c.h.b16 %v4348
        %v4487 = vunpack.c.l.b16 %v4349
        %v4488 = vunpack.c.h.b16 %v4349
        %v4489 = vunpack.c.l.b16 %v4350
        %v4490 = vunpack.c.h.b16 %v4350
        %v4491 = vunpack.c.l.b16 %v4351
        %v4492 = vunpack.c.h.b16 %v4351
        %v4493 = vunpack.c.l.b16 %v4352
        %v4494 = vunpack.c.h.b16 %v4352
        %v4495 = vunpack.c.l.b16 %v4353
        %v4496 = vunpack.c.h.b16 %v4353
        %v4497 = vunpack.c.l.b16 %v4354
        %v4498 = vunpack.c.h.b16 %v4354
        %v4499 = vpack.c.b16 %v4405, %v4403
        %v4500 = vpack.c.b16 %v4406, %v4404
        %v4501 = vpack.c.b16 %v4409, %v4407
        %v4502 = vpack.c.b16 %v4410, %v4408
        %v4503 = vpack.c.b16 %v4413, %v4411
        %v4504 = vpack.c.b16 %v4414, %v4412
        %v4505 = vpack.c.b16 %v4417, %v4415
        %v4506 = vpack.c.b16 %v4418, %v4416
        %v4507 = vpack.c.b16 %v4421, %v4419
        %v4508 = vpack.c.b16 %v4422, %v4420
        %v4509 = vpack.c.b16 %v4425, %v4423
        %v4510 = vpack.c.b16 %v4426, %v4424
        %v4511 = vpack.c.b16 %v4429, %v4427
        %v4512 = vpack.c.b16 %v4430, %v4428
        %v4513 = vpack.c.b16 %v4433, %v4431
        %v4514 = vpack.c.b16 %v4434, %v4432
        %v4515 = vpack.c.b16 %v4437, %v4435
        %v4516 = vpack.c.b16 %v4438, %v4436
        %v4517 = vpack.c.b16 %v4441, %v4439
        %v4518 = vpack.c.b16 %v4442, %v4440
        %v4519 = vpack.c.b16 %v4445, %v4443
        %v4520 = vpack.c.b16 %v4446, %v4444
        %v4521 = vpack.c.b16 %v4449, %v4447
        %v4522 = vpack.c.b16 %v4450, %v4448
        %v4523 = vpack.c.b16 %v4453, %v4451
        %v4524 = vpack.c.b16 %v4454, %v4452
        %v4525 = vpack.c.b16 %v4457, %v4455
        %v4526 = vpack.c.b16 %v4458, %v4456
        %v4527 = vpack.c.b16 %v4461, %v4459
        %v4528 = vpack.c.b16 %v4462, %v4460
        %v4529 = vpack.c.b16 %v4465, %v4463
        %v4530 = vpack.c.b16 %v4466, %v4464
        %v4531 = vpack.c.b16 %v4469, %v4467
        %v4532 = vpack.c.b16 %v4470, %v4468
        %v4533 = vpack.c.b16 %v4473, %v4471
        %v4534 = vpack.c.b16 %v4474, %v4472
        %v4535 = vpack.c.b16 %v4477, %v4475
        %v4536 = vpack.c.b16 %v4478, %v4476
        %v4537 = vpack.c.b16 %v4481, %v4479
        %v4538 = vpack.c.b16 %v4482, %v4480
        %v4539 = vpack.c.b16 %v4485, %v4483
        %v4540 = vpack.c.b16 %v4486, %v4484
        %v4541 = vpack.c.b16 %v4489, %v4487
        %v4542 = vpack.c.b16 %v4490, %v4488
        %v4543 = vpack.c.b16 %v4493, %v4491
        %v4544 = vpack.c.b16 %v4494, %v4492
        %v4545 = vpack.c.b16 %v4497, %v4495
        %v4546 = vpack.c.b16 %v4498, %v4496
        %4595 = vmatprep.subr.bf16.mxu0 %v4500
        %4596 = vmatpush1.bf16.msra.mxu0 %v4499
        %4597 = vmatprep.subr.bf16.mxu0 %v4502
        %4598 = vmatpush1.bf16.msra.mxu0 %v4501
        %4599 = vmatprep.subr.bf16.mxu0 %v4504
        %4600 = vmatpush1.bf16.msra.mxu0 %v4503
        %4601 = vmatprep.subr.bf16.mxu0 %v4506
        %4602 = vmatpush1.bf16.msra.mxu0 %v4505
        %4603 = vmatprep.subr.bf16.mxu0 %v4508
        %4604 = vmatpush1.bf16.msra.mxu0 %v4507
        %4605 = vmatprep.subr.bf16.mxu0 %v4510
        %4606 = vmatpush1.bf16.msra.mxu0 %v4509
        %4607 = vmatprep.subr.bf16.mxu0 %v4512
        %4608 = vmatpush1.bf16.msra.mxu0 %v4511
        %4609 = vmatprep.subr.bf16.mxu0 %v4514
        %4610 = vmatpush1.bf16.msra.mxu0 %v4513
        %4611 = vmatprep.subr.bf16.mxu0 %v4516
        %4612 = vmatpush1.bf16.msra.mxu0 %v4515
        %4613 = vmatprep.subr.bf16.mxu0 %v4518
        %4614 = vmatpush1.bf16.msra.mxu0 %v4517
        %4615 = vmatprep.subr.bf16.mxu0 %v4520
        %4616 = vmatpush1.bf16.msra.mxu0 %v4519
        %4617 = vmatprep.subr.bf16.mxu0 %v4522
        %4618 = vmatpush1.bf16.msra.mxu0 %v4521
        %4619 = vmatprep.subr.bf16.mxu0 %v4524
        %4620 = vmatpush1.bf16.msra.mxu0 %v4523
        %4621 = vmatprep.subr.bf16.mxu0 %v4526
        %4622 = vmatpush1.bf16.msra.mxu0 %v4525
        %4623 = vmatprep.subr.bf16.mxu0 %v4528
        %4624 = vmatpush1.bf16.msra.mxu0 %v4527
        %4625 = vmatprep.subr.bf16.mxu0 %v4530
        %4626 = vmatpush1.bf16.msra.mxu0 %v4529
        %4627 = vmatprep.mubr.bf16.mxu0 %v4161
        %4628 = vmatmul.mubr.bf16.gmra.mrb[0].mxu0 %v4160
        %v4629 = vpop.f32.mrb[0].mxu0
        %v4630 = vadd.f32 0.0, %v4629
        %v4631 = vpop.f32.mrb[0].mxu0
        %v4632 = vadd.f32 0.0, %v4631
        %v4633 = vpop.f32.mrb[0].mxu0
        %v4634 = vadd.f32 0.0, %v4633
        %v4635 = vpop.f32.mrb[0].mxu0
        %v4636 = vadd.f32 0.0, %v4635
        %4637 = vmatprep.mubr.bf16.mxu0 %v4185
        %4638 = vmatmul.mubr.bf16.gmra.mrb[0].mxu0 %v4184
        %v4639 = vpop.f32.mrb[0].mxu0
        %v4640 = vadd.f32 0.0, %v4639
        %v4641 = vpop.f32.mrb[0].mxu0
        %v4642 = vadd.f32 0.0, %v4641
        %v4643 = vpop.f32.mrb[0].mxu0
        %v4644 = vadd.f32 0.0, %v4643
        %v4645 = vpop.f32.mrb[0].mxu0
        %v4646 = vadd.f32 0.0, %v4645
        %4647 = vmatprep.mubr.bf16.mxu0 %v4209
        %4648 = vmatmul.mubr.bf16.gmra.mrb[0].mxu0 %v4208
        %v4649 = vpop.f32.mrb[0].mxu0
        %v4650 = vadd.f32 0.0, %v4649
        %v4651 = vpop.f32.mrb[0].mxu0
        %v4652 = vadd.f32 0.0, %v4651
        %v4653 = vpop.f32.mrb[0].mxu0
        %v4654 = vadd.f32 0.0, %v4653
        %v4655 = vpop.f32.mrb[0].mxu0
        %v4656 = vadd.f32 0.0, %v4655
        %4657 = vmatprep.mubr.bf16.mxu0 %v4233
        %4658 = vmatmul.mubr.bf16.gmra.mrb[0].mxu0 %v4232
        %v4659 = vpop.f32.mrb[0].mxu0
        %v4660 = vadd.f32 0.0, %v4659
        %v4661 = vpop.f32.mrb[0].mxu0
        %v4662 = vadd.f32 0.0, %v4661
        %v4663 = vpop.f32.mrb[0].mxu0
        %v4664 = vadd.f32 0.0, %v4663
        %v4665 = vpop.f32.mrb[0].mxu0
        %v4666 = vadd.f32 0.0, %v4665
        %4667 = vmatprep.mubr.bf16.mxu0 %v4256
        %4668 = vmatmul.mubr.bf16.gmra.mrb[0].mxu0 %v4255
        %v4669 = vpop.f32.mrb[0].mxu0
        %v4670 = vadd.f32 0.0, %v4669
        %v4671 = vpop.f32.mrb[0].mxu0
        %v4672 = vadd.f32 0.0, %v4671
        %v4673 = vpop.f32.mrb[0].mxu0
        %v4674 = vadd.f32 0.0, %v4673
        %v4675 = vpop.f32.mrb[0].mxu0
        %v4676 = vadd.f32 0.0, %v4675
        %4677 = vmatprep.mubr.bf16.mxu0 %v4280
        %4678 = vmatmul.mubr.bf16.gmra.mrb[0].mxu0 %v4279
        %v4679 = vpop.f32.mrb[0].mxu0
        %v4680 = vadd.f32 0.0, %v4679
        %v4681 = vpop.f32.mrb[0].mxu0
        %v4682 = vadd.f32 0.0, %v4681
        %v4683 = vpop.f32.mrb[0].mxu0
        %v4684 = vadd.f32 0.0, %v4683
        %v4685 = vpop.f32.mrb[0].mxu0
        %v4686 = vadd.f32 0.0, %v4685
        %4687 = vmatprep.mubr.bf16.mxu0 %v4304
        %4688 = vmatmul.mubr.bf16.gmra.mrb[0].mxu0 %v4303
        %v4689 = vpop.f32.mrb[0].mxu0
        %v4690 = vadd.f32 0.0, %v4689
        %v4691 = vpop.f32.mrb[0].mxu0
        %v4692 = vadd.f32 0.0, %v4691
        %v4693 = vpop.f32.mrb[0].mxu0
        %v4694 = vadd.f32 0.0, %v4693
        %v4695 = vpop.f32.mrb[0].mxu0
        %v4696 = vadd.f32 0.0, %v4695
        %4697 = vdwg.mxu0
        %4698 = vmatprep.subr.bf16.mxu0 %v4532
        %4699 = vmatpush1.bf16.msra.mxu0 %v4531
        %4700 = vmatprep.subr.bf16.mxu0 %v4534
        %4701 = vmatpush1.bf16.msra.mxu0 %v4533
        %4702 = vmatprep.subr.bf16.mxu0 %v4536
        %4703 = vmatpush1.bf16.msra.mxu0 %v4535
        %4704 = vmatprep.subr.bf16.mxu0 %v4538
        %4705 = vmatpush1.bf16.msra.mxu0 %v4537
        %4706 = vmatprep.subr.bf16.mxu0 %v4540
        %4707 = vmatpush1.bf16.msra.mxu0 %v4539
        %4708 = vmatprep.subr.bf16.mxu0 %v4542
        %4709 = vmatpush1.bf16.msra.mxu0 %v4541
        %4710 = vmatprep.subr.bf16.mxu0 %v4544
        %4711 = vmatpush1.bf16.msra.mxu0 %v4543
        %4712 = vmatprep.subr.bf16.mxu0 %v4546
        %4713 = vmatpush1.bf16.msra.mxu0 %v4545
        %4714 = vmatprep.subr.bf16.mxu0 0
        %4715 = vmatpush1.bf16.msra.mxu0 0
        %4716 = vmatprep.subr.bf16.mxu0 0
        %4717 = vmatpush1.bf16.msra.mxu0 0
        %4718 = vmatprep.subr.bf16.mxu0 0
        %4719 = vmatpush1.bf16.msra.mxu0 0
        %4720 = vmatprep.subr.bf16.mxu0 0
        %4721 = vmatpush1.bf16.msra.mxu0 0
        %4722 = vmatprep.subr.bf16.mxu0 0
        %4723 = vmatpush1.bf16.msra.mxu0 0
        %4724 = vmatprep.subr.bf16.mxu0 0
        %4725 = vmatpush1.bf16.msra.mxu0 0
        %4726 = vmatprep.subr.bf16.mxu0 0
        %4727 = vmatpush1.bf16.msra.mxu0 0
        %4728 = vmatprep.subr.bf16.mxu0 0
        %4729 = vmatpush1.bf16.msra.mxu0 0
        %4730 = vmatprep.mubr.bf16.mxu0 0
        %4731 = vmatmul.mubr.bf16.gmra.mrb[0].mxu0 %v4162
        %v4732 = vpop.f32.mrb[0].mxu0
        %v4733 = vadd.f32 %v4630, %v4732
        %v4734 = vpop.f32.mrb[0].mxu0
        %v4735 = vadd.f32 %v4632, %v4734
        %v4736 = vpop.f32.mrb[0].mxu0
        %v4737 = vadd.f32 %v4634, %v4736
        %v4738 = vpop.f32.mrb[0].mxu0
        %v4739 = vadd.f32 %v4636, %v4738
        %4740 = vmatprep.mubr.bf16.mxu0 0
        %4741 = vmatmul.mubr.bf16.gmra.mrb[0].mxu0 %v4186
        %v4742 = vpop.f32.mrb[0].mxu0
        %v4743 = vadd.f32 %v4640, %v4742
        %v4744 = vpop.f32.mrb[0].mxu0
        %v4745 = vadd.f32 %v4642, %v4744
        %v4746 = vpop.f32.mrb[0].mxu0
        %v4747 = vadd.f32 %v4644, %v4746
        %v4748 = vpop.f32.mrb[0].mxu0
        %v4749 = vadd.f32 %v4646, %v4748
        %4750 = vmatprep.mubr.bf16.mxu0 0
        %4751 = vmatmul.mubr.bf16.gmra.mrb[0].mxu0 %v4210
        %v4752 = vpop.f32.mrb[0].mxu0
        %v4753 = vadd.f32 %v4650, %v4752
        %v4754 = vpop.f32.mrb[0].mxu0
        %v4755 = vadd.f32 %v4652, %v4754
        %v4756 = vpop.f32.mrb[0].mxu0
        %v4757 = vadd.f32 %v4654, %v4756
        %v4758 = vpop.f32.mrb[0].mxu0
        %v4759 = vadd.f32 %v4656, %v4758
        %4760 = vmatprep.mubr.bf16.mxu0 0
        %4761 = vmatmul.mubr.bf16.gmra.mrb[0].mxu0 %v4234
        %v4762 = vpop.f32.mrb[0].mxu0
        %v4763 = vadd.f32 %v4660, %v4762
        %v4764 = vpop.f32.mrb[0].mxu0
        %v4765 = vadd.f32 %v4662, %v4764
        %v4766 = vpop.f32.mrb[0].mxu0
        %v4767 = vadd.f32 %v4664, %v4766
        %v4768 = vpop.f32.mrb[0].mxu0
        %v4769 = vadd.f32 %v4666, %v4768
        %4770 = vmatprep.mubr.bf16.mxu0 0
        %4771 = vmatmul.mubr.bf16.gmra.mrb[0].mxu0 %v4257
        %v4772 = vpop.f32.mrb[0].mxu0
        %v4773 = vadd.f32 %v4670, %v4772
        %v4774 = vpop.f32.mrb[0].mxu0
        %v4775 = vadd.f32 %v4672, %v4774
        %v4776 = vpop.f32.mrb[0].mxu0
        %v4777 = vadd.f32 %v4674, %v4776
        %v4778 = vpop.f32.mrb[0].mxu0
        %v4779 = vadd.f32 %v4676, %v4778
        %4780 = vmatprep.mubr.bf16.mxu0 0
        %4781 = vmatmul.mubr.bf16.gmra.mrb[0].mxu0 %v4281
        %v4782 = vpop.f32.mrb[0].mxu0
        %v4783 = vadd.f32 %v4680, %v4782
        %v4784 = vpop.f32.mrb[0].mxu0
        %v4785 = vadd.f32 %v4682, %v4784
        %v4786 = vpop.f32.mrb[0].mxu0
        %v4787 = vadd.f32 %v4684, %v4786
        %v4788 = vpop.f32.mrb[0].mxu0
        %v4789 = vadd.f32 %v4686, %v4788
        %4790 = vmatprep.mubr.bf16.mxu0 0
        %4791 = vmatmul.mubr.bf16.gmra.mrb[0].mxu0 %v4305
        %v4792 = vpop.f32.mrb[0].mxu0
        %v4793 = vadd.f32 %v4690, %v4792
        %v4794 = vpop.f32.mrb[0].mxu0
        %v4795 = vadd.f32 %v4692, %v4794
        %v4796 = vpop.f32.mrb[0].mxu0
        %v4797 = vadd.f32 %v4694, %v4796
        %v4798 = vpop.f32.mrb[0].mxu0
        %v4799 = vadd.f32 %v4696, %v4798
        %4800 = vdwg.mxu0
        %v4801 = vadd.f32 %v4111, %v4733
        %v4802 = vadd.f32 %v4112, %v4735
        %v4803 = vadd.f32 %v4113, %v4737
        %v4804 = vadd.f32 %v4114, %v4739
        %v4805 = vadd.f32 %v4115, %v4743
        %v4806 = vadd.f32 %v4116, %v4745
        %v4807 = vadd.f32 %v4117, %v4747
        %v4808 = vadd.f32 %v4118, %v4749
        %v4809 = vadd.f32 %v4119, %v4753
        %v4810 = vadd.f32 %v4120, %v4755
        %v4811 = vadd.f32 %v4121, %v4757
        %v4812 = vadd.f32 %v4122, %v4759
        %v4813 = vadd.f32 %v4123, %v4763
        %v4814 = vadd.f32 %v4124, %v4765
        %v4815 = vadd.f32 %v4125, %v4767
        %v4816 = vadd.f32 %v4126, %v4769
        %v4817 = vadd.f32 %v4127, %v4773
        %v4818 = vadd.f32 %v4128, %v4775
        %v4819 = vadd.f32 %v4129, %v4777
        %v4820 = vadd.f32 %v4130, %v4779
        %v4821 = vadd.f32 %v4131, %v4783
        %v4822 = vadd.f32 %v4132, %v4785
        %v4823 = vadd.f32 %v4133, %v4787
        %v4824 = vadd.f32 %v4134, %v4789
        %v4825 = vadd.f32 %v4135, %v4793
        %v4826 = vadd.f32 %v4136, %v4795
        %v4827 = vadd.f32 %v4137, %v4797
        %v4828 = vadd.f32 %v4138, %v4799
        %4829 = vst [vmem:[#allocation5] sm:$0xff] %v4801
        %4830 = vst [vmem:[#allocation5 + $0x8] sm:$0xff] %v4802
        %4831 = vst [vmem:[#allocation5 + $0x10] sm:$0xff] %v4803
        %4832 = vst [vmem:[#allocation5 + $0x18] sm:$0xff] %v4804
        %4833 = vst [vmem:[#allocation5 + $0x20] sm:$0xff] %v4805
        %4834 = vst [vmem:[#allocation5 + $0x28] sm:$0xff] %v4806
        %4835 = vst [vmem:[#allocation5 + $0x30] sm:$0xff] %v4807
        %4836 = vst [vmem:[#allocation5 + $0x38] sm:$0xff] %v4808
        %4837 = vst [vmem:[#allocation5 + $0x40] sm:$0xff] %v4809
        %4838 = vst [vmem:[#allocation5 + $0x48] sm:$0xff] %v4810
        %4839 = vst [vmem:[#allocation5 + $0x50] sm:$0xff] %v4811
        %4840 = vst [vmem:[#allocation5 + $0x58] sm:$0xff] %v4812
        %4841 = vst [vmem:[#allocation5 + $0x60] sm:$0xff] %v4813
        %4842 = vst [vmem:[#allocation5 + $0x68] sm:$0xff] %v4814
        %4843 = vst [vmem:[#allocation5 + $0x70] sm:$0xff] %v4815
        %4844 = vst [vmem:[#allocation5 + $0x78] sm:$0xff] %v4816
        %4845 = vst [vmem:[#allocation5 + $0x80] sm:$0xff] %v4817
        %4846 = vst [vmem:[#allocation5 + $0x88] sm:$0xff] %v4818
        %4847 = vst [vmem:[#allocation5 + $0x90] sm:$0xff] %v4819
        %4848 = vst [vmem:[#allocation5 + $0x98] sm:$0xff] %v4820
        %4849 = vst [vmem:[#allocation5 + $0xa0] sm:$0xff] %v4821
        %4850 = vst [vmem:[#allocation5 + $0xa8] sm:$0xff] %v4822
        %4851 = vst [vmem:[#allocation5 + $0xb0] sm:$0xff] %v4823
        %4852 = vst [vmem:[#allocation5 + $0xb8] sm:$0xff] %v4824
        %4853 = vst [vmem:[#allocation5 + $0xc0] sm:$0xff] %v4825
        %4854 = vst [vmem:[#allocation5 + $0xc8] sm:$0xff] %v4826
        %4855 = vst [vmem:[#allocation5 + $0xd0] sm:$0xff] %v4827
        %4856 = vst [vmem:[#allocation5 + $0xd8] sm:$0xff] %v4828
        %v4857 = vld [vmem:[#allocation5] sm:$0xff]
        %v4858 = vld [vmem:[#allocation5 + $0x8] sm:$0xff]
        %v4859 = vld [vmem:[#allocation5 + $0x10] sm:$0xff]
        %v4860 = vld [vmem:[#allocation5 + $0x18] sm:$0xff]
        %v4861 = vld [vmem:[#allocation5 + $0x20] sm:$0xff]
        %v4862 = vld [vmem:[#allocation5 + $0x28] sm:$0xff]
        %v4863 = vld [vmem:[#allocation5 + $0x30] sm:$0xff]
        %v4864 = vld [vmem:[#allocation5 + $0x38] sm:$0xff]
        %v4865 = vld [vmem:[#allocation5 + $0x40] sm:$0xff]
        %v4866 = vld [vmem:[#allocation5 + $0x48] sm:$0xff]
        %v4867 = vld [vmem:[#allocation5 + $0x50] sm:$0xff]
        %v4868 = vld [vmem:[#allocation5 + $0x58] sm:$0xff]
        %v4869 = vld [vmem:[#allocation5 + $0x60] sm:$0xff]
        %v4870 = vld [vmem:[#allocation5 + $0x68] sm:$0xff]
        %v4871 = vld [vmem:[#allocation5 + $0x70] sm:$0xff]
        %v4872 = vld [vmem:[#allocation5 + $0x78] sm:$0xff]
        %v4873 = vld [vmem:[#allocation5 + $0x80] sm:$0xff]
        %v4874 = vld [vmem:[#allocation5 + $0x88] sm:$0xff]
        %v4875 = vld [vmem:[#allocation5 + $0x90] sm:$0xff]
        %v4876 = vld [vmem:[#allocation5 + $0x98] sm:$0xff]
        %v4877 = vld [vmem:[#allocation5 + $0xa0] sm:$0xff]
        %v4878 = vld [vmem:[#allocation5 + $0xa8] sm:$0xff]
        %v4879 = vld [vmem:[#allocation5 + $0xb0] sm:$0xff]
        %v4880 = vld [vmem:[#allocation5 + $0xb8] sm:$0xff]
        %v4881 = vld [vmem:[#allocation5 + $0xc0] sm:$0xff]
        %v4882 = vld [vmem:[#allocation5 + $0xc8] sm:$0xff]
        %v4883 = vld [vmem:[#allocation5 + $0xd0] sm:$0xff]
        %v4884 = vld [vmem:[#allocation5 + $0xd8] sm:$0xff]
        %s4885 = scalar_lea.vmem [#allocation3], 96
        %v4886 = vld [vmem:[%s4885] sm:$0xff]
        %v4887 = vld [vmem:[%s4885 + $0x8] sm:$0xff]
        %v4888 = vld [vmem:[%s4885 + $0x10] sm:$0x3]
        %v4892 = vrot.slane %v4886, 1
        %v4893 = vrot.slane %v4887, 1
        %v4894 = vsel %vm715, %v4892, %v4893
        %v4895 = vrot.slane %v4888, 1
        %v4896 = vsel %vm715, %v4893, %v4895
        %v4899 = vrot.slane %v4886, 2
        %v4900 = vrot.slane %v4887, 2
        %v4901 = vsel %vm1025, %v4899, %v4900
        %v4902 = vrot.slane %v4888, 2
        %v4903 = vsel %vm1025, %v4900, %v4902
        %v4906 = vpack.c.bf16 %v4887, %v4886
        %v4907 = vpack.c.bf16 %v4896, %v4894
        %v4908 = vpack.c.bf16 %v4903, %v4901
        %s4909 = scalar_lea.vmem [#allocation3], 168
        %v4910 = vld [vmem:[%s4909] sm:$0xff]
        %v4911 = vld [vmem:[%s4909 + $0x8] sm:$0xff]
        %v4912 = vld [vmem:[%s4909 + $0x10] sm:$0x3]
        %v4916 = vrot.slane %v4910, 1
        %v4917 = vrot.slane %v4911, 1
        %v4918 = vsel %vm715, %v4916, %v4917
        %v4919 = vrot.slane %v4912, 1
        %v4920 = vsel %vm715, %v4917, %v4919
        %v4923 = vrot.slane %v4910, 2
        %v4924 = vrot.slane %v4911, 2
        %v4925 = vsel %vm1025, %v4923, %v4924
        %v4926 = vrot.slane %v4912, 2
        %v4927 = vsel %vm1025, %v4924, %v4926
        %v4930 = vpack.c.bf16 %v4911, %v4910
        %v4931 = vpack.c.bf16 %v4920, %v4918
        %v4932 = vpack.c.bf16 %v4927, %v4925
        %s4933 = scalar_lea.vmem [#allocation3], 240
        %v4934 = vld [vmem:[%s4933] sm:$0xff]
        %v4935 = vld [vmem:[%s4933 + $0x8] sm:$0xff]
        %v4936 = vld [vmem:[%s4933 + $0x10] sm:$0x3]
        %v4940 = vrot.slane %v4934, 1
        %v4941 = vrot.slane %v4935, 1
        %v4942 = vsel %vm715, %v4940, %v4941
        %v4943 = vrot.slane %v4936, 1
        %v4944 = vsel %vm715, %v4941, %v4943
        %v4947 = vrot.slane %v4934, 2
        %v4948 = vrot.slane %v4935, 2
        %v4949 = vsel %vm1025, %v4947, %v4948
        %v4950 = vrot.slane %v4936, 2
        %v4951 = vsel %vm1025, %v4948, %v4950
        %v4954 = vpack.c.bf16 %v4935, %v4934
        %v4955 = vpack.c.bf16 %v4944, %v4942
        %v4956 = vpack.c.bf16 %v4951, %v4949
        %v4957 = vld [vmem:[%s3331] sm:$0xff]
        %v4958 = vld [vmem:[%s3331 + $0x8] sm:$0xff]
        %v4959 = vld [vmem:[%s3331 + $0x10] sm:$0x3]
        %v4963 = vrot.slane %v4957, 1
        %v4964 = vrot.slane %v4958, 1
        %v4965 = vsel %vm715, %v4963, %v4964
        %v4966 = vrot.slane %v4959, 1
        %v4967 = vsel %vm715, %v4964, %v4966
        %v4970 = vrot.slane %v4957, 2
        %v4971 = vrot.slane %v4958, 2
        %v4972 = vsel %vm1025, %v4970, %v4971
        %v4973 = vrot.slane %v4959, 2
        %v4974 = vsel %vm1025, %v4971, %v4973
        %v4977 = vpack.c.bf16 %v4958, %v4957
        %v4978 = vpack.c.bf16 %v4967, %v4965
        %v4979 = vpack.c.bf16 %v4974, %v4972
        %s4980 = scalar_lea.vmem [#allocation3], 384
        %v4981 = vld [vmem:[%s4980] sm:$0xff]
        %v4982 = vld [vmem:[%s4980 + $0x8] sm:$0xff]
        %v4983 = vld [vmem:[%s4980 + $0x10] sm:$0x3]
        %v4987 = vrot.slane %v4981, 1
        %v4988 = vrot.slane %v4982, 1
        %v4989 = vsel %vm715, %v4987, %v4988
        %v4990 = vrot.slane %v4983, 1
        %v4991 = vsel %vm715, %v4988, %v4990
        %v4994 = vrot.slane %v4981, 2
        %v4995 = vrot.slane %v4982, 2
        %v4996 = vsel %vm1025, %v4994, %v4995
        %v4997 = vrot.slane %v4983, 2
        %v4998 = vsel %vm1025, %v4995, %v4997
        %v5001 = vpack.c.bf16 %v4982, %v4981
        %v5002 = vpack.c.bf16 %v4991, %v4989
        %v5003 = vpack.c.bf16 %v4998, %v4996
        %s5004 = scalar_lea.vmem [#allocation3], 456
        %v5005 = vld [vmem:[%s5004] sm:$0xff]
        %v5006 = vld [vmem:[%s5004 + $0x8] sm:$0xff]
        %v5007 = vld [vmem:[%s5004 + $0x10] sm:$0x3]
        %v5011 = vrot.slane %v5005, 1
        %v5012 = vrot.slane %v5006, 1
        %v5013 = vsel %vm715, %v5011, %v5012
        %v5014 = vrot.slane %v5007, 1
        %v5015 = vsel %vm715, %v5012, %v5014
        %v5018 = vrot.slane %v5005, 2
        %v5019 = vrot.slane %v5006, 2
        %v5020 = vsel %vm1025, %v5018, %v5019
        %v5021 = vrot.slane %v5007, 2
        %v5022 = vsel %vm1025, %v5019, %v5021
        %v5025 = vpack.c.bf16 %v5006, %v5005
        %v5026 = vpack.c.bf16 %v5015, %v5013
        %v5027 = vpack.c.bf16 %v5022, %v5020
        %s5028 = scalar_lea.vmem [#allocation3], 528
        %v5029 = vld [vmem:[%s5028] sm:$0xff]
        %v5030 = vld [vmem:[%s5028 + $0x8] sm:$0xff]
        %v5031 = vld [vmem:[%s5028 + $0x10] sm:$0x3]
        %v5035 = vrot.slane %v5029, 1
        %v5036 = vrot.slane %v5030, 1
        %v5037 = vsel %vm715, %v5035, %v5036
        %v5038 = vrot.slane %v5031, 1
        %v5039 = vsel %vm715, %v5036, %v5038
        %v5042 = vrot.slane %v5029, 2
        %v5043 = vrot.slane %v5030, 2
        %v5044 = vsel %vm1025, %v5042, %v5043
        %v5045 = vrot.slane %v5031, 2
        %v5046 = vsel %vm1025, %v5043, %v5045
        %v5049 = vpack.c.bf16 %v5030, %v5029
        %v5050 = vpack.c.bf16 %v5039, %v5037
        %v5051 = vpack.c.bf16 %v5046, %v5044
        %s5052 = scalar_lea.vmem [#allocation6], 768
        %v5053 = vld [vmem:[%s5052] sm:$0xff]
        %v5054 = vld [vmem:[%s5052 + $0x8] sm:$0xff]
        %v5055 = vld [vmem:[%s5052 + $0x10] sm:$0xff]
        %v5056 = vld [vmem:[%s5052 + $0x18] sm:$0xff]
        %v5057 = vld [vmem:[%s5052 + $0x20] sm:$0xff]
        %v5058 = vld [vmem:[%s5052 + $0x28] sm:$0xff]
        %v5059 = vld [vmem:[%s5052 + $0x30] sm:$0xff]
        %v5060 = vld [vmem:[%s5052 + $0x38] sm:$0xff]
        %v5061 = vld [vmem:[%s5052 + $0x40] sm:$0xff]
        %v5062 = vld [vmem:[%s5052 + $0x48] sm:$0xff]
        %v5063 = vld [vmem:[%s5052 + $0x50] sm:$0xff]
        %v5064 = vld [vmem:[%s5052 + $0x58] sm:$0xff]
        %v5065 = vld [vmem:[%s5052 + $0x60] sm:$0xff]
        %v5066 = vld [vmem:[%s5052 + $0x68] sm:$0xff]
        %v5067 = vld [vmem:[%s5052 + $0x70] sm:$0xff]
        %v5068 = vld [vmem:[%s5052 + $0x78] sm:$0xff]
        %v5069 = vld [vmem:[%s5052 + $0x80] sm:$0xff]
        %v5070 = vld [vmem:[%s5052 + $0x88] sm:$0xff]
        %v5071 = vld [vmem:[%s5052 + $0x90] sm:$0xff]
        %v5072 = vld [vmem:[%s5052 + $0x98] sm:$0xff]
        %v5073 = vld [vmem:[%s5052 + $0xa0] sm:$0xff]
        %v5074 = vld [vmem:[%s5052 + $0xa8] sm:$0xff]
        %v5075 = vld [vmem:[%s5052 + $0xb0] sm:$0xff]
        %v5076 = vld [vmem:[%s5052 + $0xb8] sm:$0xff]
        %v5077 = vld [vmem:[%s5052 + $0xc0] sm:$0xff]
        %v5078 = vld [vmem:[%s5052 + $0xc8] sm:$0xff]
        %v5079 = vld [vmem:[%s5052 + $0xd0] sm:$0xff]
        %v5080 = vld [vmem:[%s5052 + $0xd8] sm:$0xff]
        %v5081 = vld [vmem:[%s5052 + $0xe0] sm:$0xff]
        %v5082 = vld [vmem:[%s5052 + $0xe8] sm:$0xff]
        %v5083 = vld [vmem:[%s5052 + $0xf0] sm:$0xff]
        %v5084 = vld [vmem:[%s5052 + $0xf8] sm:$0xff]
        %v5085 = vld [vmem:[%s5052 + $0x100] sm:$0xff]
        %v5086 = vld [vmem:[%s5052 + $0x108] sm:$0xff]
        %v5087 = vld [vmem:[%s5052 + $0x110] sm:$0xff]
        %v5088 = vld [vmem:[%s5052 + $0x118] sm:$0xff]
        %v5089 = vld [vmem:[%s5052 + $0x120] sm:$0xff]
        %v5090 = vld [vmem:[%s5052 + $0x128] sm:$0xff]
        %v5091 = vld [vmem:[%s5052 + $0x130] sm:$0xff]
        %v5092 = vld [vmem:[%s5052 + $0x138] sm:$0xff]
        %v5093 = vld [vmem:[%s5052 + $0x140] sm:$0xff]
        %v5094 = vld [vmem:[%s5052 + $0x148] sm:$0xff]
        %v5095 = vld [vmem:[%s5052 + $0x150] sm:$0xff]
        %v5096 = vld [vmem:[%s5052 + $0x158] sm:$0xff]
        %v5097 = vld [vmem:[%s5052 + $0x160] sm:$0xff]
        %v5098 = vld [vmem:[%s5052 + $0x168] sm:$0xff]
        %v5099 = vld [vmem:[%s5052 + $0x170] sm:$0xff]
        %v5100 = vld [vmem:[%s5052 + $0x178] sm:$0xff]
        %v5149 = vunpack.c.l.b16 %v5053
        %v5150 = vunpack.c.h.b16 %v5053
        %v5151 = vunpack.c.l.b16 %v5054
        %v5152 = vunpack.c.h.b16 %v5054
        %v5153 = vunpack.c.l.b16 %v5055
        %v5154 = vunpack.c.h.b16 %v5055
        %v5155 = vunpack.c.l.b16 %v5056
        %v5156 = vunpack.c.h.b16 %v5056
        %v5157 = vunpack.c.l.b16 %v5057
        %v5158 = vunpack.c.h.b16 %v5057
        %v5159 = vunpack.c.l.b16 %v5058
        %v5160 = vunpack.c.h.b16 %v5058
        %v5161 = vunpack.c.l.b16 %v5059
        %v5162 = vunpack.c.h.b16 %v5059
        %v5163 = vunpack.c.l.b16 %v5060
        %v5164 = vunpack.c.h.b16 %v5060
        %v5165 = vunpack.c.l.b16 %v5061
        %v5166 = vunpack.c.h.b16 %v5061
        %v5167 = vunpack.c.l.b16 %v5062
        %v5168 = vunpack.c.h.b16 %v5062
        %v5169 = vunpack.c.l.b16 %v5063
        %v5170 = vunpack.c.h.b16 %v5063
        %v5171 = vunpack.c.l.b16 %v5064
        %v5172 = vunpack.c.h.b16 %v5064
        %v5173 = vunpack.c.l.b16 %v5065
        %v5174 = vunpack.c.h.b16 %v5065
        %v5175 = vunpack.c.l.b16 %v5066
        %v5176 = vunpack.c.h.b16 %v5066
        %v5177 = vunpack.c.l.b16 %v5067
        %v5178 = vunpack.c.h.b16 %v5067
        %v5179 = vunpack.c.l.b16 %v5068
        %v5180 = vunpack.c.h.b16 %v5068
        %v5181 = vunpack.c.l.b16 %v5069
        %v5182 = vunpack.c.h.b16 %v5069
        %v5183 = vunpack.c.l.b16 %v5070
        %v5184 = vunpack.c.h.b16 %v5070
        %v5185 = vunpack.c.l.b16 %v5071
        %v5186 = vunpack.c.h.b16 %v5071
        %v5187 = vunpack.c.l.b16 %v5072
        %v5188 = vunpack.c.h.b16 %v5072
        %v5189 = vunpack.c.l.b16 %v5073
        %v5190 = vunpack.c.h.b16 %v5073
        %v5191 = vunpack.c.l.b16 %v5074
        %v5192 = vunpack.c.h.b16 %v5074
        %v5193 = vunpack.c.l.b16 %v5075
        %v5194 = vunpack.c.h.b16 %v5075
        %v5195 = vunpack.c.l.b16 %v5076
        %v5196 = vunpack.c.h.b16 %v5076
        %v5197 = vunpack.c.l.b16 %v5077
        %v5198 = vunpack.c.h.b16 %v5077
        %v5199 = vunpack.c.l.b16 %v5078
        %v5200 = vunpack.c.h.b16 %v5078
        %v5201 = vunpack.c.l.b16 %v5079
        %v5202 = vunpack.c.h.b16 %v5079
        %v5203 = vunpack.c.l.b16 %v5080
        %v5204 = vunpack.c.h.b16 %v5080
        %v5205 = vunpack.c.l.b16 %v5081
        %v5206 = vunpack.c.h.b16 %v5081
        %v5207 = vunpack.c.l.b16 %v5082
        %v5208 = vunpack.c.h.b16 %v5082
        %v5209 = vunpack.c.l.b16 %v5083
        %v5210 = vunpack.c.h.b16 %v5083
        %v5211 = vunpack.c.l.b16 %v5084
        %v5212 = vunpack.c.h.b16 %v5084
        %v5213 = vunpack.c.l.b16 %v5085
        %v5214 = vunpack.c.h.b16 %v5085
        %v5215 = vunpack.c.l.b16 %v5086
        %v5216 = vunpack.c.h.b16 %v5086
        %v5217 = vunpack.c.l.b16 %v5087
        %v5218 = vunpack.c.h.b16 %v5087
        %v5219 = vunpack.c.l.b16 %v5088
        %v5220 = vunpack.c.h.b16 %v5088
        %v5221 = vunpack.c.l.b16 %v5089
        %v5222 = vunpack.c.h.b16 %v5089
        %v5223 = vunpack.c.l.b16 %v5090
        %v5224 = vunpack.c.h.b16 %v5090
        %v5225 = vunpack.c.l.b16 %v5091
        %v5226 = vunpack.c.h.b16 %v5091
        %v5227 = vunpack.c.l.b16 %v5092
        %v5228 = vunpack.c.h.b16 %v5092
        %v5229 = vunpack.c.l.b16 %v5093
        %v5230 = vunpack.c.h.b16 %v5093
        %v5231 = vunpack.c.l.b16 %v5094
        %v5232 = vunpack.c.h.b16 %v5094
        %v5233 = vunpack.c.l.b16 %v5095
        %v5234 = vunpack.c.h.b16 %v5095
        %v5235 = vunpack.c.l.b16 %v5096
        %v5236 = vunpack.c.h.b16 %v5096
        %v5237 = vunpack.c.l.b16 %v5097
        %v5238 = vunpack.c.h.b16 %v5097
        %v5239 = vunpack.c.l.b16 %v5098
        %v5240 = vunpack.c.h.b16 %v5098
        %v5241 = vunpack.c.l.b16 %v5099
        %v5242 = vunpack.c.h.b16 %v5099
        %v5243 = vunpack.c.l.b16 %v5100
        %v5244 = vunpack.c.h.b16 %v5100
        %v5245 = vpack.c.b16 %v5151, %v5149
        %v5246 = vpack.c.b16 %v5152, %v5150
        %v5247 = vpack.c.b16 %v5155, %v5153
        %v5248 = vpack.c.b16 %v5156, %v5154
        %v5249 = vpack.c.b16 %v5159, %v5157
        %v5250 = vpack.c.b16 %v5160, %v5158
        %v5251 = vpack.c.b16 %v5163, %v5161
        %v5252 = vpack.c.b16 %v5164, %v5162
        %v5253 = vpack.c.b16 %v5167, %v5165
        %v5254 = vpack.c.b16 %v5168, %v5166
        %v5255 = vpack.c.b16 %v5171, %v5169
        %v5256 = vpack.c.b16 %v5172, %v5170
        %v5257 = vpack.c.b16 %v5175, %v5173
        %v5258 = vpack.c.b16 %v5176, %v5174
        %v5259 = vpack.c.b16 %v5179, %v5177
        %v5260 = vpack.c.b16 %v5180, %v5178
        %v5261 = vpack.c.b16 %v5183, %v5181
        %v5262 = vpack.c.b16 %v5184, %v5182
        %v5263 = vpack.c.b16 %v5187, %v5185
        %v5264 = vpack.c.b16 %v5188, %v5186
        %v5265 = vpack.c.b16 %v5191, %v5189
        %v5266 = vpack.c.b16 %v5192, %v5190
        %v5267 = vpack.c.b16 %v5195, %v5193
        %v5268 = vpack.c.b16 %v5196, %v5194
        %v5269 = vpack.c.b16 %v5199, %v5197
        %v5270 = vpack.c.b16 %v5200, %v5198
        %v5271 = vpack.c.b16 %v5203, %v5201
        %v5272 = vpack.c.b16 %v5204, %v5202
        %v5273 = vpack.c.b16 %v5207, %v5205
        %v5274 = vpack.c.b16 %v5208, %v5206
        %v5275 = vpack.c.b16 %v5211, %v5209
        %v5276 = vpack.c.b16 %v5212, %v5210
        %v5277 = vpack.c.b16 %v5215, %v5213
        %v5278 = vpack.c.b16 %v5216, %v5214
        %v5279 = vpack.c.b16 %v5219, %v5217
        %v5280 = vpack.c.b16 %v5220, %v5218
        %v5281 = vpack.c.b16 %v5223, %v5221
        %v5282 = vpack.c.b16 %v5224, %v5222
        %v5283 = vpack.c.b16 %v5227, %v5225
        %v5284 = vpack.c.b16 %v5228, %v5226
        %v5285 = vpack.c.b16 %v5231, %v5229
        %v5286 = vpack.c.b16 %v5232, %v5230
        %v5287 = vpack.c.b16 %v5235, %v5233
        %v5288 = vpack.c.b16 %v5236, %v5234
        %v5289 = vpack.c.b16 %v5239, %v5237
        %v5290 = vpack.c.b16 %v5240, %v5238
        %v5291 = vpack.c.b16 %v5243, %v5241
        %v5292 = vpack.c.b16 %v5244, %v5242
        %5341 = vmatprep.subr.bf16.mxu0 %v5246
        %5342 = vmatpush1.bf16.msra.mxu0 %v5245
        %5343 = vmatprep.subr.bf16.mxu0 %v5248
        %5344 = vmatpush1.bf16.msra.mxu0 %v5247
        %5345 = vmatprep.subr.bf16.mxu0 %v5250
        %5346 = vmatpush1.bf16.msra.mxu0 %v5249
        %5347 = vmatprep.subr.bf16.mxu0 %v5252
        %5348 = vmatpush1.bf16.msra.mxu0 %v5251
        %5349 = vmatprep.subr.bf16.mxu0 %v5254
        %5350 = vmatpush1.bf16.msra.mxu0 %v5253
        %5351 = vmatprep.subr.bf16.mxu0 %v5256
        %5352 = vmatpush1.bf16.msra.mxu0 %v5255
        %5353 = vmatprep.subr.bf16.mxu0 %v5258
        %5354 = vmatpush1.bf16.msra.mxu0 %v5257
        %5355 = vmatprep.subr.bf16.mxu0 %v5260
        %5356 = vmatpush1.bf16.msra.mxu0 %v5259
        %5357 = vmatprep.subr.bf16.mxu0 %v5262
        %5358 = vmatpush1.bf16.msra.mxu0 %v5261
        %5359 = vmatprep.subr.bf16.mxu0 %v5264
        %5360 = vmatpush1.bf16.msra.mxu0 %v5263
        %5361 = vmatprep.subr.bf16.mxu0 %v5266
        %5362 = vmatpush1.bf16.msra.mxu0 %v5265
        %5363 = vmatprep.subr.bf16.mxu0 %v5268
        %5364 = vmatpush1.bf16.msra.mxu0 %v5267
        %5365 = vmatprep.subr.bf16.mxu0 %v5270
        %5366 = vmatpush1.bf16.msra.mxu0 %v5269
        %5367 = vmatprep.subr.bf16.mxu0 %v5272
        %5368 = vmatpush1.bf16.msra.mxu0 %v5271
        %5369 = vmatprep.subr.bf16.mxu0 %v5274
        %5370 = vmatpush1.bf16.msra.mxu0 %v5273
        %5371 = vmatprep.subr.bf16.mxu0 %v5276
        %5372 = vmatpush1.bf16.msra.mxu0 %v5275
        %5373 = vmatprep.mubr.bf16.mxu0 %v4907
        %5374 = vmatmul.mubr.bf16.gmra.mrb[0].mxu0 %v4906
        %v5375 = vpop.f32.mrb[0].mxu0
        %v5376 = vadd.f32 0.0, %v5375
        %v5377 = vpop.f32.mrb[0].mxu0
        %v5378 = vadd.f32 0.0, %v5377
        %v5379 = vpop.f32.mrb[0].mxu0
        %v5380 = vadd.f32 0.0, %v5379
        %v5381 = vpop.f32.mrb[0].mxu0
        %v5382 = vadd.f32 0.0, %v5381
        %5383 = vmatprep.mubr.bf16.mxu0 %v4931
        %5384 = vmatmul.mubr.bf16.gmra.mrb[0].mxu0 %v4930
        %v5385 = vpop.f32.mrb[0].mxu0
        %v5386 = vadd.f32 0.0, %v5385
        %v5387 = vpop.f32.mrb[0].mxu0
        %v5388 = vadd.f32 0.0, %v5387
        %v5389 = vpop.f32.mrb[0].mxu0
        %v5390 = vadd.f32 0.0, %v5389
        %v5391 = vpop.f32.mrb[0].mxu0
        %v5392 = vadd.f32 0.0, %v5391
        %5393 = vmatprep.mubr.bf16.mxu0 %v4955
        %5394 = vmatmul.mubr.bf16.gmra.mrb[0].mxu0 %v4954
        %v5395 = vpop.f32.mrb[0].mxu0
        %v5396 = vadd.f32 0.0, %v5395
        %v5397 = vpop.f32.mrb[0].mxu0
        %v5398 = vadd.f32 0.0, %v5397
        %v5399 = vpop.f32.mrb[0].mxu0
        %v5400 = vadd.f32 0.0, %v5399
        %v5401 = vpop.f32.mrb[0].mxu0
        %v5402 = vadd.f32 0.0, %v5401
        %5403 = vmatprep.mubr.bf16.mxu0 %v4978
        %5404 = vmatmul.mubr.bf16.gmra.mrb[0].mxu0 %v4977
        %v5405 = vpop.f32.mrb[0].mxu0
        %v5406 = vadd.f32 0.0, %v5405
        %v5407 = vpop.f32.mrb[0].mxu0
        %v5408 = vadd.f32 0.0, %v5407
        %v5409 = vpop.f32.mrb[0].mxu0
        %v5410 = vadd.f32 0.0, %v5409
        %v5411 = vpop.f32.mrb[0].mxu0
        %v5412 = vadd.f32 0.0, %v5411
        %5413 = vmatprep.mubr.bf16.mxu0 %v5002
        %5414 = vmatmul.mubr.bf16.gmra.mrb[0].mxu0 %v5001
        %v5415 = vpop.f32.mrb[0].mxu0
        %v5416 = vadd.f32 0.0, %v5415
        %v5417 = vpop.f32.mrb[0].mxu0
        %v5418 = vadd.f32 0.0, %v5417
        %v5419 = vpop.f32.mrb[0].mxu0
        %v5420 = vadd.f32 0.0, %v5419
        %v5421 = vpop.f32.mrb[0].mxu0
        %v5422 = vadd.f32 0.0, %v5421
        %5423 = vmatprep.mubr.bf16.mxu0 %v5026
        %5424 = vmatmul.mubr.bf16.gmra.mrb[0].mxu0 %v5025
        %v5425 = vpop.f32.mrb[0].mxu0
        %v5426 = vadd.f32 0.0, %v5425
        %v5427 = vpop.f32.mrb[0].mxu0
        %v5428 = vadd.f32 0.0, %v5427
        %v5429 = vpop.f32.mrb[0].mxu0
        %v5430 = vadd.f32 0.0, %v5429
        %v5431 = vpop.f32.mrb[0].mxu0
        %v5432 = vadd.f32 0.0, %v5431
        %5433 = vmatprep.mubr.bf16.mxu0 %v5050
        %5434 = vmatmul.mubr.bf16.gmra.mrb[0].mxu0 %v5049
        %v5435 = vpop.f32.mrb[0].mxu0
        %v5436 = vadd.f32 0.0, %v5435
        %v5437 = vpop.f32.mrb[0].mxu0
        %v5438 = vadd.f32 0.0, %v5437
        %v5439 = vpop.f32.mrb[0].mxu0
        %v5440 = vadd.f32 0.0, %v5439
        %v5441 = vpop.f32.mrb[0].mxu0
        %v5442 = vadd.f32 0.0, %v5441
        %5443 = vdwg.mxu0
        %5444 = vmatprep.subr.bf16.mxu0 %v5278
        %5445 = vmatpush1.bf16.msra.mxu0 %v5277
        %5446 = vmatprep.subr.bf16.mxu0 %v5280
        %5447 = vmatpush1.bf16.msra.mxu0 %v5279
        %5448 = vmatprep.subr.bf16.mxu0 %v5282
        %5449 = vmatpush1.bf16.msra.mxu0 %v5281
        %5450 = vmatprep.subr.bf16.mxu0 %v5284
        %5451 = vmatpush1.bf16.msra.mxu0 %v5283
        %5452 = vmatprep.subr.bf16.mxu0 %v5286
        %5453 = vmatpush1.bf16.msra.mxu0 %v5285
        %5454 = vmatprep.subr.bf16.mxu0 %v5288
        %5455 = vmatpush1.bf16.msra.mxu0 %v5287
        %5456 = vmatprep.subr.bf16.mxu0 %v5290
        %5457 = vmatpush1.bf16.msra.mxu0 %v5289
        %5458 = vmatprep.subr.bf16.mxu0 %v5292
        %5459 = vmatpush1.bf16.msra.mxu0 %v5291
        %5460 = vmatprep.subr.bf16.mxu0 0
        %5461 = vmatpush1.bf16.msra.mxu0 0
        %5462 = vmatprep.subr.bf16.mxu0 0
        %5463 = vmatpush1.bf16.msra.mxu0 0
        %5464 = vmatprep.subr.bf16.mxu0 0
        %5465 = vmatpush1.bf16.msra.mxu0 0
        %5466 = vmatprep.subr.bf16.mxu0 0
        %5467 = vmatpush1.bf16.msra.mxu0 0
        %5468 = vmatprep.subr.bf16.mxu0 0
        %5469 = vmatpush1.bf16.msra.mxu0 0
        %5470 = vmatprep.subr.bf16.mxu0 0
        %5471 = vmatpush1.bf16.msra.mxu0 0
        %5472 = vmatprep.subr.bf16.mxu0 0
        %5473 = vmatpush1.bf16.msra.mxu0 0
        %5474 = vmatprep.subr.bf16.mxu0 0
        %5475 = vmatpush1.bf16.msra.mxu0 0
        %5476 = vmatprep.mubr.bf16.mxu0 0
        %5477 = vmatmul.mubr.bf16.gmra.mrb[0].mxu0 %v4908
        %v5478 = vpop.f32.mrb[0].mxu0
        %v5479 = vadd.f32 %v5376, %v5478
        %v5480 = vpop.f32.mrb[0].mxu0
        %v5481 = vadd.f32 %v5378, %v5480
        %v5482 = vpop.f32.mrb[0].mxu0
        %v5483 = vadd.f32 %v5380, %v5482
        %v5484 = vpop.f32.mrb[0].mxu0
        %v5485 = vadd.f32 %v5382, %v5484
        %5486 = vmatprep.mubr.bf16.mxu0 0
        %5487 = vmatmul.mubr.bf16.gmra.mrb[0].mxu0 %v4932
        %v5488 = vpop.f32.mrb[0].mxu0
        %v5489 = vadd.f32 %v5386, %v5488
        %v5490 = vpop.f32.mrb[0].mxu0
        %v5491 = vadd.f32 %v5388, %v5490
        %v5492 = vpop.f32.mrb[0].mxu0
        %v5493 = vadd.f32 %v5390, %v5492
        %v5494 = vpop.f32.mrb[0].mxu0
        %v5495 = vadd.f32 %v5392, %v5494
        %5496 = vmatprep.mubr.bf16.mxu0 0
        %5497 = vmatmul.mubr.bf16.gmra.mrb[0].mxu0 %v4956
        %v5498 = vpop.f32.mrb[0].mxu0
        %v5499 = vadd.f32 %v5396, %v5498
        %v5500 = vpop.f32.mrb[0].mxu0
        %v5501 = vadd.f32 %v5398, %v5500
        %v5502 = vpop.f32.mrb[0].mxu0
        %v5503 = vadd.f32 %v5400, %v5502
        %v5504 = vpop.f32.mrb[0].mxu0
        %v5505 = vadd.f32 %v5402, %v5504
        %5506 = vmatprep.mubr.bf16.mxu0 0
        %5507 = vmatmul.mubr.bf16.gmra.mrb[0].mxu0 %v4979
        %v5508 = vpop.f32.mrb[0].mxu0
        %v5509 = vadd.f32 %v5406, %v5508
        %v5510 = vpop.f32.mrb[0].mxu0
        %v5511 = vadd.f32 %v5408, %v5510
        %v5512 = vpop.f32.mrb[0].mxu0
        %v5513 = vadd.f32 %v5410, %v5512
        %v5514 = vpop.f32.mrb[0].mxu0
        %v5515 = vadd.f32 %v5412, %v5514
        %5516 = vmatprep.mubr.bf16.mxu0 0
        %5517 = vmatmul.mubr.bf16.gmra.mrb[0].mxu0 %v5003
        %v5518 = vpop.f32.mrb[0].mxu0
        %v5519 = vadd.f32 %v5416, %v5518
        %v5520 = vpop.f32.mrb[0].mxu0
        %v5521 = vadd.f32 %v5418, %v5520
        %v5522 = vpop.f32.mrb[0].mxu0
        %v5523 = vadd.f32 %v5420, %v5522
        %v5524 = vpop.f32.mrb[0].mxu0
        %v5525 = vadd.f32 %v5422, %v5524
        %5526 = vmatprep.mubr.bf16.mxu0 0
        %5527 = vmatmul.mubr.bf16.gmra.mrb[0].mxu0 %v5027
        %v5528 = vpop.f32.mrb[0].mxu0
        %v5529 = vadd.f32 %v5426, %v5528
        %v5530 = vpop.f32.mrb[0].mxu0
        %v5531 = vadd.f32 %v5428, %v5530
        %v5532 = vpop.f32.mrb[0].mxu0
        %v5533 = vadd.f32 %v5430, %v5532
        %v5534 = vpop.f32.mrb[0].mxu0
        %v5535 = vadd.f32 %v5432, %v5534
        %5536 = vmatprep.mubr.bf16.mxu0 0
        %5537 = vmatmul.mubr.bf16.gmra.mrb[0].mxu0 %v5051
        %v5538 = vpop.f32.mrb[0].mxu0
        %v5539 = vadd.f32 %v5436, %v5538
        %v5540 = vpop.f32.mrb[0].mxu0
        %v5541 = vadd.f32 %v5438, %v5540
        %v5542 = vpop.f32.mrb[0].mxu0
        %v5543 = vadd.f32 %v5440, %v5542
        %v5544 = vpop.f32.mrb[0].mxu0
        %v5545 = vadd.f32 %v5442, %v5544
        %5546 = vdwg.mxu0
        %v5547 = vadd.f32 %v4857, %v5479
        %v5548 = vadd.f32 %v4858, %v5481
        %v5549 = vadd.f32 %v4859, %v5483
        %v5550 = vadd.f32 %v4860, %v5485
        %v5551 = vadd.f32 %v4861, %v5489
        %v5552 = vadd.f32 %v4862, %v5491
        %v5553 = vadd.f32 %v4863, %v5493
        %v5554 = vadd.f32 %v4864, %v5495
        %v5555 = vadd.f32 %v4865, %v5499
        %v5556 = vadd.f32 %v4866, %v5501
        %v5557 = vadd.f32 %v4867, %v5503
        %v5558 = vadd.f32 %v4868, %v5505
        %v5559 = vadd.f32 %v4869, %v5509
        %v5560 = vadd.f32 %v4870, %v5511
        %v5561 = vadd.f32 %v4871, %v5513
        %v5562 = vadd.f32 %v4872, %v5515
        %v5563 = vadd.f32 %v4873, %v5519
        %v5564 = vadd.f32 %v4874, %v5521
        %v5565 = vadd.f32 %v4875, %v5523
        %v5566 = vadd.f32 %v4876, %v5525
        %v5567 = vadd.f32 %v4877, %v5529
        %v5568 = vadd.f32 %v4878, %v5531
        %v5569 = vadd.f32 %v4879, %v5533
        %v5570 = vadd.f32 %v4880, %v5535
        %v5571 = vadd.f32 %v4881, %v5539
        %v5572 = vadd.f32 %v4882, %v5541
        %v5573 = vadd.f32 %v4883, %v5543
        %v5574 = vadd.f32 %v4884, %v5545
        %5575 = vst [vmem:[#allocation5] sm:$0xff] %v5547
        %5576 = vst [vmem:[#allocation5 + $0x8] sm:$0xff] %v5548
        %5577 = vst [vmem:[#allocation5 + $0x10] sm:$0xff] %v5549
        %5578 = vst [vmem:[#allocation5 + $0x18] sm:$0xff] %v5550
        %5579 = vst [vmem:[#allocation5 + $0x20] sm:$0xff] %v5551
        %5580 = vst [vmem:[#allocation5 + $0x28] sm:$0xff] %v5552
        %5581 = vst [vmem:[#allocation5 + $0x30] sm:$0xff] %v5553
        %5582 = vst [vmem:[#allocation5 + $0x38] sm:$0xff] %v5554
        %5583 = vst [vmem:[#allocation5 + $0x40] sm:$0xff] %v5555
        %5584 = vst [vmem:[#allocation5 + $0x48] sm:$0xff] %v5556
        %5585 = vst [vmem:[#allocation5 + $0x50] sm:$0xff] %v5557
        %5586 = vst [vmem:[#allocation5 + $0x58] sm:$0xff] %v5558
        %5587 = vst [vmem:[#allocation5 + $0x60] sm:$0xff] %v5559
        %5588 = vst [vmem:[#allocation5 + $0x68] sm:$0xff] %v5560
        %5589 = vst [vmem:[#allocation5 + $0x70] sm:$0xff] %v5561
        %5590 = vst [vmem:[#allocation5 + $0x78] sm:$0xff] %v5562
        %5591 = vst [vmem:[#allocation5 + $0x80] sm:$0xff] %v5563
        %5592 = vst [vmem:[#allocation5 + $0x88] sm:$0xff] %v5564
        %5593 = vst [vmem:[#allocation5 + $0x90] sm:$0xff] %v5565
        %5594 = vst [vmem:[#allocation5 + $0x98] sm:$0xff] %v5566
        %5595 = vst [vmem:[#allocation5 + $0xa0] sm:$0xff] %v5567
        %5596 = vst [vmem:[#allocation5 + $0xa8] sm:$0xff] %v5568
        %5597 = vst [vmem:[#allocation5 + $0xb0] sm:$0xff] %v5569
        %5598 = vst [vmem:[#allocation5 + $0xb8] sm:$0xff] %v5570
        %5599 = vst [vmem:[#allocation5 + $0xc0] sm:$0xff] %v5571
        %5600 = vst [vmem:[#allocation5 + $0xc8] sm:$0xff] %v5572
        %5601 = vst [vmem:[#allocation5 + $0xd0] sm:$0xff] %v5573
        %5602 = vst [vmem:[#allocation5 + $0xd8] sm:$0xff] %v5574
        %v5603 = vld [vmem:[#allocation5] sm:$0xff]
        %v5604 = vld [vmem:[#allocation5 + $0x8] sm:$0xff]
        %v5605 = vld [vmem:[#allocation5 + $0x10] sm:$0xff]
        %v5606 = vld [vmem:[#allocation5 + $0x18] sm:$0xff]
        %v5607 = vld [vmem:[#allocation5 + $0x20] sm:$0xff]
        %v5608 = vld [vmem:[#allocation5 + $0x28] sm:$0xff]
        %v5609 = vld [vmem:[#allocation5 + $0x30] sm:$0xff]
        %v5610 = vld [vmem:[#allocation5 + $0x38] sm:$0xff]
        %v5611 = vld [vmem:[#allocation5 + $0x40] sm:$0xff]
        %v5612 = vld [vmem:[#allocation5 + $0x48] sm:$0xff]
        %v5613 = vld [vmem:[#allocation5 + $0x50] sm:$0xff]
        %v5614 = vld [vmem:[#allocation5 + $0x58] sm:$0xff]
        %v5615 = vld [vmem:[#allocation5 + $0x60] sm:$0xff]
        %v5616 = vld [vmem:[#allocation5 + $0x68] sm:$0xff]
        %v5617 = vld [vmem:[#allocation5 + $0x70] sm:$0xff]
        %v5618 = vld [vmem:[#allocation5 + $0x78] sm:$0xff]
        %v5619 = vld [vmem:[#allocation5 + $0x80] sm:$0xff]
        %v5620 = vld [vmem:[#allocation5 + $0x88] sm:$0xff]
        %v5621 = vld [vmem:[#allocation5 + $0x90] sm:$0xff]
        %v5622 = vld [vmem:[#allocation5 + $0x98] sm:$0xff]
        %v5623 = vld [vmem:[#allocation5 + $0xa0] sm:$0xff]
        %v5624 = vld [vmem:[#allocation5 + $0xa8] sm:$0xff]
        %v5625 = vld [vmem:[#allocation5 + $0xb0] sm:$0xff]
        %v5626 = vld [vmem:[#allocation5 + $0xb8] sm:$0xff]
        %v5627 = vld [vmem:[#allocation5 + $0xc0] sm:$0xff]
        %v5628 = vld [vmem:[#allocation5 + $0xc8] sm:$0xff]
        %v5629 = vld [vmem:[#allocation5 + $0xd0] sm:$0xff]
        %v5630 = vld [vmem:[#allocation5 + $0xd8] sm:$0xff]
        %v5631 = vld [vmem:[%s3442] sm:$0xff]
        %v5632 = vld [vmem:[%s3442 + $0x8] sm:$0xff]
        %v5633 = vld [vmem:[%s3442 + $0x10] sm:$0x3]
        %v5637 = vrot.slane %v5631, 1
        %v5638 = vrot.slane %v5632, 1
        %v5639 = vsel %vm715, %v5637, %v5638
        %v5640 = vrot.slane %v5633, 1
        %v5641 = vsel %vm715, %v5638, %v5640
        %v5644 = vrot.slane %v5631, 2
        %v5645 = vrot.slane %v5632, 2
        %v5646 = vsel %vm1025, %v5644, %v5645
        %v5647 = vrot.slane %v5633, 2
        %v5648 = vsel %vm1025, %v5645, %v5647
        %v5651 = vpack.c.bf16 %v5632, %v5631
        %v5652 = vpack.c.bf16 %v5641, %v5639
        %v5653 = vpack.c.bf16 %v5648, %v5646
        %v5654 = vld [vmem:[%s3466] sm:$0xff]
        %v5655 = vld [vmem:[%s3466 + $0x8] sm:$0xff]
        %v5656 = vld [vmem:[%s3466 + $0x10] sm:$0x3]
        %v5660 = vrot.slane %v5654, 1
        %v5661 = vrot.slane %v5655, 1
        %v5662 = vsel %vm715, %v5660, %v5661
        %v5663 = vrot.slane %v5656, 1
        %v5664 = vsel %vm715, %v5661, %v5663
        %v5667 = vrot.slane %v5654, 2
        %v5668 = vrot.slane %v5655, 2
        %v5669 = vsel %vm1025, %v5667, %v5668
        %v5670 = vrot.slane %v5656, 2
        %v5671 = vsel %vm1025, %v5668, %v5670
        %v5674 = vpack.c.bf16 %v5655, %v5654
        %v5675 = vpack.c.bf16 %v5664, %v5662
        %v5676 = vpack.c.bf16 %v5671, %v5669
        %v5677 = vld [vmem:[%s3326] sm:$0xff]
        %v5678 = vld [vmem:[%s3326 + $0x8] sm:$0xff]
        %v5679 = vld [vmem:[%s3326 + $0x10] sm:$0x3]
        %v5683 = vrot.slane %v5677, 1
        %v5684 = vrot.slane %v5678, 1
        %v5685 = vsel %vm715, %v5683, %v5684
        %v5686 = vrot.slane %v5679, 1
        %v5687 = vsel %vm715, %v5684, %v5686
        %v5690 = vrot.slane %v5677, 2
        %v5691 = vrot.slane %v5678, 2
        %v5692 = vsel %vm1025, %v5690, %v5691
        %v5693 = vrot.slane %v5679, 2
        %v5694 = vsel %vm1025, %v5691, %v5693
        %v5697 = vpack.c.bf16 %v5678, %v5677
        %v5698 = vpack.c.bf16 %v5687, %v5685
        %v5699 = vpack.c.bf16 %v5694, %v5692
        %v5700 = vld [vmem:[%s3513] sm:$0xff]
        %v5701 = vld [vmem:[%s3513 + $0x8] sm:$0xff]
        %v5702 = vld [vmem:[%s3513 + $0x10] sm:$0x3]
        %v5706 = vrot.slane %v5700, 1
        %v5707 = vrot.slane %v5701, 1
        %v5708 = vsel %vm715, %v5706, %v5707
        %v5709 = vrot.slane %v5702, 1
        %v5710 = vsel %vm715, %v5707, %v5709
        %v5713 = vrot.slane %v5700, 2
        %v5714 = vrot.slane %v5701, 2
        %v5715 = vsel %vm1025, %v5713, %v5714
        %v5716 = vrot.slane %v5702, 2
        %v5717 = vsel %vm1025, %v5714, %v5716
        %v5720 = vpack.c.bf16 %v5701, %v5700
        %v5721 = vpack.c.bf16 %v5710, %v5708
        %v5722 = vpack.c.bf16 %v5717, %v5715
        %v5723 = vld [vmem:[%s3537] sm:$0xff]
        %v5724 = vld [vmem:[%s3537 + $0x8] sm:$0xff]
        %v5725 = vld [vmem:[%s3537 + $0x10] sm:$0x3]
        %v5729 = vrot.slane %v5723, 1
        %v5730 = vrot.slane %v5724, 1
        %v5731 = vsel %vm715, %v5729, %v5730
        %v5732 = vrot.slane %v5725, 1
        %v5733 = vsel %vm715, %v5730, %v5732
        %v5736 = vrot.slane %v5723, 2
        %v5737 = vrot.slane %v5724, 2
        %v5738 = vsel %vm1025, %v5736, %v5737
        %v5739 = vrot.slane %v5725, 2
        %v5740 = vsel %vm1025, %v5737, %v5739
        %v5743 = vpack.c.bf16 %v5724, %v5723
        %v5744 = vpack.c.bf16 %v5733, %v5731
        %v5745 = vpack.c.bf16 %v5740, %v5738
        %s5746 = scalar_lea.vmem [#allocation3], 504
        %v5747 = vld [vmem:[%s5746] sm:$0xff]
        %v5748 = vld [vmem:[%s5746 + $0x8] sm:$0xff]
        %v5749 = vld [vmem:[%s5746 + $0x10] sm:$0x3]
        %v5753 = vrot.slane %v5747, 1
        %v5754 = vrot.slane %v5748, 1
        %v5755 = vsel %vm715, %v5753, %v5754
        %v5756 = vrot.slane %v5749, 1
        %v5757 = vsel %vm715, %v5754, %v5756
        %v5760 = vrot.slane %v5747, 2
        %v5761 = vrot.slane %v5748, 2
        %v5762 = vsel %vm1025, %v5760, %v5761
        %v5763 = vrot.slane %v5749, 2
        %v5764 = vsel %vm1025, %v5761, %v5763
        %v5767 = vpack.c.bf16 %v5748, %v5747
        %v5768 = vpack.c.bf16 %v5757, %v5755
        %v5769 = vpack.c.bf16 %v5764, %v5762
        %s5770 = scalar_lea.vmem [#allocation3], 576
        %v5771 = vld [vmem:[%s5770] sm:$0xff]
        %v5772 = vld [vmem:[%s5770 + $0x8] sm:$0xff]
        %v5773 = vld [vmem:[%s5770 + $0x10] sm:$0x3]
        %v5777 = vrot.slane %v5771, 1
        %v5778 = vrot.slane %v5772, 1
        %v5779 = vsel %vm715, %v5777, %v5778
        %v5780 = vrot.slane %v5773, 1
        %v5781 = vsel %vm715, %v5778, %v5780
        %v5784 = vrot.slane %v5771, 2
        %v5785 = vrot.slane %v5772, 2
        %v5786 = vsel %vm1025, %v5784, %v5785
        %v5787 = vrot.slane %v5773, 2
        %v5788 = vsel %vm1025, %v5785, %v5787
        %v5791 = vpack.c.bf16 %v5772, %v5771
        %v5792 = vpack.c.bf16 %v5781, %v5779
        %v5793 = vpack.c.bf16 %v5788, %v5786
        %s5794 = scalar_lea.vmem [#allocation6], 1152
        %v5795 = vld [vmem:[%s5794] sm:$0xff]
        %v5796 = vld [vmem:[%s5794 + $0x8] sm:$0xff]
        %v5797 = vld [vmem:[%s5794 + $0x10] sm:$0xff]
        %v5798 = vld [vmem:[%s5794 + $0x18] sm:$0xff]
        %v5799 = vld [vmem:[%s5794 + $0x20] sm:$0xff]
        %v5800 = vld [vmem:[%s5794 + $0x28] sm:$0xff]
        %v5801 = vld [vmem:[%s5794 + $0x30] sm:$0xff]
        %v5802 = vld [vmem:[%s5794 + $0x38] sm:$0xff]
        %v5803 = vld [vmem:[%s5794 + $0x40] sm:$0xff]
        %v5804 = vld [vmem:[%s5794 + $0x48] sm:$0xff]
        %v5805 = vld [vmem:[%s5794 + $0x50] sm:$0xff]
        %v5806 = vld [vmem:[%s5794 + $0x58] sm:$0xff]
        %v5807 = vld [vmem:[%s5794 + $0x60] sm:$0xff]
        %v5808 = vld [vmem:[%s5794 + $0x68] sm:$0xff]
        %v5809 = vld [vmem:[%s5794 + $0x70] sm:$0xff]
        %v5810 = vld [vmem:[%s5794 + $0x78] sm:$0xff]
        %v5811 = vld [vmem:[%s5794 + $0x80] sm:$0xff]
        %v5812 = vld [vmem:[%s5794 + $0x88] sm:$0xff]
        %v5813 = vld [vmem:[%s5794 + $0x90] sm:$0xff]
        %v5814 = vld [vmem:[%s5794 + $0x98] sm:$0xff]
        %v5815 = vld [vmem:[%s5794 + $0xa0] sm:$0xff]
        %v5816 = vld [vmem:[%s5794 + $0xa8] sm:$0xff]
        %v5817 = vld [vmem:[%s5794 + $0xb0] sm:$0xff]
        %v5818 = vld [vmem:[%s5794 + $0xb8] sm:$0xff]
        %v5819 = vld [vmem:[%s5794 + $0xc0] sm:$0xff]
        %v5820 = vld [vmem:[%s5794 + $0xc8] sm:$0xff]
        %v5821 = vld [vmem:[%s5794 + $0xd0] sm:$0xff]
        %v5822 = vld [vmem:[%s5794 + $0xd8] sm:$0xff]
        %v5823 = vld [vmem:[%s5794 + $0xe0] sm:$0xff]
        %v5824 = vld [vmem:[%s5794 + $0xe8] sm:$0xff]
        %v5825 = vld [vmem:[%s5794 + $0xf0] sm:$0xff]
        %v5826 = vld [vmem:[%s5794 + $0xf8] sm:$0xff]
        %v5827 = vld [vmem:[%s5794 + $0x100] sm:$0xff]
        %v5828 = vld [vmem:[%s5794 + $0x108] sm:$0xff]
        %v5829 = vld [vmem:[%s5794 + $0x110] sm:$0xff]
        %v5830 = vld [vmem:[%s5794 + $0x118] sm:$0xff]
        %v5831 = vld [vmem:[%s5794 + $0x120] sm:$0xff]
        %v5832 = vld [vmem:[%s5794 + $0x128] sm:$0xff]
        %v5833 = vld [vmem:[%s5794 + $0x130] sm:$0xff]
        %v5834 = vld [vmem:[%s5794 + $0x138] sm:$0xff]
        %v5835 = vld [vmem:[%s5794 + $0x140] sm:$0xff]
        %v5836 = vld [vmem:[%s5794 + $0x148] sm:$0xff]
        %v5837 = vld [vmem:[%s5794 + $0x150] sm:$0xff]
        %v5838 = vld [vmem:[%s5794 + $0x158] sm:$0xff]
        %v5839 = vld [vmem:[%s5794 + $0x160] sm:$0xff]
        %v5840 = vld [vmem:[%s5794 + $0x168] sm:$0xff]
        %v5841 = vld [vmem:[%s5794 + $0x170] sm:$0xff]
        %v5842 = vld [vmem:[%s5794 + $0x178] sm:$0xff]
        %v5891 = vunpack.c.l.b16 %v5795
        %v5892 = vunpack.c.h.b16 %v5795
        %v5893 = vunpack.c.l.b16 %v5796
        %v5894 = vunpack.c.h.b16 %v5796
        %v5895 = vunpack.c.l.b16 %v5797
        %v5896 = vunpack.c.h.b16 %v5797
        %v5897 = vunpack.c.l.b16 %v5798
        %v5898 = vunpack.c.h.b16 %v5798
        %v5899 = vunpack.c.l.b16 %v5799
        %v5900 = vunpack.c.h.b16 %v5799
        %v5901 = vunpack.c.l.b16 %v5800
        %v5902 = vunpack.c.h.b16 %v5800
        %v5903 = vunpack.c.l.b16 %v5801
        %v5904 = vunpack.c.h.b16 %v5801
        %v5905 = vunpack.c.l.b16 %v5802
        %v5906 = vunpack.c.h.b16 %v5802
        %v5907 = vunpack.c.l.b16 %v5803
        %v5908 = vunpack.c.h.b16 %v5803
        %v5909 = vunpack.c.l.b16 %v5804
        %v5910 = vunpack.c.h.b16 %v5804
        %v5911 = vunpack.c.l.b16 %v5805
        %v5912 = vunpack.c.h.b16 %v5805
        %v5913 = vunpack.c.l.b16 %v5806
        %v5914 = vunpack.c.h.b16 %v5806
        %v5915 = vunpack.c.l.b16 %v5807
        %v5916 = vunpack.c.h.b16 %v5807
        %v5917 = vunpack.c.l.b16 %v5808
        %v5918 = vunpack.c.h.b16 %v5808
        %v5919 = vunpack.c.l.b16 %v5809
        %v5920 = vunpack.c.h.b16 %v5809
        %v5921 = vunpack.c.l.b16 %v5810
        %v5922 = vunpack.c.h.b16 %v5810
        %v5923 = vunpack.c.l.b16 %v5811
        %v5924 = vunpack.c.h.b16 %v5811
        %v5925 = vunpack.c.l.b16 %v5812
        %v5926 = vunpack.c.h.b16 %v5812
        %v5927 = vunpack.c.l.b16 %v5813
        %v5928 = vunpack.c.h.b16 %v5813
        %v5929 = vunpack.c.l.b16 %v5814
        %v5930 = vunpack.c.h.b16 %v5814
        %v5931 = vunpack.c.l.b16 %v5815
        %v5932 = vunpack.c.h.b16 %v5815
        %v5933 = vunpack.c.l.b16 %v5816
        %v5934 = vunpack.c.h.b16 %v5816
        %v5935 = vunpack.c.l.b16 %v5817
        %v5936 = vunpack.c.h.b16 %v5817
        %v5937 = vunpack.c.l.b16 %v5818
        %v5938 = vunpack.c.h.b16 %v5818
        %v5939 = vunpack.c.l.b16 %v5819
        %v5940 = vunpack.c.h.b16 %v5819
        %v5941 = vunpack.c.l.b16 %v5820
        %v5942 = vunpack.c.h.b16 %v5820
        %v5943 = vunpack.c.l.b16 %v5821
        %v5944 = vunpack.c.h.b16 %v5821
        %v5945 = vunpack.c.l.b16 %v5822
        %v5946 = vunpack.c.h.b16 %v5822
        %v5947 = vunpack.c.l.b16 %v5823
        %v5948 = vunpack.c.h.b16 %v5823
        %v5949 = vunpack.c.l.b16 %v5824
        %v5950 = vunpack.c.h.b16 %v5824
        %v5951 = vunpack.c.l.b16 %v5825
        %v5952 = vunpack.c.h.b16 %v5825
        %v5953 = vunpack.c.l.b16 %v5826
        %v5954 = vunpack.c.h.b16 %v5826
        %v5955 = vunpack.c.l.b16 %v5827
        %v5956 = vunpack.c.h.b16 %v5827
        %v5957 = vunpack.c.l.b16 %v5828
        %v5958 = vunpack.c.h.b16 %v5828
        %v5959 = vunpack.c.l.b16 %v5829
        %v5960 = vunpack.c.h.b16 %v5829
        %v5961 = vunpack.c.l.b16 %v5830
        %v5962 = vunpack.c.h.b16 %v5830
        %v5963 = vunpack.c.l.b16 %v5831
        %v5964 = vunpack.c.h.b16 %v5831
        %v5965 = vunpack.c.l.b16 %v5832
        %v5966 = vunpack.c.h.b16 %v5832
        %v5967 = vunpack.c.l.b16 %v5833
        %v5968 = vunpack.c.h.b16 %v5833
        %v5969 = vunpack.c.l.b16 %v5834
        %v5970 = vunpack.c.h.b16 %v5834
        %v5971 = vunpack.c.l.b16 %v5835
        %v5972 = vunpack.c.h.b16 %v5835
        %v5973 = vunpack.c.l.b16 %v5836
        %v5974 = vunpack.c.h.b16 %v5836
        %v5975 = vunpack.c.l.b16 %v5837
        %v5976 = vunpack.c.h.b16 %v5837
        %v5977 = vunpack.c.l.b16 %v5838
        %v5978 = vunpack.c.h.b16 %v5838
        %v5979 = vunpack.c.l.b16 %v5839
        %v5980 = vunpack.c.h.b16 %v5839
        %v5981 = vunpack.c.l.b16 %v5840
        %v5982 = vunpack.c.h.b16 %v5840
        %v5983 = vunpack.c.l.b16 %v5841
        %v5984 = vunpack.c.h.b16 %v5841
        %v5985 = vunpack.c.l.b16 %v5842
        %v5986 = vunpack.c.h.b16 %v5842
        %v5987 = vpack.c.b16 %v5893, %v5891
        %v5988 = vpack.c.b16 %v5894, %v5892
        %v5989 = vpack.c.b16 %v5897, %v5895
        %v5990 = vpack.c.b16 %v5898, %v5896
        %v5991 = vpack.c.b16 %v5901, %v5899
        %v5992 = vpack.c.b16 %v5902, %v5900
        %v5993 = vpack.c.b16 %v5905, %v5903
        %v5994 = vpack.c.b16 %v5906, %v5904
        %v5995 = vpack.c.b16 %v5909, %v5907
        %v5996 = vpack.c.b16 %v5910, %v5908
        %v5997 = vpack.c.b16 %v5913, %v5911
        %v5998 = vpack.c.b16 %v5914, %v5912
        %v5999 = vpack.c.b16 %v5917, %v5915
        %v6000 = vpack.c.b16 %v5918, %v5916
        %v6001 = vpack.c.b16 %v5921, %v5919
        %v6002 = vpack.c.b16 %v5922, %v5920
        %v6003 = vpack.c.b16 %v5925, %v5923
        %v6004 = vpack.c.b16 %v5926, %v5924
        %v6005 = vpack.c.b16 %v5929, %v5927
        %v6006 = vpack.c.b16 %v5930, %v5928
        %v6007 = vpack.c.b16 %v5933, %v5931
        %v6008 = vpack.c.b16 %v5934, %v5932
        %v6009 = vpack.c.b16 %v5937, %v5935
        %v6010 = vpack.c.b16 %v5938, %v5936
        %v6011 = vpack.c.b16 %v5941, %v5939
        %v6012 = vpack.c.b16 %v5942, %v5940
        %v6013 = vpack.c.b16 %v5945, %v5943
        %v6014 = vpack.c.b16 %v5946, %v5944
        %v6015 = vpack.c.b16 %v5949, %v5947
        %v6016 = vpack.c.b16 %v5950, %v5948
        %v6017 = vpack.c.b16 %v5953, %v5951
        %v6018 = vpack.c.b16 %v5954, %v5952
        %v6019 = vpack.c.b16 %v5957, %v5955
        %v6020 = vpack.c.b16 %v5958, %v5956
        %v6021 = vpack.c.b16 %v5961, %v5959
        %v6022 = vpack.c.b16 %v5962, %v5960
        %v6023 = vpack.c.b16 %v5965, %v5963
        %v6024 = vpack.c.b16 %v5966, %v5964
        %v6025 = vpack.c.b16 %v5969, %v5967
        %v6026 = vpack.c.b16 %v5970, %v5968
        %v6027 = vpack.c.b16 %v5973, %v5971
        %v6028 = vpack.c.b16 %v5974, %v5972
        %v6029 = vpack.c.b16 %v5977, %v5975
        %v6030 = vpack.c.b16 %v5978, %v5976
        %v6031 = vpack.c.b16 %v5981, %v5979
        %v6032 = vpack.c.b16 %v5982, %v5980
        %v6033 = vpack.c.b16 %v5985, %v5983
        %v6034 = vpack.c.b16 %v5986, %v5984
        %6083 = vmatprep.subr.bf16.mxu0 %v5988
        %6084 = vmatpush1.bf16.msra.mxu0 %v5987
        %6085 = vmatprep.subr.bf16.mxu0 %v5990
        %6086 = vmatpush1.bf16.msra.mxu0 %v5989
        %6087 = vmatprep.subr.bf16.mxu0 %v5992
        %6088 = vmatpush1.bf16.msra.mxu0 %v5991
        %6089 = vmatprep.subr.bf16.mxu0 %v5994
        %6090 = vmatpush1.bf16.msra.mxu0 %v5993
        %6091 = vmatprep.subr.bf16.mxu0 %v5996
        %6092 = vmatpush1.bf16.msra.mxu0 %v5995
        %6093 = vmatprep.subr.bf16.mxu0 %v5998
        %6094 = vmatpush1.bf16.msra.mxu0 %v5997
        %6095 = vmatprep.subr.bf16.mxu0 %v6000
        %6096 = vmatpush1.bf16.msra.mxu0 %v5999
        %6097 = vmatprep.subr.bf16.mxu0 %v6002
        %6098 = vmatpush1.bf16.msra.mxu0 %v6001
        %6099 = vmatprep.subr.bf16.mxu0 %v6004
        %6100 = vmatpush1.bf16.msra.mxu0 %v6003
        %6101 = vmatprep.subr.bf16.mxu0 %v6006
        %6102 = vmatpush1.bf16.msra.mxu0 %v6005
        %6103 = vmatprep.subr.bf16.mxu0 %v6008
        %6104 = vmatpush1.bf16.msra.mxu0 %v6007
        %6105 = vmatprep.subr.bf16.mxu0 %v6010
        %6106 = vmatpush1.bf16.msra.mxu0 %v6009
        %6107 = vmatprep.subr.bf16.mxu0 %v6012
        %6108 = vmatpush1.bf16.msra.mxu0 %v6011
        %6109 = vmatprep.subr.bf16.mxu0 %v6014
        %6110 = vmatpush1.bf16.msra.mxu0 %v6013
        %6111 = vmatprep.subr.bf16.mxu0 %v6016
        %6112 = vmatpush1.bf16.msra.mxu0 %v6015
        %6113 = vmatprep.subr.bf16.mxu0 %v6018
        %6114 = vmatpush1.bf16.msra.mxu0 %v6017
        %6115 = vmatprep.mubr.bf16.mxu0 %v5652
        %6116 = vmatmul.mubr.bf16.gmra.mrb[0].mxu0 %v5651
        %v6117 = vpop.f32.mrb[0].mxu0
        %v6118 = vadd.f32 0.0, %v6117
        %v6119 = vpop.f32.mrb[0].mxu0
        %v6120 = vadd.f32 0.0, %v6119
        %v6121 = vpop.f32.mrb[0].mxu0
        %v6122 = vadd.f32 0.0, %v6121
        %v6123 = vpop.f32.mrb[0].mxu0
        %v6124 = vadd.f32 0.0, %v6123
        %6125 = vmatprep.mubr.bf16.mxu0 %v5675
        %6126 = vmatmul.mubr.bf16.gmra.mrb[0].mxu0 %v5674
        %v6127 = vpop.f32.mrb[0].mxu0
        %v6128 = vadd.f32 0.0, %v6127
        %v6129 = vpop.f32.mrb[0].mxu0
        %v6130 = vadd.f32 0.0, %v6129
        %v6131 = vpop.f32.mrb[0].mxu0
        %v6132 = vadd.f32 0.0, %v6131
        %v6133 = vpop.f32.mrb[0].mxu0
        %v6134 = vadd.f32 0.0, %v6133
        %6135 = vmatprep.mubr.bf16.mxu0 %v5698
        %6136 = vmatmul.mubr.bf16.gmra.mrb[0].mxu0 %v5697
        %v6137 = vpop.f32.mrb[0].mxu0
        %v6138 = vadd.f32 0.0, %v6137
        %v6139 = vpop.f32.mrb[0].mxu0
        %v6140 = vadd.f32 0.0, %v6139
        %v6141 = vpop.f32.mrb[0].mxu0
        %v6142 = vadd.f32 0.0, %v6141
        %v6143 = vpop.f32.mrb[0].mxu0
        %v6144 = vadd.f32 0.0, %v6143
        %6145 = vmatprep.mubr.bf16.mxu0 %v5721
        %6146 = vmatmul.mubr.bf16.gmra.mrb[0].mxu0 %v5720
        %v6147 = vpop.f32.mrb[0].mxu0
        %v6148 = vadd.f32 0.0, %v6147
        %v6149 = vpop.f32.mrb[0].mxu0
        %v6150 = vadd.f32 0.0, %v6149
        %v6151 = vpop.f32.mrb[0].mxu0
        %v6152 = vadd.f32 0.0, %v6151
        %v6153 = vpop.f32.mrb[0].mxu0
        %v6154 = vadd.f32 0.0, %v6153
        %6155 = vmatprep.mubr.bf16.mxu0 %v5744
        %6156 = vmatmul.mubr.bf16.gmra.mrb[0].mxu0 %v5743
        %v6157 = vpop.f32.mrb[0].mxu0
        %v6158 = vadd.f32 0.0, %v6157
        %v6159 = vpop.f32.mrb[0].mxu0
        %v6160 = vadd.f32 0.0, %v6159
        %v6161 = vpop.f32.mrb[0].mxu0
        %v6162 = vadd.f32 0.0, %v6161
        %v6163 = vpop.f32.mrb[0].mxu0
        %v6164 = vadd.f32 0.0, %v6163
        %6165 = vmatprep.mubr.bf16.mxu0 %v5768
        %6166 = vmatmul.mubr.bf16.gmra.mrb[0].mxu0 %v5767
        %v6167 = vpop.f32.mrb[0].mxu0
        %v6168 = vadd.f32 0.0, %v6167
        %v6169 = vpop.f32.mrb[0].mxu0
        %v6170 = vadd.f32 0.0, %v6169
        %v6171 = vpop.f32.mrb[0].mxu0
        %v6172 = vadd.f32 0.0, %v6171
        %v6173 = vpop.f32.mrb[0].mxu0
        %v6174 = vadd.f32 0.0, %v6173
        %6175 = vmatprep.mubr.bf16.mxu0 %v5792
        %6176 = vmatmul.mubr.bf16.gmra.mrb[0].mxu0 %v5791
        %v6177 = vpop.f32.mrb[0].mxu0
        %v6178 = vadd.f32 0.0, %v6177
        %v6179 = vpop.f32.mrb[0].mxu0
        %v6180 = vadd.f32 0.0, %v6179
        %v6181 = vpop.f32.mrb[0].mxu0
        %v6182 = vadd.f32 0.0, %v6181
        %v6183 = vpop.f32.mrb[0].mxu0
        %v6184 = vadd.f32 0.0, %v6183
        %6185 = vdwg.mxu0
        %6186 = vmatprep.subr.bf16.mxu0 %v6020
        %6187 = vmatpush1.bf16.msra.mxu0 %v6019
        %6188 = vmatprep.subr.bf16.mxu0 %v6022
        %6189 = vmatpush1.bf16.msra.mxu0 %v6021
        %6190 = vmatprep.subr.bf16.mxu0 %v6024
        %6191 = vmatpush1.bf16.msra.mxu0 %v6023
        %6192 = vmatprep.subr.bf16.mxu0 %v6026
        %6193 = vmatpush1.bf16.msra.mxu0 %v6025
        %6194 = vmatprep.subr.bf16.mxu0 %v6028
        %6195 = vmatpush1.bf16.msra.mxu0 %v6027
        %6196 = vmatprep.subr.bf16.mxu0 %v6030
        %6197 = vmatpush1.bf16.msra.mxu0 %v6029
        %6198 = vmatprep.subr.bf16.mxu0 %v6032
        %6199 = vmatpush1.bf16.msra.mxu0 %v6031
        %6200 = vmatprep.subr.bf16.mxu0 %v6034
        %6201 = vmatpush1.bf16.msra.mxu0 %v6033
        %6202 = vmatprep.subr.bf16.mxu0 0
        %6203 = vmatpush1.bf16.msra.mxu0 0
        %6204 = vmatprep.subr.bf16.mxu0 0
        %6205 = vmatpush1.bf16.msra.mxu0 0
        %6206 = vmatprep.subr.bf16.mxu0 0
        %6207 = vmatpush1.bf16.msra.mxu0 0
        %6208 = vmatprep.subr.bf16.mxu0 0
        %6209 = vmatpush1.bf16.msra.mxu0 0
        %6210 = vmatprep.subr.bf16.mxu0 0
        %6211 = vmatpush1.bf16.msra.mxu0 0
        %6212 = vmatprep.subr.bf16.mxu0 0
        %6213 = vmatpush1.bf16.msra.mxu0 0
        %6214 = vmatprep.subr.bf16.mxu0 0
        %6215 = vmatpush1.bf16.msra.mxu0 0
        %6216 = vmatprep.subr.bf16.mxu0 0
        %6217 = vmatpush1.bf16.msra.mxu0 0
        %6218 = vmatprep.mubr.bf16.mxu0 0
        %6219 = vmatmul.mubr.bf16.gmra.mrb[0].mxu0 %v5653
        %v6220 = vpop.f32.mrb[0].mxu0
        %v6221 = vadd.f32 %v6118, %v6220
        %v6222 = vpop.f32.mrb[0].mxu0
        %v6223 = vadd.f32 %v6120, %v6222
        %v6224 = vpop.f32.mrb[0].mxu0
        %v6225 = vadd.f32 %v6122, %v6224
        %v6226 = vpop.f32.mrb[0].mxu0
        %v6227 = vadd.f32 %v6124, %v6226
        %6228 = vmatprep.mubr.bf16.mxu0 0
        %6229 = vmatmul.mubr.bf16.gmra.mrb[0].mxu0 %v5676
        %v6230 = vpop.f32.mrb[0].mxu0
        %v6231 = vadd.f32 %v6128, %v6230
        %v6232 = vpop.f32.mrb[0].mxu0
        %v6233 = vadd.f32 %v6130, %v6232
        %v6234 = vpop.f32.mrb[0].mxu0
        %v6235 = vadd.f32 %v6132, %v6234
        %v6236 = vpop.f32.mrb[0].mxu0
        %v6237 = vadd.f32 %v6134, %v6236
        %6238 = vmatprep.mubr.bf16.mxu0 0
        %6239 = vmatmul.mubr.bf16.gmra.mrb[0].mxu0 %v5699
        %v6240 = vpop.f32.mrb[0].mxu0
        %v6241 = vadd.f32 %v6138, %v6240
        %v6242 = vpop.f32.mrb[0].mxu0
        %v6243 = vadd.f32 %v6140, %v6242
        %v6244 = vpop.f32.mrb[0].mxu0
        %v6245 = vadd.f32 %v6142, %v6244
        %v6246 = vpop.f32.mrb[0].mxu0
        %v6247 = vadd.f32 %v6144, %v6246
        %6248 = vmatprep.mubr.bf16.mxu0 0
        %6249 = vmatmul.mubr.bf16.gmra.mrb[0].mxu0 %v5722
        %v6250 = vpop.f32.mrb[0].mxu0
        %v6251 = vadd.f32 %v6148, %v6250
        %v6252 = vpop.f32.mrb[0].mxu0
        %v6253 = vadd.f32 %v6150, %v6252
        %v6254 = vpop.f32.mrb[0].mxu0
        %v6255 = vadd.f32 %v6152, %v6254
        %v6256 = vpop.f32.mrb[0].mxu0
        %v6257 = vadd.f32 %v6154, %v6256
        %6258 = vmatprep.mubr.bf16.mxu0 0
        %6259 = vmatmul.mubr.bf16.gmra.mrb[0].mxu0 %v5745
        %v6260 = vpop.f32.mrb[0].mxu0
        %v6261 = vadd.f32 %v6158, %v6260
        %v6262 = vpop.f32.mrb[0].mxu0
        %v6263 = vadd.f32 %v6160, %v6262
        %v6264 = vpop.f32.mrb[0].mxu0
        %v6265 = vadd.f32 %v6162, %v6264
        %v6266 = vpop.f32.mrb[0].mxu0
        %v6267 = vadd.f32 %v6164, %v6266
        %6268 = vmatprep.mubr.bf16.mxu0 0
        %6269 = vmatmul.mubr.bf16.gmra.mrb[0].mxu0 %v5769
        %v6270 = vpop.f32.mrb[0].mxu0
        %v6271 = vadd.f32 %v6168, %v6270
        %v6272 = vpop.f32.mrb[0].mxu0
        %v6273 = vadd.f32 %v6170, %v6272
        %v6274 = vpop.f32.mrb[0].mxu0
        %v6275 = vadd.f32 %v6172, %v6274
        %v6276 = vpop.f32.mrb[0].mxu0
        %v6277 = vadd.f32 %v6174, %v6276
        %6278 = vmatprep.mubr.bf16.mxu0 0
        %6279 = vmatmul.mubr.bf16.gmra.mrb[0].mxu0 %v5793
        %v6280 = vpop.f32.mrb[0].mxu0
        %v6281 = vadd.f32 %v6178, %v6280
        %v6282 = vpop.f32.mrb[0].mxu0
        %v6283 = vadd.f32 %v6180, %v6282
        %v6284 = vpop.f32.mrb[0].mxu0
        %v6285 = vadd.f32 %v6182, %v6284
        %v6286 = vpop.f32.mrb[0].mxu0
        %v6287 = vadd.f32 %v6184, %v6286
        %6288 = vdwg.mxu0
        %v6289 = vadd.f32 %v5603, %v6221
        %v6290 = vadd.f32 %v5604, %v6223
        %v6291 = vadd.f32 %v5605, %v6225
        %v6292 = vadd.f32 %v5606, %v6227
        %v6293 = vadd.f32 %v5607, %v6231
        %v6294 = vadd.f32 %v5608, %v6233
        %v6295 = vadd.f32 %v5609, %v6235
        %v6296 = vadd.f32 %v5610, %v6237
        %v6297 = vadd.f32 %v5611, %v6241
        %v6298 = vadd.f32 %v5612, %v6243
        %v6299 = vadd.f32 %v5613, %v6245
        %v6300 = vadd.f32 %v5614, %v6247
        %v6301 = vadd.f32 %v5615, %v6251
        %v6302 = vadd.f32 %v5616, %v6253
        %v6303 = vadd.f32 %v5617, %v6255
        %v6304 = vadd.f32 %v5618, %v6257
        %v6305 = vadd.f32 %v5619, %v6261
        %v6306 = vadd.f32 %v5620, %v6263
        %v6307 = vadd.f32 %v5621, %v6265
        %v6308 = vadd.f32 %v5622, %v6267
        %v6309 = vadd.f32 %v5623, %v6271
        %v6310 = vadd.f32 %v5624, %v6273
        %v6311 = vadd.f32 %v5625, %v6275
        %v6312 = vadd.f32 %v5626, %v6277
        %v6313 = vadd.f32 %v5627, %v6281
        %v6314 = vadd.f32 %v5628, %v6283
        %v6315 = vadd.f32 %v5629, %v6285
        %v6316 = vadd.f32 %v5630, %v6287
        %6317 = vst [vmem:[#allocation5] sm:$0xff] %v6289
        %6318 = vst [vmem:[#allocation5 + $0x8] sm:$0xff] %v6290
        %6319 = vst [vmem:[#allocation5 + $0x10] sm:$0xff] %v6291
        %6320 = vst [vmem:[#allocation5 + $0x18] sm:$0xff] %v6292
        %6321 = vst [vmem:[#allocation5 + $0x20] sm:$0xff] %v6293
        %6322 = vst [vmem:[#allocation5 + $0x28] sm:$0xff] %v6294
        %6323 = vst [vmem:[#allocation5 + $0x30] sm:$0xff] %v6295
        %6324 = vst [vmem:[#allocation5 + $0x38] sm:$0xff] %v6296
        %6325 = vst [vmem:[#allocation5 + $0x40] sm:$0xff] %v6297
        %6326 = vst [vmem:[#allocation5 + $0x48] sm:$0xff] %v6298
        %6327 = vst [vmem:[#allocation5 + $0x50] sm:$0xff] %v6299
        %6328 = vst [vmem:[#allocation5 + $0x58] sm:$0xff] %v6300
        %6329 = vst [vmem:[#allocation5 + $0x60] sm:$0xff] %v6301
        %6330 = vst [vmem:[#allocation5 + $0x68] sm:$0xff] %v6302
        %6331 = vst [vmem:[#allocation5 + $0x70] sm:$0xff] %v6303
        %6332 = vst [vmem:[#allocation5 + $0x78] sm:$0xff] %v6304
        %6333 = vst [vmem:[#allocation5 + $0x80] sm:$0xff] %v6305
        %6334 = vst [vmem:[#allocation5 + $0x88] sm:$0xff] %v6306
        %6335 = vst [vmem:[#allocation5 + $0x90] sm:$0xff] %v6307
        %6336 = vst [vmem:[#allocation5 + $0x98] sm:$0xff] %v6308
        %6337 = vst [vmem:[#allocation5 + $0xa0] sm:$0xff] %v6309
        %6338 = vst [vmem:[#allocation5 + $0xa8] sm:$0xff] %v6310
        %6339 = vst [vmem:[#allocation5 + $0xb0] sm:$0xff] %v6311
        %6340 = vst [vmem:[#allocation5 + $0xb8] sm:$0xff] %v6312
        %6341 = vst [vmem:[#allocation5 + $0xc0] sm:$0xff] %v6313
        %6342 = vst [vmem:[#allocation5 + $0xc8] sm:$0xff] %v6314
        %6343 = vst [vmem:[#allocation5 + $0xd0] sm:$0xff] %v6315
        %6344 = vst [vmem:[#allocation5 + $0xd8] sm:$0xff] %v6316
        %v6345 = vld [vmem:[#allocation5] sm:$0xff]
        %v6346 = vld [vmem:[#allocation5 + $0x8] sm:$0xff]
        %v6347 = vld [vmem:[#allocation5 + $0x10] sm:$0xff]
        %v6348 = vld [vmem:[#allocation5 + $0x18] sm:$0xff]
        %v6349 = vld [vmem:[#allocation5 + $0x20] sm:$0xff]
        %v6350 = vld [vmem:[#allocation5 + $0x28] sm:$0xff]
        %v6351 = vld [vmem:[#allocation5 + $0x30] sm:$0xff]
        %v6352 = vld [vmem:[#allocation5 + $0x38] sm:$0xff]
        %v6353 = vld [vmem:[#allocation5 + $0x40] sm:$0xff]
        %v6354 = vld [vmem:[#allocation5 + $0x48] sm:$0xff]
        %v6355 = vld [vmem:[#allocation5 + $0x50] sm:$0xff]
        %v6356 = vld [vmem:[#allocation5 + $0x58] sm:$0xff]
        %v6357 = vld [vmem:[#allocation5 + $0x60] sm:$0xff]
        %v6358 = vld [vmem:[#allocation5 + $0x68] sm:$0xff]
        %v6359 = vld [vmem:[#allocation5 + $0x70] sm:$0xff]
        %v6360 = vld [vmem:[#allocation5 + $0x78] sm:$0xff]
        %v6361 = vld [vmem:[#allocation5 + $0x80] sm:$0xff]
        %v6362 = vld [vmem:[#allocation5 + $0x88] sm:$0xff]
        %v6363 = vld [vmem:[#allocation5 + $0x90] sm:$0xff]
        %v6364 = vld [vmem:[#allocation5 + $0x98] sm:$0xff]
        %v6365 = vld [vmem:[#allocation5 + $0xa0] sm:$0xff]
        %v6366 = vld [vmem:[#allocation5 + $0xa8] sm:$0xff]
        %v6367 = vld [vmem:[#allocation5 + $0xb0] sm:$0xff]
        %v6368 = vld [vmem:[#allocation5 + $0xb8] sm:$0xff]
        %v6369 = vld [vmem:[#allocation5 + $0xc0] sm:$0xff]
        %v6370 = vld [vmem:[#allocation5 + $0xc8] sm:$0xff]
        %v6371 = vld [vmem:[#allocation5 + $0xd0] sm:$0xff]
        %v6372 = vld [vmem:[#allocation5 + $0xd8] sm:$0xff]
        %v6373 = vld [vmem:[%s4187] sm:$0xff]
        %v6374 = vld [vmem:[%s4187 + $0x8] sm:$0xff]
        %v6375 = vld [vmem:[%s4187 + $0x10] sm:$0x3]
        %v6379 = vrot.slane %v6373, 1
        %v6380 = vrot.slane %v6374, 1
        %v6381 = vsel %vm715, %v6379, %v6380
        %v6382 = vrot.slane %v6375, 1
        %v6383 = vsel %vm715, %v6380, %v6382
        %v6386 = vrot.slane %v6373, 2
        %v6387 = vrot.slane %v6374, 2
        %v6388 = vsel %vm1025, %v6386, %v6387
        %v6389 = vrot.slane %v6375, 2
        %v6390 = vsel %vm1025, %v6387, %v6389
        %v6393 = vpack.c.bf16 %v6374, %v6373
        %v6394 = vpack.c.bf16 %v6383, %v6381
        %v6395 = vpack.c.bf16 %v6390, %v6388
        %v6396 = vld [vmem:[%s4211] sm:$0xff]
        %v6397 = vld [vmem:[%s4211 + $0x8] sm:$0xff]
        %v6398 = vld [vmem:[%s4211 + $0x10] sm:$0x3]
        %v6402 = vrot.slane %v6396, 1
        %v6403 = vrot.slane %v6397, 1
        %v6404 = vsel %vm715, %v6402, %v6403
        %v6405 = vrot.slane %v6398, 1
        %v6406 = vsel %vm715, %v6403, %v6405
        %v6409 = vrot.slane %v6396, 2
        %v6410 = vrot.slane %v6397, 2
        %v6411 = vsel %vm1025, %v6409, %v6410
        %v6412 = vrot.slane %v6398, 2
        %v6413 = vsel %vm1025, %v6410, %v6412
        %v6416 = vpack.c.bf16 %v6397, %v6396
        %v6417 = vpack.c.bf16 %v6406, %v6404
        %v6418 = vpack.c.bf16 %v6413, %v6411
        %v6419 = vld [vmem:[%s3336] sm:$0xff]
        %v6420 = vld [vmem:[%s3336 + $0x8] sm:$0xff]
        %v6421 = vld [vmem:[%s3336 + $0x10] sm:$0x3]
        %v6425 = vrot.slane %v6419, 1
        %v6426 = vrot.slane %v6420, 1
        %v6427 = vsel %vm715, %v6425, %v6426
        %v6428 = vrot.slane %v6421, 1
        %v6429 = vsel %vm715, %v6426, %v6428
        %v6432 = vrot.slane %v6419, 2
        %v6433 = vrot.slane %v6420, 2
        %v6434 = vsel %vm1025, %v6432, %v6433
        %v6435 = vrot.slane %v6421, 2
        %v6436 = vsel %vm1025, %v6433, %v6435
        %v6439 = vpack.c.bf16 %v6420, %v6419
        %v6440 = vpack.c.bf16 %v6429, %v6427
        %v6441 = vpack.c.bf16 %v6436, %v6434
        %v6442 = vld [vmem:[%s4258] sm:$0xff]
        %v6443 = vld [vmem:[%s4258 + $0x8] sm:$0xff]
        %v6444 = vld [vmem:[%s4258 + $0x10] sm:$0x3]
        %v6448 = vrot.slane %v6442, 1
        %v6449 = vrot.slane %v6443, 1
        %v6450 = vsel %vm715, %v6448, %v6449
        %v6451 = vrot.slane %v6444, 1
        %v6452 = vsel %vm715, %v6449, %v6451
        %v6455 = vrot.slane %v6442, 2
        %v6456 = vrot.slane %v6443, 2
        %v6457 = vsel %vm1025, %v6455, %v6456
        %v6458 = vrot.slane %v6444, 2
        %v6459 = vsel %vm1025, %v6456, %v6458
        %v6462 = vpack.c.bf16 %v6443, %v6442
        %v6463 = vpack.c.bf16 %v6452, %v6450
        %v6464 = vpack.c.bf16 %v6459, %v6457
        %v6465 = vld [vmem:[%s4282] sm:$0xff]
        %v6466 = vld [vmem:[%s4282 + $0x8] sm:$0xff]
        %v6467 = vld [vmem:[%s4282 + $0x10] sm:$0x3]
        %v6471 = vrot.slane %v6465, 1
        %v6472 = vrot.slane %v6466, 1
        %v6473 = vsel %vm715, %v6471, %v6472
        %v6474 = vrot.slane %v6467, 1
        %v6475 = vsel %vm715, %v6472, %v6474
        %v6478 = vrot.slane %v6465, 2
        %v6479 = vrot.slane %v6466, 2
        %v6480 = vsel %vm1025, %v6478, %v6479
        %v6481 = vrot.slane %v6467, 2
        %v6482 = vsel %vm1025, %v6479, %v6481
        %v6485 = vpack.c.bf16 %v6466, %v6465
        %v6486 = vpack.c.bf16 %v6475, %v6473
        %v6487 = vpack.c.bf16 %v6482, %v6480
        %s6488 = scalar_lea.vmem [#allocation3], 552
        %v6489 = vld [vmem:[%s6488] sm:$0xff]
        %v6490 = vld [vmem:[%s6488 + $0x8] sm:$0xff]
        %v6491 = vld [vmem:[%s6488 + $0x10] sm:$0x3]
        %v6495 = vrot.slane %v6489, 1
        %v6496 = vrot.slane %v6490, 1
        %v6497 = vsel %vm715, %v6495, %v6496
        %v6498 = vrot.slane %v6491, 1
        %v6499 = vsel %vm715, %v6496, %v6498
        %v6502 = vrot.slane %v6489, 2
        %v6503 = vrot.slane %v6490, 2
        %v6504 = vsel %vm1025, %v6502, %v6503
        %v6505 = vrot.slane %v6491, 2
        %v6506 = vsel %vm1025, %v6503, %v6505
        %v6509 = vpack.c.bf16 %v6490, %v6489
        %v6510 = vpack.c.bf16 %v6499, %v6497
        %v6511 = vpack.c.bf16 %v6506, %v6504
        %s6512 = scalar_lea.vmem [#allocation3], 624
        %v6513 = vld [vmem:[%s6512] sm:$0xff]
        %v6514 = vld [vmem:[%s6512 + $0x8] sm:$0xff]
        %v6515 = vld [vmem:[%s6512 + $0x10] sm:$0x3]
        %v6519 = vrot.slane %v6513, 1
        %v6520 = vrot.slane %v6514, 1
        %v6521 = vsel %vm715, %v6519, %v6520
        %v6522 = vrot.slane %v6515, 1
        %v6523 = vsel %vm715, %v6520, %v6522
        %v6526 = vrot.slane %v6513, 2
        %v6527 = vrot.slane %v6514, 2
        %v6528 = vsel %vm1025, %v6526, %v6527
        %v6529 = vrot.slane %v6515, 2
        %v6530 = vsel %vm1025, %v6527, %v6529
        %v6533 = vpack.c.bf16 %v6514, %v6513
        %v6534 = vpack.c.bf16 %v6523, %v6521
        %v6535 = vpack.c.bf16 %v6530, %v6528
        %s6536 = scalar_lea.vmem [#allocation6], 1536
        %v6537 = vld [vmem:[%s6536] sm:$0xff]
        %v6538 = vld [vmem:[%s6536 + $0x8] sm:$0xff]
        %v6539 = vld [vmem:[%s6536 + $0x10] sm:$0xff]
        %v6540 = vld [vmem:[%s6536 + $0x18] sm:$0xff]
        %v6541 = vld [vmem:[%s6536 + $0x20] sm:$0xff]
        %v6542 = vld [vmem:[%s6536 + $0x28] sm:$0xff]
        %v6543 = vld [vmem:[%s6536 + $0x30] sm:$0xff]
        %v6544 = vld [vmem:[%s6536 + $0x38] sm:$0xff]
        %v6545 = vld [vmem:[%s6536 + $0x40] sm:$0xff]
        %v6546 = vld [vmem:[%s6536 + $0x48] sm:$0xff]
        %v6547 = vld [vmem:[%s6536 + $0x50] sm:$0xff]
        %v6548 = vld [vmem:[%s6536 + $0x58] sm:$0xff]
        %v6549 = vld [vmem:[%s6536 + $0x60] sm:$0xff]
        %v6550 = vld [vmem:[%s6536 + $0x68] sm:$0xff]
        %v6551 = vld [vmem:[%s6536 + $0x70] sm:$0xff]
        %v6552 = vld [vmem:[%s6536 + $0x78] sm:$0xff]
        %v6553 = vld [vmem:[%s6536 + $0x80] sm:$0xff]
        %v6554 = vld [vmem:[%s6536 + $0x88] sm:$0xff]
        %v6555 = vld [vmem:[%s6536 + $0x90] sm:$0xff]
        %v6556 = vld [vmem:[%s6536 + $0x98] sm:$0xff]
        %v6557 = vld [vmem:[%s6536 + $0xa0] sm:$0xff]
        %v6558 = vld [vmem:[%s6536 + $0xa8] sm:$0xff]
        %v6559 = vld [vmem:[%s6536 + $0xb0] sm:$0xff]
        %v6560 = vld [vmem:[%s6536 + $0xb8] sm:$0xff]
        %v6561 = vld [vmem:[%s6536 + $0xc0] sm:$0xff]
        %v6562 = vld [vmem:[%s6536 + $0xc8] sm:$0xff]
        %v6563 = vld [vmem:[%s6536 + $0xd0] sm:$0xff]
        %v6564 = vld [vmem:[%s6536 + $0xd8] sm:$0xff]
        %v6565 = vld [vmem:[%s6536 + $0xe0] sm:$0xff]
        %v6566 = vld [vmem:[%s6536 + $0xe8] sm:$0xff]
        %v6567 = vld [vmem:[%s6536 + $0xf0] sm:$0xff]
        %v6568 = vld [vmem:[%s6536 + $0xf8] sm:$0xff]
        %v6569 = vld [vmem:[%s6536 + $0x100] sm:$0xff]
        %v6570 = vld [vmem:[%s6536 + $0x108] sm:$0xff]
        %v6571 = vld [vmem:[%s6536 + $0x110] sm:$0xff]
        %v6572 = vld [vmem:[%s6536 + $0x118] sm:$0xff]
        %v6573 = vld [vmem:[%s6536 + $0x120] sm:$0xff]
        %v6574 = vld [vmem:[%s6536 + $0x128] sm:$0xff]
        %v6575 = vld [vmem:[%s6536 + $0x130] sm:$0xff]
        %v6576 = vld [vmem:[%s6536 + $0x138] sm:$0xff]
        %v6577 = vld [vmem:[%s6536 + $0x140] sm:$0xff]
        %v6578 = vld [vmem:[%s6536 + $0x148] sm:$0xff]
        %v6579 = vld [vmem:[%s6536 + $0x150] sm:$0xff]
        %v6580 = vld [vmem:[%s6536 + $0x158] sm:$0xff]
        %v6581 = vld [vmem:[%s6536 + $0x160] sm:$0xff]
        %v6582 = vld [vmem:[%s6536 + $0x168] sm:$0xff]
        %v6583 = vld [vmem:[%s6536 + $0x170] sm:$0xff]
        %v6584 = vld [vmem:[%s6536 + $0x178] sm:$0xff]
        %v6633 = vunpack.c.l.b16 %v6537
        %v6634 = vunpack.c.h.b16 %v6537
        %v6635 = vunpack.c.l.b16 %v6538
        %v6636 = vunpack.c.h.b16 %v6538
        %v6637 = vunpack.c.l.b16 %v6539
        %v6638 = vunpack.c.h.b16 %v6539
        %v6639 = vunpack.c.l.b16 %v6540
        %v6640 = vunpack.c.h.b16 %v6540
        %v6641 = vunpack.c.l.b16 %v6541
        %v6642 = vunpack.c.h.b16 %v6541
        %v6643 = vunpack.c.l.b16 %v6542
        %v6644 = vunpack.c.h.b16 %v6542
        %v6645 = vunpack.c.l.b16 %v6543
        %v6646 = vunpack.c.h.b16 %v6543
        %v6647 = vunpack.c.l.b16 %v6544
        %v6648 = vunpack.c.h.b16 %v6544
        %v6649 = vunpack.c.l.b16 %v6545
        %v6650 = vunpack.c.h.b16 %v6545
        %v6651 = vunpack.c.l.b16 %v6546
        %v6652 = vunpack.c.h.b16 %v6546
        %v6653 = vunpack.c.l.b16 %v6547
        %v6654 = vunpack.c.h.b16 %v6547
        %v6655 = vunpack.c.l.b16 %v6548
        %v6656 = vunpack.c.h.b16 %v6548
        %v6657 = vunpack.c.l.b16 %v6549
        %v6658 = vunpack.c.h.b16 %v6549
        %v6659 = vunpack.c.l.b16 %v6550
        %v6660 = vunpack.c.h.b16 %v6550
        %v6661 = vunpack.c.l.b16 %v6551
        %v6662 = vunpack.c.h.b16 %v6551
        %v6663 = vunpack.c.l.b16 %v6552
        %v6664 = vunpack.c.h.b16 %v6552
        %v6665 = vunpack.c.l.b16 %v6553
        %v6666 = vunpack.c.h.b16 %v6553
        %v6667 = vunpack.c.l.b16 %v6554
        %v6668 = vunpack.c.h.b16 %v6554
        %v6669 = vunpack.c.l.b16 %v6555
        %v6670 = vunpack.c.h.b16 %v6555
        %v6671 = vunpack.c.l.b16 %v6556
        %v6672 = vunpack.c.h.b16 %v6556
        %v6673 = vunpack.c.l.b16 %v6557
        %v6674 = vunpack.c.h.b16 %v6557
        %v6675 = vunpack.c.l.b16 %v6558
        %v6676 = vunpack.c.h.b16 %v6558
        %v6677 = vunpack.c.l.b16 %v6559
        %v6678 = vunpack.c.h.b16 %v6559
        %v6679 = vunpack.c.l.b16 %v6560
        %v6680 = vunpack.c.h.b16 %v6560
        %v6681 = vunpack.c.l.b16 %v6561
        %v6682 = vunpack.c.h.b16 %v6561
        %v6683 = vunpack.c.l.b16 %v6562
        %v6684 = vunpack.c.h.b16 %v6562
        %v6685 = vunpack.c.l.b16 %v6563
        %v6686 = vunpack.c.h.b16 %v6563
        %v6687 = vunpack.c.l.b16 %v6564
        %v6688 = vunpack.c.h.b16 %v6564
        %v6689 = vunpack.c.l.b16 %v6565
        %v6690 = vunpack.c.h.b16 %v6565
        %v6691 = vunpack.c.l.b16 %v6566
        %v6692 = vunpack.c.h.b16 %v6566
        %v6693 = vunpack.c.l.b16 %v6567
        %v6694 = vunpack.c.h.b16 %v6567
        %v6695 = vunpack.c.l.b16 %v6568
        %v6696 = vunpack.c.h.b16 %v6568
        %v6697 = vunpack.c.l.b16 %v6569
        %v6698 = vunpack.c.h.b16 %v6569
        %v6699 = vunpack.c.l.b16 %v6570
        %v6700 = vunpack.c.h.b16 %v6570
        %v6701 = vunpack.c.l.b16 %v6571
        %v6702 = vunpack.c.h.b16 %v6571
        %v6703 = vunpack.c.l.b16 %v6572
        %v6704 = vunpack.c.h.b16 %v6572
        %v6705 = vunpack.c.l.b16 %v6573
        %v6706 = vunpack.c.h.b16 %v6573
        %v6707 = vunpack.c.l.b16 %v6574
        %v6708 = vunpack.c.h.b16 %v6574
        %v6709 = vunpack.c.l.b16 %v6575
        %v6710 = vunpack.c.h.b16 %v6575
        %v6711 = vunpack.c.l.b16 %v6576
        %v6712 = vunpack.c.h.b16 %v6576
        %v6713 = vunpack.c.l.b16 %v6577
        %v6714 = vunpack.c.h.b16 %v6577
        %v6715 = vunpack.c.l.b16 %v6578
        %v6716 = vunpack.c.h.b16 %v6578
        %v6717 = vunpack.c.l.b16 %v6579
        %v6718 = vunpack.c.h.b16 %v6579
        %v6719 = vunpack.c.l.b16 %v6580
        %v6720 = vunpack.c.h.b16 %v6580
        %v6721 = vunpack.c.l.b16 %v6581
        %v6722 = vunpack.c.h.b16 %v6581
        %v6723 = vunpack.c.l.b16 %v6582
        %v6724 = vunpack.c.h.b16 %v6582
        %v6725 = vunpack.c.l.b16 %v6583
        %v6726 = vunpack.c.h.b16 %v6583
        %v6727 = vunpack.c.l.b16 %v6584
        %v6728 = vunpack.c.h.b16 %v6584
        %v6729 = vpack.c.b16 %v6635, %v6633
        %v6730 = vpack.c.b16 %v6636, %v6634
        %v6731 = vpack.c.b16 %v6639, %v6637
        %v6732 = vpack.c.b16 %v6640, %v6638
        %v6733 = vpack.c.b16 %v6643, %v6641
        %v6734 = vpack.c.b16 %v6644, %v6642
        %v6735 = vpack.c.b16 %v6647, %v6645
        %v6736 = vpack.c.b16 %v6648, %v6646
        %v6737 = vpack.c.b16 %v6651, %v6649
        %v6738 = vpack.c.b16 %v6652, %v6650
        %v6739 = vpack.c.b16 %v6655, %v6653
        %v6740 = vpack.c.b16 %v6656, %v6654
        %v6741 = vpack.c.b16 %v6659, %v6657
        %v6742 = vpack.c.b16 %v6660, %v6658
        %v6743 = vpack.c.b16 %v6663, %v6661
        %v6744 = vpack.c.b16 %v6664, %v6662
        %v6745 = vpack.c.b16 %v6667, %v6665
        %v6746 = vpack.c.b16 %v6668, %v6666
        %v6747 = vpack.c.b16 %v6671, %v6669
        %v6748 = vpack.c.b16 %v6672, %v6670
        %v6749 = vpack.c.b16 %v6675, %v6673
        %v6750 = vpack.c.b16 %v6676, %v6674
        %v6751 = vpack.c.b16 %v6679, %v6677
        %v6752 = vpack.c.b16 %v6680, %v6678
        %v6753 = vpack.c.b16 %v6683, %v6681
        %v6754 = vpack.c.b16 %v6684, %v6682
        %v6755 = vpack.c.b16 %v6687, %v6685
        %v6756 = vpack.c.b16 %v6688, %v6686
        %v6757 = vpack.c.b16 %v6691, %v6689
        %v6758 = vpack.c.b16 %v6692, %v6690
        %v6759 = vpack.c.b16 %v6695, %v6693
        %v6760 = vpack.c.b16 %v6696, %v6694
        %v6761 = vpack.c.b16 %v6699, %v6697
        %v6762 = vpack.c.b16 %v6700, %v6698
        %v6763 = vpack.c.b16 %v6703, %v6701
        %v6764 = vpack.c.b16 %v6704, %v6702
        %v6765 = vpack.c.b16 %v6707, %v6705
        %v6766 = vpack.c.b16 %v6708, %v6706
        %v6767 = vpack.c.b16 %v6711, %v6709
        %v6768 = vpack.c.b16 %v6712, %v6710
        %v6769 = vpack.c.b16 %v6715, %v6713
        %v6770 = vpack.c.b16 %v6716, %v6714
        %v6771 = vpack.c.b16 %v6719, %v6717
        %v6772 = vpack.c.b16 %v6720, %v6718
        %v6773 = vpack.c.b16 %v6723, %v6721
        %v6774 = vpack.c.b16 %v6724, %v6722
        %v6775 = vpack.c.b16 %v6727, %v6725
        %v6776 = vpack.c.b16 %v6728, %v6726
        %6825 = vmatprep.subr.bf16.mxu0 %v6730
        %6826 = vmatpush1.bf16.msra.mxu0 %v6729
        %6827 = vmatprep.subr.bf16.mxu0 %v6732
        %6828 = vmatpush1.bf16.msra.mxu0 %v6731
        %6829 = vmatprep.subr.bf16.mxu0 %v6734
        %6830 = vmatpush1.bf16.msra.mxu0 %v6733
        %6831 = vmatprep.subr.bf16.mxu0 %v6736
        %6832 = vmatpush1.bf16.msra.mxu0 %v6735
        %6833 = vmatprep.subr.bf16.mxu0 %v6738
        %6834 = vmatpush1.bf16.msra.mxu0 %v6737
        %6835 = vmatprep.subr.bf16.mxu0 %v6740
        %6836 = vmatpush1.bf16.msra.mxu0 %v6739
        %6837 = vmatprep.subr.bf16.mxu0 %v6742
        %6838 = vmatpush1.bf16.msra.mxu0 %v6741
        %6839 = vmatprep.subr.bf16.mxu0 %v6744
        %6840 = vmatpush1.bf16.msra.mxu0 %v6743
        %6841 = vmatprep.subr.bf16.mxu0 %v6746
        %6842 = vmatpush1.bf16.msra.mxu0 %v6745
        %6843 = vmatprep.subr.bf16.mxu0 %v6748
        %6844 = vmatpush1.bf16.msra.mxu0 %v6747
        %6845 = vmatprep.subr.bf16.mxu0 %v6750
        %6846 = vmatpush1.bf16.msra.mxu0 %v6749
        %6847 = vmatprep.subr.bf16.mxu0 %v6752
        %6848 = vmatpush1.bf16.msra.mxu0 %v6751
        %6849 = vmatprep.subr.bf16.mxu0 %v6754
        %6850 = vmatpush1.bf16.msra.mxu0 %v6753
        %6851 = vmatprep.subr.bf16.mxu0 %v6756
        %6852 = vmatpush1.bf16.msra.mxu0 %v6755
        %6853 = vmatprep.subr.bf16.mxu0 %v6758
        %6854 = vmatpush1.bf16.msra.mxu0 %v6757
        %6855 = vmatprep.subr.bf16.mxu0 %v6760
        %6856 = vmatpush1.bf16.msra.mxu0 %v6759
        %6857 = vmatprep.mubr.bf16.mxu0 %v6394
        %6858 = vmatmul.mubr.bf16.gmra.mrb[0].mxu0 %v6393
        %v6859 = vpop.f32.mrb[0].mxu0
        %v6860 = vadd.f32 0.0, %v6859
        %v6861 = vpop.f32.mrb[0].mxu0
        %v6862 = vadd.f32 0.0, %v6861
        %v6863 = vpop.f32.mrb[0].mxu0
        %v6864 = vadd.f32 0.0, %v6863
        %v6865 = vpop.f32.mrb[0].mxu0
        %v6866 = vadd.f32 0.0, %v6865
        %6867 = vmatprep.mubr.bf16.mxu0 %v6417
        %6868 = vmatmul.mubr.bf16.gmra.mrb[0].mxu0 %v6416
        %v6869 = vpop.f32.mrb[0].mxu0
        %v6870 = vadd.f32 0.0, %v6869
        %v6871 = vpop.f32.mrb[0].mxu0
        %v6872 = vadd.f32 0.0, %v6871
        %v6873 = vpop.f32.mrb[0].mxu0
        %v6874 = vadd.f32 0.0, %v6873
        %v6875 = vpop.f32.mrb[0].mxu0
        %v6876 = vadd.f32 0.0, %v6875
        %6877 = vmatprep.mubr.bf16.mxu0 %v6440
        %6878 = vmatmul.mubr.bf16.gmra.mrb[0].mxu0 %v6439
        %v6879 = vpop.f32.mrb[0].mxu0
        %v6880 = vadd.f32 0.0, %v6879
        %v6881 = vpop.f32.mrb[0].mxu0
        %v6882 = vadd.f32 0.0, %v6881
        %v6883 = vpop.f32.mrb[0].mxu0
        %v6884 = vadd.f32 0.0, %v6883
        %v6885 = vpop.f32.mrb[0].mxu0
        %v6886 = vadd.f32 0.0, %v6885
        %6887 = vmatprep.mubr.bf16.mxu0 %v6463
        %6888 = vmatmul.mubr.bf16.gmra.mrb[0].mxu0 %v6462
        %v6889 = vpop.f32.mrb[0].mxu0
        %v6890 = vadd.f32 0.0, %v6889
        %v6891 = vpop.f32.mrb[0].mxu0
        %v6892 = vadd.f32 0.0, %v6891
        %v6893 = vpop.f32.mrb[0].mxu0
        %v6894 = vadd.f32 0.0, %v6893
        %v6895 = vpop.f32.mrb[0].mxu0
        %v6896 = vadd.f32 0.0, %v6895
        %6897 = vmatprep.mubr.bf16.mxu0 %v6486
        %6898 = vmatmul.mubr.bf16.gmra.mrb[0].mxu0 %v6485
        %v6899 = vpop.f32.mrb[0].mxu0
        %v6900 = vadd.f32 0.0, %v6899
        %v6901 = vpop.f32.mrb[0].mxu0
        %v6902 = vadd.f32 0.0, %v6901
        %v6903 = vpop.f32.mrb[0].mxu0
        %v6904 = vadd.f32 0.0, %v6903
        %v6905 = vpop.f32.mrb[0].mxu0
        %v6906 = vadd.f32 0.0, %v6905
        %6907 = vmatprep.mubr.bf16.mxu0 %v6510
        %6908 = vmatmul.mubr.bf16.gmra.mrb[0].mxu0 %v6509
        %v6909 = vpop.f32.mrb[0].mxu0
        %v6910 = vadd.f32 0.0, %v6909
        %v6911 = vpop.f32.mrb[0].mxu0
        %v6912 = vadd.f32 0.0, %v6911
        %v6913 = vpop.f32.mrb[0].mxu0
        %v6914 = vadd.f32 0.0, %v6913
        %v6915 = vpop.f32.mrb[0].mxu0
        %v6916 = vadd.f32 0.0, %v6915
        %6917 = vmatprep.mubr.bf16.mxu0 %v6534
        %6918 = vmatmul.mubr.bf16.gmra.mrb[0].mxu0 %v6533
        %v6919 = vpop.f32.mrb[0].mxu0
        %v6920 = vadd.f32 0.0, %v6919
        %v6921 = vpop.f32.mrb[0].mxu0
        %v6922 = vadd.f32 0.0, %v6921
        %v6923 = vpop.f32.mrb[0].mxu0
        %v6924 = vadd.f32 0.0, %v6923
        %v6925 = vpop.f32.mrb[0].mxu0
        %v6926 = vadd.f32 0.0, %v6925
        %6927 = vdwg.mxu0
        %6928 = vmatprep.subr.bf16.mxu0 %v6762
        %6929 = vmatpush1.bf16.msra.mxu0 %v6761
        %6930 = vmatprep.subr.bf16.mxu0 %v6764
        %6931 = vmatpush1.bf16.msra.mxu0 %v6763
        %6932 = vmatprep.subr.bf16.mxu0 %v6766
        %6933 = vmatpush1.bf16.msra.mxu0 %v6765
        %6934 = vmatprep.subr.bf16.mxu0 %v6768
        %6935 = vmatpush1.bf16.msra.mxu0 %v6767
        %6936 = vmatprep.subr.bf16.mxu0 %v6770
        %6937 = vmatpush1.bf16.msra.mxu0 %v6769
        %6938 = vmatprep.subr.bf16.mxu0 %v6772
        %6939 = vmatpush1.bf16.msra.mxu0 %v6771
        %6940 = vmatprep.subr.bf16.mxu0 %v6774
        %6941 = vmatpush1.bf16.msra.mxu0 %v6773
        %6942 = vmatprep.subr.bf16.mxu0 %v6776
        %6943 = vmatpush1.bf16.msra.mxu0 %v6775
        %6944 = vmatprep.subr.bf16.mxu0 0
        %6945 = vmatpush1.bf16.msra.mxu0 0
        %6946 = vmatprep.subr.bf16.mxu0 0
        %6947 = vmatpush1.bf16.msra.mxu0 0
        %6948 = vmatprep.subr.bf16.mxu0 0
        %6949 = vmatpush1.bf16.msra.mxu0 0
        %6950 = vmatprep.subr.bf16.mxu0 0
        %6951 = vmatpush1.bf16.msra.mxu0 0
        %6952 = vmatprep.subr.bf16.mxu0 0
        %6953 = vmatpush1.bf16.msra.mxu0 0
        %6954 = vmatprep.subr.bf16.mxu0 0
        %6955 = vmatpush1.bf16.msra.mxu0 0
        %6956 = vmatprep.subr.bf16.mxu0 0
        %6957 = vmatpush1.bf16.msra.mxu0 0
        %6958 = vmatprep.subr.bf16.mxu0 0
        %6959 = vmatpush1.bf16.msra.mxu0 0
        %6960 = vmatprep.mubr.bf16.mxu0 0
        %6961 = vmatmul.mubr.bf16.gmra.mrb[0].mxu0 %v6395
        %v6962 = vpop.f32.mrb[0].mxu0
        %v6963 = vadd.f32 %v6860, %v6962
        %v6964 = vpop.f32.mrb[0].mxu0
        %v6965 = vadd.f32 %v6862, %v6964
        %v6966 = vpop.f32.mrb[0].mxu0
        %v6967 = vadd.f32 %v6864, %v6966
        %v6968 = vpop.f32.mrb[0].mxu0
        %v6969 = vadd.f32 %v6866, %v6968
        %6970 = vmatprep.mubr.bf16.mxu0 0
        %6971 = vmatmul.mubr.bf16.gmra.mrb[0].mxu0 %v6418
        %v6972 = vpop.f32.mrb[0].mxu0
        %v6973 = vadd.f32 %v6870, %v6972
        %v6974 = vpop.f32.mrb[0].mxu0
        %v6975 = vadd.f32 %v6872, %v6974
        %v6976 = vpop.f32.mrb[0].mxu0
        %v6977 = vadd.f32 %v6874, %v6976
        %v6978 = vpop.f32.mrb[0].mxu0
        %v6979 = vadd.f32 %v6876, %v6978
        %6980 = vmatprep.mubr.bf16.mxu0 0
        %6981 = vmatmul.mubr.bf16.gmra.mrb[0].mxu0 %v6441
        %v6982 = vpop.f32.mrb[0].mxu0
        %v6983 = vadd.f32 %v6880, %v6982
        %v6984 = vpop.f32.mrb[0].mxu0
        %v6985 = vadd.f32 %v6882, %v6984
        %v6986 = vpop.f32.mrb[0].mxu0
        %v6987 = vadd.f32 %v6884, %v6986
        %v6988 = vpop.f32.mrb[0].mxu0
        %v6989 = vadd.f32 %v6886, %v6988
        %6990 = vmatprep.mubr.bf16.mxu0 0
        %6991 = vmatmul.mubr.bf16.gmra.mrb[0].mxu0 %v6464
        %v6992 = vpop.f32.mrb[0].mxu0
        %v6993 = vadd.f32 %v6890, %v6992
        %v6994 = vpop.f32.mrb[0].mxu0
        %v6995 = vadd.f32 %v6892, %v6994
        %v6996 = vpop.f32.mrb[0].mxu0
        %v6997 = vadd.f32 %v6894, %v6996
        %v6998 = vpop.f32.mrb[0].mxu0
        %v6999 = vadd.f32 %v6896, %v6998
        %7000 = vmatprep.mubr.bf16.mxu0 0
        %7001 = vmatmul.mubr.bf16.gmra.mrb[0].mxu0 %v6487
        %v7002 = vpop.f32.mrb[0].mxu0
        %v7003 = vadd.f32 %v6900, %v7002
        %v7004 = vpop.f32.mrb[0].mxu0
        %v7005 = vadd.f32 %v6902, %v7004
        %v7006 = vpop.f32.mrb[0].mxu0
        %v7007 = vadd.f32 %v6904, %v7006
        %v7008 = vpop.f32.mrb[0].mxu0
        %v7009 = vadd.f32 %v6906, %v7008
        %7010 = vmatprep.mubr.bf16.mxu0 0
        %7011 = vmatmul.mubr.bf16.gmra.mrb[0].mxu0 %v6511
        %v7012 = vpop.f32.mrb[0].mxu0
        %v7013 = vadd.f32 %v6910, %v7012
        %v7014 = vpop.f32.mrb[0].mxu0
        %v7015 = vadd.f32 %v6912, %v7014
        %v7016 = vpop.f32.mrb[0].mxu0
        %v7017 = vadd.f32 %v6914, %v7016
        %v7018 = vpop.f32.mrb[0].mxu0
        %v7019 = vadd.f32 %v6916, %v7018
        %7020 = vmatprep.mubr.bf16.mxu0 0
        %7021 = vmatmul.mubr.bf16.gmra.mrb[0].mxu0 %v6535
        %v7022 = vpop.f32.mrb[0].mxu0
        %v7023 = vadd.f32 %v6920, %v7022
        %v7024 = vpop.f32.mrb[0].mxu0
        %v7025 = vadd.f32 %v6922, %v7024
        %v7026 = vpop.f32.mrb[0].mxu0
        %v7027 = vadd.f32 %v6924, %v7026
        %v7028 = vpop.f32.mrb[0].mxu0
        %v7029 = vadd.f32 %v6926, %v7028
        %7030 = vdwg.mxu0
        %v7031 = vadd.f32 %v6345, %v6963
        %v7032 = vadd.f32 %v6346, %v6965
        %v7033 = vadd.f32 %v6347, %v6967
        %v7034 = vadd.f32 %v6348, %v6969
        %v7035 = vadd.f32 %v6349, %v6973
        %v7036 = vadd.f32 %v6350, %v6975
        %v7037 = vadd.f32 %v6351, %v6977
        %v7038 = vadd.f32 %v6352, %v6979
        %v7039 = vadd.f32 %v6353, %v6983
        %v7040 = vadd.f32 %v6354, %v6985
        %v7041 = vadd.f32 %v6355, %v6987
        %v7042 = vadd.f32 %v6356, %v6989
        %v7043 = vadd.f32 %v6357, %v6993
        %v7044 = vadd.f32 %v6358, %v6995
        %v7045 = vadd.f32 %v6359, %v6997
        %v7046 = vadd.f32 %v6360, %v6999
        %v7047 = vadd.f32 %v6361, %v7003
        %v7048 = vadd.f32 %v6362, %v7005
        %v7049 = vadd.f32 %v6363, %v7007
        %v7050 = vadd.f32 %v6364, %v7009
        %v7051 = vadd.f32 %v6365, %v7013
        %v7052 = vadd.f32 %v6366, %v7015
        %v7053 = vadd.f32 %v6367, %v7017
        %v7054 = vadd.f32 %v6368, %v7019
        %v7055 = vadd.f32 %v6369, %v7023
        %v7056 = vadd.f32 %v6370, %v7025
        %v7057 = vadd.f32 %v6371, %v7027
        %v7058 = vadd.f32 %v6372, %v7029
        %7059 = vst [vmem:[#allocation5] sm:$0xff] %v7031
        %7060 = vst [vmem:[#allocation5 + $0x8] sm:$0xff] %v7032
        %7061 = vst [vmem:[#allocation5 + $0x10] sm:$0xff] %v7033
        %7062 = vst [vmem:[#allocation5 + $0x18] sm:$0xff] %v7034
        %7063 = vst [vmem:[#allocation5 + $0x20] sm:$0xff] %v7035
        %7064 = vst [vmem:[#allocation5 + $0x28] sm:$0xff] %v7036
        %7065 = vst [vmem:[#allocation5 + $0x30] sm:$0xff] %v7037
        %7066 = vst [vmem:[#allocation5 + $0x38] sm:$0xff] %v7038
        %7067 = vst [vmem:[#allocation5 + $0x40] sm:$0xff] %v7039
        %7068 = vst [vmem:[#allocation5 + $0x48] sm:$0xff] %v7040
        %7069 = vst [vmem:[#allocation5 + $0x50] sm:$0xff] %v7041
        %7070 = vst [vmem:[#allocation5 + $0x58] sm:$0xff] %v7042
        %7071 = vst [vmem:[#allocation5 + $0x60] sm:$0xff] %v7043
        %7072 = vst [vmem:[#allocation5 + $0x68] sm:$0xff] %v7044
        %7073 = vst [vmem:[#allocation5 + $0x70] sm:$0xff] %v7045
        %7074 = vst [vmem:[#allocation5 + $0x78] sm:$0xff] %v7046
        %7075 = vst [vmem:[#allocation5 + $0x80] sm:$0xff] %v7047
        %7076 = vst [vmem:[#allocation5 + $0x88] sm:$0xff] %v7048
        %7077 = vst [vmem:[#allocation5 + $0x90] sm:$0xff] %v7049
        %7078 = vst [vmem:[#allocation5 + $0x98] sm:$0xff] %v7050
        %7079 = vst [vmem:[#allocation5 + $0xa0] sm:$0xff] %v7051
        %7080 = vst [vmem:[#allocation5 + $0xa8] sm:$0xff] %v7052
        %7081 = vst [vmem:[#allocation5 + $0xb0] sm:$0xff] %v7053
        %7082 = vst [vmem:[#allocation5 + $0xb8] sm:$0xff] %v7054
        %7083 = vst [vmem:[#allocation5 + $0xc0] sm:$0xff] %v7055
        %7084 = vst [vmem:[#allocation5 + $0xc8] sm:$0xff] %v7056
        %7085 = vst [vmem:[#allocation5 + $0xd0] sm:$0xff] %v7057
        %7086 = vst [vmem:[#allocation5 + $0xd8] sm:$0xff] %v7058
        %v7087 = vld [vmem:[#allocation5] sm:$0xff]
        %v7088 = vld [vmem:[#allocation5 + $0x8] sm:$0xff]
        %v7089 = vld [vmem:[#allocation5 + $0x10] sm:$0xff]
        %v7090 = vld [vmem:[#allocation5 + $0x18] sm:$0xff]
        %v7091 = vld [vmem:[#allocation5 + $0x20] sm:$0xff]
        %v7092 = vld [vmem:[#allocation5 + $0x28] sm:$0xff]
        %v7093 = vld [vmem:[#allocation5 + $0x30] sm:$0xff]
        %v7094 = vld [vmem:[#allocation5 + $0x38] sm:$0xff]
        %v7095 = vld [vmem:[#allocation5 + $0x40] sm:$0xff]
        %v7096 = vld [vmem:[#allocation5 + $0x48] sm:$0xff]
        %v7097 = vld [vmem:[#allocation5 + $0x50] sm:$0xff]
        %v7098 = vld [vmem:[#allocation5 + $0x58] sm:$0xff]
        %v7099 = vld [vmem:[#allocation5 + $0x60] sm:$0xff]
        %v7100 = vld [vmem:[#allocation5 + $0x68] sm:$0xff]
        %v7101 = vld [vmem:[#allocation5 + $0x70] sm:$0xff]
        %v7102 = vld [vmem:[#allocation5 + $0x78] sm:$0xff]
        %v7103 = vld [vmem:[#allocation5 + $0x80] sm:$0xff]
        %v7104 = vld [vmem:[#allocation5 + $0x88] sm:$0xff]
        %v7105 = vld [vmem:[#allocation5 + $0x90] sm:$0xff]
        %v7106 = vld [vmem:[#allocation5 + $0x98] sm:$0xff]
        %v7107 = vld [vmem:[#allocation5 + $0xa0] sm:$0xff]
        %v7108 = vld [vmem:[#allocation5 + $0xa8] sm:$0xff]
        %v7109 = vld [vmem:[#allocation5 + $0xb0] sm:$0xff]
        %v7110 = vld [vmem:[#allocation5 + $0xb8] sm:$0xff]
        %v7111 = vld [vmem:[%s8] sm:$0x3]
        %v7113 = vlaneseq
        %v7114 = vshrl.u32 %v7113, 7
        %v7115 = vsub.s32 0, %v7114
        %v7116 = vrot.slane %v7111, %v7115
        %v7117 = vlaneseq
        %v7118 = vshrl.u32 %v7117, 7
        %v7119 = vsub.s32 1, %v7118
        %v7120 = vrot.slane %v7111, %v7119
        %v7123 = vmul.f32 %v7087, %v7116
        %v7124 = vmul.f32 %v7088, %v7120
        %v7125 = vmul.f32 %v7089, %v7116
        %v7126 = vmul.f32 %v7090, %v7120
        %v7127 = vmul.f32 %v7091, %v7116
        %v7128 = vmul.f32 %v7092, %v7120
        %v7129 = vmul.f32 %v7093, %v7116
        %v7130 = vmul.f32 %v7094, %v7120
        %v7131 = vmul.f32 %v7095, %v7116
        %v7132 = vmul.f32 %v7096, %v7120
        %v7133 = vmul.f32 %v7097, %v7116
        %v7134 = vmul.f32 %v7098, %v7120
        %v7135 = vmul.f32 %v7099, %v7116
        %v7136 = vmul.f32 %v7100, %v7120
        %v7137 = vmul.f32 %v7101, %v7116
        %v7138 = vmul.f32 %v7102, %v7120
        %v7139 = vmul.f32 %v7103, %v7116
        %v7140 = vmul.f32 %v7104, %v7120
        %v7141 = vmul.f32 %v7105, %v7116
        %v7142 = vmul.f32 %v7106, %v7120
        %v7143 = vmul.f32 %v7107, %v7116
        %v7144 = vmul.f32 %v7108, %v7120
        %v7145 = vmul.f32 %v7109, %v7116
        %v7146 = vmul.f32 %v7110, %v7120
        %v7147 = vld [vmem:[%s9] sm:$0x3]
        %v7149 = vlaneseq
        %v7150 = vshrl.u32 %v7149, 7
        %v7151 = vsub.s32 0, %v7150
        %v7152 = vrot.slane %v7147, %v7151
        %v7153 = vlaneseq
        %v7154 = vshrl.u32 %v7153, 7
        %v7155 = vsub.s32 1, %v7154
        %v7156 = vrot.slane %v7147, %v7155
        %v7159 = vadd.f32 %v7123, %v7152
        %v7160 = vadd.f32 %v7124, %v7156
        %v7161 = vadd.f32 %v7125, %v7152
        %v7162 = vadd.f32 %v7126, %v7156
        %v7163 = vadd.f32 %v7127, %v7152
        %v7164 = vadd.f32 %v7128, %v7156
        %v7165 = vadd.f32 %v7129, %v7152
        %v7166 = vadd.f32 %v7130, %v7156
        %v7167 = vadd.f32 %v7131, %v7152
        %v7168 = vadd.f32 %v7132, %v7156
        %v7169 = vadd.f32 %v7133, %v7152
        %v7170 = vadd.f32 %v7134, %v7156
        %v7171 = vadd.f32 %v7135, %v7152
        %v7172 = vadd.f32 %v7136, %v7156
        %v7173 = vadd.f32 %v7137, %v7152
        %v7174 = vadd.f32 %v7138, %v7156
        %v7175 = vadd.f32 %v7139, %v7152
        %v7176 = vadd.f32 %v7140, %v7156
        %v7177 = vadd.f32 %v7141, %v7152
        %v7178 = vadd.f32 %v7142, %v7156
        %v7179 = vadd.f32 %v7143, %v7152
        %v7180 = vadd.f32 %v7144, %v7156
        %v7181 = vadd.f32 %v7145, %v7152
        %v7182 = vadd.f32 %v7146, %v7156
        %vm7183 = vcmp.ge.f32.partialorder %v7159, 0.0
        %vm7184 = vcmp.ge.f32.partialorder %v7160, 0.0
        %vm7185 = vcmp.ge.f32.partialorder %v7161, 0.0
        %vm7186 = vcmp.ge.f32.partialorder %v7162, 0.0
        %vm7187 = vcmp.ge.f32.partialorder %v7163, 0.0
        %vm7188 = vcmp.ge.f32.partialorder %v7164, 0.0
        %vm7189 = vcmp.ge.f32.partialorder %v7165, 0.0
        %vm7190 = vcmp.ge.f32.partialorder %v7166, 0.0
        %vm7191 = vcmp.ge.f32.partialorder %v7167, 0.0
        %vm7192 = vcmp.ge.f32.partialorder %v7168, 0.0
        %vm7193 = vcmp.ge.f32.partialorder %v7169, 0.0
        %vm7194 = vcmp.ge.f32.partialorder %v7170, 0.0
        %vm7195 = vcmp.ge.f32.partialorder %v7171, 0.0
        %vm7196 = vcmp.ge.f32.partialorder %v7172, 0.0
        %vm7197 = vcmp.ge.f32.partialorder %v7173, 0.0
        %vm7198 = vcmp.ge.f32.partialorder %v7174, 0.0
        %vm7199 = vcmp.ge.f32.partialorder %v7175, 0.0
        %vm7200 = vcmp.ge.f32.partialorder %v7176, 0.0
        %vm7201 = vcmp.ge.f32.partialorder %v7177, 0.0
        %vm7202 = vcmp.ge.f32.partialorder %v7178, 0.0
        %vm7203 = vcmp.ge.f32.partialorder %v7179, 0.0
        %vm7204 = vcmp.ge.f32.partialorder %v7180, 0.0
        %vm7205 = vcmp.ge.f32.partialorder %v7181, 0.0
        %vm7206 = vcmp.ge.f32.partialorder %v7182, 0.0
        %v7207 = vmul.f32 %v7159, 0.01
        %v7208 = vmul.f32 %v7160, 0.01
        %v7209 = vmul.f32 %v7161, 0.01
        %v7210 = vmul.f32 %v7162, 0.01
        %v7211 = vmul.f32 %v7163, 0.01
        %v7212 = vmul.f32 %v7164, 0.01
        %v7213 = vmul.f32 %v7165, 0.01
        %v7214 = vmul.f32 %v7166, 0.01
        %v7215 = vmul.f32 %v7167, 0.01
        %v7216 = vmul.f32 %v7168, 0.01
        %v7217 = vmul.f32 %v7169, 0.01
        %v7218 = vmul.f32 %v7170, 0.01
        %v7219 = vmul.f32 %v7171, 0.01
        %v7220 = vmul.f32 %v7172, 0.01
        %v7221 = vmul.f32 %v7173, 0.01
        %v7222 = vmul.f32 %v7174, 0.01
        %v7223 = vmul.f32 %v7175, 0.01
        %v7224 = vmul.f32 %v7176, 0.01
        %v7225 = vmul.f32 %v7177, 0.01
        %v7226 = vmul.f32 %v7178, 0.01
        %v7227 = vmul.f32 %v7179, 0.01
        %v7228 = vmul.f32 %v7180, 0.01
        %v7229 = vmul.f32 %v7181, 0.01
        %v7230 = vmul.f32 %v7182, 0.01
        %v7231 = vsel %vm7183, %v7159, %v7207
        %v7232 = vsel %vm7184, %v7160, %v7208
        %v7233 = vsel %vm7185, %v7161, %v7209
        %v7234 = vsel %vm7186, %v7162, %v7210
        %v7235 = vsel %vm7187, %v7163, %v7211
        %v7236 = vsel %vm7188, %v7164, %v7212
        %v7237 = vsel %vm7189, %v7165, %v7213
        %v7238 = vsel %vm7190, %v7166, %v7214
        %v7239 = vsel %vm7191, %v7167, %v7215
        %v7240 = vsel %vm7192, %v7168, %v7216
        %v7241 = vsel %vm7193, %v7169, %v7217
        %v7242 = vsel %vm7194, %v7170, %v7218
        %v7243 = vsel %vm7195, %v7171, %v7219
        %v7244 = vsel %vm7196, %v7172, %v7220
        %v7245 = vsel %vm7197, %v7173, %v7221
        %v7246 = vsel %vm7198, %v7174, %v7222
        %v7247 = vsel %vm7199, %v7175, %v7223
        %v7248 = vsel %vm7200, %v7176, %v7224
        %v7249 = vsel %vm7201, %v7177, %v7225
        %v7250 = vsel %vm7202, %v7178, %v7226
        %v7251 = vsel %vm7203, %v7179, %v7227
        %v7252 = vsel %vm7204, %v7180, %v7228
        %v7253 = vsel %vm7205, %v7181, %v7229
        %v7254 = vsel %vm7206, %v7182, %v7230
        %v7255 = vmax.f32 %v7231, %v7235
        %v7256 = vmax.f32 %v7232, %v7236
        %v7257 = vmax.f32 %v7233, %v7237
        %v7258 = vmax.f32 %v7234, %v7238
        %v7259 = vld [vmem:[%s10] sm:$0xff]
        %v7260 = vld [vmem:[%s10 + $0x8] sm:$0xff]
        %v7261 = vld [vmem:[%s10 + $0x10] sm:$0xff]
        %v7262 = vld [vmem:[%s10 + $0x18] sm:$0xff]
        %v7263 = vmul.f32 %v7255, %v7259
        %v7264 = vmul.f32 %v7256, %v7260
        %v7265 = vmul.f32 %v7257, %v7261
        %v7266 = vmul.f32 %v7258, %v7262
        %v7267 = vadd.f32 %v7263, %v7264
        %7268 = vadd.xlane.f32.xlu0 %v7267
        %v7269 = vpop.xlane.xlu0 %7268
        %v7270 = vadd.f32 %v7265, %v7266
        %7271 = vadd.xlane.f32.xlu0 %v7270
        %v7272 = vpop.xlane.xlu0 %7271
        %v7273 = vadd.f32 %v7269, %v7272
        %v7274 = vrot.slane %v7273, 4
        %v7275 = vadd.f32 %v7273, %v7274
        %v7276 = vrot.slane %v7275, 2
        %v7277 = vadd.f32 %v7275, %v7276
        %v7278 = vrot.slane %v7277, 1
        %v7279 = vadd.f32 %v7277, %v7278
        %v7280 = vadd.f32 %v7279, 0.0
        %s7281 = scalar_lea.vmem %s10, 96
        %v7282 = vld [vmem:[%s7281] sm:$0xff]
        %v7283 = vld [vmem:[%s7281 + $0x8] sm:$0xff]
        %v7284 = vld [vmem:[%s7281 + $0x10] sm:$0xff]
        %v7285 = vld [vmem:[%s7281 + $0x18] sm:$0xff]
        %v7286 = vmul.f32 %v7255, %v7282
        %v7287 = vmul.f32 %v7256, %v7283
        %v7288 = vmul.f32 %v7257, %v7284
        %v7289 = vmul.f32 %v7258, %v7285
        %v7290 = vadd.f32 %v7286, %v7287
        %7291 = vadd.xlane.f32.xlu0 %v7290
        %v7292 = vpop.xlane.xlu0 %7291
        %v7293 = vadd.f32 %v7288, %v7289
        %7294 = vadd.xlane.f32.xlu0 %v7293
        %v7295 = vpop.xlane.xlu0 %7294
        %v7296 = vadd.f32 %v7292, %v7295
        %v7297 = vrot.slane %v7296, 4
        %v7298 = vadd.f32 %v7296, %v7297
        %v7299 = vrot.slane %v7298, 2
        %v7300 = vadd.f32 %v7298, %v7299
        %v7301 = vrot.slane %v7300, 1
        %v7302 = vadd.f32 %v7300, %v7301
        %v7303 = vadd.f32 %v7302, 0.0
        %v7304 = vmax.f32 %v7239, %v7243
        %v7305 = vmax.f32 %v7240, %v7244
        %v7306 = vmax.f32 %v7241, %v7245
        %v7307 = vmax.f32 %v7242, %v7246
        %v7308 = vld [vmem:[%s10 + $0x20] sm:$0xff]
        %v7309 = vld [vmem:[%s10 + $0x28] sm:$0xff]
        %v7310 = vld [vmem:[%s10 + $0x30] sm:$0xff]
        %v7311 = vld [vmem:[%s10 + $0x38] sm:$0xff]
        %v7312 = vmul.f32 %v7304, %v7308
        %v7313 = vmul.f32 %v7305, %v7309
        %v7314 = vmul.f32 %v7306, %v7310
        %v7315 = vmul.f32 %v7307, %v7311
        %v7316 = vadd.f32 %v7312, %v7313
        %7317 = vadd.xlane.f32.xlu0 %v7316
        %v7318 = vpop.xlane.xlu0 %7317
        %v7319 = vadd.f32 %v7314, %v7315
        %7320 = vadd.xlane.f32.xlu0 %v7319
        %v7321 = vpop.xlane.xlu0 %7320
        %v7322 = vadd.f32 %v7318, %v7321
        %v7323 = vrot.slane %v7322, 4
        %v7324 = vadd.f32 %v7322, %v7323
        %v7325 = vrot.slane %v7324, 2
        %v7326 = vadd.f32 %v7324, %v7325
        %v7327 = vrot.slane %v7326, 1
        %v7328 = vadd.f32 %v7326, %v7327
        %v7329 = vadd.f32 %v7280, %v7328
        %v7330 = vld [vmem:[%s7281 + $0x20] sm:$0xff]
        %v7331 = vld [vmem:[%s7281 + $0x28] sm:$0xff]
        %v7332 = vld [vmem:[%s7281 + $0x30] sm:$0xff]
        %v7333 = vld [vmem:[%s7281 + $0x38] sm:$0xff]
        %v7334 = vmul.f32 %v7304, %v7330
        %v7335 = vmul.f32 %v7305, %v7331
        %v7336 = vmul.f32 %v7306, %v7332
        %v7337 = vmul.f32 %v7307, %v7333
        %v7338 = vadd.f32 %v7334, %v7335
        %7339 = vadd.xlane.f32.xlu0 %v7338
        %v7340 = vpop.xlane.xlu0 %7339
        %v7341 = vadd.f32 %v7336, %v7337
        %7342 = vadd.xlane.f32.xlu0 %v7341
        %v7343 = vpop.xlane.xlu0 %7342
        %v7344 = vadd.f32 %v7340, %v7343
        %v7345 = vrot.slane %v7344, 4
        %v7346 = vadd.f32 %v7344, %v7345
        %v7347 = vrot.slane %v7346, 2
        %v7348 = vadd.f32 %v7346, %v7347
        %v7349 = vrot.slane %v7348, 1
        %v7350 = vadd.f32 %v7348, %v7349
        %v7351 = vadd.f32 %v7303, %v7350
        %v7352 = vmax.f32 %v7247, %v7251
        %v7353 = vmax.f32 %v7248, %v7252
        %v7354 = vmax.f32 %v7249, %v7253
        %v7355 = vmax.f32 %v7250, %v7254
        %v7356 = vld [vmem:[%s10 + $0x40] sm:$0xff]
        %v7357 = vld [vmem:[%s10 + $0x48] sm:$0xff]
        %v7358 = vld [vmem:[%s10 + $0x50] sm:$0xff]
        %v7359 = vld [vmem:[%s10 + $0x58] sm:$0xff]
        %v7360 = vmul.f32 %v7352, %v7356
        %v7361 = vmul.f32 %v7353, %v7357
        %v7362 = vmul.f32 %v7354, %v7358
        %v7363 = vmul.f32 %v7355, %v7359
        %v7364 = vadd.f32 %v7360, %v7361
        %7365 = vadd.xlane.f32.xlu0 %v7364
        %v7366 = vpop.xlane.xlu0 %7365
        %v7367 = vadd.f32 %v7362, %v7363
        %7368 = vadd.xlane.f32.xlu0 %v7367
        %v7369 = vpop.xlane.xlu0 %7368
        %v7370 = vadd.f32 %v7366, %v7369
        %v7371 = vrot.slane %v7370, 4
        %v7372 = vadd.f32 %v7370, %v7371
        %v7373 = vrot.slane %v7372, 2
        %v7374 = vadd.f32 %v7372, %v7373
        %v7375 = vrot.slane %v7374, 1
        %v7376 = vadd.f32 %v7374, %v7375
        %v7377 = vadd.f32 %v7329, %v7376
        %v7378 = vld [vmem:[%s7281 + $0x40] sm:$0xff]
        %v7379 = vld [vmem:[%s7281 + $0x48] sm:$0xff]
        %v7380 = vld [vmem:[%s7281 + $0x50] sm:$0xff]
        %v7381 = vld [vmem:[%s7281 + $0x58] sm:$0xff]
        %v7382 = vmul.f32 %v7352, %v7378
        %v7383 = vmul.f32 %v7353, %v7379
        %v7384 = vmul.f32 %v7354, %v7380
        %v7385 = vmul.f32 %v7355, %v7381
        %v7386 = vadd.f32 %v7382, %v7383
        %7387 = vadd.xlane.f32.xlu0 %v7386
        %v7388 = vpop.xlane.xlu0 %7387
        %v7389 = vadd.f32 %v7384, %v7385
        %7390 = vadd.xlane.f32.xlu0 %v7389
        %v7391 = vpop.xlane.xlu0 %7390
        %v7392 = vadd.f32 %v7388, %v7391
        %v7393 = vrot.slane %v7392, 4
        %v7394 = vadd.f32 %v7392, %v7393
        %v7395 = vrot.slane %v7394, 2
        %v7396 = vadd.f32 %v7394, %v7395
        %v7397 = vrot.slane %v7396, 1
        %v7398 = vadd.f32 %v7396, %v7397
        %v7399 = vadd.f32 %v7351, %v7398
        %v7400 = vlaneseq
        %v7401 = vand.u32 %v7400, 127
        %vm7402 = vcmp.eq.s32.totalorder %v7401, 0
        %vm7403 = vcmp.eq.s32.totalorder %v7401, 1
        %v7404 = vsel %vm7403, %v7399, 0.0
        %v7405 = vsel %vm7402, %v7377, %v7404
        %v7406 = vld [vmem:[%s11] sm:$0x1]
        %v7407 = vadd.f32 %v7405, %v7406
        %7408 = vst [vmem:[%s420] sm:$0x1] %v7407
        %s7409 = sand.u32 %s292, 1
        %s7410 = scalar_lea.sflag [#allocation8], %s7409
        %s7411 = sand.u32 %s292, 1
        %s7412 = scalar_lea.vmem [#allocation9], %s7411
        // Predicated region
        $region73: #{net2_forward.1} parent=67 // pred_check
          %p7413 = pneg %p302
        $region74: #{net2_forward.1} parent=67 // pred_check_branch
          %7415 = sbr.rel (%p7413) target = $region76
        $region75: #{net2_forward.1} parent=67 // pred_region
          %s7417 = ssub.s32 16, 16
          %7418 = vsyncadd %s7410, %s7417
          %s7419 = smul.addr %s27, 16
          %s7420 = scalar_lea.hbm %s12, %s7419
          %s7422 = sshll.u32 %s7412, 4
          %s7423 = int_to_ptr.vmem [resolvable:$true] %s7422
          %7425 = dma.vmem_to_hbm [thread:$0]  %s7423, 16, %s7420, %s7410
        $region76: #{net2_forward.1} parent=67 // pred_fallthru
          _
      $region68: #{net2_forward.1} parent=5 // pred_fallthru
        _
      %p7426 = scmp.le.s32.totalorder 2, %s22
      // Predicated region
      $region77: #{net2_forward.1} parent=5 // pred_check
        %p7427 = pneg %p7426
      $region78: #{net2_forward.1} parent=5 // pred_check_branch
        %7429 = sbr.rel (%p7427) target = $region80
      $region79: #{net2_forward.1} parent=5 // pred_region
        %s7430 = ssub.s32 %s22, 2
        // Predicated region
        $region81: #{net2_forward.1} parent=79 // pred_check
          %p7431 = pneg %p308
        $region82: #{net2_forward.1} parent=79 // pred_check_branch
          %7433 = sbr.rel (%p7431) target = $region84
        $region83: #{net2_forward.1} parent=79 // pred_region
          %s7434 = sand.u32 %s293, 1
          %s7435 = scalar_lea.sflag [#allocation8], %s7434
          %s7436 = sand.u32 %s293, 1
          %s7437 = scalar_lea.vmem [#allocation9], %s7436
          %7438 = dma.done %s7435, 16
        $region84: #{net2_forward.1} parent=79 // pred_fallthru
          _
      $region80: #{net2_forward.1} parent=5 // pred_fallthru
        _
    $region6: #{net2_forward.1} parent=1 // loop_footer
      %s26 = sadd.s32 1, %s22
    $region7: #{net2_forward.1} parent=1 // loop_footer_branch
      %21 = sbr.rel target = $region3
    $region8: #{net2_forward.1} parent=1 // loop_exit
      _
    %7439 = vsyncpa [#allocation7], 1
    %s7440 = scalar_lea.sflag [#allocation7], 1
    %7441 = vsyncpa %s7440, 1
    %7442 = vsyncpa [#allocation8], 1
    %s7443 = scalar_lea.sflag [#allocation8], 1
    %7444 = vsyncpa %s7443, 1

</llo_original>
